<compile_context>
chip_gen: v6e
topology: v6e:2x2x1
jax: 0.10.0
libtpu: 0.0.40
codegen_flags: <defaults>
</compile_context>

<pallas_src>
import functools

import jax
import jax.numpy as jnp
from jax import lax
from jax.experimental import pallas as pl
from jax.experimental.pallas import tpu as pltpu


# ----------------------------- fused kernel --------------------------------

def make_fused_kernel(*, T, B, Fd, H, C, out_T, num_layers):
    """Builds the single fused forward kernel (all shapes static)."""

    def kernel(*refs):
        conv_ref = refs[0]                      # SMEM f32 (48,)
        xp_ref = refs[1]                        # (B, 5, T+2, Fd+2)
        valid_ref = refs[2]                     # (T, B, 1) float mask
        fcw_ref = refs[3 + 3 * num_layers]      # (2H, C)
        fcb_ref = refs[4 + 3 * num_layers]      # (1, C)
        out_ref = refs[5 + 3 * num_layers]      # (B*out_T, C)

        # ---- Conv2d(5->1, k=3, p=1) + BatchNorm2d(1) train stats + ReLU ----
        conv_outs = []
        for b in range(B):
            xb = xp_ref[b]                      # (5, T+2, Fd+2) single VMEM load
            acc = jnp.zeros((T, Fd), jnp.float32)
            for c in range(5):
                xc = xb[c]                      # (T+2, Fd+2)
                for kw in range(3):
                    col = xc[:, kw:kw + Fd]     # lane shift hoisted per (c, kw)
                    for kh in range(3):
                        acc = acc + col[kh:kh + T, :] * conv_ref[c * 9 + kh * 3 + kw]
            conv_outs.append(acc + conv_ref[45])

        n = float(B * T * Fd)
        mu = sum(jnp.sum(a) for a in conv_outs) / n
        var = 0.0
        for a in conv_outs:
            d = a - mu
            var = var + jnp.sum(d * d)
        var = var / n
        inv = lax.rsqrt(var + 1e-5)
        feats = [jnp.maximum(conv_ref[46] * ((a - mu) * inv) + conv_ref[47], 0.0)
                 for a in conv_outs]            # per-b (T, Fd)

        valid = valid_ref[...]                  # (T, B, 1), {0., 1.}

        def lstm_cell(g, c_prev):
            # PyTorch gate order: i, f, g, o
            i = jax.nn.sigmoid(g[:, 0 * H:1 * H])
            f = jax.nn.sigmoid(g[:, 1 * H:2 * H])
            gg = jnp.tanh(g[:, 2 * H:3 * H])
            o = jax.nn.sigmoid(g[:, 3 * H:4 * H])
            c_new = f * c_prev + i * gg
            return o * jnp.tanh(c_new), c_new

        def run_bilstm(x_flat, wih, bias, whh_bd, row_fn):
            # x_flat : (B*T, d_in) layer input, row layout given by row_fn(t, b)
            # wih    : (d_in, 8H)  both directions' input weights
            # bias   : (1, 8H)     b_ih + b_hh, both directions
            # whh_bd : (2H, 8H)    block-diagonal recurrent weights (fwd | bwd)
            # Fused bidirectional input projection (prologue, one MXU pass).
            xg = jnp.dot(x_flat, wih, preferred_element_type=jnp.float32) + bias
            zero = jnp.zeros((B, H), jnp.float32)
            h_f, c_f, h_b, c_b = zero, zero, zero, zero
            ys_f = [None] * T
            ys_b = [None] * T

            def gather(tt):
                return jnp.concatenate(
                    [xg[row_fn(tt, bb):row_fn(tt, bb) + 1] for bb in range(B)],
                    axis=0)                                         # (B, 8H)

            for t in range(T):                  # in-body time loop, unrolled
                tb = T - 1 - t
                h2 = jnp.concatenate([h_f, h_b], axis=1)            # (B, 2H)
                rec = jnp.dot(h2, whh_bd,
                              preferred_element_type=jnp.float32)   # (B, 8H)
                g_f = gather(t)[:, :4 * H] + rec[:, :4 * H]
                g_b = gather(tb)[:, 4 * H:] + rec[:, 4 * H:]
                hf_new, cf_new = lstm_cell(g_f, c_f)
                hb_new, cb_new = lstm_cell(g_b, c_b)
                v_f, v_b = valid[t], valid[tb]                      # (B, 1)
                h_f = v_f * hf_new + (1.0 - v_f) * h_f
                c_f = v_f * cf_new + (1.0 - v_f) * c_f
                h_b = v_b * hb_new + (1.0 - v_b) * h_b
                c_b = v_b * cb_new + (1.0 - v_b) * c_b
                ys_f[t] = v_f * hf_new          # padded steps emit zeros
                ys_b[tb] = v_b * hb_new
            return ys_f, ys_b

        # layer 0 input: batch-major rows (b*T + t), built by plain concat
        x_in = jnp.concatenate(feats, axis=0)                       # (B*T, Fd)
        row_fn = lambda t, b: b * T + t
        ys_f = ys_b = None
        for layer in range(num_layers):
            wih_ref = refs[3 + 3 * layer]
            b_ref = refs[4 + 3 * layer]
            whh_ref = refs[5 + 3 * layer]
            ys_f, ys_b = run_bilstm(x_in, wih_ref[...], b_ref[...],
                                    whh_ref[...], row_fn)
            if layer + 1 < num_layers:
                # next layer's input: time-major rows (t*B + b), fwd | bwd
                x_in = jnp.concatenate(
                    [jnp.concatenate([ys_f[t], ys_b[t]], axis=1) for t in range(T)],
                    axis=0)                                          # (T*B, 2H)
                row_fn = lambda t, b: t * B + b

        # ---- epilogue: assemble (B, out_T, 2H), FC + log_softmax ----
        pad_rows = out_T - T
        blocks = []
        for b in range(B):
            col_f = jnp.concatenate([ys_f[t][b:b + 1] for t in range(T)], axis=0)
            col_b = jnp.concatenate([ys_b[t][b:b + 1] for t in range(T)], axis=0)
            blocks.append(jnp.concatenate([col_f, col_b], axis=1))  # (T, 2H)
            if pad_rows > 0:
                blocks.append(jnp.zeros((pad_rows, 2 * H), jnp.float32))
        x_fc = jnp.concatenate(blocks, axis=0)                      # (B*out_T, 2H)

        z = jnp.dot(x_fc, fcw_ref[...],
                    preferred_element_type=jnp.float32) + fcb_ref[...]
        m = jnp.max(z, axis=-1, keepdims=True)
        lse = jnp.log(jnp.sum(jnp.exp(z - m), axis=-1, keepdims=True)) + m
        out_ref[...] = z - lse

    return kernel


# --------------------------- parameters / forward ---------------------------

def init_params(key, hidden_size, num_layers, num_classes, into_lstm=40):
    params = {}
    k_cw, k_cb, k_fw, k_fb, k_lstm = jax.random.split(key, 5)
    kc = 1.0 / (5 * 3 * 3) ** 0.5
    params['conv_w'] = jax.random.uniform(k_cw, (5, 3, 3), jnp.float32, -kc, kc)
    params['conv_b'] = jax.random.uniform(k_cb, (), jnp.float32, -kc, kc)
    params['bn_gamma'] = jnp.float32(1.0)
    params['bn_beta'] = jnp.float32(0.0)

    H = hidden_size
    kl = 1.0 / H ** 0.5
    keys = jax.random.split(k_lstm, num_layers * 2 * 4).reshape(num_layers, 2, 4, 2)
    lstm = []
    for layer in range(num_layers):
        d_in = into_lstm if layer == 0 else 2 * H
        w_ih_t_dirs, b_dirs = [], []
        whh_bd = jnp.zeros((2 * H, 8 * H), jnp.float32)
        for d in range(2):
            kw_ih, kw_hh, kb_ih, kb_hh = keys[layer, d]
            w_ih = jax.random.uniform(kw_ih, (4 * H, d_in), jnp.float32, -kl, kl)
            w_hh = jax.random.uniform(kw_hh, (4 * H, H), jnp.float32, -kl, kl)
            b_ih = jax.random.uniform(kb_ih, (4 * H,), jnp.float32, -kl, kl)
            b_hh = jax.random.uniform(kb_hh, (4 * H,), jnp.float32, -kl, kl)
            w_ih_t_dirs.append(w_ih.T)
            b_dirs.append(b_ih + b_hh)
            # block-diagonal W_hh^T: fwd in top-left, bwd in bottom-right
            whh_bd = whh_bd.at[d * H:(d + 1) * H,
                               d * 4 * H:(d + 1) * 4 * H].set(w_hh.T)
        lstm.append({
            'w_ih_t': jnp.concatenate(w_ih_t_dirs, axis=1),   # (d_in, 8H)
            'b': jnp.concatenate(b_dirs),                     # (8H,)
            'whh_bd': whh_bd,                                 # (2H, 8H)
        })
    params['lstm'] = lstm

    kf = 1.0 / (2 * H) ** 0.5
    params['fc_w_t'] = jax.random.uniform(k_fw, (2 * H, num_classes),
                                          jnp.float32, -kf, kf)
    params['fc_b'] = jax.random.uniform(k_fb, (num_classes,), jnp.float32, -kf, kf)
    return params


def forward(params, batch_features, input_lengths, *,
            hidden_size, num_layers, output_size):
    B, T, F = batch_features.shape
    Fd = F // 5
    H = hidden_size
    out_T, C = output_size

    # conv-friendly layout: (B, 5, T+2, Fd+2) so each tile spans (T+2, Fd+2)
    x5 = batch_features.reshape(B, T, 5, Fd).transpose(0, 2, 1, 3)
    xp = jnp.pad(x5, ((0, 0), (0, 0), (1, 1), (1, 1))).astype(jnp.float32)

    conv_params = jnp.concatenate(
        [params['conv_w'].reshape(-1),
         jnp.stack([params['conv_b'], params['bn_gamma'], params['bn_beta']])]
    ).astype(jnp.float32)                                           # (48,)

    # packed-sequence validity mask (time-major): 1.0 where t < length
    valid = (jnp.arange(T)[:, None] < input_lengths[None, :])
    valid = valid.astype(jnp.float32)[:, :, None]                   # (T, B, 1)

    lstm_args = []
    for layer in range(num_layers):
        p = params['lstm'][layer]
        lstm_args += [p['w_ih_t'], p['b'].reshape(1, -1), p['whh_bd']]

    kernel = make_fused_kernel(T=T, B=B, Fd=Fd, H=H, C=C,
                               out_T=out_T, num_layers=num_layers)
    n_in = 3 + 3 * num_layers + 2
    logp = pl.pallas_call(
        kernel,
        out_shape=jax.ShapeDtypeStruct((B * out_T, C), jnp.float32),
        in_specs=[pl.BlockSpec(memory_space=pltpu.MemorySpace.SMEM)]
                 + [pl.BlockSpec(memory_space=pltpu.MemorySpace.VMEM)] * (n_in - 1),
        out_specs=pl.BlockSpec(memory_space=pltpu.MemorySpace.VMEM),
    )(conv_params, xp, valid, *lstm_args,
      params['fc_w_t'], params['fc_b'].reshape(1, -1))

    return logp.reshape(B, out_T, C)


# --------------------------------- main -------------------------------------

if __name__ == "__main__":
    B, T = 2, 8
    into_lstm = 40
    F = 5 * into_lstm            # 200 input features -> view(B, T, 5, 40)
    hidden_size = 32
    num_layers = 2
    output_size = (10, 16)       # (max output timesteps, num classes)

    key = jax.random.PRNGKey(0)
    k_x, k_p = jax.random.split(key)
    x = jax.random.normal(k_x, (B, T, F), jnp.float32)
    input_lengths = jnp.array([8, 5], jnp.int32)

    params = init_params(k_p, hidden_size, num_layers, output_size[1], into_lstm)

    fwd = jax.jit(functools.partial(forward,
                                    hidden_size=hidden_size,
                                    num_layers=num_layers,
                                    output_size=output_size))
    out = fwd(params, x, input_lengths)
    out = jax.block_until_ready(out)

    assert out.shape == (B, output_size[0], output_size[1]), out.shape
    # log_softmax rows must exponentiate-sum to 1
    row_sums = jnp.exp(out).sum(axis=-1)
    assert bool(jnp.all(jnp.isfinite(out)))
    assert bool(jnp.allclose(row_sums, 1.0, atol=1e-4))
    print("KERNEL_OK")
</pallas_src>

<mosaic_0001>
module attributes {stable_mosaic.version = 11 : i64} {
  func.func @kernel(%arg0: memref<48xf32, #tpu.memory_space<smem>>, %arg1: memref<2x5x10x42xf32, #tpu.memory_space<vmem>>, %arg2: memref<8x2x1xf32, #tpu.memory_space<vmem>>, %arg3: memref<40x256xf32, #tpu.memory_space<vmem>>, %arg4: memref<1x256xf32, #tpu.memory_space<vmem>>, %arg5: memref<64x256xf32, #tpu.memory_space<vmem>>, %arg6: memref<64x256xf32, #tpu.memory_space<vmem>>, %arg7: memref<1x256xf32, #tpu.memory_space<vmem>>, %arg8: memref<64x256xf32, #tpu.memory_space<vmem>>, %arg9: memref<64x16xf32, #tpu.memory_space<vmem>>, %arg10: memref<1x16xf32, #tpu.memory_space<vmem>>, %arg11: memref<20x16xf32, #tpu.memory_space<vmem>>) attributes {dimension_semantics = [], scalar_prefetch = 0 : i64, scratch_operands = 0 : i64, tpu.core_type = #tpu.core_type<tc>} {
    %c0 = arith.constant 0 : index
    %c0_0 = arith.constant 0 : index
    %c0_1 = arith.constant 0 : index
    %c0_2 = arith.constant 0 : index
    %0 = vector.load %arg1[%c0, %c0_0, %c0_1, %c0_2] : memref<2x5x10x42xf32, #tpu.memory_space<vmem>>, vector<1x5x10x42xf32>
    %1 = vector.shape_cast %0 : vector<1x5x10x42xf32> to vector<5x10x42xf32>
    %cst = arith.constant 0.000000e+00 : f32
    %2 = vector.broadcast %cst : f32 to vector<8x40xf32>
    %3 = vector.extract_strided_slice %1 {offsets = [0, 0, 0], sizes = [1, 10, 42], strides = [1, 1, 1]} : vector<5x10x42xf32> to vector<1x10x42xf32>
    %4 = vector.shape_cast %3 : vector<1x10x42xf32> to vector<10x42xf32>
    %5 = vector.extract_strided_slice %4 {offsets = [0, 0], sizes = [10, 40], strides = [1, 1]} : vector<10x42xf32> to vector<10x40xf32>
    %6 = vector.extract_strided_slice %5 {offsets = [0, 0], sizes = [8, 40], strides = [1, 1]} : vector<10x40xf32> to vector<8x40xf32>
    %c0_3 = arith.constant 0 : index
    %7 = memref.load %arg0[%c0_3] : memref<48xf32, #tpu.memory_space<smem>>
    %8 = vector.broadcast %7 : f32 to vector<8x40xf32>
    %9 = arith.mulf %6, %8 : vector<8x40xf32>
    %10 = arith.addf %2, %9 : vector<8x40xf32>
    %11 = vector.extract_strided_slice %5 {offsets = [1, 0], sizes = [8, 40], strides = [1, 1]} : vector<10x40xf32> to vector<8x40xf32>
    %c3 = arith.constant 3 : index
    %12 = memref.load %arg0[%c3] : memref<48xf32, #tpu.memory_space<smem>>
    %13 = vector.broadcast %12 : f32 to vector<8x40xf32>
    %14 = arith.mulf %11, %13 : vector<8x40xf32>
    %15 = arith.addf %10, %14 : vector<8x40xf32>
    %16 = vector.extract_strided_slice %5 {offsets = [2, 0], sizes = [8, 40], strides = [1, 1]} : vector<10x40xf32> to vector<8x40xf32>
    %c6 = arith.constant 6 : index
    %17 = memref.load %arg0[%c6] : memref<48xf32, #tpu.memory_space<smem>>
    %18 = vector.broadcast %17 : f32 to vector<8x40xf32>
    %19 = arith.mulf %16, %18 : vector<8x40xf32>
    %20 = arith.addf %15, %19 : vector<8x40xf32>
    %21 = vector.extract_strided_slice %4 {offsets = [0, 1], sizes = [10, 40], strides = [1, 1]} : vector<10x42xf32> to vector<10x40xf32>
    %22 = vector.extract_strided_slice %21 {offsets = [0, 0], sizes = [8, 40], strides = [1, 1]} : vector<10x40xf32> to vector<8x40xf32>
    %c1 = arith.constant 1 : index
    %23 = memref.load %arg0[%c1] : memref<48xf32, #tpu.memory_space<smem>>
    %24 = vector.broadcast %23 : f32 to vector<8x40xf32>
    %25 = arith.mulf %22, %24 : vector<8x40xf32>
    %26 = arith.addf %20, %25 : vector<8x40xf32>
    %27 = vector.extract_strided_slice %21 {offsets = [1, 0], sizes = [8, 40], strides = [1, 1]} : vector<10x40xf32> to vector<8x40xf32>
    %c4 = arith.constant 4 : index
    %28 = memref.load %arg0[%c4] : memref<48xf32, #tpu.memory_space<smem>>
    %29 = vector.broadcast %28 : f32 to vector<8x40xf32>
    %30 = arith.mulf %27, %29 : vector<8x40xf32>
    %31 = arith.addf %26, %30 : vector<8x40xf32>
    %32 = vector.extract_strided_slice %21 {offsets = [2, 0], sizes = [8, 40], strides = [1, 1]} : vector<10x40xf32> to vector<8x40xf32>
    %c7 = arith.constant 7 : index
    %33 = memref.load %arg0[%c7] : memref<48xf32, #tpu.memory_space<smem>>
    %34 = vector.broadcast %33 : f32 to vector<8x40xf32>
    %35 = arith.mulf %32, %34 : vector<8x40xf32>
    %36 = arith.addf %31, %35 : vector<8x40xf32>
    %37 = vector.extract_strided_slice %4 {offsets = [0, 2], sizes = [10, 40], strides = [1, 1]} : vector<10x42xf32> to vector<10x40xf32>
    %38 = vector.extract_strided_slice %37 {offsets = [0, 0], sizes = [8, 40], strides = [1, 1]} : vector<10x40xf32> to vector<8x40xf32>
    %c2 = arith.constant 2 : index
    %39 = memref.load %arg0[%c2] : memref<48xf32, #tpu.memory_space<smem>>
    %40 = vector.broadcast %39 : f32 to vector<8x40xf32>
    %41 = arith.mulf %38, %40 : vector<8x40xf32>
    %42 = arith.addf %36, %41 : vector<8x40xf32>
    %43 = vector.extract_strided_slice %37 {offsets = [1, 0], sizes = [8, 40], strides = [1, 1]} : vector<10x40xf32> to vector<8x40xf32>
    %c5 = arith.constant 5 : index
    %44 = memref.load %arg0[%c5] : memref<48xf32, #tpu.memory_space<smem>>
    %45 = vector.broadcast %44 : f32 to vector<8x40xf32>
    %46 = arith.mulf %43, %45 : vector<8x40xf32>
    %47 = arith.addf %42, %46 : vector<8x40xf32>
    %48 = vector.extract_strided_slice %37 {offsets = [2, 0], sizes = [8, 40], strides = [1, 1]} : vector<10x40xf32> to vector<8x40xf32>
    %c8 = arith.constant 8 : index
    %49 = memref.load %arg0[%c8] : memref<48xf32, #tpu.memory_space<smem>>
    %50 = vector.broadcast %49 : f32 to vector<8x40xf32>
    %51 = arith.mulf %48, %50 : vector<8x40xf32>
    %52 = arith.addf %47, %51 : vector<8x40xf32>
    %53 = vector.extract_strided_slice %1 {offsets = [1, 0, 0], sizes = [1, 10, 42], strides = [1, 1, 1]} : vector<5x10x42xf32> to vector<1x10x42xf32>
    %54 = vector.shape_cast %53 : vector<1x10x42xf32> to vector<10x42xf32>
    %55 = vector.extract_strided_slice %54 {offsets = [0, 0], sizes = [10, 40], strides = [1, 1]} : vector<10x42xf32> to vector<10x40xf32>
    %56 = vector.extract_strided_slice %55 {offsets = [0, 0], sizes = [8, 40], strides = [1, 1]} : vector<10x40xf32> to vector<8x40xf32>
    %c9 = arith.constant 9 : index
    %57 = memref.load %arg0[%c9] : memref<48xf32, #tpu.memory_space<smem>>
    %58 = vector.broadcast %57 : f32 to vector<8x40xf32>
    %59 = arith.mulf %56, %58 : vector<8x40xf32>
    %60 = arith.addf %52, %59 : vector<8x40xf32>
    %61 = vector.extract_strided_slice %55 {offsets = [1, 0], sizes = [8, 40], strides = [1, 1]} : vector<10x40xf32> to vector<8x40xf32>
    %c12 = arith.constant 12 : index
    %62 = memref.load %arg0[%c12] : memref<48xf32, #tpu.memory_space<smem>>
    %63 = vector.broadcast %62 : f32 to vector<8x40xf32>
    %64 = arith.mulf %61, %63 : vector<8x40xf32>
    %65 = arith.addf %60, %64 : vector<8x40xf32>
    %66 = vector.extract_strided_slice %55 {offsets = [2, 0], sizes = [8, 40], strides = [1, 1]} : vector<10x40xf32> to vector<8x40xf32>
    %c15 = arith.constant 15 : index
    %67 = memref.load %arg0[%c15] : memref<48xf32, #tpu.memory_space<smem>>
    %68 = vector.broadcast %67 : f32 to vector<8x40xf32>
    %69 = arith.mulf %66, %68 : vector<8x40xf32>
    %70 = arith.addf %65, %69 : vector<8x40xf32>
    %71 = vector.extract_strided_slice %54 {offsets = [0, 1], sizes = [10, 40], strides = [1, 1]} : vector<10x42xf32> to vector<10x40xf32>
    %72 = vector.extract_strided_slice %71 {offsets = [0, 0], sizes = [8, 40], strides = [1, 1]} : vector<10x40xf32> to vector<8x40xf32>
    %c10 = arith.constant 10 : index
    %73 = memref.load %arg0[%c10] : memref<48xf32, #tpu.memory_space<smem>>
    %74 = vector.broadcast %73 : f32 to vector<8x40xf32>
    %75 = arith.mulf %72, %74 : vector<8x40xf32>
    %76 = arith.addf %70, %75 : vector<8x40xf32>
    %77 = vector.extract_strided_slice %71 {offsets = [1, 0], sizes = [8, 40], strides = [1, 1]} : vector<10x40xf32> to vector<8x40xf32>
    %c13 = arith.constant 13 : index
    %78 = memref.load %arg0[%c13] : memref<48xf32, #tpu.memory_space<smem>>
    %79 = vector.broadcast %78 : f32 to vector<8x40xf32>
    %80 = arith.mulf %77, %79 : vector<8x40xf32>
    %81 = arith.addf %76, %80 : vector<8x40xf32>
    %82 = vector.extract_strided_slice %71 {offsets = [2, 0], sizes = [8, 40], strides = [1, 1]} : vector<10x40xf32> to vector<8x40xf32>
    %c16 = arith.constant 16 : index
    %83 = memref.load %arg0[%c16] : memref<48xf32, #tpu.memory_space<smem>>
    %84 = vector.broadcast %83 : f32 to vector<8x40xf32>
    %85 = arith.mulf %82, %84 : vector<8x40xf32>
    %86 = arith.addf %81, %85 : vector<8x40xf32>
    %87 = vector.extract_strided_slice %54 {offsets = [0, 2], sizes = [10, 40], strides = [1, 1]} : vector<10x42xf32> to vector<10x40xf32>
    %88 = vector.extract_strided_slice %87 {offsets = [0, 0], sizes = [8, 40], strides = [1, 1]} : vector<10x40xf32> to vector<8x40xf32>
    %c11 = arith.constant 11 : index
    %89 = memref.load %arg0[%c11] : memref<48xf32, #tpu.memory_space<smem>>
    %90 = vector.broadcast %89 : f32 to vector<8x40xf32>
    %91 = arith.mulf %88, %90 : vector<8x40xf32>
    %92 = arith.addf %86, %91 : vector<8x40xf32>
    %93 = vector.extract_strided_slice %87 {offsets = [1, 0], sizes = [8, 40], strides = [1, 1]} : vector<10x40xf32> to vector<8x40xf32>
    %c14 = arith.constant 14 : index
    %94 = memref.load %arg0[%c14] : memref<48xf32, #tpu.memory_space<smem>>
    %95 = vector.broadcast %94 : f32 to vector<8x40xf32>
    %96 = arith.mulf %93, %95 : vector<8x40xf32>
    %97 = arith.addf %92, %96 : vector<8x40xf32>
    %98 = vector.extract_strided_slice %87 {offsets = [2, 0], sizes = [8, 40], strides = [1, 1]} : vector<10x40xf32> to vector<8x40xf32>
    %c17 = arith.constant 17 : index
    %99 = memref.load %arg0[%c17] : memref<48xf32, #tpu.memory_space<smem>>
    %100 = vector.broadcast %99 : f32 to vector<8x40xf32>
    %101 = arith.mulf %98, %100 : vector<8x40xf32>
    %102 = arith.addf %97, %101 : vector<8x40xf32>
    %103 = vector.extract_strided_slice %1 {offsets = [2, 0, 0], sizes = [1, 10, 42], strides = [1, 1, 1]} : vector<5x10x42xf32> to vector<1x10x42xf32>
    %104 = vector.shape_cast %103 : vector<1x10x42xf32> to vector<10x42xf32>
    %105 = vector.extract_strided_slice %104 {offsets = [0, 0], sizes = [10, 40], strides = [1, 1]} : vector<10x42xf32> to vector<10x40xf32>
    %106 = vector.extract_strided_slice %105 {offsets = [0, 0], sizes = [8, 40], strides = [1, 1]} : vector<10x40xf32> to vector<8x40xf32>
    %c18 = arith.constant 18 : index
    %107 = memref.load %arg0[%c18] : memref<48xf32, #tpu.memory_space<smem>>
    %108 = vector.broadcast %107 : f32 to vector<8x40xf32>
    %109 = arith.mulf %106, %108 : vector<8x40xf32>
    %110 = arith.addf %102, %109 : vector<8x40xf32>
    %111 = vector.extract_strided_slice %105 {offsets = [1, 0], sizes = [8, 40], strides = [1, 1]} : vector<10x40xf32> to vector<8x40xf32>
    %c21 = arith.constant 21 : index
    %112 = memref.load %arg0[%c21] : memref<48xf32, #tpu.memory_space<smem>>
    %113 = vector.broadcast %112 : f32 to vector<8x40xf32>
    %114 = arith.mulf %111, %113 : vector<8x40xf32>
    %115 = arith.addf %110, %114 : vector<8x40xf32>
    %116 = vector.extract_strided_slice %105 {offsets = [2, 0], sizes = [8, 40], strides = [1, 1]} : vector<10x40xf32> to vector<8x40xf32>
    %c24 = arith.constant 24 : index
    %117 = memref.load %arg0[%c24] : memref<48xf32, #tpu.memory_space<smem>>
    %118 = vector.broadcast %117 : f32 to vector<8x40xf32>
    %119 = arith.mulf %116, %118 : vector<8x40xf32>
    %120 = arith.addf %115, %119 : vector<8x40xf32>
    %121 = vector.extract_strided_slice %104 {offsets = [0, 1], sizes = [10, 40], strides = [1, 1]} : vector<10x42xf32> to vector<10x40xf32>
    %122 = vector.extract_strided_slice %121 {offsets = [0, 0], sizes = [8, 40], strides = [1, 1]} : vector<10x40xf32> to vector<8x40xf32>
    %c19 = arith.constant 19 : index
    %123 = memref.load %arg0[%c19] : memref<48xf32, #tpu.memory_space<smem>>
    %124 = vector.broadcast %123 : f32 to vector<8x40xf32>
    %125 = arith.mulf %122, %124 : vector<8x40xf32>
    %126 = arith.addf %120, %125 : vector<8x40xf32>
    %127 = vector.extract_strided_slice %121 {offsets = [1, 0], sizes = [8, 40], strides = [1, 1]} : vector<10x40xf32> to vector<8x40xf32>
    %c22 = arith.constant 22 : index
    %128 = memref.load %arg0[%c22] : memref<48xf32, #tpu.memory_space<smem>>
    %129 = vector.broadcast %128 : f32 to vector<8x40xf32>
    %130 = arith.mulf %127, %129 : vector<8x40xf32>
    %131 = arith.addf %126, %130 : vector<8x40xf32>
    %132 = vector.extract_strided_slice %121 {offsets = [2, 0], sizes = [8, 40], strides = [1, 1]} : vector<10x40xf32> to vector<8x40xf32>
    %c25 = arith.constant 25 : index
    %133 = memref.load %arg0[%c25] : memref<48xf32, #tpu.memory_space<smem>>
    %134 = vector.broadcast %133 : f32 to vector<8x40xf32>
    %135 = arith.mulf %132, %134 : vector<8x40xf32>
    %136 = arith.addf %131, %135 : vector<8x40xf32>
    %137 = vector.extract_strided_slice %104 {offsets = [0, 2], sizes = [10, 40], strides = [1, 1]} : vector<10x42xf32> to vector<10x40xf32>
    %138 = vector.extract_strided_slice %137 {offsets = [0, 0], sizes = [8, 40], strides = [1, 1]} : vector<10x40xf32> to vector<8x40xf32>
    %c20 = arith.constant 20 : index
    %139 = memref.load %arg0[%c20] : memref<48xf32, #tpu.memory_space<smem>>
    %140 = vector.broadcast %139 : f32 to vector<8x40xf32>
    %141 = arith.mulf %138, %140 : vector<8x40xf32>
    %142 = arith.addf %136, %141 : vector<8x40xf32>
    %143 = vector.extract_strided_slice %137 {offsets = [1, 0], sizes = [8, 40], strides = [1, 1]} : vector<10x40xf32> to vector<8x40xf32>
    %c23 = arith.constant 23 : index
    %144 = memref.load %arg0[%c23] : memref<48xf32, #tpu.memory_space<smem>>
    %145 = vector.broadcast %144 : f32 to vector<8x40xf32>
    %146 = arith.mulf %143, %145 : vector<8x40xf32>
    %147 = arith.addf %142, %146 : vector<8x40xf32>
    %148 = vector.extract_strided_slice %137 {offsets = [2, 0], sizes = [8, 40], strides = [1, 1]} : vector<10x40xf32> to vector<8x40xf32>
    %c26 = arith.constant 26 : index
    %149 = memref.load %arg0[%c26] : memref<48xf32, #tpu.memory_space<smem>>
    %150 = vector.broadcast %149 : f32 to vector<8x40xf32>
    %151 = arith.mulf %148, %150 : vector<8x40xf32>
    %152 = arith.addf %147, %151 : vector<8x40xf32>
    %153 = vector.extract_strided_slice %1 {offsets = [3, 0, 0], sizes = [1, 10, 42], strides = [1, 1, 1]} : vector<5x10x42xf32> to vector<1x10x42xf32>
    %154 = vector.shape_cast %153 : vector<1x10x42xf32> to vector<10x42xf32>
    %155 = vector.extract_strided_slice %154 {offsets = [0, 0], sizes = [10, 40], strides = [1, 1]} : vector<10x42xf32> to vector<10x40xf32>
    %156 = vector.extract_strided_slice %155 {offsets = [0, 0], sizes = [8, 40], strides = [1, 1]} : vector<10x40xf32> to vector<8x40xf32>
    %c27 = arith.constant 27 : index
    %157 = memref.load %arg0[%c27] : memref<48xf32, #tpu.memory_space<smem>>
    %158 = vector.broadcast %157 : f32 to vector<8x40xf32>
    %159 = arith.mulf %156, %158 : vector<8x40xf32>
    %160 = arith.addf %152, %159 : vector<8x40xf32>
    %161 = vector.extract_strided_slice %155 {offsets = [1, 0], sizes = [8, 40], strides = [1, 1]} : vector<10x40xf32> to vector<8x40xf32>
    %c30 = arith.constant 30 : index
    %162 = memref.load %arg0[%c30] : memref<48xf32, #tpu.memory_space<smem>>
    %163 = vector.broadcast %162 : f32 to vector<8x40xf32>
    %164 = arith.mulf %161, %163 : vector<8x40xf32>
    %165 = arith.addf %160, %164 : vector<8x40xf32>
    %166 = vector.extract_strided_slice %155 {offsets = [2, 0], sizes = [8, 40], strides = [1, 1]} : vector<10x40xf32> to vector<8x40xf32>
    %c33 = arith.constant 33 : index
    %167 = memref.load %arg0[%c33] : memref<48xf32, #tpu.memory_space<smem>>
    %168 = vector.broadcast %167 : f32 to vector<8x40xf32>
    %169 = arith.mulf %166, %168 : vector<8x40xf32>
    %170 = arith.addf %165, %169 : vector<8x40xf32>
    %171 = vector.extract_strided_slice %154 {offsets = [0, 1], sizes = [10, 40], strides = [1, 1]} : vector<10x42xf32> to vector<10x40xf32>
    %172 = vector.extract_strided_slice %171 {offsets = [0, 0], sizes = [8, 40], strides = [1, 1]} : vector<10x40xf32> to vector<8x40xf32>
    %c28 = arith.constant 28 : index
    %173 = memref.load %arg0[%c28] : memref<48xf32, #tpu.memory_space<smem>>
    %174 = vector.broadcast %173 : f32 to vector<8x40xf32>
    %175 = arith.mulf %172, %174 : vector<8x40xf32>
    %176 = arith.addf %170, %175 : vector<8x40xf32>
    %177 = vector.extract_strided_slice %171 {offsets = [1, 0], sizes = [8, 40], strides = [1, 1]} : vector<10x40xf32> to vector<8x40xf32>
    %c31 = arith.constant 31 : index
    %178 = memref.load %arg0[%c31] : memref<48xf32, #tpu.memory_space<smem>>
    %179 = vector.broadcast %178 : f32 to vector<8x40xf32>
    %180 = arith.mulf %177, %179 : vector<8x40xf32>
    %181 = arith.addf %176, %180 : vector<8x40xf32>
    %182 = vector.extract_strided_slice %171 {offsets = [2, 0], sizes = [8, 40], strides = [1, 1]} : vector<10x40xf32> to vector<8x40xf32>
    %c34 = arith.constant 34 : index
    %183 = memref.load %arg0[%c34] : memref<48xf32, #tpu.memory_space<smem>>
    %184 = vector.broadcast %183 : f32 to vector<8x40xf32>
    %185 = arith.mulf %182, %184 : vector<8x40xf32>
    %186 = arith.addf %181, %185 : vector<8x40xf32>
    %187 = vector.extract_strided_slice %154 {offsets = [0, 2], sizes = [10, 40], strides = [1, 1]} : vector<10x42xf32> to vector<10x40xf32>
    %188 = vector.extract_strided_slice %187 {offsets = [0, 0], sizes = [8, 40], strides = [1, 1]} : vector<10x40xf32> to vector<8x40xf32>
    %c29 = arith.constant 29 : index
    %189 = memref.load %arg0[%c29] : memref<48xf32, #tpu.memory_space<smem>>
    %190 = vector.broadcast %189 : f32 to vector<8x40xf32>
    %191 = arith.mulf %188, %190 : vector<8x40xf32>
    %192 = arith.addf %186, %191 : vector<8x40xf32>
    %193 = vector.extract_strided_slice %187 {offsets = [1, 0], sizes = [8, 40], strides = [1, 1]} : vector<10x40xf32> to vector<8x40xf32>
    %c32 = arith.constant 32 : index
    %194 = memref.load %arg0[%c32] : memref<48xf32, #tpu.memory_space<smem>>
    %195 = vector.broadcast %194 : f32 to vector<8x40xf32>
    %196 = arith.mulf %193, %195 : vector<8x40xf32>
    %197 = arith.addf %192, %196 : vector<8x40xf32>
    %198 = vector.extract_strided_slice %187 {offsets = [2, 0], sizes = [8, 40], strides = [1, 1]} : vector<10x40xf32> to vector<8x40xf32>
    %c35 = arith.constant 35 : index
    %199 = memref.load %arg0[%c35] : memref<48xf32, #tpu.memory_space<smem>>
    %200 = vector.broadcast %199 : f32 to vector<8x40xf32>
    %201 = arith.mulf %198, %200 : vector<8x40xf32>
    %202 = arith.addf %197, %201 : vector<8x40xf32>
    %203 = vector.extract_strided_slice %1 {offsets = [4, 0, 0], sizes = [1, 10, 42], strides = [1, 1, 1]} : vector<5x10x42xf32> to vector<1x10x42xf32>
    %204 = vector.shape_cast %203 : vector<1x10x42xf32> to vector<10x42xf32>
    %205 = vector.extract_strided_slice %204 {offsets = [0, 0], sizes = [10, 40], strides = [1, 1]} : vector<10x42xf32> to vector<10x40xf32>
    %206 = vector.extract_strided_slice %205 {offsets = [0, 0], sizes = [8, 40], strides = [1, 1]} : vector<10x40xf32> to vector<8x40xf32>
    %c36 = arith.constant 36 : index
    %207 = memref.load %arg0[%c36] : memref<48xf32, #tpu.memory_space<smem>>
    %208 = vector.broadcast %207 : f32 to vector<8x40xf32>
    %209 = arith.mulf %206, %208 : vector<8x40xf32>
    %210 = arith.addf %202, %209 : vector<8x40xf32>
    %211 = vector.extract_strided_slice %205 {offsets = [1, 0], sizes = [8, 40], strides = [1, 1]} : vector<10x40xf32> to vector<8x40xf32>
    %c39 = arith.constant 39 : index
    %212 = memref.load %arg0[%c39] : memref<48xf32, #tpu.memory_space<smem>>
    %213 = vector.broadcast %212 : f32 to vector<8x40xf32>
    %214 = arith.mulf %211, %213 : vector<8x40xf32>
    %215 = arith.addf %210, %214 : vector<8x40xf32>
    %216 = vector.extract_strided_slice %205 {offsets = [2, 0], sizes = [8, 40], strides = [1, 1]} : vector<10x40xf32> to vector<8x40xf32>
    %c42 = arith.constant 42 : index
    %217 = memref.load %arg0[%c42] : memref<48xf32, #tpu.memory_space<smem>>
    %218 = vector.broadcast %217 : f32 to vector<8x40xf32>
    %219 = arith.mulf %216, %218 : vector<8x40xf32>
    %220 = arith.addf %215, %219 : vector<8x40xf32>
    %221 = vector.extract_strided_slice %204 {offsets = [0, 1], sizes = [10, 40], strides = [1, 1]} : vector<10x42xf32> to vector<10x40xf32>
    %222 = vector.extract_strided_slice %221 {offsets = [0, 0], sizes = [8, 40], strides = [1, 1]} : vector<10x40xf32> to vector<8x40xf32>
    %c37 = arith.constant 37 : index
    %223 = memref.load %arg0[%c37] : memref<48xf32, #tpu.memory_space<smem>>
    %224 = vector.broadcast %223 : f32 to vector<8x40xf32>
    %225 = arith.mulf %222, %224 : vector<8x40xf32>
    %226 = arith.addf %220, %225 : vector<8x40xf32>
    %227 = vector.extract_strided_slice %221 {offsets = [1, 0], sizes = [8, 40], strides = [1, 1]} : vector<10x40xf32> to vector<8x40xf32>
    %c40 = arith.constant 40 : index
    %228 = memref.load %arg0[%c40] : memref<48xf32, #tpu.memory_space<smem>>
    %229 = vector.broadcast %228 : f32 to vector<8x40xf32>
    %230 = arith.mulf %227, %229 : vector<8x40xf32>
    %231 = arith.addf %226, %230 : vector<8x40xf32>
    %232 = vector.extract_strided_slice %221 {offsets = [2, 0], sizes = [8, 40], strides = [1, 1]} : vector<10x40xf32> to vector<8x40xf32>
    %c43 = arith.constant 43 : index
    %233 = memref.load %arg0[%c43] : memref<48xf32, #tpu.memory_space<smem>>
    %234 = vector.broadcast %233 : f32 to vector<8x40xf32>
    %235 = arith.mulf %232, %234 : vector<8x40xf32>
    %236 = arith.addf %231, %235 : vector<8x40xf32>
    %237 = vector.extract_strided_slice %204 {offsets = [0, 2], sizes = [10, 40], strides = [1, 1]} : vector<10x42xf32> to vector<10x40xf32>
    %238 = vector.extract_strided_slice %237 {offsets = [0, 0], sizes = [8, 40], strides = [1, 1]} : vector<10x40xf32> to vector<8x40xf32>
    %c38 = arith.constant 38 : index
    %239 = memref.load %arg0[%c38] : memref<48xf32, #tpu.memory_space<smem>>
    %240 = vector.broadcast %239 : f32 to vector<8x40xf32>
    %241 = arith.mulf %238, %240 : vector<8x40xf32>
    %242 = arith.addf %236, %241 : vector<8x40xf32>
    %243 = vector.extract_strided_slice %237 {offsets = [1, 0], sizes = [8, 40], strides = [1, 1]} : vector<10x40xf32> to vector<8x40xf32>
    %c41 = arith.constant 41 : index
    %244 = memref.load %arg0[%c41] : memref<48xf32, #tpu.memory_space<smem>>
    %245 = vector.broadcast %244 : f32 to vector<8x40xf32>
    %246 = arith.mulf %243, %245 : vector<8x40xf32>
    %247 = arith.addf %242, %246 : vector<8x40xf32>
    %248 = vector.extract_strided_slice %237 {offsets = [2, 0], sizes = [8, 40], strides = [1, 1]} : vector<10x40xf32> to vector<8x40xf32>
    %c44 = arith.constant 44 : index
    %249 = memref.load %arg0[%c44] : memref<48xf32, #tpu.memory_space<smem>>
    %250 = vector.broadcast %249 : f32 to vector<8x40xf32>
    %251 = arith.mulf %248, %250 : vector<8x40xf32>
    %252 = arith.addf %247, %251 : vector<8x40xf32>
    %c45 = arith.constant 45 : index
    %253 = memref.load %arg0[%c45] : memref<48xf32, #tpu.memory_space<smem>>
    %254 = vector.broadcast %253 : f32 to vector<8x40xf32>
    %255 = arith.addf %252, %254 : vector<8x40xf32>
    %c1_4 = arith.constant 1 : index
    %c0_5 = arith.constant 0 : index
    %c0_6 = arith.constant 0 : index
    %c0_7 = arith.constant 0 : index
    %256 = vector.load %arg1[%c1_4, %c0_5, %c0_6, %c0_7] : memref<2x5x10x42xf32, #tpu.memory_space<vmem>>, vector<1x5x10x42xf32>
    %257 = vector.shape_cast %256 : vector<1x5x10x42xf32> to vector<5x10x42xf32>
    %cst_8 = arith.constant 0.000000e+00 : f32
    %258 = vector.broadcast %cst_8 : f32 to vector<8x40xf32>
    %259 = vector.extract_strided_slice %257 {offsets = [0, 0, 0], sizes = [1, 10, 42], strides = [1, 1, 1]} : vector<5x10x42xf32> to vector<1x10x42xf32>
    %260 = vector.shape_cast %259 : vector<1x10x42xf32> to vector<10x42xf32>
    %261 = vector.extract_strided_slice %260 {offsets = [0, 0], sizes = [10, 40], strides = [1, 1]} : vector<10x42xf32> to vector<10x40xf32>
    %262 = vector.extract_strided_slice %261 {offsets = [0, 0], sizes = [8, 40], strides = [1, 1]} : vector<10x40xf32> to vector<8x40xf32>
    %c0_9 = arith.constant 0 : index
    %263 = memref.load %arg0[%c0_9] : memref<48xf32, #tpu.memory_space<smem>>
    %264 = vector.broadcast %263 : f32 to vector<8x40xf32>
    %265 = arith.mulf %262, %264 : vector<8x40xf32>
    %266 = arith.addf %258, %265 : vector<8x40xf32>
    %267 = vector.extract_strided_slice %261 {offsets = [1, 0], sizes = [8, 40], strides = [1, 1]} : vector<10x40xf32> to vector<8x40xf32>
    %c3_10 = arith.constant 3 : index
    %268 = memref.load %arg0[%c3_10] : memref<48xf32, #tpu.memory_space<smem>>
    %269 = vector.broadcast %268 : f32 to vector<8x40xf32>
    %270 = arith.mulf %267, %269 : vector<8x40xf32>
    %271 = arith.addf %266, %270 : vector<8x40xf32>
    %272 = vector.extract_strided_slice %261 {offsets = [2, 0], sizes = [8, 40], strides = [1, 1]} : vector<10x40xf32> to vector<8x40xf32>
    %c6_11 = arith.constant 6 : index
    %273 = memref.load %arg0[%c6_11] : memref<48xf32, #tpu.memory_space<smem>>
    %274 = vector.broadcast %273 : f32 to vector<8x40xf32>
    %275 = arith.mulf %272, %274 : vector<8x40xf32>
    %276 = arith.addf %271, %275 : vector<8x40xf32>
    %277 = vector.extract_strided_slice %260 {offsets = [0, 1], sizes = [10, 40], strides = [1, 1]} : vector<10x42xf32> to vector<10x40xf32>
    %278 = vector.extract_strided_slice %277 {offsets = [0, 0], sizes = [8, 40], strides = [1, 1]} : vector<10x40xf32> to vector<8x40xf32>
    %c1_12 = arith.constant 1 : index
    %279 = memref.load %arg0[%c1_12] : memref<48xf32, #tpu.memory_space<smem>>
    %280 = vector.broadcast %279 : f32 to vector<8x40xf32>
    %281 = arith.mulf %278, %280 : vector<8x40xf32>
    %282 = arith.addf %276, %281 : vector<8x40xf32>
    %283 = vector.extract_strided_slice %277 {offsets = [1, 0], sizes = [8, 40], strides = [1, 1]} : vector<10x40xf32> to vector<8x40xf32>
    %c4_13 = arith.constant 4 : index
    %284 = memref.load %arg0[%c4_13] : memref<48xf32, #tpu.memory_space<smem>>
    %285 = vector.broadcast %284 : f32 to vector<8x40xf32>
    %286 = arith.mulf %283, %285 : vector<8x40xf32>
    %287 = arith.addf %282, %286 : vector<8x40xf32>
    %288 = vector.extract_strided_slice %277 {offsets = [2, 0], sizes = [8, 40], strides = [1, 1]} : vector<10x40xf32> to vector<8x40xf32>
    %c7_14 = arith.constant 7 : index
    %289 = memref.load %arg0[%c7_14] : memref<48xf32, #tpu.memory_space<smem>>
    %290 = vector.broadcast %289 : f32 to vector<8x40xf32>
    %291 = arith.mulf %288, %290 : vector<8x40xf32>
    %292 = arith.addf %287, %291 : vector<8x40xf32>
    %293 = vector.extract_strided_slice %260 {offsets = [0, 2], sizes = [10, 40], strides = [1, 1]} : vector<10x42xf32> to vector<10x40xf32>
    %294 = vector.extract_strided_slice %293 {offsets = [0, 0], sizes = [8, 40], strides = [1, 1]} : vector<10x40xf32> to vector<8x40xf32>
    %c2_15 = arith.constant 2 : index
    %295 = memref.load %arg0[%c2_15] : memref<48xf32, #tpu.memory_space<smem>>
    %296 = vector.broadcast %295 : f32 to vector<8x40xf32>
    %297 = arith.mulf %294, %296 : vector<8x40xf32>
    %298 = arith.addf %292, %297 : vector<8x40xf32>
    %299 = vector.extract_strided_slice %293 {offsets = [1, 0], sizes = [8, 40], strides = [1, 1]} : vector<10x40xf32> to vector<8x40xf32>
    %c5_16 = arith.constant 5 : index
    %300 = memref.load %arg0[%c5_16] : memref<48xf32, #tpu.memory_space<smem>>
    %301 = vector.broadcast %300 : f32 to vector<8x40xf32>
    %302 = arith.mulf %299, %301 : vector<8x40xf32>
    %303 = arith.addf %298, %302 : vector<8x40xf32>
    %304 = vector.extract_strided_slice %293 {offsets = [2, 0], sizes = [8, 40], strides = [1, 1]} : vector<10x40xf32> to vector<8x40xf32>
    %c8_17 = arith.constant 8 : index
    %305 = memref.load %arg0[%c8_17] : memref<48xf32, #tpu.memory_space<smem>>
    %306 = vector.broadcast %305 : f32 to vector<8x40xf32>
    %307 = arith.mulf %304, %306 : vector<8x40xf32>
    %308 = arith.addf %303, %307 : vector<8x40xf32>
    %309 = vector.extract_strided_slice %257 {offsets = [1, 0, 0], sizes = [1, 10, 42], strides = [1, 1, 1]} : vector<5x10x42xf32> to vector<1x10x42xf32>
    %310 = vector.shape_cast %309 : vector<1x10x42xf32> to vector<10x42xf32>
    %311 = vector.extract_strided_slice %310 {offsets = [0, 0], sizes = [10, 40], strides = [1, 1]} : vector<10x42xf32> to vector<10x40xf32>
    %312 = vector.extract_strided_slice %311 {offsets = [0, 0], sizes = [8, 40], strides = [1, 1]} : vector<10x40xf32> to vector<8x40xf32>
    %c9_18 = arith.constant 9 : index
    %313 = memref.load %arg0[%c9_18] : memref<48xf32, #tpu.memory_space<smem>>
    %314 = vector.broadcast %313 : f32 to vector<8x40xf32>
    %315 = arith.mulf %312, %314 : vector<8x40xf32>
    %316 = arith.addf %308, %315 : vector<8x40xf32>
    %317 = vector.extract_strided_slice %311 {offsets = [1, 0], sizes = [8, 40], strides = [1, 1]} : vector<10x40xf32> to vector<8x40xf32>
    %c12_19 = arith.constant 12 : index
    %318 = memref.load %arg0[%c12_19] : memref<48xf32, #tpu.memory_space<smem>>
    %319 = vector.broadcast %318 : f32 to vector<8x40xf32>
    %320 = arith.mulf %317, %319 : vector<8x40xf32>
    %321 = arith.addf %316, %320 : vector<8x40xf32>
    %322 = vector.extract_strided_slice %311 {offsets = [2, 0], sizes = [8, 40], strides = [1, 1]} : vector<10x40xf32> to vector<8x40xf32>
    %c15_20 = arith.constant 15 : index
    %323 = memref.load %arg0[%c15_20] : memref<48xf32, #tpu.memory_space<smem>>
    %324 = vector.broadcast %323 : f32 to vector<8x40xf32>
    %325 = arith.mulf %322, %324 : vector<8x40xf32>
    %326 = arith.addf %321, %325 : vector<8x40xf32>
    %327 = vector.extract_strided_slice %310 {offsets = [0, 1], sizes = [10, 40], strides = [1, 1]} : vector<10x42xf32> to vector<10x40xf32>
    %328 = vector.extract_strided_slice %327 {offsets = [0, 0], sizes = [8, 40], strides = [1, 1]} : vector<10x40xf32> to vector<8x40xf32>
    %c10_21 = arith.constant 10 : index
    %329 = memref.load %arg0[%c10_21] : memref<48xf32, #tpu.memory_space<smem>>
    %330 = vector.broadcast %329 : f32 to vector<8x40xf32>
    %331 = arith.mulf %328, %330 : vector<8x40xf32>
    %332 = arith.addf %326, %331 : vector<8x40xf32>
    %333 = vector.extract_strided_slice %327 {offsets = [1, 0], sizes = [8, 40], strides = [1, 1]} : vector<10x40xf32> to vector<8x40xf32>
    %c13_22 = arith.constant 13 : index
    %334 = memref.load %arg0[%c13_22] : memref<48xf32, #tpu.memory_space<smem>>
    %335 = vector.broadcast %334 : f32 to vector<8x40xf32>
    %336 = arith.mulf %333, %335 : vector<8x40xf32>
    %337 = arith.addf %332, %336 : vector<8x40xf32>
    %338 = vector.extract_strided_slice %327 {offsets = [2, 0], sizes = [8, 40], strides = [1, 1]} : vector<10x40xf32> to vector<8x40xf32>
    %c16_23 = arith.constant 16 : index
    %339 = memref.load %arg0[%c16_23] : memref<48xf32, #tpu.memory_space<smem>>
    %340 = vector.broadcast %339 : f32 to vector<8x40xf32>
    %341 = arith.mulf %338, %340 : vector<8x40xf32>
    %342 = arith.addf %337, %341 : vector<8x40xf32>
    %343 = vector.extract_strided_slice %310 {offsets = [0, 2], sizes = [10, 40], strides = [1, 1]} : vector<10x42xf32> to vector<10x40xf32>
    %344 = vector.extract_strided_slice %343 {offsets = [0, 0], sizes = [8, 40], strides = [1, 1]} : vector<10x40xf32> to vector<8x40xf32>
    %c11_24 = arith.constant 11 : index
    %345 = memref.load %arg0[%c11_24] : memref<48xf32, #tpu.memory_space<smem>>
    %346 = vector.broadcast %345 : f32 to vector<8x40xf32>
    %347 = arith.mulf %344, %346 : vector<8x40xf32>
    %348 = arith.addf %342, %347 : vector<8x40xf32>
    %349 = vector.extract_strided_slice %343 {offsets = [1, 0], sizes = [8, 40], strides = [1, 1]} : vector<10x40xf32> to vector<8x40xf32>
    %c14_25 = arith.constant 14 : index
    %350 = memref.load %arg0[%c14_25] : memref<48xf32, #tpu.memory_space<smem>>
    %351 = vector.broadcast %350 : f32 to vector<8x40xf32>
    %352 = arith.mulf %349, %351 : vector<8x40xf32>
    %353 = arith.addf %348, %352 : vector<8x40xf32>
    %354 = vector.extract_strided_slice %343 {offsets = [2, 0], sizes = [8, 40], strides = [1, 1]} : vector<10x40xf32> to vector<8x40xf32>
    %c17_26 = arith.constant 17 : index
    %355 = memref.load %arg0[%c17_26] : memref<48xf32, #tpu.memory_space<smem>>
    %356 = vector.broadcast %355 : f32 to vector<8x40xf32>
    %357 = arith.mulf %354, %356 : vector<8x40xf32>
    %358 = arith.addf %353, %357 : vector<8x40xf32>
    %359 = vector.extract_strided_slice %257 {offsets = [2, 0, 0], sizes = [1, 10, 42], strides = [1, 1, 1]} : vector<5x10x42xf32> to vector<1x10x42xf32>
    %360 = vector.shape_cast %359 : vector<1x10x42xf32> to vector<10x42xf32>
    %361 = vector.extract_strided_slice %360 {offsets = [0, 0], sizes = [10, 40], strides = [1, 1]} : vector<10x42xf32> to vector<10x40xf32>
    %362 = vector.extract_strided_slice %361 {offsets = [0, 0], sizes = [8, 40], strides = [1, 1]} : vector<10x40xf32> to vector<8x40xf32>
    %c18_27 = arith.constant 18 : index
    %363 = memref.load %arg0[%c18_27] : memref<48xf32, #tpu.memory_space<smem>>
    %364 = vector.broadcast %363 : f32 to vector<8x40xf32>
    %365 = arith.mulf %362, %364 : vector<8x40xf32>
    %366 = arith.addf %358, %365 : vector<8x40xf32>
    %367 = vector.extract_strided_slice %361 {offsets = [1, 0], sizes = [8, 40], strides = [1, 1]} : vector<10x40xf32> to vector<8x40xf32>
    %c21_28 = arith.constant 21 : index
    %368 = memref.load %arg0[%c21_28] : memref<48xf32, #tpu.memory_space<smem>>
    %369 = vector.broadcast %368 : f32 to vector<8x40xf32>
    %370 = arith.mulf %367, %369 : vector<8x40xf32>
    %371 = arith.addf %366, %370 : vector<8x40xf32>
    %372 = vector.extract_strided_slice %361 {offsets = [2, 0], sizes = [8, 40], strides = [1, 1]} : vector<10x40xf32> to vector<8x40xf32>
    %c24_29 = arith.constant 24 : index
    %373 = memref.load %arg0[%c24_29] : memref<48xf32, #tpu.memory_space<smem>>
    %374 = vector.broadcast %373 : f32 to vector<8x40xf32>
    %375 = arith.mulf %372, %374 : vector<8x40xf32>
    %376 = arith.addf %371, %375 : vector<8x40xf32>
    %377 = vector.extract_strided_slice %360 {offsets = [0, 1], sizes = [10, 40], strides = [1, 1]} : vector<10x42xf32> to vector<10x40xf32>
    %378 = vector.extract_strided_slice %377 {offsets = [0, 0], sizes = [8, 40], strides = [1, 1]} : vector<10x40xf32> to vector<8x40xf32>
    %c19_30 = arith.constant 19 : index
    %379 = memref.load %arg0[%c19_30] : memref<48xf32, #tpu.memory_space<smem>>
    %380 = vector.broadcast %379 : f32 to vector<8x40xf32>
    %381 = arith.mulf %378, %380 : vector<8x40xf32>
    %382 = arith.addf %376, %381 : vector<8x40xf32>
    %383 = vector.extract_strided_slice %377 {offsets = [1, 0], sizes = [8, 40], strides = [1, 1]} : vector<10x40xf32> to vector<8x40xf32>
    %c22_31 = arith.constant 22 : index
    %384 = memref.load %arg0[%c22_31] : memref<48xf32, #tpu.memory_space<smem>>
    %385 = vector.broadcast %384 : f32 to vector<8x40xf32>
    %386 = arith.mulf %383, %385 : vector<8x40xf32>
    %387 = arith.addf %382, %386 : vector<8x40xf32>
    %388 = vector.extract_strided_slice %377 {offsets = [2, 0], sizes = [8, 40], strides = [1, 1]} : vector<10x40xf32> to vector<8x40xf32>
    %c25_32 = arith.constant 25 : index
    %389 = memref.load %arg0[%c25_32] : memref<48xf32, #tpu.memory_space<smem>>
    %390 = vector.broadcast %389 : f32 to vector<8x40xf32>
    %391 = arith.mulf %388, %390 : vector<8x40xf32>
    %392 = arith.addf %387, %391 : vector<8x40xf32>
    %393 = vector.extract_strided_slice %360 {offsets = [0, 2], sizes = [10, 40], strides = [1, 1]} : vector<10x42xf32> to vector<10x40xf32>
    %394 = vector.extract_strided_slice %393 {offsets = [0, 0], sizes = [8, 40], strides = [1, 1]} : vector<10x40xf32> to vector<8x40xf32>
    %c20_33 = arith.constant 20 : index
    %395 = memref.load %arg0[%c20_33] : memref<48xf32, #tpu.memory_space<smem>>
    %396 = vector.broadcast %395 : f32 to vector<8x40xf32>
    %397 = arith.mulf %394, %396 : vector<8x40xf32>
    %398 = arith.addf %392, %397 : vector<8x40xf32>
    %399 = vector.extract_strided_slice %393 {offsets = [1, 0], sizes = [8, 40], strides = [1, 1]} : vector<10x40xf32> to vector<8x40xf32>
    %c23_34 = arith.constant 23 : index
    %400 = memref.load %arg0[%c23_34] : memref<48xf32, #tpu.memory_space<smem>>
    %401 = vector.broadcast %400 : f32 to vector<8x40xf32>
    %402 = arith.mulf %399, %401 : vector<8x40xf32>
    %403 = arith.addf %398, %402 : vector<8x40xf32>
    %404 = vector.extract_strided_slice %393 {offsets = [2, 0], sizes = [8, 40], strides = [1, 1]} : vector<10x40xf32> to vector<8x40xf32>
    %c26_35 = arith.constant 26 : index
    %405 = memref.load %arg0[%c26_35] : memref<48xf32, #tpu.memory_space<smem>>
    %406 = vector.broadcast %405 : f32 to vector<8x40xf32>
    %407 = arith.mulf %404, %406 : vector<8x40xf32>
    %408 = arith.addf %403, %407 : vector<8x40xf32>
    %409 = vector.extract_strided_slice %257 {offsets = [3, 0, 0], sizes = [1, 10, 42], strides = [1, 1, 1]} : vector<5x10x42xf32> to vector<1x10x42xf32>
    %410 = vector.shape_cast %409 : vector<1x10x42xf32> to vector<10x42xf32>
    %411 = vector.extract_strided_slice %410 {offsets = [0, 0], sizes = [10, 40], strides = [1, 1]} : vector<10x42xf32> to vector<10x40xf32>
    %412 = vector.extract_strided_slice %411 {offsets = [0, 0], sizes = [8, 40], strides = [1, 1]} : vector<10x40xf32> to vector<8x40xf32>
    %c27_36 = arith.constant 27 : index
    %413 = memref.load %arg0[%c27_36] : memref<48xf32, #tpu.memory_space<smem>>
    %414 = vector.broadcast %413 : f32 to vector<8x40xf32>
    %415 = arith.mulf %412, %414 : vector<8x40xf32>
    %416 = arith.addf %408, %415 : vector<8x40xf32>
    %417 = vector.extract_strided_slice %411 {offsets = [1, 0], sizes = [8, 40], strides = [1, 1]} : vector<10x40xf32> to vector<8x40xf32>
    %c30_37 = arith.constant 30 : index
    %418 = memref.load %arg0[%c30_37] : memref<48xf32, #tpu.memory_space<smem>>
    %419 = vector.broadcast %418 : f32 to vector<8x40xf32>
    %420 = arith.mulf %417, %419 : vector<8x40xf32>
    %421 = arith.addf %416, %420 : vector<8x40xf32>
    %422 = vector.extract_strided_slice %411 {offsets = [2, 0], sizes = [8, 40], strides = [1, 1]} : vector<10x40xf32> to vector<8x40xf32>
    %c33_38 = arith.constant 33 : index
    %423 = memref.load %arg0[%c33_38] : memref<48xf32, #tpu.memory_space<smem>>
    %424 = vector.broadcast %423 : f32 to vector<8x40xf32>
    %425 = arith.mulf %422, %424 : vector<8x40xf32>
    %426 = arith.addf %421, %425 : vector<8x40xf32>
    %427 = vector.extract_strided_slice %410 {offsets = [0, 1], sizes = [10, 40], strides = [1, 1]} : vector<10x42xf32> to vector<10x40xf32>
    %428 = vector.extract_strided_slice %427 {offsets = [0, 0], sizes = [8, 40], strides = [1, 1]} : vector<10x40xf32> to vector<8x40xf32>
    %c28_39 = arith.constant 28 : index
    %429 = memref.load %arg0[%c28_39] : memref<48xf32, #tpu.memory_space<smem>>
    %430 = vector.broadcast %429 : f32 to vector<8x40xf32>
    %431 = arith.mulf %428, %430 : vector<8x40xf32>
    %432 = arith.addf %426, %431 : vector<8x40xf32>
    %433 = vector.extract_strided_slice %427 {offsets = [1, 0], sizes = [8, 40], strides = [1, 1]} : vector<10x40xf32> to vector<8x40xf32>
    %c31_40 = arith.constant 31 : index
    %434 = memref.load %arg0[%c31_40] : memref<48xf32, #tpu.memory_space<smem>>
    %435 = vector.broadcast %434 : f32 to vector<8x40xf32>
    %436 = arith.mulf %433, %435 : vector<8x40xf32>
    %437 = arith.addf %432, %436 : vector<8x40xf32>
    %438 = vector.extract_strided_slice %427 {offsets = [2, 0], sizes = [8, 40], strides = [1, 1]} : vector<10x40xf32> to vector<8x40xf32>
    %c34_41 = arith.constant 34 : index
    %439 = memref.load %arg0[%c34_41] : memref<48xf32, #tpu.memory_space<smem>>
    %440 = vector.broadcast %439 : f32 to vector<8x40xf32>
    %441 = arith.mulf %438, %440 : vector<8x40xf32>
    %442 = arith.addf %437, %441 : vector<8x40xf32>
    %443 = vector.extract_strided_slice %410 {offsets = [0, 2], sizes = [10, 40], strides = [1, 1]} : vector<10x42xf32> to vector<10x40xf32>
    %444 = vector.extract_strided_slice %443 {offsets = [0, 0], sizes = [8, 40], strides = [1, 1]} : vector<10x40xf32> to vector<8x40xf32>
    %c29_42 = arith.constant 29 : index
    %445 = memref.load %arg0[%c29_42] : memref<48xf32, #tpu.memory_space<smem>>
    %446 = vector.broadcast %445 : f32 to vector<8x40xf32>
    %447 = arith.mulf %444, %446 : vector<8x40xf32>
    %448 = arith.addf %442, %447 : vector<8x40xf32>
    %449 = vector.extract_strided_slice %443 {offsets = [1, 0], sizes = [8, 40], strides = [1, 1]} : vector<10x40xf32> to vector<8x40xf32>
    %c32_43 = arith.constant 32 : index
    %450 = memref.load %arg0[%c32_43] : memref<48xf32, #tpu.memory_space<smem>>
    %451 = vector.broadcast %450 : f32 to vector<8x40xf32>
    %452 = arith.mulf %449, %451 : vector<8x40xf32>
    %453 = arith.addf %448, %452 : vector<8x40xf32>
    %454 = vector.extract_strided_slice %443 {offsets = [2, 0], sizes = [8, 40], strides = [1, 1]} : vector<10x40xf32> to vector<8x40xf32>
    %c35_44 = arith.constant 35 : index
    %455 = memref.load %arg0[%c35_44] : memref<48xf32, #tpu.memory_space<smem>>
    %456 = vector.broadcast %455 : f32 to vector<8x40xf32>
    %457 = arith.mulf %454, %456 : vector<8x40xf32>
    %458 = arith.addf %453, %457 : vector<8x40xf32>
    %459 = vector.extract_strided_slice %257 {offsets = [4, 0, 0], sizes = [1, 10, 42], strides = [1, 1, 1]} : vector<5x10x42xf32> to vector<1x10x42xf32>
    %460 = vector.shape_cast %459 : vector<1x10x42xf32> to vector<10x42xf32>
    %461 = vector.extract_strided_slice %460 {offsets = [0, 0], sizes = [10, 40], strides = [1, 1]} : vector<10x42xf32> to vector<10x40xf32>
    %462 = vector.extract_strided_slice %461 {offsets = [0, 0], sizes = [8, 40], strides = [1, 1]} : vector<10x40xf32> to vector<8x40xf32>
    %c36_45 = arith.constant 36 : index
    %463 = memref.load %arg0[%c36_45] : memref<48xf32, #tpu.memory_space<smem>>
    %464 = vector.broadcast %463 : f32 to vector<8x40xf32>
    %465 = arith.mulf %462, %464 : vector<8x40xf32>
    %466 = arith.addf %458, %465 : vector<8x40xf32>
    %467 = vector.extract_strided_slice %461 {offsets = [1, 0], sizes = [8, 40], strides = [1, 1]} : vector<10x40xf32> to vector<8x40xf32>
    %c39_46 = arith.constant 39 : index
    %468 = memref.load %arg0[%c39_46] : memref<48xf32, #tpu.memory_space<smem>>
    %469 = vector.broadcast %468 : f32 to vector<8x40xf32>
    %470 = arith.mulf %467, %469 : vector<8x40xf32>
    %471 = arith.addf %466, %470 : vector<8x40xf32>
    %472 = vector.extract_strided_slice %461 {offsets = [2, 0], sizes = [8, 40], strides = [1, 1]} : vector<10x40xf32> to vector<8x40xf32>
    %c42_47 = arith.constant 42 : index
    %473 = memref.load %arg0[%c42_47] : memref<48xf32, #tpu.memory_space<smem>>
    %474 = vector.broadcast %473 : f32 to vector<8x40xf32>
    %475 = arith.mulf %472, %474 : vector<8x40xf32>
    %476 = arith.addf %471, %475 : vector<8x40xf32>
    %477 = vector.extract_strided_slice %460 {offsets = [0, 1], sizes = [10, 40], strides = [1, 1]} : vector<10x42xf32> to vector<10x40xf32>
    %478 = vector.extract_strided_slice %477 {offsets = [0, 0], sizes = [8, 40], strides = [1, 1]} : vector<10x40xf32> to vector<8x40xf32>
    %c37_48 = arith.constant 37 : index
    %479 = memref.load %arg0[%c37_48] : memref<48xf32, #tpu.memory_space<smem>>
    %480 = vector.broadcast %479 : f32 to vector<8x40xf32>
    %481 = arith.mulf %478, %480 : vector<8x40xf32>
    %482 = arith.addf %476, %481 : vector<8x40xf32>
    %483 = vector.extract_strided_slice %477 {offsets = [1, 0], sizes = [8, 40], strides = [1, 1]} : vector<10x40xf32> to vector<8x40xf32>
    %c40_49 = arith.constant 40 : index
    %484 = memref.load %arg0[%c40_49] : memref<48xf32, #tpu.memory_space<smem>>
    %485 = vector.broadcast %484 : f32 to vector<8x40xf32>
    %486 = arith.mulf %483, %485 : vector<8x40xf32>
    %487 = arith.addf %482, %486 : vector<8x40xf32>
    %488 = vector.extract_strided_slice %477 {offsets = [2, 0], sizes = [8, 40], strides = [1, 1]} : vector<10x40xf32> to vector<8x40xf32>
    %c43_50 = arith.constant 43 : index
    %489 = memref.load %arg0[%c43_50] : memref<48xf32, #tpu.memory_space<smem>>
    %490 = vector.broadcast %489 : f32 to vector<8x40xf32>
    %491 = arith.mulf %488, %490 : vector<8x40xf32>
    %492 = arith.addf %487, %491 : vector<8x40xf32>
    %493 = vector.extract_strided_slice %460 {offsets = [0, 2], sizes = [10, 40], strides = [1, 1]} : vector<10x42xf32> to vector<10x40xf32>
    %494 = vector.extract_strided_slice %493 {offsets = [0, 0], sizes = [8, 40], strides = [1, 1]} : vector<10x40xf32> to vector<8x40xf32>
    %c38_51 = arith.constant 38 : index
    %495 = memref.load %arg0[%c38_51] : memref<48xf32, #tpu.memory_space<smem>>
    %496 = vector.broadcast %495 : f32 to vector<8x40xf32>
    %497 = arith.mulf %494, %496 : vector<8x40xf32>
    %498 = arith.addf %492, %497 : vector<8x40xf32>
    %499 = vector.extract_strided_slice %493 {offsets = [1, 0], sizes = [8, 40], strides = [1, 1]} : vector<10x40xf32> to vector<8x40xf32>
    %c41_52 = arith.constant 41 : index
    %500 = memref.load %arg0[%c41_52] : memref<48xf32, #tpu.memory_space<smem>>
    %501 = vector.broadcast %500 : f32 to vector<8x40xf32>
    %502 = arith.mulf %499, %501 : vector<8x40xf32>
    %503 = arith.addf %498, %502 : vector<8x40xf32>
    %504 = vector.extract_strided_slice %493 {offsets = [2, 0], sizes = [8, 40], strides = [1, 1]} : vector<10x40xf32> to vector<8x40xf32>
    %c44_53 = arith.constant 44 : index
    %505 = memref.load %arg0[%c44_53] : memref<48xf32, #tpu.memory_space<smem>>
    %506 = vector.broadcast %505 : f32 to vector<8x40xf32>
    %507 = arith.mulf %504, %506 : vector<8x40xf32>
    %508 = arith.addf %503, %507 : vector<8x40xf32>
    %c45_54 = arith.constant 45 : index
    %509 = memref.load %arg0[%c45_54] : memref<48xf32, #tpu.memory_space<smem>>
    %510 = vector.broadcast %509 : f32 to vector<8x40xf32>
    %511 = arith.addf %508, %510 : vector<8x40xf32>
    %512 = vector.shape_cast %255 : vector<8x40xf32> to vector<1x8x40xf32>
    %cst_55 = arith.constant dense<0.000000e+00> : vector<1xf32>
    %513 = vector.multi_reduction <add>, %512, %cst_55 [1, 2] : vector<1x8x40xf32> to vector<1xf32>
    %514 = vector.shape_cast %513 : vector<1xf32> to vector<1x1x1xf32>
    %515 = vector.extract %514[0, 0, 0] : f32 from vector<1x1x1xf32>
    %cst_56 = arith.constant 0.000000e+00 : f32
    %516 = arith.addf %cst_56, %515 : f32
    %517 = vector.shape_cast %511 : vector<8x40xf32> to vector<1x8x40xf32>
    %cst_57 = arith.constant dense<0.000000e+00> : vector<1xf32>
    %518 = vector.multi_reduction <add>, %517, %cst_57 [1, 2] : vector<1x8x40xf32> to vector<1xf32>
    %519 = vector.shape_cast %518 : vector<1xf32> to vector<1x1x1xf32>
    %520 = vector.extract %519[0, 0, 0] : f32 from vector<1x1x1xf32>
    %521 = arith.addf %516, %520 : f32
    %cst_58 = arith.constant 6.400000e+02 : f32
    %522 = arith.divf %521, %cst_58 : f32
    %523 = vector.broadcast %522 : f32 to vector<8x40xf32>
    %524 = arith.subf %255, %523 : vector<8x40xf32>
    %525 = arith.mulf %524, %524 : vector<8x40xf32>
    %526 = vector.shape_cast %525 : vector<8x40xf32> to vector<1x8x40xf32>
    %cst_59 = arith.constant dense<0.000000e+00> : vector<1xf32>
    %527 = vector.multi_reduction <add>, %526, %cst_59 [1, 2] : vector<1x8x40xf32> to vector<1xf32>
    %528 = vector.shape_cast %527 : vector<1xf32> to vector<1x1x1xf32>
    %529 = vector.extract %528[0, 0, 0] : f32 from vector<1x1x1xf32>
    %cst_60 = arith.constant 0.000000e+00 : f32
    %530 = arith.addf %cst_60, %529 : f32
    %531 = vector.broadcast %522 : f32 to vector<8x40xf32>
    %532 = arith.subf %511, %531 : vector<8x40xf32>
    %533 = arith.mulf %532, %532 : vector<8x40xf32>
    %534 = vector.shape_cast %533 : vector<8x40xf32> to vector<1x8x40xf32>
    %cst_61 = arith.constant dense<0.000000e+00> : vector<1xf32>
    %535 = vector.multi_reduction <add>, %534, %cst_61 [1, 2] : vector<1x8x40xf32> to vector<1xf32>
    %536 = vector.shape_cast %535 : vector<1xf32> to vector<1x1x1xf32>
    %537 = vector.extract %536[0, 0, 0] : f32 from vector<1x1x1xf32>
    %538 = arith.addf %530, %537 : f32
    %cst_62 = arith.constant 6.400000e+02 : f32
    %539 = arith.divf %538, %cst_62 : f32
    %cst_63 = arith.constant 9.99999974E-6 : f32
    %540 = arith.addf %539, %cst_63 : f32
    %541 = math.rsqrt %540 : f32
    %c46 = arith.constant 46 : index
    %542 = memref.load %arg0[%c46] : memref<48xf32, #tpu.memory_space<smem>>
    %543 = vector.broadcast %522 : f32 to vector<8x40xf32>
    %544 = arith.subf %255, %543 : vector<8x40xf32>
    %545 = vector.broadcast %541 : f32 to vector<8x40xf32>
    %546 = arith.mulf %544, %545 : vector<8x40xf32>
    %547 = vector.broadcast %542 : f32 to vector<8x40xf32>
    %548 = arith.mulf %547, %546 : vector<8x40xf32>
    %c47 = arith.constant 47 : index
    %549 = memref.load %arg0[%c47] : memref<48xf32, #tpu.memory_space<smem>>
    %550 = vector.broadcast %549 : f32 to vector<8x40xf32>
    %551 = arith.addf %548, %550 : vector<8x40xf32>
    %cst_64 = arith.constant 0.000000e+00 : f32
    %552 = vector.broadcast %cst_64 : f32 to vector<8x40xf32>
    %553 = arith.maximumf %551, %552 : vector<8x40xf32>
    %c46_65 = arith.constant 46 : index
    %554 = memref.load %arg0[%c46_65] : memref<48xf32, #tpu.memory_space<smem>>
    %555 = vector.broadcast %522 : f32 to vector<8x40xf32>
    %556 = arith.subf %511, %555 : vector<8x40xf32>
    %557 = vector.broadcast %541 : f32 to vector<8x40xf32>
    %558 = arith.mulf %556, %557 : vector<8x40xf32>
    %559 = vector.broadcast %554 : f32 to vector<8x40xf32>
    %560 = arith.mulf %559, %558 : vector<8x40xf32>
    %c47_66 = arith.constant 47 : index
    %561 = memref.load %arg0[%c47_66] : memref<48xf32, #tpu.memory_space<smem>>
    %562 = vector.broadcast %561 : f32 to vector<8x40xf32>
    %563 = arith.addf %560, %562 : vector<8x40xf32>
    %cst_67 = arith.constant 0.000000e+00 : f32
    %564 = vector.broadcast %cst_67 : f32 to vector<8x40xf32>
    %565 = arith.maximumf %563, %564 : vector<8x40xf32>
    %c0_68 = arith.constant 0 : index
    %c0_69 = arith.constant 0 : index
    %c0_70 = arith.constant 0 : index
    %566 = vector.load %arg2[%c0_68, %c0_69, %c0_70] : memref<8x2x1xf32, #tpu.memory_space<vmem>>, vector<8x2x1xf32>
    %567 = tpu.concatenate %553, %565 in 0 : vector<8x40xf32>, vector<8x40xf32> -> vector<16x40xf32>
    %c0_71 = arith.constant 0 : index
    %c0_72 = arith.constant 0 : index
    %568 = vector.load %arg3[%c0_71, %c0_72] : memref<40x256xf32, #tpu.memory_space<vmem>>, vector<40x256xf32>
    %c0_73 = arith.constant 0 : index
    %c0_74 = arith.constant 0 : index
    %569 = vector.load %arg4[%c0_73, %c0_74] : memref<1x256xf32, #tpu.memory_space<vmem>>, vector<1x256xf32>
    %c0_75 = arith.constant 0 : index
    %c0_76 = arith.constant 0 : index
    %570 = vector.load %arg5[%c0_75, %c0_76] : memref<64x256xf32, #tpu.memory_space<vmem>>, vector<64x256xf32>
    %cst_77 = arith.constant dense<0.000000e+00> : vector<16x256xf32>
    %571 = tpu.matmul %567, %568, %cst_77 {dimension_numbers = #tpu.dot_dimension_numbers<[1], [0], [0], [1], [0, 0, 1, 1], [], []>} : vector<16x40xf32>, vector<40x256xf32>, vector<16x256xf32> -> vector<16x256xf32>
    %572 = vector.broadcast %569 : vector<1x256xf32> to vector<16x256xf32>
    %573 = arith.addf %571, %572 : vector<16x256xf32>
    %cst_78 = arith.constant 0.000000e+00 : f32
    %574 = vector.broadcast %cst_78 : f32 to vector<2x32xf32>
    %575 = tpu.concatenate %574, %574 in 1 : vector<2x32xf32>, vector<2x32xf32> -> vector<2x64xf32>
    %cst_79 = arith.constant dense<0.000000e+00> : vector<2x256xf32>
    %576 = tpu.matmul %575, %570, %cst_79 {dimension_numbers = #tpu.dot_dimension_numbers<[1], [0], [0], [1], [0, 0, 1, 1], [], []>} : vector<2x64xf32>, vector<64x256xf32>, vector<2x256xf32> -> vector<2x256xf32>
    %577 = vector.extract_strided_slice %573 {offsets = [0, 0], sizes = [1, 256], strides = [1, 1]} : vector<16x256xf32> to vector<1x256xf32>
    %578 = vector.extract_strided_slice %573 {offsets = [8, 0], sizes = [1, 256], strides = [1, 1]} : vector<16x256xf32> to vector<1x256xf32>
    %579 = tpu.concatenate %577, %578 in 0 : vector<1x256xf32>, vector<1x256xf32> -> vector<2x256xf32>
    %580 = vector.extract_strided_slice %579 {offsets = [0, 0], sizes = [2, 128], strides = [1, 1]} : vector<2x256xf32> to vector<2x128xf32>
    %581 = vector.extract_strided_slice %576 {offsets = [0, 0], sizes = [2, 128], strides = [1, 1]} : vector<2x256xf32> to vector<2x128xf32>
    %582 = arith.addf %580, %581 : vector<2x128xf32>
    %583 = vector.extract_strided_slice %573 {offsets = [7, 0], sizes = [1, 256], strides = [1, 1]} : vector<16x256xf32> to vector<1x256xf32>
    %584 = vector.extract_strided_slice %573 {offsets = [15, 0], sizes = [1, 256], strides = [1, 1]} : vector<16x256xf32> to vector<1x256xf32>
    %585 = tpu.concatenate %583, %584 in 0 : vector<1x256xf32>, vector<1x256xf32> -> vector<2x256xf32>
    %586 = vector.extract_strided_slice %585 {offsets = [0, 128], sizes = [2, 128], strides = [1, 1]} : vector<2x256xf32> to vector<2x128xf32>
    %587 = vector.extract_strided_slice %576 {offsets = [0, 128], sizes = [2, 128], strides = [1, 1]} : vector<2x256xf32> to vector<2x128xf32>
    %588 = arith.addf %586, %587 : vector<2x128xf32>
    %589 = vector.extract_strided_slice %582 {offsets = [0, 0], sizes = [2, 32], strides = [1, 1]} : vector<2x128xf32> to vector<2x32xf32>
    %590 = arith.negf %589 : vector<2x32xf32>
    %591 = math.exp %590 : vector<2x32xf32>
    %cst_80 = arith.constant 1.000000e+00 : f32
    %592 = vector.broadcast %cst_80 : f32 to vector<2x32xf32>
    %593 = arith.addf %592, %591 : vector<2x32xf32>
    %594 = arith.divf %592, %593 : vector<2x32xf32>
    %595 = vector.extract_strided_slice %582 {offsets = [0, 32], sizes = [2, 32], strides = [1, 1]} : vector<2x128xf32> to vector<2x32xf32>
    %596 = arith.negf %595 : vector<2x32xf32>
    %597 = math.exp %596 : vector<2x32xf32>
    %cst_81 = arith.constant 1.000000e+00 : f32
    %598 = vector.broadcast %cst_81 : f32 to vector<2x32xf32>
    %599 = arith.addf %598, %597 : vector<2x32xf32>
    %600 = arith.divf %598, %599 : vector<2x32xf32>
    %601 = vector.extract_strided_slice %582 {offsets = [0, 64], sizes = [2, 32], strides = [1, 1]} : vector<2x128xf32> to vector<2x32xf32>
    %602 = math.tanh %601 : vector<2x32xf32>
    %603 = vector.extract_strided_slice %582 {offsets = [0, 96], sizes = [2, 32], strides = [1, 1]} : vector<2x128xf32> to vector<2x32xf32>
    %604 = arith.negf %603 : vector<2x32xf32>
    %605 = math.exp %604 : vector<2x32xf32>
    %cst_82 = arith.constant 1.000000e+00 : f32
    %606 = vector.broadcast %cst_82 : f32 to vector<2x32xf32>
    %607 = arith.addf %606, %605 : vector<2x32xf32>
    %608 = arith.divf %606, %607 : vector<2x32xf32>
    %609 = arith.mulf %600, %574 : vector<2x32xf32>
    %610 = arith.mulf %594, %602 : vector<2x32xf32>
    %611 = arith.addf %609, %610 : vector<2x32xf32>
    %612 = math.tanh %611 : vector<2x32xf32>
    %613 = arith.mulf %608, %612 : vector<2x32xf32>
    %614 = vector.extract_strided_slice %588 {offsets = [0, 0], sizes = [2, 32], strides = [1, 1]} : vector<2x128xf32> to vector<2x32xf32>
    %615 = arith.negf %614 : vector<2x32xf32>
    %616 = math.exp %615 : vector<2x32xf32>
    %cst_83 = arith.constant 1.000000e+00 : f32
    %617 = vector.broadcast %cst_83 : f32 to vector<2x32xf32>
    %618 = arith.addf %617, %616 : vector<2x32xf32>
    %619 = arith.divf %617, %618 : vector<2x32xf32>
    %620 = vector.extract_strided_slice %588 {offsets = [0, 32], sizes = [2, 32], strides = [1, 1]} : vector<2x128xf32> to vector<2x32xf32>
    %621 = arith.negf %620 : vector<2x32xf32>
    %622 = math.exp %621 : vector<2x32xf32>
    %cst_84 = arith.constant 1.000000e+00 : f32
    %623 = vector.broadcast %cst_84 : f32 to vector<2x32xf32>
    %624 = arith.addf %623, %622 : vector<2x32xf32>
    %625 = arith.divf %623, %624 : vector<2x32xf32>
    %626 = vector.extract_strided_slice %588 {offsets = [0, 64], sizes = [2, 32], strides = [1, 1]} : vector<2x128xf32> to vector<2x32xf32>
    %627 = math.tanh %626 : vector<2x32xf32>
    %628 = vector.extract_strided_slice %588 {offsets = [0, 96], sizes = [2, 32], strides = [1, 1]} : vector<2x128xf32> to vector<2x32xf32>
    %629 = arith.negf %628 : vector<2x32xf32>
    %630 = math.exp %629 : vector<2x32xf32>
    %cst_85 = arith.constant 1.000000e+00 : f32
    %631 = vector.broadcast %cst_85 : f32 to vector<2x32xf32>
    %632 = arith.addf %631, %630 : vector<2x32xf32>
    %633 = arith.divf %631, %632 : vector<2x32xf32>
    %634 = arith.mulf %625, %574 : vector<2x32xf32>
    %635 = arith.mulf %619, %627 : vector<2x32xf32>
    %636 = arith.addf %634, %635 : vector<2x32xf32>
    %637 = math.tanh %636 : vector<2x32xf32>
    %638 = arith.mulf %633, %637 : vector<2x32xf32>
    %639 = vector.extract_strided_slice %566 {offsets = [0, 0, 0], sizes = [1, 2, 1], strides = [1, 1, 1]} : vector<8x2x1xf32> to vector<1x2x1xf32>
    %640 = vector.shape_cast %639 : vector<1x2x1xf32> to vector<2x1xf32>
    %641 = vector.extract_strided_slice %566 {offsets = [7, 0, 0], sizes = [1, 2, 1], strides = [1, 1, 1]} : vector<8x2x1xf32> to vector<1x2x1xf32>
    %642 = vector.shape_cast %641 : vector<1x2x1xf32> to vector<2x1xf32>
    %643 = vector.broadcast %640 : vector<2x1xf32> to vector<2x32xf32>
    %644 = arith.mulf %643, %613 : vector<2x32xf32>
    %cst_86 = arith.constant 1.000000e+00 : f32
    %645 = vector.broadcast %cst_86 : f32 to vector<2x1xf32>
    %646 = arith.subf %645, %640 : vector<2x1xf32>
    %647 = vector.broadcast %646 : vector<2x1xf32> to vector<2x32xf32>
    %648 = arith.mulf %647, %574 : vector<2x32xf32>
    %649 = arith.addf %644, %648 : vector<2x32xf32>
    %650 = vector.broadcast %640 : vector<2x1xf32> to vector<2x32xf32>
    %651 = arith.mulf %650, %611 : vector<2x32xf32>
    %cst_87 = arith.constant 1.000000e+00 : f32
    %652 = vector.broadcast %cst_87 : f32 to vector<2x1xf32>
    %653 = arith.subf %652, %640 : vector<2x1xf32>
    %654 = vector.broadcast %653 : vector<2x1xf32> to vector<2x32xf32>
    %655 = arith.mulf %654, %574 : vector<2x32xf32>
    %656 = arith.addf %651, %655 : vector<2x32xf32>
    %657 = vector.broadcast %642 : vector<2x1xf32> to vector<2x32xf32>
    %658 = arith.mulf %657, %638 : vector<2x32xf32>
    %cst_88 = arith.constant 1.000000e+00 : f32
    %659 = vector.broadcast %cst_88 : f32 to vector<2x1xf32>
    %660 = arith.subf %659, %642 : vector<2x1xf32>
    %661 = vector.broadcast %660 : vector<2x1xf32> to vector<2x32xf32>
    %662 = arith.mulf %661, %574 : vector<2x32xf32>
    %663 = arith.addf %658, %662 : vector<2x32xf32>
    %664 = vector.broadcast %642 : vector<2x1xf32> to vector<2x32xf32>
    %665 = arith.mulf %664, %636 : vector<2x32xf32>
    %cst_89 = arith.constant 1.000000e+00 : f32
    %666 = vector.broadcast %cst_89 : f32 to vector<2x1xf32>
    %667 = arith.subf %666, %642 : vector<2x1xf32>
    %668 = vector.broadcast %667 : vector<2x1xf32> to vector<2x32xf32>
    %669 = arith.mulf %668, %574 : vector<2x32xf32>
    %670 = arith.addf %665, %669 : vector<2x32xf32>
    %671 = vector.broadcast %640 : vector<2x1xf32> to vector<2x32xf32>
    %672 = arith.mulf %671, %613 : vector<2x32xf32>
    %673 = vector.broadcast %642 : vector<2x1xf32> to vector<2x32xf32>
    %674 = arith.mulf %673, %638 : vector<2x32xf32>
    %675 = tpu.concatenate %649, %663 in 1 : vector<2x32xf32>, vector<2x32xf32> -> vector<2x64xf32>
    %cst_90 = arith.constant dense<0.000000e+00> : vector<2x256xf32>
    %676 = tpu.matmul %675, %570, %cst_90 {dimension_numbers = #tpu.dot_dimension_numbers<[1], [0], [0], [1], [0, 0, 1, 1], [], []>} : vector<2x64xf32>, vector<64x256xf32>, vector<2x256xf32> -> vector<2x256xf32>
    %677 = vector.extract_strided_slice %573 {offsets = [1, 0], sizes = [1, 256], strides = [1, 1]} : vector<16x256xf32> to vector<1x256xf32>
    %678 = vector.extract_strided_slice %573 {offsets = [9, 0], sizes = [1, 256], strides = [1, 1]} : vector<16x256xf32> to vector<1x256xf32>
    %679 = tpu.concatenate %677, %678 in 0 : vector<1x256xf32>, vector<1x256xf32> -> vector<2x256xf32>
    %680 = vector.extract_strided_slice %679 {offsets = [0, 0], sizes = [2, 128], strides = [1, 1]} : vector<2x256xf32> to vector<2x128xf32>
    %681 = vector.extract_strided_slice %676 {offsets = [0, 0], sizes = [2, 128], strides = [1, 1]} : vector<2x256xf32> to vector<2x128xf32>
    %682 = arith.addf %680, %681 : vector<2x128xf32>
    %683 = vector.extract_strided_slice %573 {offsets = [6, 0], sizes = [1, 256], strides = [1, 1]} : vector<16x256xf32> to vector<1x256xf32>
    %684 = vector.extract_strided_slice %573 {offsets = [14, 0], sizes = [1, 256], strides = [1, 1]} : vector<16x256xf32> to vector<1x256xf32>
    %685 = tpu.concatenate %683, %684 in 0 : vector<1x256xf32>, vector<1x256xf32> -> vector<2x256xf32>
    %686 = vector.extract_strided_slice %685 {offsets = [0, 128], sizes = [2, 128], strides = [1, 1]} : vector<2x256xf32> to vector<2x128xf32>
    %687 = vector.extract_strided_slice %676 {offsets = [0, 128], sizes = [2, 128], strides = [1, 1]} : vector<2x256xf32> to vector<2x128xf32>
    %688 = arith.addf %686, %687 : vector<2x128xf32>
    %689 = vector.extract_strided_slice %682 {offsets = [0, 0], sizes = [2, 32], strides = [1, 1]} : vector<2x128xf32> to vector<2x32xf32>
    %690 = arith.negf %689 : vector<2x32xf32>
    %691 = math.exp %690 : vector<2x32xf32>
    %cst_91 = arith.constant 1.000000e+00 : f32
    %692 = vector.broadcast %cst_91 : f32 to vector<2x32xf32>
    %693 = arith.addf %692, %691 : vector<2x32xf32>
    %694 = arith.divf %692, %693 : vector<2x32xf32>
    %695 = vector.extract_strided_slice %682 {offsets = [0, 32], sizes = [2, 32], strides = [1, 1]} : vector<2x128xf32> to vector<2x32xf32>
    %696 = arith.negf %695 : vector<2x32xf32>
    %697 = math.exp %696 : vector<2x32xf32>
    %cst_92 = arith.constant 1.000000e+00 : f32
    %698 = vector.broadcast %cst_92 : f32 to vector<2x32xf32>
    %699 = arith.addf %698, %697 : vector<2x32xf32>
    %700 = arith.divf %698, %699 : vector<2x32xf32>
    %701 = vector.extract_strided_slice %682 {offsets = [0, 64], sizes = [2, 32], strides = [1, 1]} : vector<2x128xf32> to vector<2x32xf32>
    %702 = math.tanh %701 : vector<2x32xf32>
    %703 = vector.extract_strided_slice %682 {offsets = [0, 96], sizes = [2, 32], strides = [1, 1]} : vector<2x128xf32> to vector<2x32xf32>
    %704 = arith.negf %703 : vector<2x32xf32>
    %705 = math.exp %704 : vector<2x32xf32>
    %cst_93 = arith.constant 1.000000e+00 : f32
    %706 = vector.broadcast %cst_93 : f32 to vector<2x32xf32>
    %707 = arith.addf %706, %705 : vector<2x32xf32>
    %708 = arith.divf %706, %707 : vector<2x32xf32>
    %709 = arith.mulf %700, %656 : vector<2x32xf32>
    %710 = arith.mulf %694, %702 : vector<2x32xf32>
    %711 = arith.addf %709, %710 : vector<2x32xf32>
    %712 = math.tanh %711 : vector<2x32xf32>
    %713 = arith.mulf %708, %712 : vector<2x32xf32>
    %714 = vector.extract_strided_slice %688 {offsets = [0, 0], sizes = [2, 32], strides = [1, 1]} : vector<2x128xf32> to vector<2x32xf32>
    %715 = arith.negf %714 : vector<2x32xf32>
    %716 = math.exp %715 : vector<2x32xf32>
    %cst_94 = arith.constant 1.000000e+00 : f32
    %717 = vector.broadcast %cst_94 : f32 to vector<2x32xf32>
    %718 = arith.addf %717, %716 : vector<2x32xf32>
    %719 = arith.divf %717, %718 : vector<2x32xf32>
    %720 = vector.extract_strided_slice %688 {offsets = [0, 32], sizes = [2, 32], strides = [1, 1]} : vector<2x128xf32> to vector<2x32xf32>
    %721 = arith.negf %720 : vector<2x32xf32>
    %722 = math.exp %721 : vector<2x32xf32>
    %cst_95 = arith.constant 1.000000e+00 : f32
    %723 = vector.broadcast %cst_95 : f32 to vector<2x32xf32>
    %724 = arith.addf %723, %722 : vector<2x32xf32>
    %725 = arith.divf %723, %724 : vector<2x32xf32>
    %726 = vector.extract_strided_slice %688 {offsets = [0, 64], sizes = [2, 32], strides = [1, 1]} : vector<2x128xf32> to vector<2x32xf32>
    %727 = math.tanh %726 : vector<2x32xf32>
    %728 = vector.extract_strided_slice %688 {offsets = [0, 96], sizes = [2, 32], strides = [1, 1]} : vector<2x128xf32> to vector<2x32xf32>
    %729 = arith.negf %728 : vector<2x32xf32>
    %730 = math.exp %729 : vector<2x32xf32>
    %cst_96 = arith.constant 1.000000e+00 : f32
    %731 = vector.broadcast %cst_96 : f32 to vector<2x32xf32>
    %732 = arith.addf %731, %730 : vector<2x32xf32>
    %733 = arith.divf %731, %732 : vector<2x32xf32>
    %734 = arith.mulf %725, %670 : vector<2x32xf32>
    %735 = arith.mulf %719, %727 : vector<2x32xf32>
    %736 = arith.addf %734, %735 : vector<2x32xf32>
    %737 = math.tanh %736 : vector<2x32xf32>
    %738 = arith.mulf %733, %737 : vector<2x32xf32>
    %739 = vector.extract_strided_slice %566 {offsets = [1, 0, 0], sizes = [1, 2, 1], strides = [1, 1, 1]} : vector<8x2x1xf32> to vector<1x2x1xf32>
    %740 = vector.shape_cast %739 : vector<1x2x1xf32> to vector<2x1xf32>
    %741 = vector.extract_strided_slice %566 {offsets = [6, 0, 0], sizes = [1, 2, 1], strides = [1, 1, 1]} : vector<8x2x1xf32> to vector<1x2x1xf32>
    %742 = vector.shape_cast %741 : vector<1x2x1xf32> to vector<2x1xf32>
    %743 = vector.broadcast %740 : vector<2x1xf32> to vector<2x32xf32>
    %744 = arith.mulf %743, %713 : vector<2x32xf32>
    %cst_97 = arith.constant 1.000000e+00 : f32
    %745 = vector.broadcast %cst_97 : f32 to vector<2x1xf32>
    %746 = arith.subf %745, %740 : vector<2x1xf32>
    %747 = vector.broadcast %746 : vector<2x1xf32> to vector<2x32xf32>
    %748 = arith.mulf %747, %649 : vector<2x32xf32>
    %749 = arith.addf %744, %748 : vector<2x32xf32>
    %750 = vector.broadcast %740 : vector<2x1xf32> to vector<2x32xf32>
    %751 = arith.mulf %750, %711 : vector<2x32xf32>
    %cst_98 = arith.constant 1.000000e+00 : f32
    %752 = vector.broadcast %cst_98 : f32 to vector<2x1xf32>
    %753 = arith.subf %752, %740 : vector<2x1xf32>
    %754 = vector.broadcast %753 : vector<2x1xf32> to vector<2x32xf32>
    %755 = arith.mulf %754, %656 : vector<2x32xf32>
    %756 = arith.addf %751, %755 : vector<2x32xf32>
    %757 = vector.broadcast %742 : vector<2x1xf32> to vector<2x32xf32>
    %758 = arith.mulf %757, %738 : vector<2x32xf32>
    %cst_99 = arith.constant 1.000000e+00 : f32
    %759 = vector.broadcast %cst_99 : f32 to vector<2x1xf32>
    %760 = arith.subf %759, %742 : vector<2x1xf32>
    %761 = vector.broadcast %760 : vector<2x1xf32> to vector<2x32xf32>
    %762 = arith.mulf %761, %663 : vector<2x32xf32>
    %763 = arith.addf %758, %762 : vector<2x32xf32>
    %764 = vector.broadcast %742 : vector<2x1xf32> to vector<2x32xf32>
    %765 = arith.mulf %764, %736 : vector<2x32xf32>
    %cst_100 = arith.constant 1.000000e+00 : f32
    %766 = vector.broadcast %cst_100 : f32 to vector<2x1xf32>
    %767 = arith.subf %766, %742 : vector<2x1xf32>
    %768 = vector.broadcast %767 : vector<2x1xf32> to vector<2x32xf32>
    %769 = arith.mulf %768, %670 : vector<2x32xf32>
    %770 = arith.addf %765, %769 : vector<2x32xf32>
    %771 = vector.broadcast %740 : vector<2x1xf32> to vector<2x32xf32>
    %772 = arith.mulf %771, %713 : vector<2x32xf32>
    %773 = vector.broadcast %742 : vector<2x1xf32> to vector<2x32xf32>
    %774 = arith.mulf %773, %738 : vector<2x32xf32>
    %775 = tpu.concatenate %749, %763 in 1 : vector<2x32xf32>, vector<2x32xf32> -> vector<2x64xf32>
    %cst_101 = arith.constant dense<0.000000e+00> : vector<2x256xf32>
    %776 = tpu.matmul %775, %570, %cst_101 {dimension_numbers = #tpu.dot_dimension_numbers<[1], [0], [0], [1], [0, 0, 1, 1], [], []>} : vector<2x64xf32>, vector<64x256xf32>, vector<2x256xf32> -> vector<2x256xf32>
    %777 = vector.extract_strided_slice %573 {offsets = [2, 0], sizes = [1, 256], strides = [1, 1]} : vector<16x256xf32> to vector<1x256xf32>
    %778 = vector.extract_strided_slice %573 {offsets = [10, 0], sizes = [1, 256], strides = [1, 1]} : vector<16x256xf32> to vector<1x256xf32>
    %779 = tpu.concatenate %777, %778 in 0 : vector<1x256xf32>, vector<1x256xf32> -> vector<2x256xf32>
    %780 = vector.extract_strided_slice %779 {offsets = [0, 0], sizes = [2, 128], strides = [1, 1]} : vector<2x256xf32> to vector<2x128xf32>
    %781 = vector.extract_strided_slice %776 {offsets = [0, 0], sizes = [2, 128], strides = [1, 1]} : vector<2x256xf32> to vector<2x128xf32>
    %782 = arith.addf %780, %781 : vector<2x128xf32>
    %783 = vector.extract_strided_slice %573 {offsets = [5, 0], sizes = [1, 256], strides = [1, 1]} : vector<16x256xf32> to vector<1x256xf32>
    %784 = vector.extract_strided_slice %573 {offsets = [13, 0], sizes = [1, 256], strides = [1, 1]} : vector<16x256xf32> to vector<1x256xf32>
    %785 = tpu.concatenate %783, %784 in 0 : vector<1x256xf32>, vector<1x256xf32> -> vector<2x256xf32>
    %786 = vector.extract_strided_slice %785 {offsets = [0, 128], sizes = [2, 128], strides = [1, 1]} : vector<2x256xf32> to vector<2x128xf32>
    %787 = vector.extract_strided_slice %776 {offsets = [0, 128], sizes = [2, 128], strides = [1, 1]} : vector<2x256xf32> to vector<2x128xf32>
    %788 = arith.addf %786, %787 : vector<2x128xf32>
    %789 = vector.extract_strided_slice %782 {offsets = [0, 0], sizes = [2, 32], strides = [1, 1]} : vector<2x128xf32> to vector<2x32xf32>
    %790 = arith.negf %789 : vector<2x32xf32>
    %791 = math.exp %790 : vector<2x32xf32>
    %cst_102 = arith.constant 1.000000e+00 : f32
    %792 = vector.broadcast %cst_102 : f32 to vector<2x32xf32>
    %793 = arith.addf %792, %791 : vector<2x32xf32>
    %794 = arith.divf %792, %793 : vector<2x32xf32>
    %795 = vector.extract_strided_slice %782 {offsets = [0, 32], sizes = [2, 32], strides = [1, 1]} : vector<2x128xf32> to vector<2x32xf32>
    %796 = arith.negf %795 : vector<2x32xf32>
    %797 = math.exp %796 : vector<2x32xf32>
    %cst_103 = arith.constant 1.000000e+00 : f32
    %798 = vector.broadcast %cst_103 : f32 to vector<2x32xf32>
    %799 = arith.addf %798, %797 : vector<2x32xf32>
    %800 = arith.divf %798, %799 : vector<2x32xf32>
    %801 = vector.extract_strided_slice %782 {offsets = [0, 64], sizes = [2, 32], strides = [1, 1]} : vector<2x128xf32> to vector<2x32xf32>
    %802 = math.tanh %801 : vector<2x32xf32>
    %803 = vector.extract_strided_slice %782 {offsets = [0, 96], sizes = [2, 32], strides = [1, 1]} : vector<2x128xf32> to vector<2x32xf32>
    %804 = arith.negf %803 : vector<2x32xf32>
    %805 = math.exp %804 : vector<2x32xf32>
    %cst_104 = arith.constant 1.000000e+00 : f32
    %806 = vector.broadcast %cst_104 : f32 to vector<2x32xf32>
    %807 = arith.addf %806, %805 : vector<2x32xf32>
    %808 = arith.divf %806, %807 : vector<2x32xf32>
    %809 = arith.mulf %800, %756 : vector<2x32xf32>
    %810 = arith.mulf %794, %802 : vector<2x32xf32>
    %811 = arith.addf %809, %810 : vector<2x32xf32>
    %812 = math.tanh %811 : vector<2x32xf32>
    %813 = arith.mulf %808, %812 : vector<2x32xf32>
    %814 = vector.extract_strided_slice %788 {offsets = [0, 0], sizes = [2, 32], strides = [1, 1]} : vector<2x128xf32> to vector<2x32xf32>
    %815 = arith.negf %814 : vector<2x32xf32>
    %816 = math.exp %815 : vector<2x32xf32>
    %cst_105 = arith.constant 1.000000e+00 : f32
    %817 = vector.broadcast %cst_105 : f32 to vector<2x32xf32>
    %818 = arith.addf %817, %816 : vector<2x32xf32>
    %819 = arith.divf %817, %818 : vector<2x32xf32>
    %820 = vector.extract_strided_slice %788 {offsets = [0, 32], sizes = [2, 32], strides = [1, 1]} : vector<2x128xf32> to vector<2x32xf32>
    %821 = arith.negf %820 : vector<2x32xf32>
    %822 = math.exp %821 : vector<2x32xf32>
    %cst_106 = arith.constant 1.000000e+00 : f32
    %823 = vector.broadcast %cst_106 : f32 to vector<2x32xf32>
    %824 = arith.addf %823, %822 : vector<2x32xf32>
    %825 = arith.divf %823, %824 : vector<2x32xf32>
    %826 = vector.extract_strided_slice %788 {offsets = [0, 64], sizes = [2, 32], strides = [1, 1]} : vector<2x128xf32> to vector<2x32xf32>
    %827 = math.tanh %826 : vector<2x32xf32>
    %828 = vector.extract_strided_slice %788 {offsets = [0, 96], sizes = [2, 32], strides = [1, 1]} : vector<2x128xf32> to vector<2x32xf32>
    %829 = arith.negf %828 : vector<2x32xf32>
    %830 = math.exp %829 : vector<2x32xf32>
    %cst_107 = arith.constant 1.000000e+00 : f32
    %831 = vector.broadcast %cst_107 : f32 to vector<2x32xf32>
    %832 = arith.addf %831, %830 : vector<2x32xf32>
    %833 = arith.divf %831, %832 : vector<2x32xf32>
    %834 = arith.mulf %825, %770 : vector<2x32xf32>
    %835 = arith.mulf %819, %827 : vector<2x32xf32>
    %836 = arith.addf %834, %835 : vector<2x32xf32>
    %837 = math.tanh %836 : vector<2x32xf32>
    %838 = arith.mulf %833, %837 : vector<2x32xf32>
    %839 = vector.extract_strided_slice %566 {offsets = [2, 0, 0], sizes = [1, 2, 1], strides = [1, 1, 1]} : vector<8x2x1xf32> to vector<1x2x1xf32>
    %840 = vector.shape_cast %839 : vector<1x2x1xf32> to vector<2x1xf32>
    %841 = vector.extract_strided_slice %566 {offsets = [5, 0, 0], sizes = [1, 2, 1], strides = [1, 1, 1]} : vector<8x2x1xf32> to vector<1x2x1xf32>
    %842 = vector.shape_cast %841 : vector<1x2x1xf32> to vector<2x1xf32>
    %843 = vector.broadcast %840 : vector<2x1xf32> to vector<2x32xf32>
    %844 = arith.mulf %843, %813 : vector<2x32xf32>
    %cst_108 = arith.constant 1.000000e+00 : f32
    %845 = vector.broadcast %cst_108 : f32 to vector<2x1xf32>
    %846 = arith.subf %845, %840 : vector<2x1xf32>
    %847 = vector.broadcast %846 : vector<2x1xf32> to vector<2x32xf32>
    %848 = arith.mulf %847, %749 : vector<2x32xf32>
    %849 = arith.addf %844, %848 : vector<2x32xf32>
    %850 = vector.broadcast %840 : vector<2x1xf32> to vector<2x32xf32>
    %851 = arith.mulf %850, %811 : vector<2x32xf32>
    %cst_109 = arith.constant 1.000000e+00 : f32
    %852 = vector.broadcast %cst_109 : f32 to vector<2x1xf32>
    %853 = arith.subf %852, %840 : vector<2x1xf32>
    %854 = vector.broadcast %853 : vector<2x1xf32> to vector<2x32xf32>
    %855 = arith.mulf %854, %756 : vector<2x32xf32>
    %856 = arith.addf %851, %855 : vector<2x32xf32>
    %857 = vector.broadcast %842 : vector<2x1xf32> to vector<2x32xf32>
    %858 = arith.mulf %857, %838 : vector<2x32xf32>
    %cst_110 = arith.constant 1.000000e+00 : f32
    %859 = vector.broadcast %cst_110 : f32 to vector<2x1xf32>
    %860 = arith.subf %859, %842 : vector<2x1xf32>
    %861 = vector.broadcast %860 : vector<2x1xf32> to vector<2x32xf32>
    %862 = arith.mulf %861, %763 : vector<2x32xf32>
    %863 = arith.addf %858, %862 : vector<2x32xf32>
    %864 = vector.broadcast %842 : vector<2x1xf32> to vector<2x32xf32>
    %865 = arith.mulf %864, %836 : vector<2x32xf32>
    %cst_111 = arith.constant 1.000000e+00 : f32
    %866 = vector.broadcast %cst_111 : f32 to vector<2x1xf32>
    %867 = arith.subf %866, %842 : vector<2x1xf32>
    %868 = vector.broadcast %867 : vector<2x1xf32> to vector<2x32xf32>
    %869 = arith.mulf %868, %770 : vector<2x32xf32>
    %870 = arith.addf %865, %869 : vector<2x32xf32>
    %871 = vector.broadcast %840 : vector<2x1xf32> to vector<2x32xf32>
    %872 = arith.mulf %871, %813 : vector<2x32xf32>
    %873 = vector.broadcast %842 : vector<2x1xf32> to vector<2x32xf32>
    %874 = arith.mulf %873, %838 : vector<2x32xf32>
    %875 = tpu.concatenate %849, %863 in 1 : vector<2x32xf32>, vector<2x32xf32> -> vector<2x64xf32>
    %cst_112 = arith.constant dense<0.000000e+00> : vector<2x256xf32>
    %876 = tpu.matmul %875, %570, %cst_112 {dimension_numbers = #tpu.dot_dimension_numbers<[1], [0], [0], [1], [0, 0, 1, 1], [], []>} : vector<2x64xf32>, vector<64x256xf32>, vector<2x256xf32> -> vector<2x256xf32>
    %877 = vector.extract_strided_slice %573 {offsets = [3, 0], sizes = [1, 256], strides = [1, 1]} : vector<16x256xf32> to vector<1x256xf32>
    %878 = vector.extract_strided_slice %573 {offsets = [11, 0], sizes = [1, 256], strides = [1, 1]} : vector<16x256xf32> to vector<1x256xf32>
    %879 = tpu.concatenate %877, %878 in 0 : vector<1x256xf32>, vector<1x256xf32> -> vector<2x256xf32>
    %880 = vector.extract_strided_slice %879 {offsets = [0, 0], sizes = [2, 128], strides = [1, 1]} : vector<2x256xf32> to vector<2x128xf32>
    %881 = vector.extract_strided_slice %876 {offsets = [0, 0], sizes = [2, 128], strides = [1, 1]} : vector<2x256xf32> to vector<2x128xf32>
    %882 = arith.addf %880, %881 : vector<2x128xf32>
    %883 = vector.extract_strided_slice %573 {offsets = [4, 0], sizes = [1, 256], strides = [1, 1]} : vector<16x256xf32> to vector<1x256xf32>
    %884 = vector.extract_strided_slice %573 {offsets = [12, 0], sizes = [1, 256], strides = [1, 1]} : vector<16x256xf32> to vector<1x256xf32>
    %885 = tpu.concatenate %883, %884 in 0 : vector<1x256xf32>, vector<1x256xf32> -> vector<2x256xf32>
    %886 = vector.extract_strided_slice %885 {offsets = [0, 128], sizes = [2, 128], strides = [1, 1]} : vector<2x256xf32> to vector<2x128xf32>
    %887 = vector.extract_strided_slice %876 {offsets = [0, 128], sizes = [2, 128], strides = [1, 1]} : vector<2x256xf32> to vector<2x128xf32>
    %888 = arith.addf %886, %887 : vector<2x128xf32>
    %889 = vector.extract_strided_slice %882 {offsets = [0, 0], sizes = [2, 32], strides = [1, 1]} : vector<2x128xf32> to vector<2x32xf32>
    %890 = arith.negf %889 : vector<2x32xf32>
    %891 = math.exp %890 : vector<2x32xf32>
    %cst_113 = arith.constant 1.000000e+00 : f32
    %892 = vector.broadcast %cst_113 : f32 to vector<2x32xf32>
    %893 = arith.addf %892, %891 : vector<2x32xf32>
    %894 = arith.divf %892, %893 : vector<2x32xf32>
    %895 = vector.extract_strided_slice %882 {offsets = [0, 32], sizes = [2, 32], strides = [1, 1]} : vector<2x128xf32> to vector<2x32xf32>
    %896 = arith.negf %895 : vector<2x32xf32>
    %897 = math.exp %896 : vector<2x32xf32>
    %cst_114 = arith.constant 1.000000e+00 : f32
    %898 = vector.broadcast %cst_114 : f32 to vector<2x32xf32>
    %899 = arith.addf %898, %897 : vector<2x32xf32>
    %900 = arith.divf %898, %899 : vector<2x32xf32>
    %901 = vector.extract_strided_slice %882 {offsets = [0, 64], sizes = [2, 32], strides = [1, 1]} : vector<2x128xf32> to vector<2x32xf32>
    %902 = math.tanh %901 : vector<2x32xf32>
    %903 = vector.extract_strided_slice %882 {offsets = [0, 96], sizes = [2, 32], strides = [1, 1]} : vector<2x128xf32> to vector<2x32xf32>
    %904 = arith.negf %903 : vector<2x32xf32>
    %905 = math.exp %904 : vector<2x32xf32>
    %cst_115 = arith.constant 1.000000e+00 : f32
    %906 = vector.broadcast %cst_115 : f32 to vector<2x32xf32>
    %907 = arith.addf %906, %905 : vector<2x32xf32>
    %908 = arith.divf %906, %907 : vector<2x32xf32>
    %909 = arith.mulf %900, %856 : vector<2x32xf32>
    %910 = arith.mulf %894, %902 : vector<2x32xf32>
    %911 = arith.addf %909, %910 : vector<2x32xf32>
    %912 = math.tanh %911 : vector<2x32xf32>
    %913 = arith.mulf %908, %912 : vector<2x32xf32>
    %914 = vector.extract_strided_slice %888 {offsets = [0, 0], sizes = [2, 32], strides = [1, 1]} : vector<2x128xf32> to vector<2x32xf32>
    %915 = arith.negf %914 : vector<2x32xf32>
    %916 = math.exp %915 : vector<2x32xf32>
    %cst_116 = arith.constant 1.000000e+00 : f32
    %917 = vector.broadcast %cst_116 : f32 to vector<2x32xf32>
    %918 = arith.addf %917, %916 : vector<2x32xf32>
    %919 = arith.divf %917, %918 : vector<2x32xf32>
    %920 = vector.extract_strided_slice %888 {offsets = [0, 32], sizes = [2, 32], strides = [1, 1]} : vector<2x128xf32> to vector<2x32xf32>
    %921 = arith.negf %920 : vector<2x32xf32>
    %922 = math.exp %921 : vector<2x32xf32>
    %cst_117 = arith.constant 1.000000e+00 : f32
    %923 = vector.broadcast %cst_117 : f32 to vector<2x32xf32>
    %924 = arith.addf %923, %922 : vector<2x32xf32>
    %925 = arith.divf %923, %924 : vector<2x32xf32>
    %926 = vector.extract_strided_slice %888 {offsets = [0, 64], sizes = [2, 32], strides = [1, 1]} : vector<2x128xf32> to vector<2x32xf32>
    %927 = math.tanh %926 : vector<2x32xf32>
    %928 = vector.extract_strided_slice %888 {offsets = [0, 96], sizes = [2, 32], strides = [1, 1]} : vector<2x128xf32> to vector<2x32xf32>
    %929 = arith.negf %928 : vector<2x32xf32>
    %930 = math.exp %929 : vector<2x32xf32>
    %cst_118 = arith.constant 1.000000e+00 : f32
    %931 = vector.broadcast %cst_118 : f32 to vector<2x32xf32>
    %932 = arith.addf %931, %930 : vector<2x32xf32>
    %933 = arith.divf %931, %932 : vector<2x32xf32>
    %934 = arith.mulf %925, %870 : vector<2x32xf32>
    %935 = arith.mulf %919, %927 : vector<2x32xf32>
    %936 = arith.addf %934, %935 : vector<2x32xf32>
    %937 = math.tanh %936 : vector<2x32xf32>
    %938 = arith.mulf %933, %937 : vector<2x32xf32>
    %939 = vector.extract_strided_slice %566 {offsets = [3, 0, 0], sizes = [1, 2, 1], strides = [1, 1, 1]} : vector<8x2x1xf32> to vector<1x2x1xf32>
    %940 = vector.shape_cast %939 : vector<1x2x1xf32> to vector<2x1xf32>
    %941 = vector.extract_strided_slice %566 {offsets = [4, 0, 0], sizes = [1, 2, 1], strides = [1, 1, 1]} : vector<8x2x1xf32> to vector<1x2x1xf32>
    %942 = vector.shape_cast %941 : vector<1x2x1xf32> to vector<2x1xf32>
    %943 = vector.broadcast %940 : vector<2x1xf32> to vector<2x32xf32>
    %944 = arith.mulf %943, %913 : vector<2x32xf32>
    %cst_119 = arith.constant 1.000000e+00 : f32
    %945 = vector.broadcast %cst_119 : f32 to vector<2x1xf32>
    %946 = arith.subf %945, %940 : vector<2x1xf32>
    %947 = vector.broadcast %946 : vector<2x1xf32> to vector<2x32xf32>
    %948 = arith.mulf %947, %849 : vector<2x32xf32>
    %949 = arith.addf %944, %948 : vector<2x32xf32>
    %950 = vector.broadcast %940 : vector<2x1xf32> to vector<2x32xf32>
    %951 = arith.mulf %950, %911 : vector<2x32xf32>
    %cst_120 = arith.constant 1.000000e+00 : f32
    %952 = vector.broadcast %cst_120 : f32 to vector<2x1xf32>
    %953 = arith.subf %952, %940 : vector<2x1xf32>
    %954 = vector.broadcast %953 : vector<2x1xf32> to vector<2x32xf32>
    %955 = arith.mulf %954, %856 : vector<2x32xf32>
    %956 = arith.addf %951, %955 : vector<2x32xf32>
    %957 = vector.broadcast %942 : vector<2x1xf32> to vector<2x32xf32>
    %958 = arith.mulf %957, %938 : vector<2x32xf32>
    %cst_121 = arith.constant 1.000000e+00 : f32
    %959 = vector.broadcast %cst_121 : f32 to vector<2x1xf32>
    %960 = arith.subf %959, %942 : vector<2x1xf32>
    %961 = vector.broadcast %960 : vector<2x1xf32> to vector<2x32xf32>
    %962 = arith.mulf %961, %863 : vector<2x32xf32>
    %963 = arith.addf %958, %962 : vector<2x32xf32>
    %964 = vector.broadcast %942 : vector<2x1xf32> to vector<2x32xf32>
    %965 = arith.mulf %964, %936 : vector<2x32xf32>
    %cst_122 = arith.constant 1.000000e+00 : f32
    %966 = vector.broadcast %cst_122 : f32 to vector<2x1xf32>
    %967 = arith.subf %966, %942 : vector<2x1xf32>
    %968 = vector.broadcast %967 : vector<2x1xf32> to vector<2x32xf32>
    %969 = arith.mulf %968, %870 : vector<2x32xf32>
    %970 = arith.addf %965, %969 : vector<2x32xf32>
    %971 = vector.broadcast %940 : vector<2x1xf32> to vector<2x32xf32>
    %972 = arith.mulf %971, %913 : vector<2x32xf32>
    %973 = vector.broadcast %942 : vector<2x1xf32> to vector<2x32xf32>
    %974 = arith.mulf %973, %938 : vector<2x32xf32>
    %975 = tpu.concatenate %949, %963 in 1 : vector<2x32xf32>, vector<2x32xf32> -> vector<2x64xf32>
    %cst_123 = arith.constant dense<0.000000e+00> : vector<2x256xf32>
    %976 = tpu.matmul %975, %570, %cst_123 {dimension_numbers = #tpu.dot_dimension_numbers<[1], [0], [0], [1], [0, 0, 1, 1], [], []>} : vector<2x64xf32>, vector<64x256xf32>, vector<2x256xf32> -> vector<2x256xf32>
    %977 = vector.extract_strided_slice %573 {offsets = [4, 0], sizes = [1, 256], strides = [1, 1]} : vector<16x256xf32> to vector<1x256xf32>
    %978 = vector.extract_strided_slice %573 {offsets = [12, 0], sizes = [1, 256], strides = [1, 1]} : vector<16x256xf32> to vector<1x256xf32>
    %979 = tpu.concatenate %977, %978 in 0 : vector<1x256xf32>, vector<1x256xf32> -> vector<2x256xf32>
    %980 = vector.extract_strided_slice %979 {offsets = [0, 0], sizes = [2, 128], strides = [1, 1]} : vector<2x256xf32> to vector<2x128xf32>
    %981 = vector.extract_strided_slice %976 {offsets = [0, 0], sizes = [2, 128], strides = [1, 1]} : vector<2x256xf32> to vector<2x128xf32>
    %982 = arith.addf %980, %981 : vector<2x128xf32>
    %983 = vector.extract_strided_slice %573 {offsets = [3, 0], sizes = [1, 256], strides = [1, 1]} : vector<16x256xf32> to vector<1x256xf32>
    %984 = vector.extract_strided_slice %573 {offsets = [11, 0], sizes = [1, 256], strides = [1, 1]} : vector<16x256xf32> to vector<1x256xf32>
    %985 = tpu.concatenate %983, %984 in 0 : vector<1x256xf32>, vector<1x256xf32> -> vector<2x256xf32>
    %986 = vector.extract_strided_slice %985 {offsets = [0, 128], sizes = [2, 128], strides = [1, 1]} : vector<2x256xf32> to vector<2x128xf32>
    %987 = vector.extract_strided_slice %976 {offsets = [0, 128], sizes = [2, 128], strides = [1, 1]} : vector<2x256xf32> to vector<2x128xf32>
    %988 = arith.addf %986, %987 : vector<2x128xf32>
    %989 = vector.extract_strided_slice %982 {offsets = [0, 0], sizes = [2, 32], strides = [1, 1]} : vector<2x128xf32> to vector<2x32xf32>
    %990 = arith.negf %989 : vector<2x32xf32>
    %991 = math.exp %990 : vector<2x32xf32>
    %cst_124 = arith.constant 1.000000e+00 : f32
    %992 = vector.broadcast %cst_124 : f32 to vector<2x32xf32>
    %993 = arith.addf %992, %991 : vector<2x32xf32>
    %994 = arith.divf %992, %993 : vector<2x32xf32>
    %995 = vector.extract_strided_slice %982 {offsets = [0, 32], sizes = [2, 32], strides = [1, 1]} : vector<2x128xf32> to vector<2x32xf32>
    %996 = arith.negf %995 : vector<2x32xf32>
    %997 = math.exp %996 : vector<2x32xf32>
    %cst_125 = arith.constant 1.000000e+00 : f32
    %998 = vector.broadcast %cst_125 : f32 to vector<2x32xf32>
    %999 = arith.addf %998, %997 : vector<2x32xf32>
    %1000 = arith.divf %998, %999 : vector<2x32xf32>
    %1001 = vector.extract_strided_slice %982 {offsets = [0, 64], sizes = [2, 32], strides = [1, 1]} : vector<2x128xf32> to vector<2x32xf32>
    %1002 = math.tanh %1001 : vector<2x32xf32>
    %1003 = vector.extract_strided_slice %982 {offsets = [0, 96], sizes = [2, 32], strides = [1, 1]} : vector<2x128xf32> to vector<2x32xf32>
    %1004 = arith.negf %1003 : vector<2x32xf32>
    %1005 = math.exp %1004 : vector<2x32xf32>
    %cst_126 = arith.constant 1.000000e+00 : f32
    %1006 = vector.broadcast %cst_126 : f32 to vector<2x32xf32>
    %1007 = arith.addf %1006, %1005 : vector<2x32xf32>
    %1008 = arith.divf %1006, %1007 : vector<2x32xf32>
    %1009 = arith.mulf %1000, %956 : vector<2x32xf32>
    %1010 = arith.mulf %994, %1002 : vector<2x32xf32>
    %1011 = arith.addf %1009, %1010 : vector<2x32xf32>
    %1012 = math.tanh %1011 : vector<2x32xf32>
    %1013 = arith.mulf %1008, %1012 : vector<2x32xf32>
    %1014 = vector.extract_strided_slice %988 {offsets = [0, 0], sizes = [2, 32], strides = [1, 1]} : vector<2x128xf32> to vector<2x32xf32>
    %1015 = arith.negf %1014 : vector<2x32xf32>
    %1016 = math.exp %1015 : vector<2x32xf32>
    %cst_127 = arith.constant 1.000000e+00 : f32
    %1017 = vector.broadcast %cst_127 : f32 to vector<2x32xf32>
    %1018 = arith.addf %1017, %1016 : vector<2x32xf32>
    %1019 = arith.divf %1017, %1018 : vector<2x32xf32>
    %1020 = vector.extract_strided_slice %988 {offsets = [0, 32], sizes = [2, 32], strides = [1, 1]} : vector<2x128xf32> to vector<2x32xf32>
    %1021 = arith.negf %1020 : vector<2x32xf32>
    %1022 = math.exp %1021 : vector<2x32xf32>
    %cst_128 = arith.constant 1.000000e+00 : f32
    %1023 = vector.broadcast %cst_128 : f32 to vector<2x32xf32>
    %1024 = arith.addf %1023, %1022 : vector<2x32xf32>
    %1025 = arith.divf %1023, %1024 : vector<2x32xf32>
    %1026 = vector.extract_strided_slice %988 {offsets = [0, 64], sizes = [2, 32], strides = [1, 1]} : vector<2x128xf32> to vector<2x32xf32>
    %1027 = math.tanh %1026 : vector<2x32xf32>
    %1028 = vector.extract_strided_slice %988 {offsets = [0, 96], sizes = [2, 32], strides = [1, 1]} : vector<2x128xf32> to vector<2x32xf32>
    %1029 = arith.negf %1028 : vector<2x32xf32>
    %1030 = math.exp %1029 : vector<2x32xf32>
    %cst_129 = arith.constant 1.000000e+00 : f32
    %1031 = vector.broadcast %cst_129 : f32 to vector<2x32xf32>
    %1032 = arith.addf %1031, %1030 : vector<2x32xf32>
    %1033 = arith.divf %1031, %1032 : vector<2x32xf32>
    %1034 = arith.mulf %1025, %970 : vector<2x32xf32>
    %1035 = arith.mulf %1019, %1027 : vector<2x32xf32>
    %1036 = arith.addf %1034, %1035 : vector<2x32xf32>
    %1037 = math.tanh %1036 : vector<2x32xf32>
    %1038 = arith.mulf %1033, %1037 : vector<2x32xf32>
    %1039 = vector.extract_strided_slice %566 {offsets = [4, 0, 0], sizes = [1, 2, 1], strides = [1, 1, 1]} : vector<8x2x1xf32> to vector<1x2x1xf32>
    %1040 = vector.shape_cast %1039 : vector<1x2x1xf32> to vector<2x1xf32>
    %1041 = vector.extract_strided_slice %566 {offsets = [3, 0, 0], sizes = [1, 2, 1], strides = [1, 1, 1]} : vector<8x2x1xf32> to vector<1x2x1xf32>
    %1042 = vector.shape_cast %1041 : vector<1x2x1xf32> to vector<2x1xf32>
    %1043 = vector.broadcast %1040 : vector<2x1xf32> to vector<2x32xf32>
    %1044 = arith.mulf %1043, %1013 : vector<2x32xf32>
    %cst_130 = arith.constant 1.000000e+00 : f32
    %1045 = vector.broadcast %cst_130 : f32 to vector<2x1xf32>
    %1046 = arith.subf %1045, %1040 : vector<2x1xf32>
    %1047 = vector.broadcast %1046 : vector<2x1xf32> to vector<2x32xf32>
    %1048 = arith.mulf %1047, %949 : vector<2x32xf32>
    %1049 = arith.addf %1044, %1048 : vector<2x32xf32>
    %1050 = vector.broadcast %1040 : vector<2x1xf32> to vector<2x32xf32>
    %1051 = arith.mulf %1050, %1011 : vector<2x32xf32>
    %cst_131 = arith.constant 1.000000e+00 : f32
    %1052 = vector.broadcast %cst_131 : f32 to vector<2x1xf32>
    %1053 = arith.subf %1052, %1040 : vector<2x1xf32>
    %1054 = vector.broadcast %1053 : vector<2x1xf32> to vector<2x32xf32>
    %1055 = arith.mulf %1054, %956 : vector<2x32xf32>
    %1056 = arith.addf %1051, %1055 : vector<2x32xf32>
    %1057 = vector.broadcast %1042 : vector<2x1xf32> to vector<2x32xf32>
    %1058 = arith.mulf %1057, %1038 : vector<2x32xf32>
    %cst_132 = arith.constant 1.000000e+00 : f32
    %1059 = vector.broadcast %cst_132 : f32 to vector<2x1xf32>
    %1060 = arith.subf %1059, %1042 : vector<2x1xf32>
    %1061 = vector.broadcast %1060 : vector<2x1xf32> to vector<2x32xf32>
    %1062 = arith.mulf %1061, %963 : vector<2x32xf32>
    %1063 = arith.addf %1058, %1062 : vector<2x32xf32>
    %1064 = vector.broadcast %1042 : vector<2x1xf32> to vector<2x32xf32>
    %1065 = arith.mulf %1064, %1036 : vector<2x32xf32>
    %cst_133 = arith.constant 1.000000e+00 : f32
    %1066 = vector.broadcast %cst_133 : f32 to vector<2x1xf32>
    %1067 = arith.subf %1066, %1042 : vector<2x1xf32>
    %1068 = vector.broadcast %1067 : vector<2x1xf32> to vector<2x32xf32>
    %1069 = arith.mulf %1068, %970 : vector<2x32xf32>
    %1070 = arith.addf %1065, %1069 : vector<2x32xf32>
    %1071 = vector.broadcast %1040 : vector<2x1xf32> to vector<2x32xf32>
    %1072 = arith.mulf %1071, %1013 : vector<2x32xf32>
    %1073 = vector.broadcast %1042 : vector<2x1xf32> to vector<2x32xf32>
    %1074 = arith.mulf %1073, %1038 : vector<2x32xf32>
    %1075 = tpu.concatenate %1049, %1063 in 1 : vector<2x32xf32>, vector<2x32xf32> -> vector<2x64xf32>
    %cst_134 = arith.constant dense<0.000000e+00> : vector<2x256xf32>
    %1076 = tpu.matmul %1075, %570, %cst_134 {dimension_numbers = #tpu.dot_dimension_numbers<[1], [0], [0], [1], [0, 0, 1, 1], [], []>} : vector<2x64xf32>, vector<64x256xf32>, vector<2x256xf32> -> vector<2x256xf32>
    %1077 = vector.extract_strided_slice %573 {offsets = [5, 0], sizes = [1, 256], strides = [1, 1]} : vector<16x256xf32> to vector<1x256xf32>
    %1078 = vector.extract_strided_slice %573 {offsets = [13, 0], sizes = [1, 256], strides = [1, 1]} : vector<16x256xf32> to vector<1x256xf32>
    %1079 = tpu.concatenate %1077, %1078 in 0 : vector<1x256xf32>, vector<1x256xf32> -> vector<2x256xf32>
    %1080 = vector.extract_strided_slice %1079 {offsets = [0, 0], sizes = [2, 128], strides = [1, 1]} : vector<2x256xf32> to vector<2x128xf32>
    %1081 = vector.extract_strided_slice %1076 {offsets = [0, 0], sizes = [2, 128], strides = [1, 1]} : vector<2x256xf32> to vector<2x128xf32>
    %1082 = arith.addf %1080, %1081 : vector<2x128xf32>
    %1083 = vector.extract_strided_slice %573 {offsets = [2, 0], sizes = [1, 256], strides = [1, 1]} : vector<16x256xf32> to vector<1x256xf32>
    %1084 = vector.extract_strided_slice %573 {offsets = [10, 0], sizes = [1, 256], strides = [1, 1]} : vector<16x256xf32> to vector<1x256xf32>
    %1085 = tpu.concatenate %1083, %1084 in 0 : vector<1x256xf32>, vector<1x256xf32> -> vector<2x256xf32>
    %1086 = vector.extract_strided_slice %1085 {offsets = [0, 128], sizes = [2, 128], strides = [1, 1]} : vector<2x256xf32> to vector<2x128xf32>
    %1087 = vector.extract_strided_slice %1076 {offsets = [0, 128], sizes = [2, 128], strides = [1, 1]} : vector<2x256xf32> to vector<2x128xf32>
    %1088 = arith.addf %1086, %1087 : vector<2x128xf32>
    %1089 = vector.extract_strided_slice %1082 {offsets = [0, 0], sizes = [2, 32], strides = [1, 1]} : vector<2x128xf32> to vector<2x32xf32>
    %1090 = arith.negf %1089 : vector<2x32xf32>
    %1091 = math.exp %1090 : vector<2x32xf32>
    %cst_135 = arith.constant 1.000000e+00 : f32
    %1092 = vector.broadcast %cst_135 : f32 to vector<2x32xf32>
    %1093 = arith.addf %1092, %1091 : vector<2x32xf32>
    %1094 = arith.divf %1092, %1093 : vector<2x32xf32>
    %1095 = vector.extract_strided_slice %1082 {offsets = [0, 32], sizes = [2, 32], strides = [1, 1]} : vector<2x128xf32> to vector<2x32xf32>
    %1096 = arith.negf %1095 : vector<2x32xf32>
    %1097 = math.exp %1096 : vector<2x32xf32>
    %cst_136 = arith.constant 1.000000e+00 : f32
    %1098 = vector.broadcast %cst_136 : f32 to vector<2x32xf32>
    %1099 = arith.addf %1098, %1097 : vector<2x32xf32>
    %1100 = arith.divf %1098, %1099 : vector<2x32xf32>
    %1101 = vector.extract_strided_slice %1082 {offsets = [0, 64], sizes = [2, 32], strides = [1, 1]} : vector<2x128xf32> to vector<2x32xf32>
    %1102 = math.tanh %1101 : vector<2x32xf32>
    %1103 = vector.extract_strided_slice %1082 {offsets = [0, 96], sizes = [2, 32], strides = [1, 1]} : vector<2x128xf32> to vector<2x32xf32>
    %1104 = arith.negf %1103 : vector<2x32xf32>
    %1105 = math.exp %1104 : vector<2x32xf32>
    %cst_137 = arith.constant 1.000000e+00 : f32
    %1106 = vector.broadcast %cst_137 : f32 to vector<2x32xf32>
    %1107 = arith.addf %1106, %1105 : vector<2x32xf32>
    %1108 = arith.divf %1106, %1107 : vector<2x32xf32>
    %1109 = arith.mulf %1100, %1056 : vector<2x32xf32>
    %1110 = arith.mulf %1094, %1102 : vector<2x32xf32>
    %1111 = arith.addf %1109, %1110 : vector<2x32xf32>
    %1112 = math.tanh %1111 : vector<2x32xf32>
    %1113 = arith.mulf %1108, %1112 : vector<2x32xf32>
    %1114 = vector.extract_strided_slice %1088 {offsets = [0, 0], sizes = [2, 32], strides = [1, 1]} : vector<2x128xf32> to vector<2x32xf32>
    %1115 = arith.negf %1114 : vector<2x32xf32>
    %1116 = math.exp %1115 : vector<2x32xf32>
    %cst_138 = arith.constant 1.000000e+00 : f32
    %1117 = vector.broadcast %cst_138 : f32 to vector<2x32xf32>
    %1118 = arith.addf %1117, %1116 : vector<2x32xf32>
    %1119 = arith.divf %1117, %1118 : vector<2x32xf32>
    %1120 = vector.extract_strided_slice %1088 {offsets = [0, 32], sizes = [2, 32], strides = [1, 1]} : vector<2x128xf32> to vector<2x32xf32>
    %1121 = arith.negf %1120 : vector<2x32xf32>
    %1122 = math.exp %1121 : vector<2x32xf32>
    %cst_139 = arith.constant 1.000000e+00 : f32
    %1123 = vector.broadcast %cst_139 : f32 to vector<2x32xf32>
    %1124 = arith.addf %1123, %1122 : vector<2x32xf32>
    %1125 = arith.divf %1123, %1124 : vector<2x32xf32>
    %1126 = vector.extract_strided_slice %1088 {offsets = [0, 64], sizes = [2, 32], strides = [1, 1]} : vector<2x128xf32> to vector<2x32xf32>
    %1127 = math.tanh %1126 : vector<2x32xf32>
    %1128 = vector.extract_strided_slice %1088 {offsets = [0, 96], sizes = [2, 32], strides = [1, 1]} : vector<2x128xf32> to vector<2x32xf32>
    %1129 = arith.negf %1128 : vector<2x32xf32>
    %1130 = math.exp %1129 : vector<2x32xf32>
    %cst_140 = arith.constant 1.000000e+00 : f32
    %1131 = vector.broadcast %cst_140 : f32 to vector<2x32xf32>
    %1132 = arith.addf %1131, %1130 : vector<2x32xf32>
    %1133 = arith.divf %1131, %1132 : vector<2x32xf32>
    %1134 = arith.mulf %1125, %1070 : vector<2x32xf32>
    %1135 = arith.mulf %1119, %1127 : vector<2x32xf32>
    %1136 = arith.addf %1134, %1135 : vector<2x32xf32>
    %1137 = math.tanh %1136 : vector<2x32xf32>
    %1138 = arith.mulf %1133, %1137 : vector<2x32xf32>
    %1139 = vector.extract_strided_slice %566 {offsets = [5, 0, 0], sizes = [1, 2, 1], strides = [1, 1, 1]} : vector<8x2x1xf32> to vector<1x2x1xf32>
    %1140 = vector.shape_cast %1139 : vector<1x2x1xf32> to vector<2x1xf32>
    %1141 = vector.extract_strided_slice %566 {offsets = [2, 0, 0], sizes = [1, 2, 1], strides = [1, 1, 1]} : vector<8x2x1xf32> to vector<1x2x1xf32>
    %1142 = vector.shape_cast %1141 : vector<1x2x1xf32> to vector<2x1xf32>
    %1143 = vector.broadcast %1140 : vector<2x1xf32> to vector<2x32xf32>
    %1144 = arith.mulf %1143, %1113 : vector<2x32xf32>
    %cst_141 = arith.constant 1.000000e+00 : f32
    %1145 = vector.broadcast %cst_141 : f32 to vector<2x1xf32>
    %1146 = arith.subf %1145, %1140 : vector<2x1xf32>
    %1147 = vector.broadcast %1146 : vector<2x1xf32> to vector<2x32xf32>
    %1148 = arith.mulf %1147, %1049 : vector<2x32xf32>
    %1149 = arith.addf %1144, %1148 : vector<2x32xf32>
    %1150 = vector.broadcast %1140 : vector<2x1xf32> to vector<2x32xf32>
    %1151 = arith.mulf %1150, %1111 : vector<2x32xf32>
    %cst_142 = arith.constant 1.000000e+00 : f32
    %1152 = vector.broadcast %cst_142 : f32 to vector<2x1xf32>
    %1153 = arith.subf %1152, %1140 : vector<2x1xf32>
    %1154 = vector.broadcast %1153 : vector<2x1xf32> to vector<2x32xf32>
    %1155 = arith.mulf %1154, %1056 : vector<2x32xf32>
    %1156 = arith.addf %1151, %1155 : vector<2x32xf32>
    %1157 = vector.broadcast %1142 : vector<2x1xf32> to vector<2x32xf32>
    %1158 = arith.mulf %1157, %1138 : vector<2x32xf32>
    %cst_143 = arith.constant 1.000000e+00 : f32
    %1159 = vector.broadcast %cst_143 : f32 to vector<2x1xf32>
    %1160 = arith.subf %1159, %1142 : vector<2x1xf32>
    %1161 = vector.broadcast %1160 : vector<2x1xf32> to vector<2x32xf32>
    %1162 = arith.mulf %1161, %1063 : vector<2x32xf32>
    %1163 = arith.addf %1158, %1162 : vector<2x32xf32>
    %1164 = vector.broadcast %1142 : vector<2x1xf32> to vector<2x32xf32>
    %1165 = arith.mulf %1164, %1136 : vector<2x32xf32>
    %cst_144 = arith.constant 1.000000e+00 : f32
    %1166 = vector.broadcast %cst_144 : f32 to vector<2x1xf32>
    %1167 = arith.subf %1166, %1142 : vector<2x1xf32>
    %1168 = vector.broadcast %1167 : vector<2x1xf32> to vector<2x32xf32>
    %1169 = arith.mulf %1168, %1070 : vector<2x32xf32>
    %1170 = arith.addf %1165, %1169 : vector<2x32xf32>
    %1171 = vector.broadcast %1140 : vector<2x1xf32> to vector<2x32xf32>
    %1172 = arith.mulf %1171, %1113 : vector<2x32xf32>
    %1173 = vector.broadcast %1142 : vector<2x1xf32> to vector<2x32xf32>
    %1174 = arith.mulf %1173, %1138 : vector<2x32xf32>
    %1175 = tpu.concatenate %1149, %1163 in 1 : vector<2x32xf32>, vector<2x32xf32> -> vector<2x64xf32>
    %cst_145 = arith.constant dense<0.000000e+00> : vector<2x256xf32>
    %1176 = tpu.matmul %1175, %570, %cst_145 {dimension_numbers = #tpu.dot_dimension_numbers<[1], [0], [0], [1], [0, 0, 1, 1], [], []>} : vector<2x64xf32>, vector<64x256xf32>, vector<2x256xf32> -> vector<2x256xf32>
    %1177 = vector.extract_strided_slice %573 {offsets = [6, 0], sizes = [1, 256], strides = [1, 1]} : vector<16x256xf32> to vector<1x256xf32>
    %1178 = vector.extract_strided_slice %573 {offsets = [14, 0], sizes = [1, 256], strides = [1, 1]} : vector<16x256xf32> to vector<1x256xf32>
    %1179 = tpu.concatenate %1177, %1178 in 0 : vector<1x256xf32>, vector<1x256xf32> -> vector<2x256xf32>
    %1180 = vector.extract_strided_slice %1179 {offsets = [0, 0], sizes = [2, 128], strides = [1, 1]} : vector<2x256xf32> to vector<2x128xf32>
    %1181 = vector.extract_strided_slice %1176 {offsets = [0, 0], sizes = [2, 128], strides = [1, 1]} : vector<2x256xf32> to vector<2x128xf32>
    %1182 = arith.addf %1180, %1181 : vector<2x128xf32>
    %1183 = vector.extract_strided_slice %573 {offsets = [1, 0], sizes = [1, 256], strides = [1, 1]} : vector<16x256xf32> to vector<1x256xf32>
    %1184 = vector.extract_strided_slice %573 {offsets = [9, 0], sizes = [1, 256], strides = [1, 1]} : vector<16x256xf32> to vector<1x256xf32>
    %1185 = tpu.concatenate %1183, %1184 in 0 : vector<1x256xf32>, vector<1x256xf32> -> vector<2x256xf32>
    %1186 = vector.extract_strided_slice %1185 {offsets = [0, 128], sizes = [2, 128], strides = [1, 1]} : vector<2x256xf32> to vector<2x128xf32>
    %1187 = vector.extract_strided_slice %1176 {offsets = [0, 128], sizes = [2, 128], strides = [1, 1]} : vector<2x256xf32> to vector<2x128xf32>
    %1188 = arith.addf %1186, %1187 : vector<2x128xf32>
    %1189 = vector.extract_strided_slice %1182 {offsets = [0, 0], sizes = [2, 32], strides = [1, 1]} : vector<2x128xf32> to vector<2x32xf32>
    %1190 = arith.negf %1189 : vector<2x32xf32>
    %1191 = math.exp %1190 : vector<2x32xf32>
    %cst_146 = arith.constant 1.000000e+00 : f32
    %1192 = vector.broadcast %cst_146 : f32 to vector<2x32xf32>
    %1193 = arith.addf %1192, %1191 : vector<2x32xf32>
    %1194 = arith.divf %1192, %1193 : vector<2x32xf32>
    %1195 = vector.extract_strided_slice %1182 {offsets = [0, 32], sizes = [2, 32], strides = [1, 1]} : vector<2x128xf32> to vector<2x32xf32>
    %1196 = arith.negf %1195 : vector<2x32xf32>
    %1197 = math.exp %1196 : vector<2x32xf32>
    %cst_147 = arith.constant 1.000000e+00 : f32
    %1198 = vector.broadcast %cst_147 : f32 to vector<2x32xf32>
    %1199 = arith.addf %1198, %1197 : vector<2x32xf32>
    %1200 = arith.divf %1198, %1199 : vector<2x32xf32>
    %1201 = vector.extract_strided_slice %1182 {offsets = [0, 64], sizes = [2, 32], strides = [1, 1]} : vector<2x128xf32> to vector<2x32xf32>
    %1202 = math.tanh %1201 : vector<2x32xf32>
    %1203 = vector.extract_strided_slice %1182 {offsets = [0, 96], sizes = [2, 32], strides = [1, 1]} : vector<2x128xf32> to vector<2x32xf32>
    %1204 = arith.negf %1203 : vector<2x32xf32>
    %1205 = math.exp %1204 : vector<2x32xf32>
    %cst_148 = arith.constant 1.000000e+00 : f32
    %1206 = vector.broadcast %cst_148 : f32 to vector<2x32xf32>
    %1207 = arith.addf %1206, %1205 : vector<2x32xf32>
    %1208 = arith.divf %1206, %1207 : vector<2x32xf32>
    %1209 = arith.mulf %1200, %1156 : vector<2x32xf32>
    %1210 = arith.mulf %1194, %1202 : vector<2x32xf32>
    %1211 = arith.addf %1209, %1210 : vector<2x32xf32>
    %1212 = math.tanh %1211 : vector<2x32xf32>
    %1213 = arith.mulf %1208, %1212 : vector<2x32xf32>
    %1214 = vector.extract_strided_slice %1188 {offsets = [0, 0], sizes = [2, 32], strides = [1, 1]} : vector<2x128xf32> to vector<2x32xf32>
    %1215 = arith.negf %1214 : vector<2x32xf32>
    %1216 = math.exp %1215 : vector<2x32xf32>
    %cst_149 = arith.constant 1.000000e+00 : f32
    %1217 = vector.broadcast %cst_149 : f32 to vector<2x32xf32>
    %1218 = arith.addf %1217, %1216 : vector<2x32xf32>
    %1219 = arith.divf %1217, %1218 : vector<2x32xf32>
    %1220 = vector.extract_strided_slice %1188 {offsets = [0, 32], sizes = [2, 32], strides = [1, 1]} : vector<2x128xf32> to vector<2x32xf32>
    %1221 = arith.negf %1220 : vector<2x32xf32>
    %1222 = math.exp %1221 : vector<2x32xf32>
    %cst_150 = arith.constant 1.000000e+00 : f32
    %1223 = vector.broadcast %cst_150 : f32 to vector<2x32xf32>
    %1224 = arith.addf %1223, %1222 : vector<2x32xf32>
    %1225 = arith.divf %1223, %1224 : vector<2x32xf32>
    %1226 = vector.extract_strided_slice %1188 {offsets = [0, 64], sizes = [2, 32], strides = [1, 1]} : vector<2x128xf32> to vector<2x32xf32>
    %1227 = math.tanh %1226 : vector<2x32xf32>
    %1228 = vector.extract_strided_slice %1188 {offsets = [0, 96], sizes = [2, 32], strides = [1, 1]} : vector<2x128xf32> to vector<2x32xf32>
    %1229 = arith.negf %1228 : vector<2x32xf32>
    %1230 = math.exp %1229 : vector<2x32xf32>
    %cst_151 = arith.constant 1.000000e+00 : f32
    %1231 = vector.broadcast %cst_151 : f32 to vector<2x32xf32>
    %1232 = arith.addf %1231, %1230 : vector<2x32xf32>
    %1233 = arith.divf %1231, %1232 : vector<2x32xf32>
    %1234 = arith.mulf %1225, %1170 : vector<2x32xf32>
    %1235 = arith.mulf %1219, %1227 : vector<2x32xf32>
    %1236 = arith.addf %1234, %1235 : vector<2x32xf32>
    %1237 = math.tanh %1236 : vector<2x32xf32>
    %1238 = arith.mulf %1233, %1237 : vector<2x32xf32>
    %1239 = vector.extract_strided_slice %566 {offsets = [6, 0, 0], sizes = [1, 2, 1], strides = [1, 1, 1]} : vector<8x2x1xf32> to vector<1x2x1xf32>
    %1240 = vector.shape_cast %1239 : vector<1x2x1xf32> to vector<2x1xf32>
    %1241 = vector.extract_strided_slice %566 {offsets = [1, 0, 0], sizes = [1, 2, 1], strides = [1, 1, 1]} : vector<8x2x1xf32> to vector<1x2x1xf32>
    %1242 = vector.shape_cast %1241 : vector<1x2x1xf32> to vector<2x1xf32>
    %1243 = vector.broadcast %1240 : vector<2x1xf32> to vector<2x32xf32>
    %1244 = arith.mulf %1243, %1213 : vector<2x32xf32>
    %cst_152 = arith.constant 1.000000e+00 : f32
    %1245 = vector.broadcast %cst_152 : f32 to vector<2x1xf32>
    %1246 = arith.subf %1245, %1240 : vector<2x1xf32>
    %1247 = vector.broadcast %1246 : vector<2x1xf32> to vector<2x32xf32>
    %1248 = arith.mulf %1247, %1149 : vector<2x32xf32>
    %1249 = arith.addf %1244, %1248 : vector<2x32xf32>
    %1250 = vector.broadcast %1240 : vector<2x1xf32> to vector<2x32xf32>
    %1251 = arith.mulf %1250, %1211 : vector<2x32xf32>
    %cst_153 = arith.constant 1.000000e+00 : f32
    %1252 = vector.broadcast %cst_153 : f32 to vector<2x1xf32>
    %1253 = arith.subf %1252, %1240 : vector<2x1xf32>
    %1254 = vector.broadcast %1253 : vector<2x1xf32> to vector<2x32xf32>
    %1255 = arith.mulf %1254, %1156 : vector<2x32xf32>
    %1256 = arith.addf %1251, %1255 : vector<2x32xf32>
    %1257 = vector.broadcast %1242 : vector<2x1xf32> to vector<2x32xf32>
    %1258 = arith.mulf %1257, %1238 : vector<2x32xf32>
    %cst_154 = arith.constant 1.000000e+00 : f32
    %1259 = vector.broadcast %cst_154 : f32 to vector<2x1xf32>
    %1260 = arith.subf %1259, %1242 : vector<2x1xf32>
    %1261 = vector.broadcast %1260 : vector<2x1xf32> to vector<2x32xf32>
    %1262 = arith.mulf %1261, %1163 : vector<2x32xf32>
    %1263 = arith.addf %1258, %1262 : vector<2x32xf32>
    %1264 = vector.broadcast %1242 : vector<2x1xf32> to vector<2x32xf32>
    %1265 = arith.mulf %1264, %1236 : vector<2x32xf32>
    %cst_155 = arith.constant 1.000000e+00 : f32
    %1266 = vector.broadcast %cst_155 : f32 to vector<2x1xf32>
    %1267 = arith.subf %1266, %1242 : vector<2x1xf32>
    %1268 = vector.broadcast %1267 : vector<2x1xf32> to vector<2x32xf32>
    %1269 = arith.mulf %1268, %1170 : vector<2x32xf32>
    %1270 = arith.addf %1265, %1269 : vector<2x32xf32>
    %1271 = vector.broadcast %1240 : vector<2x1xf32> to vector<2x32xf32>
    %1272 = arith.mulf %1271, %1213 : vector<2x32xf32>
    %1273 = vector.broadcast %1242 : vector<2x1xf32> to vector<2x32xf32>
    %1274 = arith.mulf %1273, %1238 : vector<2x32xf32>
    %1275 = tpu.concatenate %1249, %1263 in 1 : vector<2x32xf32>, vector<2x32xf32> -> vector<2x64xf32>
    %cst_156 = arith.constant dense<0.000000e+00> : vector<2x256xf32>
    %1276 = tpu.matmul %1275, %570, %cst_156 {dimension_numbers = #tpu.dot_dimension_numbers<[1], [0], [0], [1], [0, 0, 1, 1], [], []>} : vector<2x64xf32>, vector<64x256xf32>, vector<2x256xf32> -> vector<2x256xf32>
    %1277 = vector.extract_strided_slice %573 {offsets = [7, 0], sizes = [1, 256], strides = [1, 1]} : vector<16x256xf32> to vector<1x256xf32>
    %1278 = vector.extract_strided_slice %573 {offsets = [15, 0], sizes = [1, 256], strides = [1, 1]} : vector<16x256xf32> to vector<1x256xf32>
    %1279 = tpu.concatenate %1277, %1278 in 0 : vector<1x256xf32>, vector<1x256xf32> -> vector<2x256xf32>
    %1280 = vector.extract_strided_slice %1279 {offsets = [0, 0], sizes = [2, 128], strides = [1, 1]} : vector<2x256xf32> to vector<2x128xf32>
    %1281 = vector.extract_strided_slice %1276 {offsets = [0, 0], sizes = [2, 128], strides = [1, 1]} : vector<2x256xf32> to vector<2x128xf32>
    %1282 = arith.addf %1280, %1281 : vector<2x128xf32>
    %1283 = vector.extract_strided_slice %573 {offsets = [0, 0], sizes = [1, 256], strides = [1, 1]} : vector<16x256xf32> to vector<1x256xf32>
    %1284 = vector.extract_strided_slice %573 {offsets = [8, 0], sizes = [1, 256], strides = [1, 1]} : vector<16x256xf32> to vector<1x256xf32>
    %1285 = tpu.concatenate %1283, %1284 in 0 : vector<1x256xf32>, vector<1x256xf32> -> vector<2x256xf32>
    %1286 = vector.extract_strided_slice %1285 {offsets = [0, 128], sizes = [2, 128], strides = [1, 1]} : vector<2x256xf32> to vector<2x128xf32>
    %1287 = vector.extract_strided_slice %1276 {offsets = [0, 128], sizes = [2, 128], strides = [1, 1]} : vector<2x256xf32> to vector<2x128xf32>
    %1288 = arith.addf %1286, %1287 : vector<2x128xf32>
    %1289 = vector.extract_strided_slice %1282 {offsets = [0, 0], sizes = [2, 32], strides = [1, 1]} : vector<2x128xf32> to vector<2x32xf32>
    %1290 = arith.negf %1289 : vector<2x32xf32>
    %1291 = math.exp %1290 : vector<2x32xf32>
    %cst_157 = arith.constant 1.000000e+00 : f32
    %1292 = vector.broadcast %cst_157 : f32 to vector<2x32xf32>
    %1293 = arith.addf %1292, %1291 : vector<2x32xf32>
    %1294 = arith.divf %1292, %1293 : vector<2x32xf32>
    %1295 = vector.extract_strided_slice %1282 {offsets = [0, 32], sizes = [2, 32], strides = [1, 1]} : vector<2x128xf32> to vector<2x32xf32>
    %1296 = arith.negf %1295 : vector<2x32xf32>
    %1297 = math.exp %1296 : vector<2x32xf32>
    %cst_158 = arith.constant 1.000000e+00 : f32
    %1298 = vector.broadcast %cst_158 : f32 to vector<2x32xf32>
    %1299 = arith.addf %1298, %1297 : vector<2x32xf32>
    %1300 = arith.divf %1298, %1299 : vector<2x32xf32>
    %1301 = vector.extract_strided_slice %1282 {offsets = [0, 64], sizes = [2, 32], strides = [1, 1]} : vector<2x128xf32> to vector<2x32xf32>
    %1302 = math.tanh %1301 : vector<2x32xf32>
    %1303 = vector.extract_strided_slice %1282 {offsets = [0, 96], sizes = [2, 32], strides = [1, 1]} : vector<2x128xf32> to vector<2x32xf32>
    %1304 = arith.negf %1303 : vector<2x32xf32>
    %1305 = math.exp %1304 : vector<2x32xf32>
    %cst_159 = arith.constant 1.000000e+00 : f32
    %1306 = vector.broadcast %cst_159 : f32 to vector<2x32xf32>
    %1307 = arith.addf %1306, %1305 : vector<2x32xf32>
    %1308 = arith.divf %1306, %1307 : vector<2x32xf32>
    %1309 = arith.mulf %1300, %1256 : vector<2x32xf32>
    %1310 = arith.mulf %1294, %1302 : vector<2x32xf32>
    %1311 = arith.addf %1309, %1310 : vector<2x32xf32>
    %1312 = math.tanh %1311 : vector<2x32xf32>
    %1313 = arith.mulf %1308, %1312 : vector<2x32xf32>
    %1314 = vector.extract_strided_slice %1288 {offsets = [0, 0], sizes = [2, 32], strides = [1, 1]} : vector<2x128xf32> to vector<2x32xf32>
    %1315 = arith.negf %1314 : vector<2x32xf32>
    %1316 = math.exp %1315 : vector<2x32xf32>
    %cst_160 = arith.constant 1.000000e+00 : f32
    %1317 = vector.broadcast %cst_160 : f32 to vector<2x32xf32>
    %1318 = arith.addf %1317, %1316 : vector<2x32xf32>
    %1319 = arith.divf %1317, %1318 : vector<2x32xf32>
    %1320 = vector.extract_strided_slice %1288 {offsets = [0, 32], sizes = [2, 32], strides = [1, 1]} : vector<2x128xf32> to vector<2x32xf32>
    %1321 = arith.negf %1320 : vector<2x32xf32>
    %1322 = math.exp %1321 : vector<2x32xf32>
    %cst_161 = arith.constant 1.000000e+00 : f32
    %1323 = vector.broadcast %cst_161 : f32 to vector<2x32xf32>
    %1324 = arith.addf %1323, %1322 : vector<2x32xf32>
    %1325 = arith.divf %1323, %1324 : vector<2x32xf32>
    %1326 = vector.extract_strided_slice %1288 {offsets = [0, 64], sizes = [2, 32], strides = [1, 1]} : vector<2x128xf32> to vector<2x32xf32>
    %1327 = math.tanh %1326 : vector<2x32xf32>
    %1328 = vector.extract_strided_slice %1288 {offsets = [0, 96], sizes = [2, 32], strides = [1, 1]} : vector<2x128xf32> to vector<2x32xf32>
    %1329 = arith.negf %1328 : vector<2x32xf32>
    %1330 = math.exp %1329 : vector<2x32xf32>
    %cst_162 = arith.constant 1.000000e+00 : f32
    %1331 = vector.broadcast %cst_162 : f32 to vector<2x32xf32>
    %1332 = arith.addf %1331, %1330 : vector<2x32xf32>
    %1333 = arith.divf %1331, %1332 : vector<2x32xf32>
    %1334 = arith.mulf %1325, %1270 : vector<2x32xf32>
    %1335 = arith.mulf %1319, %1327 : vector<2x32xf32>
    %1336 = arith.addf %1334, %1335 : vector<2x32xf32>
    %1337 = math.tanh %1336 : vector<2x32xf32>
    %1338 = arith.mulf %1333, %1337 : vector<2x32xf32>
    %1339 = vector.extract_strided_slice %566 {offsets = [7, 0, 0], sizes = [1, 2, 1], strides = [1, 1, 1]} : vector<8x2x1xf32> to vector<1x2x1xf32>
    %1340 = vector.shape_cast %1339 : vector<1x2x1xf32> to vector<2x1xf32>
    %1341 = vector.extract_strided_slice %566 {offsets = [0, 0, 0], sizes = [1, 2, 1], strides = [1, 1, 1]} : vector<8x2x1xf32> to vector<1x2x1xf32>
    %1342 = vector.shape_cast %1341 : vector<1x2x1xf32> to vector<2x1xf32>
    %1343 = vector.broadcast %1340 : vector<2x1xf32> to vector<2x32xf32>
    %1344 = arith.mulf %1343, %1313 : vector<2x32xf32>
    %1345 = vector.broadcast %1342 : vector<2x1xf32> to vector<2x32xf32>
    %1346 = arith.mulf %1345, %1338 : vector<2x32xf32>
    %1347 = tpu.concatenate %672, %1346 in 1 : vector<2x32xf32>, vector<2x32xf32> -> vector<2x64xf32>
    %1348 = tpu.concatenate %772, %1274 in 1 : vector<2x32xf32>, vector<2x32xf32> -> vector<2x64xf32>
    %1349 = tpu.concatenate %872, %1174 in 1 : vector<2x32xf32>, vector<2x32xf32> -> vector<2x64xf32>
    %1350 = tpu.concatenate %972, %1074 in 1 : vector<2x32xf32>, vector<2x32xf32> -> vector<2x64xf32>
    %1351 = tpu.concatenate %1072, %974 in 1 : vector<2x32xf32>, vector<2x32xf32> -> vector<2x64xf32>
    %1352 = tpu.concatenate %1172, %874 in 1 : vector<2x32xf32>, vector<2x32xf32> -> vector<2x64xf32>
    %1353 = tpu.concatenate %1272, %774 in 1 : vector<2x32xf32>, vector<2x32xf32> -> vector<2x64xf32>
    %1354 = tpu.concatenate %1344, %674 in 1 : vector<2x32xf32>, vector<2x32xf32> -> vector<2x64xf32>
    %1355 = tpu.concatenate %1347, %1348, %1349, %1350, %1351, %1352, %1353, %1354 in 0 : vector<2x64xf32>, vector<2x64xf32>, vector<2x64xf32>, vector<2x64xf32>, vector<2x64xf32>, vector<2x64xf32>, vector<2x64xf32>, vector<2x64xf32> -> vector<16x64xf32>
    %c0_163 = arith.constant 0 : index
    %c0_164 = arith.constant 0 : index
    %1356 = vector.load %arg6[%c0_163, %c0_164] : memref<64x256xf32, #tpu.memory_space<vmem>>, vector<64x256xf32>
    %c0_165 = arith.constant 0 : index
    %c0_166 = arith.constant 0 : index
    %1357 = vector.load %arg7[%c0_165, %c0_166] : memref<1x256xf32, #tpu.memory_space<vmem>>, vector<1x256xf32>
    %c0_167 = arith.constant 0 : index
    %c0_168 = arith.constant 0 : index
    %1358 = vector.load %arg8[%c0_167, %c0_168] : memref<64x256xf32, #tpu.memory_space<vmem>>, vector<64x256xf32>
    %cst_169 = arith.constant dense<0.000000e+00> : vector<16x256xf32>
    %1359 = tpu.matmul %1355, %1356, %cst_169 {dimension_numbers = #tpu.dot_dimension_numbers<[1], [0], [0], [1], [0, 0, 1, 1], [], []>} : vector<16x64xf32>, vector<64x256xf32>, vector<16x256xf32> -> vector<16x256xf32>
    %1360 = vector.broadcast %1357 : vector<1x256xf32> to vector<16x256xf32>
    %1361 = arith.addf %1359, %1360 : vector<16x256xf32>
    %cst_170 = arith.constant 0.000000e+00 : f32
    %1362 = vector.broadcast %cst_170 : f32 to vector<2x32xf32>
    %1363 = tpu.concatenate %1362, %1362 in 1 : vector<2x32xf32>, vector<2x32xf32> -> vector<2x64xf32>
    %cst_171 = arith.constant dense<0.000000e+00> : vector<2x256xf32>
    %1364 = tpu.matmul %1363, %1358, %cst_171 {dimension_numbers = #tpu.dot_dimension_numbers<[1], [0], [0], [1], [0, 0, 1, 1], [], []>} : vector<2x64xf32>, vector<64x256xf32>, vector<2x256xf32> -> vector<2x256xf32>
    %1365 = vector.extract_strided_slice %1361 {offsets = [0, 0], sizes = [1, 256], strides = [1, 1]} : vector<16x256xf32> to vector<1x256xf32>
    %1366 = vector.extract_strided_slice %1361 {offsets = [1, 0], sizes = [1, 256], strides = [1, 1]} : vector<16x256xf32> to vector<1x256xf32>
    %1367 = tpu.concatenate %1365, %1366 in 0 : vector<1x256xf32>, vector<1x256xf32> -> vector<2x256xf32>
    %1368 = vector.extract_strided_slice %1367 {offsets = [0, 0], sizes = [2, 128], strides = [1, 1]} : vector<2x256xf32> to vector<2x128xf32>
    %1369 = vector.extract_strided_slice %1364 {offsets = [0, 0], sizes = [2, 128], strides = [1, 1]} : vector<2x256xf32> to vector<2x128xf32>
    %1370 = arith.addf %1368, %1369 : vector<2x128xf32>
    %1371 = vector.extract_strided_slice %1361 {offsets = [14, 0], sizes = [1, 256], strides = [1, 1]} : vector<16x256xf32> to vector<1x256xf32>
    %1372 = vector.extract_strided_slice %1361 {offsets = [15, 0], sizes = [1, 256], strides = [1, 1]} : vector<16x256xf32> to vector<1x256xf32>
    %1373 = tpu.concatenate %1371, %1372 in 0 : vector<1x256xf32>, vector<1x256xf32> -> vector<2x256xf32>
    %1374 = vector.extract_strided_slice %1373 {offsets = [0, 128], sizes = [2, 128], strides = [1, 1]} : vector<2x256xf32> to vector<2x128xf32>
    %1375 = vector.extract_strided_slice %1364 {offsets = [0, 128], sizes = [2, 128], strides = [1, 1]} : vector<2x256xf32> to vector<2x128xf32>
    %1376 = arith.addf %1374, %1375 : vector<2x128xf32>
    %1377 = vector.extract_strided_slice %1370 {offsets = [0, 0], sizes = [2, 32], strides = [1, 1]} : vector<2x128xf32> to vector<2x32xf32>
    %1378 = arith.negf %1377 : vector<2x32xf32>
    %1379 = math.exp %1378 : vector<2x32xf32>
    %cst_172 = arith.constant 1.000000e+00 : f32
    %1380 = vector.broadcast %cst_172 : f32 to vector<2x32xf32>
    %1381 = arith.addf %1380, %1379 : vector<2x32xf32>
    %1382 = arith.divf %1380, %1381 : vector<2x32xf32>
    %1383 = vector.extract_strided_slice %1370 {offsets = [0, 32], sizes = [2, 32], strides = [1, 1]} : vector<2x128xf32> to vector<2x32xf32>
    %1384 = arith.negf %1383 : vector<2x32xf32>
    %1385 = math.exp %1384 : vector<2x32xf32>
    %cst_173 = arith.constant 1.000000e+00 : f32
    %1386 = vector.broadcast %cst_173 : f32 to vector<2x32xf32>
    %1387 = arith.addf %1386, %1385 : vector<2x32xf32>
    %1388 = arith.divf %1386, %1387 : vector<2x32xf32>
    %1389 = vector.extract_strided_slice %1370 {offsets = [0, 64], sizes = [2, 32], strides = [1, 1]} : vector<2x128xf32> to vector<2x32xf32>
    %1390 = math.tanh %1389 : vector<2x32xf32>
    %1391 = vector.extract_strided_slice %1370 {offsets = [0, 96], sizes = [2, 32], strides = [1, 1]} : vector<2x128xf32> to vector<2x32xf32>
    %1392 = arith.negf %1391 : vector<2x32xf32>
    %1393 = math.exp %1392 : vector<2x32xf32>
    %cst_174 = arith.constant 1.000000e+00 : f32
    %1394 = vector.broadcast %cst_174 : f32 to vector<2x32xf32>
    %1395 = arith.addf %1394, %1393 : vector<2x32xf32>
    %1396 = arith.divf %1394, %1395 : vector<2x32xf32>
    %1397 = arith.mulf %1388, %1362 : vector<2x32xf32>
    %1398 = arith.mulf %1382, %1390 : vector<2x32xf32>
    %1399 = arith.addf %1397, %1398 : vector<2x32xf32>
    %1400 = math.tanh %1399 : vector<2x32xf32>
    %1401 = arith.mulf %1396, %1400 : vector<2x32xf32>
    %1402 = vector.extract_strided_slice %1376 {offsets = [0, 0], sizes = [2, 32], strides = [1, 1]} : vector<2x128xf32> to vector<2x32xf32>
    %1403 = arith.negf %1402 : vector<2x32xf32>
    %1404 = math.exp %1403 : vector<2x32xf32>
    %cst_175 = arith.constant 1.000000e+00 : f32
    %1405 = vector.broadcast %cst_175 : f32 to vector<2x32xf32>
    %1406 = arith.addf %1405, %1404 : vector<2x32xf32>
    %1407 = arith.divf %1405, %1406 : vector<2x32xf32>
    %1408 = vector.extract_strided_slice %1376 {offsets = [0, 32], sizes = [2, 32], strides = [1, 1]} : vector<2x128xf32> to vector<2x32xf32>
    %1409 = arith.negf %1408 : vector<2x32xf32>
    %1410 = math.exp %1409 : vector<2x32xf32>
    %cst_176 = arith.constant 1.000000e+00 : f32
    %1411 = vector.broadcast %cst_176 : f32 to vector<2x32xf32>
    %1412 = arith.addf %1411, %1410 : vector<2x32xf32>
    %1413 = arith.divf %1411, %1412 : vector<2x32xf32>
    %1414 = vector.extract_strided_slice %1376 {offsets = [0, 64], sizes = [2, 32], strides = [1, 1]} : vector<2x128xf32> to vector<2x32xf32>
    %1415 = math.tanh %1414 : vector<2x32xf32>
    %1416 = vector.extract_strided_slice %1376 {offsets = [0, 96], sizes = [2, 32], strides = [1, 1]} : vector<2x128xf32> to vector<2x32xf32>
    %1417 = arith.negf %1416 : vector<2x32xf32>
    %1418 = math.exp %1417 : vector<2x32xf32>
    %cst_177 = arith.constant 1.000000e+00 : f32
    %1419 = vector.broadcast %cst_177 : f32 to vector<2x32xf32>
    %1420 = arith.addf %1419, %1418 : vector<2x32xf32>
    %1421 = arith.divf %1419, %1420 : vector<2x32xf32>
    %1422 = arith.mulf %1413, %1362 : vector<2x32xf32>
    %1423 = arith.mulf %1407, %1415 : vector<2x32xf32>
    %1424 = arith.addf %1422, %1423 : vector<2x32xf32>
    %1425 = math.tanh %1424 : vector<2x32xf32>
    %1426 = arith.mulf %1421, %1425 : vector<2x32xf32>
    %1427 = vector.extract_strided_slice %566 {offsets = [0, 0, 0], sizes = [1, 2, 1], strides = [1, 1, 1]} : vector<8x2x1xf32> to vector<1x2x1xf32>
    %1428 = vector.shape_cast %1427 : vector<1x2x1xf32> to vector<2x1xf32>
    %1429 = vector.extract_strided_slice %566 {offsets = [7, 0, 0], sizes = [1, 2, 1], strides = [1, 1, 1]} : vector<8x2x1xf32> to vector<1x2x1xf32>
    %1430 = vector.shape_cast %1429 : vector<1x2x1xf32> to vector<2x1xf32>
    %1431 = vector.broadcast %1428 : vector<2x1xf32> to vector<2x32xf32>
    %1432 = arith.mulf %1431, %1401 : vector<2x32xf32>
    %cst_178 = arith.constant 1.000000e+00 : f32
    %1433 = vector.broadcast %cst_178 : f32 to vector<2x1xf32>
    %1434 = arith.subf %1433, %1428 : vector<2x1xf32>
    %1435 = vector.broadcast %1434 : vector<2x1xf32> to vector<2x32xf32>
    %1436 = arith.mulf %1435, %1362 : vector<2x32xf32>
    %1437 = arith.addf %1432, %1436 : vector<2x32xf32>
    %1438 = vector.broadcast %1428 : vector<2x1xf32> to vector<2x32xf32>
    %1439 = arith.mulf %1438, %1399 : vector<2x32xf32>
    %cst_179 = arith.constant 1.000000e+00 : f32
    %1440 = vector.broadcast %cst_179 : f32 to vector<2x1xf32>
    %1441 = arith.subf %1440, %1428 : vector<2x1xf32>
    %1442 = vector.broadcast %1441 : vector<2x1xf32> to vector<2x32xf32>
    %1443 = arith.mulf %1442, %1362 : vector<2x32xf32>
    %1444 = arith.addf %1439, %1443 : vector<2x32xf32>
    %1445 = vector.broadcast %1430 : vector<2x1xf32> to vector<2x32xf32>
    %1446 = arith.mulf %1445, %1426 : vector<2x32xf32>
    %cst_180 = arith.constant 1.000000e+00 : f32
    %1447 = vector.broadcast %cst_180 : f32 to vector<2x1xf32>
    %1448 = arith.subf %1447, %1430 : vector<2x1xf32>
    %1449 = vector.broadcast %1448 : vector<2x1xf32> to vector<2x32xf32>
    %1450 = arith.mulf %1449, %1362 : vector<2x32xf32>
    %1451 = arith.addf %1446, %1450 : vector<2x32xf32>
    %1452 = vector.broadcast %1430 : vector<2x1xf32> to vector<2x32xf32>
    %1453 = arith.mulf %1452, %1424 : vector<2x32xf32>
    %cst_181 = arith.constant 1.000000e+00 : f32
    %1454 = vector.broadcast %cst_181 : f32 to vector<2x1xf32>
    %1455 = arith.subf %1454, %1430 : vector<2x1xf32>
    %1456 = vector.broadcast %1455 : vector<2x1xf32> to vector<2x32xf32>
    %1457 = arith.mulf %1456, %1362 : vector<2x32xf32>
    %1458 = arith.addf %1453, %1457 : vector<2x32xf32>
    %1459 = vector.broadcast %1428 : vector<2x1xf32> to vector<2x32xf32>
    %1460 = arith.mulf %1459, %1401 : vector<2x32xf32>
    %1461 = vector.broadcast %1430 : vector<2x1xf32> to vector<2x32xf32>
    %1462 = arith.mulf %1461, %1426 : vector<2x32xf32>
    %1463 = tpu.concatenate %1437, %1451 in 1 : vector<2x32xf32>, vector<2x32xf32> -> vector<2x64xf32>
    %cst_182 = arith.constant dense<0.000000e+00> : vector<2x256xf32>
    %1464 = tpu.matmul %1463, %1358, %cst_182 {dimension_numbers = #tpu.dot_dimension_numbers<[1], [0], [0], [1], [0, 0, 1, 1], [], []>} : vector<2x64xf32>, vector<64x256xf32>, vector<2x256xf32> -> vector<2x256xf32>
    %1465 = vector.extract_strided_slice %1361 {offsets = [2, 0], sizes = [1, 256], strides = [1, 1]} : vector<16x256xf32> to vector<1x256xf32>
    %1466 = vector.extract_strided_slice %1361 {offsets = [3, 0], sizes = [1, 256], strides = [1, 1]} : vector<16x256xf32> to vector<1x256xf32>
    %1467 = tpu.concatenate %1465, %1466 in 0 : vector<1x256xf32>, vector<1x256xf32> -> vector<2x256xf32>
    %1468 = vector.extract_strided_slice %1467 {offsets = [0, 0], sizes = [2, 128], strides = [1, 1]} : vector<2x256xf32> to vector<2x128xf32>
    %1469 = vector.extract_strided_slice %1464 {offsets = [0, 0], sizes = [2, 128], strides = [1, 1]} : vector<2x256xf32> to vector<2x128xf32>
    %1470 = arith.addf %1468, %1469 : vector<2x128xf32>
    %1471 = vector.extract_strided_slice %1361 {offsets = [12, 0], sizes = [1, 256], strides = [1, 1]} : vector<16x256xf32> to vector<1x256xf32>
    %1472 = vector.extract_strided_slice %1361 {offsets = [13, 0], sizes = [1, 256], strides = [1, 1]} : vector<16x256xf32> to vector<1x256xf32>
    %1473 = tpu.concatenate %1471, %1472 in 0 : vector<1x256xf32>, vector<1x256xf32> -> vector<2x256xf32>
    %1474 = vector.extract_strided_slice %1473 {offsets = [0, 128], sizes = [2, 128], strides = [1, 1]} : vector<2x256xf32> to vector<2x128xf32>
    %1475 = vector.extract_strided_slice %1464 {offsets = [0, 128], sizes = [2, 128], strides = [1, 1]} : vector<2x256xf32> to vector<2x128xf32>
    %1476 = arith.addf %1474, %1475 : vector<2x128xf32>
    %1477 = vector.extract_strided_slice %1470 {offsets = [0, 0], sizes = [2, 32], strides = [1, 1]} : vector<2x128xf32> to vector<2x32xf32>
    %1478 = arith.negf %1477 : vector<2x32xf32>
    %1479 = math.exp %1478 : vector<2x32xf32>
    %cst_183 = arith.constant 1.000000e+00 : f32
    %1480 = vector.broadcast %cst_183 : f32 to vector<2x32xf32>
    %1481 = arith.addf %1480, %1479 : vector<2x32xf32>
    %1482 = arith.divf %1480, %1481 : vector<2x32xf32>
    %1483 = vector.extract_strided_slice %1470 {offsets = [0, 32], sizes = [2, 32], strides = [1, 1]} : vector<2x128xf32> to vector<2x32xf32>
    %1484 = arith.negf %1483 : vector<2x32xf32>
    %1485 = math.exp %1484 : vector<2x32xf32>
    %cst_184 = arith.constant 1.000000e+00 : f32
    %1486 = vector.broadcast %cst_184 : f32 to vector<2x32xf32>
    %1487 = arith.addf %1486, %1485 : vector<2x32xf32>
    %1488 = arith.divf %1486, %1487 : vector<2x32xf32>
    %1489 = vector.extract_strided_slice %1470 {offsets = [0, 64], sizes = [2, 32], strides = [1, 1]} : vector<2x128xf32> to vector<2x32xf32>
    %1490 = math.tanh %1489 : vector<2x32xf32>
    %1491 = vector.extract_strided_slice %1470 {offsets = [0, 96], sizes = [2, 32], strides = [1, 1]} : vector<2x128xf32> to vector<2x32xf32>
    %1492 = arith.negf %1491 : vector<2x32xf32>
    %1493 = math.exp %1492 : vector<2x32xf32>
    %cst_185 = arith.constant 1.000000e+00 : f32
    %1494 = vector.broadcast %cst_185 : f32 to vector<2x32xf32>
    %1495 = arith.addf %1494, %1493 : vector<2x32xf32>
    %1496 = arith.divf %1494, %1495 : vector<2x32xf32>
    %1497 = arith.mulf %1488, %1444 : vector<2x32xf32>
    %1498 = arith.mulf %1482, %1490 : vector<2x32xf32>
    %1499 = arith.addf %1497, %1498 : vector<2x32xf32>
    %1500 = math.tanh %1499 : vector<2x32xf32>
    %1501 = arith.mulf %1496, %1500 : vector<2x32xf32>
    %1502 = vector.extract_strided_slice %1476 {offsets = [0, 0], sizes = [2, 32], strides = [1, 1]} : vector<2x128xf32> to vector<2x32xf32>
    %1503 = arith.negf %1502 : vector<2x32xf32>
    %1504 = math.exp %1503 : vector<2x32xf32>
    %cst_186 = arith.constant 1.000000e+00 : f32
    %1505 = vector.broadcast %cst_186 : f32 to vector<2x32xf32>
    %1506 = arith.addf %1505, %1504 : vector<2x32xf32>
    %1507 = arith.divf %1505, %1506 : vector<2x32xf32>
    %1508 = vector.extract_strided_slice %1476 {offsets = [0, 32], sizes = [2, 32], strides = [1, 1]} : vector<2x128xf32> to vector<2x32xf32>
    %1509 = arith.negf %1508 : vector<2x32xf32>
    %1510 = math.exp %1509 : vector<2x32xf32>
    %cst_187 = arith.constant 1.000000e+00 : f32
    %1511 = vector.broadcast %cst_187 : f32 to vector<2x32xf32>
    %1512 = arith.addf %1511, %1510 : vector<2x32xf32>
    %1513 = arith.divf %1511, %1512 : vector<2x32xf32>
    %1514 = vector.extract_strided_slice %1476 {offsets = [0, 64], sizes = [2, 32], strides = [1, 1]} : vector<2x128xf32> to vector<2x32xf32>
    %1515 = math.tanh %1514 : vector<2x32xf32>
    %1516 = vector.extract_strided_slice %1476 {offsets = [0, 96], sizes = [2, 32], strides = [1, 1]} : vector<2x128xf32> to vector<2x32xf32>
    %1517 = arith.negf %1516 : vector<2x32xf32>
    %1518 = math.exp %1517 : vector<2x32xf32>
    %cst_188 = arith.constant 1.000000e+00 : f32
    %1519 = vector.broadcast %cst_188 : f32 to vector<2x32xf32>
    %1520 = arith.addf %1519, %1518 : vector<2x32xf32>
    %1521 = arith.divf %1519, %1520 : vector<2x32xf32>
    %1522 = arith.mulf %1513, %1458 : vector<2x32xf32>
    %1523 = arith.mulf %1507, %1515 : vector<2x32xf32>
    %1524 = arith.addf %1522, %1523 : vector<2x32xf32>
    %1525 = math.tanh %1524 : vector<2x32xf32>
    %1526 = arith.mulf %1521, %1525 : vector<2x32xf32>
    %1527 = vector.extract_strided_slice %566 {offsets = [1, 0, 0], sizes = [1, 2, 1], strides = [1, 1, 1]} : vector<8x2x1xf32> to vector<1x2x1xf32>
    %1528 = vector.shape_cast %1527 : vector<1x2x1xf32> to vector<2x1xf32>
    %1529 = vector.extract_strided_slice %566 {offsets = [6, 0, 0], sizes = [1, 2, 1], strides = [1, 1, 1]} : vector<8x2x1xf32> to vector<1x2x1xf32>
    %1530 = vector.shape_cast %1529 : vector<1x2x1xf32> to vector<2x1xf32>
    %1531 = vector.broadcast %1528 : vector<2x1xf32> to vector<2x32xf32>
    %1532 = arith.mulf %1531, %1501 : vector<2x32xf32>
    %cst_189 = arith.constant 1.000000e+00 : f32
    %1533 = vector.broadcast %cst_189 : f32 to vector<2x1xf32>
    %1534 = arith.subf %1533, %1528 : vector<2x1xf32>
    %1535 = vector.broadcast %1534 : vector<2x1xf32> to vector<2x32xf32>
    %1536 = arith.mulf %1535, %1437 : vector<2x32xf32>
    %1537 = arith.addf %1532, %1536 : vector<2x32xf32>
    %1538 = vector.broadcast %1528 : vector<2x1xf32> to vector<2x32xf32>
    %1539 = arith.mulf %1538, %1499 : vector<2x32xf32>
    %cst_190 = arith.constant 1.000000e+00 : f32
    %1540 = vector.broadcast %cst_190 : f32 to vector<2x1xf32>
    %1541 = arith.subf %1540, %1528 : vector<2x1xf32>
    %1542 = vector.broadcast %1541 : vector<2x1xf32> to vector<2x32xf32>
    %1543 = arith.mulf %1542, %1444 : vector<2x32xf32>
    %1544 = arith.addf %1539, %1543 : vector<2x32xf32>
    %1545 = vector.broadcast %1530 : vector<2x1xf32> to vector<2x32xf32>
    %1546 = arith.mulf %1545, %1526 : vector<2x32xf32>
    %cst_191 = arith.constant 1.000000e+00 : f32
    %1547 = vector.broadcast %cst_191 : f32 to vector<2x1xf32>
    %1548 = arith.subf %1547, %1530 : vector<2x1xf32>
    %1549 = vector.broadcast %1548 : vector<2x1xf32> to vector<2x32xf32>
    %1550 = arith.mulf %1549, %1451 : vector<2x32xf32>
    %1551 = arith.addf %1546, %1550 : vector<2x32xf32>
    %1552 = vector.broadcast %1530 : vector<2x1xf32> to vector<2x32xf32>
    %1553 = arith.mulf %1552, %1524 : vector<2x32xf32>
    %cst_192 = arith.constant 1.000000e+00 : f32
    %1554 = vector.broadcast %cst_192 : f32 to vector<2x1xf32>
    %1555 = arith.subf %1554, %1530 : vector<2x1xf32>
    %1556 = vector.broadcast %1555 : vector<2x1xf32> to vector<2x32xf32>
    %1557 = arith.mulf %1556, %1458 : vector<2x32xf32>
    %1558 = arith.addf %1553, %1557 : vector<2x32xf32>
    %1559 = vector.broadcast %1528 : vector<2x1xf32> to vector<2x32xf32>
    %1560 = arith.mulf %1559, %1501 : vector<2x32xf32>
    %1561 = vector.broadcast %1530 : vector<2x1xf32> to vector<2x32xf32>
    %1562 = arith.mulf %1561, %1526 : vector<2x32xf32>
    %1563 = tpu.concatenate %1537, %1551 in 1 : vector<2x32xf32>, vector<2x32xf32> -> vector<2x64xf32>
    %cst_193 = arith.constant dense<0.000000e+00> : vector<2x256xf32>
    %1564 = tpu.matmul %1563, %1358, %cst_193 {dimension_numbers = #tpu.dot_dimension_numbers<[1], [0], [0], [1], [0, 0, 1, 1], [], []>} : vector<2x64xf32>, vector<64x256xf32>, vector<2x256xf32> -> vector<2x256xf32>
    %1565 = vector.extract_strided_slice %1361 {offsets = [4, 0], sizes = [1, 256], strides = [1, 1]} : vector<16x256xf32> to vector<1x256xf32>
    %1566 = vector.extract_strided_slice %1361 {offsets = [5, 0], sizes = [1, 256], strides = [1, 1]} : vector<16x256xf32> to vector<1x256xf32>
    %1567 = tpu.concatenate %1565, %1566 in 0 : vector<1x256xf32>, vector<1x256xf32> -> vector<2x256xf32>
    %1568 = vector.extract_strided_slice %1567 {offsets = [0, 0], sizes = [2, 128], strides = [1, 1]} : vector<2x256xf32> to vector<2x128xf32>
    %1569 = vector.extract_strided_slice %1564 {offsets = [0, 0], sizes = [2, 128], strides = [1, 1]} : vector<2x256xf32> to vector<2x128xf32>
    %1570 = arith.addf %1568, %1569 : vector<2x128xf32>
    %1571 = vector.extract_strided_slice %1361 {offsets = [10, 0], sizes = [1, 256], strides = [1, 1]} : vector<16x256xf32> to vector<1x256xf32>
    %1572 = vector.extract_strided_slice %1361 {offsets = [11, 0], sizes = [1, 256], strides = [1, 1]} : vector<16x256xf32> to vector<1x256xf32>
    %1573 = tpu.concatenate %1571, %1572 in 0 : vector<1x256xf32>, vector<1x256xf32> -> vector<2x256xf32>
    %1574 = vector.extract_strided_slice %1573 {offsets = [0, 128], sizes = [2, 128], strides = [1, 1]} : vector<2x256xf32> to vector<2x128xf32>
    %1575 = vector.extract_strided_slice %1564 {offsets = [0, 128], sizes = [2, 128], strides = [1, 1]} : vector<2x256xf32> to vector<2x128xf32>
    %1576 = arith.addf %1574, %1575 : vector<2x128xf32>
    %1577 = vector.extract_strided_slice %1570 {offsets = [0, 0], sizes = [2, 32], strides = [1, 1]} : vector<2x128xf32> to vector<2x32xf32>
    %1578 = arith.negf %1577 : vector<2x32xf32>
    %1579 = math.exp %1578 : vector<2x32xf32>
    %cst_194 = arith.constant 1.000000e+00 : f32
    %1580 = vector.broadcast %cst_194 : f32 to vector<2x32xf32>
    %1581 = arith.addf %1580, %1579 : vector<2x32xf32>
    %1582 = arith.divf %1580, %1581 : vector<2x32xf32>
    %1583 = vector.extract_strided_slice %1570 {offsets = [0, 32], sizes = [2, 32], strides = [1, 1]} : vector<2x128xf32> to vector<2x32xf32>
    %1584 = arith.negf %1583 : vector<2x32xf32>
    %1585 = math.exp %1584 : vector<2x32xf32>
    %cst_195 = arith.constant 1.000000e+00 : f32
    %1586 = vector.broadcast %cst_195 : f32 to vector<2x32xf32>
    %1587 = arith.addf %1586, %1585 : vector<2x32xf32>
    %1588 = arith.divf %1586, %1587 : vector<2x32xf32>
    %1589 = vector.extract_strided_slice %1570 {offsets = [0, 64], sizes = [2, 32], strides = [1, 1]} : vector<2x128xf32> to vector<2x32xf32>
    %1590 = math.tanh %1589 : vector<2x32xf32>
    %1591 = vector.extract_strided_slice %1570 {offsets = [0, 96], sizes = [2, 32], strides = [1, 1]} : vector<2x128xf32> to vector<2x32xf32>
    %1592 = arith.negf %1591 : vector<2x32xf32>
    %1593 = math.exp %1592 : vector<2x32xf32>
    %cst_196 = arith.constant 1.000000e+00 : f32
    %1594 = vector.broadcast %cst_196 : f32 to vector<2x32xf32>
    %1595 = arith.addf %1594, %1593 : vector<2x32xf32>
    %1596 = arith.divf %1594, %1595 : vector<2x32xf32>
    %1597 = arith.mulf %1588, %1544 : vector<2x32xf32>
    %1598 = arith.mulf %1582, %1590 : vector<2x32xf32>
    %1599 = arith.addf %1597, %1598 : vector<2x32xf32>
    %1600 = math.tanh %1599 : vector<2x32xf32>
    %1601 = arith.mulf %1596, %1600 : vector<2x32xf32>
    %1602 = vector.extract_strided_slice %1576 {offsets = [0, 0], sizes = [2, 32], strides = [1, 1]} : vector<2x128xf32> to vector<2x32xf32>
    %1603 = arith.negf %1602 : vector<2x32xf32>
    %1604 = math.exp %1603 : vector<2x32xf32>
    %cst_197 = arith.constant 1.000000e+00 : f32
    %1605 = vector.broadcast %cst_197 : f32 to vector<2x32xf32>
    %1606 = arith.addf %1605, %1604 : vector<2x32xf32>
    %1607 = arith.divf %1605, %1606 : vector<2x32xf32>
    %1608 = vector.extract_strided_slice %1576 {offsets = [0, 32], sizes = [2, 32], strides = [1, 1]} : vector<2x128xf32> to vector<2x32xf32>
    %1609 = arith.negf %1608 : vector<2x32xf32>
    %1610 = math.exp %1609 : vector<2x32xf32>
    %cst_198 = arith.constant 1.000000e+00 : f32
    %1611 = vector.broadcast %cst_198 : f32 to vector<2x32xf32>
    %1612 = arith.addf %1611, %1610 : vector<2x32xf32>
    %1613 = arith.divf %1611, %1612 : vector<2x32xf32>
    %1614 = vector.extract_strided_slice %1576 {offsets = [0, 64], sizes = [2, 32], strides = [1, 1]} : vector<2x128xf32> to vector<2x32xf32>
    %1615 = math.tanh %1614 : vector<2x32xf32>
    %1616 = vector.extract_strided_slice %1576 {offsets = [0, 96], sizes = [2, 32], strides = [1, 1]} : vector<2x128xf32> to vector<2x32xf32>
    %1617 = arith.negf %1616 : vector<2x32xf32>
    %1618 = math.exp %1617 : vector<2x32xf32>
    %cst_199 = arith.constant 1.000000e+00 : f32
    %1619 = vector.broadcast %cst_199 : f32 to vector<2x32xf32>
    %1620 = arith.addf %1619, %1618 : vector<2x32xf32>
    %1621 = arith.divf %1619, %1620 : vector<2x32xf32>
    %1622 = arith.mulf %1613, %1558 : vector<2x32xf32>
    %1623 = arith.mulf %1607, %1615 : vector<2x32xf32>
    %1624 = arith.addf %1622, %1623 : vector<2x32xf32>
    %1625 = math.tanh %1624 : vector<2x32xf32>
    %1626 = arith.mulf %1621, %1625 : vector<2x32xf32>
    %1627 = vector.extract_strided_slice %566 {offsets = [2, 0, 0], sizes = [1, 2, 1], strides = [1, 1, 1]} : vector<8x2x1xf32> to vector<1x2x1xf32>
    %1628 = vector.shape_cast %1627 : vector<1x2x1xf32> to vector<2x1xf32>
    %1629 = vector.extract_strided_slice %566 {offsets = [5, 0, 0], sizes = [1, 2, 1], strides = [1, 1, 1]} : vector<8x2x1xf32> to vector<1x2x1xf32>
    %1630 = vector.shape_cast %1629 : vector<1x2x1xf32> to vector<2x1xf32>
    %1631 = vector.broadcast %1628 : vector<2x1xf32> to vector<2x32xf32>
    %1632 = arith.mulf %1631, %1601 : vector<2x32xf32>
    %cst_200 = arith.constant 1.000000e+00 : f32
    %1633 = vector.broadcast %cst_200 : f32 to vector<2x1xf32>
    %1634 = arith.subf %1633, %1628 : vector<2x1xf32>
    %1635 = vector.broadcast %1634 : vector<2x1xf32> to vector<2x32xf32>
    %1636 = arith.mulf %1635, %1537 : vector<2x32xf32>
    %1637 = arith.addf %1632, %1636 : vector<2x32xf32>
    %1638 = vector.broadcast %1628 : vector<2x1xf32> to vector<2x32xf32>
    %1639 = arith.mulf %1638, %1599 : vector<2x32xf32>
    %cst_201 = arith.constant 1.000000e+00 : f32
    %1640 = vector.broadcast %cst_201 : f32 to vector<2x1xf32>
    %1641 = arith.subf %1640, %1628 : vector<2x1xf32>
    %1642 = vector.broadcast %1641 : vector<2x1xf32> to vector<2x32xf32>
    %1643 = arith.mulf %1642, %1544 : vector<2x32xf32>
    %1644 = arith.addf %1639, %1643 : vector<2x32xf32>
    %1645 = vector.broadcast %1630 : vector<2x1xf32> to vector<2x32xf32>
    %1646 = arith.mulf %1645, %1626 : vector<2x32xf32>
    %cst_202 = arith.constant 1.000000e+00 : f32
    %1647 = vector.broadcast %cst_202 : f32 to vector<2x1xf32>
    %1648 = arith.subf %1647, %1630 : vector<2x1xf32>
    %1649 = vector.broadcast %1648 : vector<2x1xf32> to vector<2x32xf32>
    %1650 = arith.mulf %1649, %1551 : vector<2x32xf32>
    %1651 = arith.addf %1646, %1650 : vector<2x32xf32>
    %1652 = vector.broadcast %1630 : vector<2x1xf32> to vector<2x32xf32>
    %1653 = arith.mulf %1652, %1624 : vector<2x32xf32>
    %cst_203 = arith.constant 1.000000e+00 : f32
    %1654 = vector.broadcast %cst_203 : f32 to vector<2x1xf32>
    %1655 = arith.subf %1654, %1630 : vector<2x1xf32>
    %1656 = vector.broadcast %1655 : vector<2x1xf32> to vector<2x32xf32>
    %1657 = arith.mulf %1656, %1558 : vector<2x32xf32>
    %1658 = arith.addf %1653, %1657 : vector<2x32xf32>
    %1659 = vector.broadcast %1628 : vector<2x1xf32> to vector<2x32xf32>
    %1660 = arith.mulf %1659, %1601 : vector<2x32xf32>
    %1661 = vector.broadcast %1630 : vector<2x1xf32> to vector<2x32xf32>
    %1662 = arith.mulf %1661, %1626 : vector<2x32xf32>
    %1663 = tpu.concatenate %1637, %1651 in 1 : vector<2x32xf32>, vector<2x32xf32> -> vector<2x64xf32>
    %cst_204 = arith.constant dense<0.000000e+00> : vector<2x256xf32>
    %1664 = tpu.matmul %1663, %1358, %cst_204 {dimension_numbers = #tpu.dot_dimension_numbers<[1], [0], [0], [1], [0, 0, 1, 1], [], []>} : vector<2x64xf32>, vector<64x256xf32>, vector<2x256xf32> -> vector<2x256xf32>
    %1665 = vector.extract_strided_slice %1361 {offsets = [6, 0], sizes = [1, 256], strides = [1, 1]} : vector<16x256xf32> to vector<1x256xf32>
    %1666 = vector.extract_strided_slice %1361 {offsets = [7, 0], sizes = [1, 256], strides = [1, 1]} : vector<16x256xf32> to vector<1x256xf32>
    %1667 = tpu.concatenate %1665, %1666 in 0 : vector<1x256xf32>, vector<1x256xf32> -> vector<2x256xf32>
    %1668 = vector.extract_strided_slice %1667 {offsets = [0, 0], sizes = [2, 128], strides = [1, 1]} : vector<2x256xf32> to vector<2x128xf32>
    %1669 = vector.extract_strided_slice %1664 {offsets = [0, 0], sizes = [2, 128], strides = [1, 1]} : vector<2x256xf32> to vector<2x128xf32>
    %1670 = arith.addf %1668, %1669 : vector<2x128xf32>
    %1671 = vector.extract_strided_slice %1361 {offsets = [8, 0], sizes = [1, 256], strides = [1, 1]} : vector<16x256xf32> to vector<1x256xf32>
    %1672 = vector.extract_strided_slice %1361 {offsets = [9, 0], sizes = [1, 256], strides = [1, 1]} : vector<16x256xf32> to vector<1x256xf32>
    %1673 = tpu.concatenate %1671, %1672 in 0 : vector<1x256xf32>, vector<1x256xf32> -> vector<2x256xf32>
    %1674 = vector.extract_strided_slice %1673 {offsets = [0, 128], sizes = [2, 128], strides = [1, 1]} : vector<2x256xf32> to vector<2x128xf32>
    %1675 = vector.extract_strided_slice %1664 {offsets = [0, 128], sizes = [2, 128], strides = [1, 1]} : vector<2x256xf32> to vector<2x128xf32>
    %1676 = arith.addf %1674, %1675 : vector<2x128xf32>
    %1677 = vector.extract_strided_slice %1670 {offsets = [0, 0], sizes = [2, 32], strides = [1, 1]} : vector<2x128xf32> to vector<2x32xf32>
    %1678 = arith.negf %1677 : vector<2x32xf32>
    %1679 = math.exp %1678 : vector<2x32xf32>
    %cst_205 = arith.constant 1.000000e+00 : f32
    %1680 = vector.broadcast %cst_205 : f32 to vector<2x32xf32>
    %1681 = arith.addf %1680, %1679 : vector<2x32xf32>
    %1682 = arith.divf %1680, %1681 : vector<2x32xf32>
    %1683 = vector.extract_strided_slice %1670 {offsets = [0, 32], sizes = [2, 32], strides = [1, 1]} : vector<2x128xf32> to vector<2x32xf32>
    %1684 = arith.negf %1683 : vector<2x32xf32>
    %1685 = math.exp %1684 : vector<2x32xf32>
    %cst_206 = arith.constant 1.000000e+00 : f32
    %1686 = vector.broadcast %cst_206 : f32 to vector<2x32xf32>
    %1687 = arith.addf %1686, %1685 : vector<2x32xf32>
    %1688 = arith.divf %1686, %1687 : vector<2x32xf32>
    %1689 = vector.extract_strided_slice %1670 {offsets = [0, 64], sizes = [2, 32], strides = [1, 1]} : vector<2x128xf32> to vector<2x32xf32>
    %1690 = math.tanh %1689 : vector<2x32xf32>
    %1691 = vector.extract_strided_slice %1670 {offsets = [0, 96], sizes = [2, 32], strides = [1, 1]} : vector<2x128xf32> to vector<2x32xf32>
    %1692 = arith.negf %1691 : vector<2x32xf32>
    %1693 = math.exp %1692 : vector<2x32xf32>
    %cst_207 = arith.constant 1.000000e+00 : f32
    %1694 = vector.broadcast %cst_207 : f32 to vector<2x32xf32>
    %1695 = arith.addf %1694, %1693 : vector<2x32xf32>
    %1696 = arith.divf %1694, %1695 : vector<2x32xf32>
    %1697 = arith.mulf %1688, %1644 : vector<2x32xf32>
    %1698 = arith.mulf %1682, %1690 : vector<2x32xf32>
    %1699 = arith.addf %1697, %1698 : vector<2x32xf32>
    %1700 = math.tanh %1699 : vector<2x32xf32>
    %1701 = arith.mulf %1696, %1700 : vector<2x32xf32>
    %1702 = vector.extract_strided_slice %1676 {offsets = [0, 0], sizes = [2, 32], strides = [1, 1]} : vector<2x128xf32> to vector<2x32xf32>
    %1703 = arith.negf %1702 : vector<2x32xf32>
    %1704 = math.exp %1703 : vector<2x32xf32>
    %cst_208 = arith.constant 1.000000e+00 : f32
    %1705 = vector.broadcast %cst_208 : f32 to vector<2x32xf32>
    %1706 = arith.addf %1705, %1704 : vector<2x32xf32>
    %1707 = arith.divf %1705, %1706 : vector<2x32xf32>
    %1708 = vector.extract_strided_slice %1676 {offsets = [0, 32], sizes = [2, 32], strides = [1, 1]} : vector<2x128xf32> to vector<2x32xf32>
    %1709 = arith.negf %1708 : vector<2x32xf32>
    %1710 = math.exp %1709 : vector<2x32xf32>
    %cst_209 = arith.constant 1.000000e+00 : f32
    %1711 = vector.broadcast %cst_209 : f32 to vector<2x32xf32>
    %1712 = arith.addf %1711, %1710 : vector<2x32xf32>
    %1713 = arith.divf %1711, %1712 : vector<2x32xf32>
    %1714 = vector.extract_strided_slice %1676 {offsets = [0, 64], sizes = [2, 32], strides = [1, 1]} : vector<2x128xf32> to vector<2x32xf32>
    %1715 = math.tanh %1714 : vector<2x32xf32>
    %1716 = vector.extract_strided_slice %1676 {offsets = [0, 96], sizes = [2, 32], strides = [1, 1]} : vector<2x128xf32> to vector<2x32xf32>
    %1717 = arith.negf %1716 : vector<2x32xf32>
    %1718 = math.exp %1717 : vector<2x32xf32>
    %cst_210 = arith.constant 1.000000e+00 : f32
    %1719 = vector.broadcast %cst_210 : f32 to vector<2x32xf32>
    %1720 = arith.addf %1719, %1718 : vector<2x32xf32>
    %1721 = arith.divf %1719, %1720 : vector<2x32xf32>
    %1722 = arith.mulf %1713, %1658 : vector<2x32xf32>
    %1723 = arith.mulf %1707, %1715 : vector<2x32xf32>
    %1724 = arith.addf %1722, %1723 : vector<2x32xf32>
    %1725 = math.tanh %1724 : vector<2x32xf32>
    %1726 = arith.mulf %1721, %1725 : vector<2x32xf32>
    %1727 = vector.extract_strided_slice %566 {offsets = [3, 0, 0], sizes = [1, 2, 1], strides = [1, 1, 1]} : vector<8x2x1xf32> to vector<1x2x1xf32>
    %1728 = vector.shape_cast %1727 : vector<1x2x1xf32> to vector<2x1xf32>
    %1729 = vector.extract_strided_slice %566 {offsets = [4, 0, 0], sizes = [1, 2, 1], strides = [1, 1, 1]} : vector<8x2x1xf32> to vector<1x2x1xf32>
    %1730 = vector.shape_cast %1729 : vector<1x2x1xf32> to vector<2x1xf32>
    %1731 = vector.broadcast %1728 : vector<2x1xf32> to vector<2x32xf32>
    %1732 = arith.mulf %1731, %1701 : vector<2x32xf32>
    %cst_211 = arith.constant 1.000000e+00 : f32
    %1733 = vector.broadcast %cst_211 : f32 to vector<2x1xf32>
    %1734 = arith.subf %1733, %1728 : vector<2x1xf32>
    %1735 = vector.broadcast %1734 : vector<2x1xf32> to vector<2x32xf32>
    %1736 = arith.mulf %1735, %1637 : vector<2x32xf32>
    %1737 = arith.addf %1732, %1736 : vector<2x32xf32>
    %1738 = vector.broadcast %1728 : vector<2x1xf32> to vector<2x32xf32>
    %1739 = arith.mulf %1738, %1699 : vector<2x32xf32>
    %cst_212 = arith.constant 1.000000e+00 : f32
    %1740 = vector.broadcast %cst_212 : f32 to vector<2x1xf32>
    %1741 = arith.subf %1740, %1728 : vector<2x1xf32>
    %1742 = vector.broadcast %1741 : vector<2x1xf32> to vector<2x32xf32>
    %1743 = arith.mulf %1742, %1644 : vector<2x32xf32>
    %1744 = arith.addf %1739, %1743 : vector<2x32xf32>
    %1745 = vector.broadcast %1730 : vector<2x1xf32> to vector<2x32xf32>
    %1746 = arith.mulf %1745, %1726 : vector<2x32xf32>
    %cst_213 = arith.constant 1.000000e+00 : f32
    %1747 = vector.broadcast %cst_213 : f32 to vector<2x1xf32>
    %1748 = arith.subf %1747, %1730 : vector<2x1xf32>
    %1749 = vector.broadcast %1748 : vector<2x1xf32> to vector<2x32xf32>
    %1750 = arith.mulf %1749, %1651 : vector<2x32xf32>
    %1751 = arith.addf %1746, %1750 : vector<2x32xf32>
    %1752 = vector.broadcast %1730 : vector<2x1xf32> to vector<2x32xf32>
    %1753 = arith.mulf %1752, %1724 : vector<2x32xf32>
    %cst_214 = arith.constant 1.000000e+00 : f32
    %1754 = vector.broadcast %cst_214 : f32 to vector<2x1xf32>
    %1755 = arith.subf %1754, %1730 : vector<2x1xf32>
    %1756 = vector.broadcast %1755 : vector<2x1xf32> to vector<2x32xf32>
    %1757 = arith.mulf %1756, %1658 : vector<2x32xf32>
    %1758 = arith.addf %1753, %1757 : vector<2x32xf32>
    %1759 = vector.broadcast %1728 : vector<2x1xf32> to vector<2x32xf32>
    %1760 = arith.mulf %1759, %1701 : vector<2x32xf32>
    %1761 = vector.broadcast %1730 : vector<2x1xf32> to vector<2x32xf32>
    %1762 = arith.mulf %1761, %1726 : vector<2x32xf32>
    %1763 = tpu.concatenate %1737, %1751 in 1 : vector<2x32xf32>, vector<2x32xf32> -> vector<2x64xf32>
    %cst_215 = arith.constant dense<0.000000e+00> : vector<2x256xf32>
    %1764 = tpu.matmul %1763, %1358, %cst_215 {dimension_numbers = #tpu.dot_dimension_numbers<[1], [0], [0], [1], [0, 0, 1, 1], [], []>} : vector<2x64xf32>, vector<64x256xf32>, vector<2x256xf32> -> vector<2x256xf32>
    %1765 = vector.extract_strided_slice %1361 {offsets = [8, 0], sizes = [1, 256], strides = [1, 1]} : vector<16x256xf32> to vector<1x256xf32>
    %1766 = vector.extract_strided_slice %1361 {offsets = [9, 0], sizes = [1, 256], strides = [1, 1]} : vector<16x256xf32> to vector<1x256xf32>
    %1767 = tpu.concatenate %1765, %1766 in 0 : vector<1x256xf32>, vector<1x256xf32> -> vector<2x256xf32>
    %1768 = vector.extract_strided_slice %1767 {offsets = [0, 0], sizes = [2, 128], strides = [1, 1]} : vector<2x256xf32> to vector<2x128xf32>
    %1769 = vector.extract_strided_slice %1764 {offsets = [0, 0], sizes = [2, 128], strides = [1, 1]} : vector<2x256xf32> to vector<2x128xf32>
    %1770 = arith.addf %1768, %1769 : vector<2x128xf32>
    %1771 = vector.extract_strided_slice %1361 {offsets = [6, 0], sizes = [1, 256], strides = [1, 1]} : vector<16x256xf32> to vector<1x256xf32>
    %1772 = vector.extract_strided_slice %1361 {offsets = [7, 0], sizes = [1, 256], strides = [1, 1]} : vector<16x256xf32> to vector<1x256xf32>
    %1773 = tpu.concatenate %1771, %1772 in 0 : vector<1x256xf32>, vector<1x256xf32> -> vector<2x256xf32>
    %1774 = vector.extract_strided_slice %1773 {offsets = [0, 128], sizes = [2, 128], strides = [1, 1]} : vector<2x256xf32> to vector<2x128xf32>
    %1775 = vector.extract_strided_slice %1764 {offsets = [0, 128], sizes = [2, 128], strides = [1, 1]} : vector<2x256xf32> to vector<2x128xf32>
    %1776 = arith.addf %1774, %1775 : vector<2x128xf32>
    %1777 = vector.extract_strided_slice %1770 {offsets = [0, 0], sizes = [2, 32], strides = [1, 1]} : vector<2x128xf32> to vector<2x32xf32>
    %1778 = arith.negf %1777 : vector<2x32xf32>
    %1779 = math.exp %1778 : vector<2x32xf32>
    %cst_216 = arith.constant 1.000000e+00 : f32
    %1780 = vector.broadcast %cst_216 : f32 to vector<2x32xf32>
    %1781 = arith.addf %1780, %1779 : vector<2x32xf32>
    %1782 = arith.divf %1780, %1781 : vector<2x32xf32>
    %1783 = vector.extract_strided_slice %1770 {offsets = [0, 32], sizes = [2, 32], strides = [1, 1]} : vector<2x128xf32> to vector<2x32xf32>
    %1784 = arith.negf %1783 : vector<2x32xf32>
    %1785 = math.exp %1784 : vector<2x32xf32>
    %cst_217 = arith.constant 1.000000e+00 : f32
    %1786 = vector.broadcast %cst_217 : f32 to vector<2x32xf32>
    %1787 = arith.addf %1786, %1785 : vector<2x32xf32>
    %1788 = arith.divf %1786, %1787 : vector<2x32xf32>
    %1789 = vector.extract_strided_slice %1770 {offsets = [0, 64], sizes = [2, 32], strides = [1, 1]} : vector<2x128xf32> to vector<2x32xf32>
    %1790 = math.tanh %1789 : vector<2x32xf32>
    %1791 = vector.extract_strided_slice %1770 {offsets = [0, 96], sizes = [2, 32], strides = [1, 1]} : vector<2x128xf32> to vector<2x32xf32>
    %1792 = arith.negf %1791 : vector<2x32xf32>
    %1793 = math.exp %1792 : vector<2x32xf32>
    %cst_218 = arith.constant 1.000000e+00 : f32
    %1794 = vector.broadcast %cst_218 : f32 to vector<2x32xf32>
    %1795 = arith.addf %1794, %1793 : vector<2x32xf32>
    %1796 = arith.divf %1794, %1795 : vector<2x32xf32>
    %1797 = arith.mulf %1788, %1744 : vector<2x32xf32>
    %1798 = arith.mulf %1782, %1790 : vector<2x32xf32>
    %1799 = arith.addf %1797, %1798 : vector<2x32xf32>
    %1800 = math.tanh %1799 : vector<2x32xf32>
    %1801 = arith.mulf %1796, %1800 : vector<2x32xf32>
    %1802 = vector.extract_strided_slice %1776 {offsets = [0, 0], sizes = [2, 32], strides = [1, 1]} : vector<2x128xf32> to vector<2x32xf32>
    %1803 = arith.negf %1802 : vector<2x32xf32>
    %1804 = math.exp %1803 : vector<2x32xf32>
    %cst_219 = arith.constant 1.000000e+00 : f32
    %1805 = vector.broadcast %cst_219 : f32 to vector<2x32xf32>
    %1806 = arith.addf %1805, %1804 : vector<2x32xf32>
    %1807 = arith.divf %1805, %1806 : vector<2x32xf32>
    %1808 = vector.extract_strided_slice %1776 {offsets = [0, 32], sizes = [2, 32], strides = [1, 1]} : vector<2x128xf32> to vector<2x32xf32>
    %1809 = arith.negf %1808 : vector<2x32xf32>
    %1810 = math.exp %1809 : vector<2x32xf32>
    %cst_220 = arith.constant 1.000000e+00 : f32
    %1811 = vector.broadcast %cst_220 : f32 to vector<2x32xf32>
    %1812 = arith.addf %1811, %1810 : vector<2x32xf32>
    %1813 = arith.divf %1811, %1812 : vector<2x32xf32>
    %1814 = vector.extract_strided_slice %1776 {offsets = [0, 64], sizes = [2, 32], strides = [1, 1]} : vector<2x128xf32> to vector<2x32xf32>
    %1815 = math.tanh %1814 : vector<2x32xf32>
    %1816 = vector.extract_strided_slice %1776 {offsets = [0, 96], sizes = [2, 32], strides = [1, 1]} : vector<2x128xf32> to vector<2x32xf32>
    %1817 = arith.negf %1816 : vector<2x32xf32>
    %1818 = math.exp %1817 : vector<2x32xf32>
    %cst_221 = arith.constant 1.000000e+00 : f32
    %1819 = vector.broadcast %cst_221 : f32 to vector<2x32xf32>
    %1820 = arith.addf %1819, %1818 : vector<2x32xf32>
    %1821 = arith.divf %1819, %1820 : vector<2x32xf32>
    %1822 = arith.mulf %1813, %1758 : vector<2x32xf32>
    %1823 = arith.mulf %1807, %1815 : vector<2x32xf32>
    %1824 = arith.addf %1822, %1823 : vector<2x32xf32>
    %1825 = math.tanh %1824 : vector<2x32xf32>
    %1826 = arith.mulf %1821, %1825 : vector<2x32xf32>
    %1827 = vector.extract_strided_slice %566 {offsets = [4, 0, 0], sizes = [1, 2, 1], strides = [1, 1, 1]} : vector<8x2x1xf32> to vector<1x2x1xf32>
    %1828 = vector.shape_cast %1827 : vector<1x2x1xf32> to vector<2x1xf32>
    %1829 = vector.extract_strided_slice %566 {offsets = [3, 0, 0], sizes = [1, 2, 1], strides = [1, 1, 1]} : vector<8x2x1xf32> to vector<1x2x1xf32>
    %1830 = vector.shape_cast %1829 : vector<1x2x1xf32> to vector<2x1xf32>
    %1831 = vector.broadcast %1828 : vector<2x1xf32> to vector<2x32xf32>
    %1832 = arith.mulf %1831, %1801 : vector<2x32xf32>
    %cst_222 = arith.constant 1.000000e+00 : f32
    %1833 = vector.broadcast %cst_222 : f32 to vector<2x1xf32>
    %1834 = arith.subf %1833, %1828 : vector<2x1xf32>
    %1835 = vector.broadcast %1834 : vector<2x1xf32> to vector<2x32xf32>
    %1836 = arith.mulf %1835, %1737 : vector<2x32xf32>
    %1837 = arith.addf %1832, %1836 : vector<2x32xf32>
    %1838 = vector.broadcast %1828 : vector<2x1xf32> to vector<2x32xf32>
    %1839 = arith.mulf %1838, %1799 : vector<2x32xf32>
    %cst_223 = arith.constant 1.000000e+00 : f32
    %1840 = vector.broadcast %cst_223 : f32 to vector<2x1xf32>
    %1841 = arith.subf %1840, %1828 : vector<2x1xf32>
    %1842 = vector.broadcast %1841 : vector<2x1xf32> to vector<2x32xf32>
    %1843 = arith.mulf %1842, %1744 : vector<2x32xf32>
    %1844 = arith.addf %1839, %1843 : vector<2x32xf32>
    %1845 = vector.broadcast %1830 : vector<2x1xf32> to vector<2x32xf32>
    %1846 = arith.mulf %1845, %1826 : vector<2x32xf32>
    %cst_224 = arith.constant 1.000000e+00 : f32
    %1847 = vector.broadcast %cst_224 : f32 to vector<2x1xf32>
    %1848 = arith.subf %1847, %1830 : vector<2x1xf32>
    %1849 = vector.broadcast %1848 : vector<2x1xf32> to vector<2x32xf32>
    %1850 = arith.mulf %1849, %1751 : vector<2x32xf32>
    %1851 = arith.addf %1846, %1850 : vector<2x32xf32>
    %1852 = vector.broadcast %1830 : vector<2x1xf32> to vector<2x32xf32>
    %1853 = arith.mulf %1852, %1824 : vector<2x32xf32>
    %cst_225 = arith.constant 1.000000e+00 : f32
    %1854 = vector.broadcast %cst_225 : f32 to vector<2x1xf32>
    %1855 = arith.subf %1854, %1830 : vector<2x1xf32>
    %1856 = vector.broadcast %1855 : vector<2x1xf32> to vector<2x32xf32>
    %1857 = arith.mulf %1856, %1758 : vector<2x32xf32>
    %1858 = arith.addf %1853, %1857 : vector<2x32xf32>
    %1859 = vector.broadcast %1828 : vector<2x1xf32> to vector<2x32xf32>
    %1860 = arith.mulf %1859, %1801 : vector<2x32xf32>
    %1861 = vector.broadcast %1830 : vector<2x1xf32> to vector<2x32xf32>
    %1862 = arith.mulf %1861, %1826 : vector<2x32xf32>
    %1863 = tpu.concatenate %1837, %1851 in 1 : vector<2x32xf32>, vector<2x32xf32> -> vector<2x64xf32>
    %cst_226 = arith.constant dense<0.000000e+00> : vector<2x256xf32>
    %1864 = tpu.matmul %1863, %1358, %cst_226 {dimension_numbers = #tpu.dot_dimension_numbers<[1], [0], [0], [1], [0, 0, 1, 1], [], []>} : vector<2x64xf32>, vector<64x256xf32>, vector<2x256xf32> -> vector<2x256xf32>
    %1865 = vector.extract_strided_slice %1361 {offsets = [10, 0], sizes = [1, 256], strides = [1, 1]} : vector<16x256xf32> to vector<1x256xf32>
    %1866 = vector.extract_strided_slice %1361 {offsets = [11, 0], sizes = [1, 256], strides = [1, 1]} : vector<16x256xf32> to vector<1x256xf32>
    %1867 = tpu.concatenate %1865, %1866 in 0 : vector<1x256xf32>, vector<1x256xf32> -> vector<2x256xf32>
    %1868 = vector.extract_strided_slice %1867 {offsets = [0, 0], sizes = [2, 128], strides = [1, 1]} : vector<2x256xf32> to vector<2x128xf32>
    %1869 = vector.extract_strided_slice %1864 {offsets = [0, 0], sizes = [2, 128], strides = [1, 1]} : vector<2x256xf32> to vector<2x128xf32>
    %1870 = arith.addf %1868, %1869 : vector<2x128xf32>
    %1871 = vector.extract_strided_slice %1361 {offsets = [4, 0], sizes = [1, 256], strides = [1, 1]} : vector<16x256xf32> to vector<1x256xf32>
    %1872 = vector.extract_strided_slice %1361 {offsets = [5, 0], sizes = [1, 256], strides = [1, 1]} : vector<16x256xf32> to vector<1x256xf32>
    %1873 = tpu.concatenate %1871, %1872 in 0 : vector<1x256xf32>, vector<1x256xf32> -> vector<2x256xf32>
    %1874 = vector.extract_strided_slice %1873 {offsets = [0, 128], sizes = [2, 128], strides = [1, 1]} : vector<2x256xf32> to vector<2x128xf32>
    %1875 = vector.extract_strided_slice %1864 {offsets = [0, 128], sizes = [2, 128], strides = [1, 1]} : vector<2x256xf32> to vector<2x128xf32>
    %1876 = arith.addf %1874, %1875 : vector<2x128xf32>
    %1877 = vector.extract_strided_slice %1870 {offsets = [0, 0], sizes = [2, 32], strides = [1, 1]} : vector<2x128xf32> to vector<2x32xf32>
    %1878 = arith.negf %1877 : vector<2x32xf32>
    %1879 = math.exp %1878 : vector<2x32xf32>
    %cst_227 = arith.constant 1.000000e+00 : f32
    %1880 = vector.broadcast %cst_227 : f32 to vector<2x32xf32>
    %1881 = arith.addf %1880, %1879 : vector<2x32xf32>
    %1882 = arith.divf %1880, %1881 : vector<2x32xf32>
    %1883 = vector.extract_strided_slice %1870 {offsets = [0, 32], sizes = [2, 32], strides = [1, 1]} : vector<2x128xf32> to vector<2x32xf32>
    %1884 = arith.negf %1883 : vector<2x32xf32>
    %1885 = math.exp %1884 : vector<2x32xf32>
    %cst_228 = arith.constant 1.000000e+00 : f32
    %1886 = vector.broadcast %cst_228 : f32 to vector<2x32xf32>
    %1887 = arith.addf %1886, %1885 : vector<2x32xf32>
    %1888 = arith.divf %1886, %1887 : vector<2x32xf32>
    %1889 = vector.extract_strided_slice %1870 {offsets = [0, 64], sizes = [2, 32], strides = [1, 1]} : vector<2x128xf32> to vector<2x32xf32>
    %1890 = math.tanh %1889 : vector<2x32xf32>
    %1891 = vector.extract_strided_slice %1870 {offsets = [0, 96], sizes = [2, 32], strides = [1, 1]} : vector<2x128xf32> to vector<2x32xf32>
    %1892 = arith.negf %1891 : vector<2x32xf32>
    %1893 = math.exp %1892 : vector<2x32xf32>
    %cst_229 = arith.constant 1.000000e+00 : f32
    %1894 = vector.broadcast %cst_229 : f32 to vector<2x32xf32>
    %1895 = arith.addf %1894, %1893 : vector<2x32xf32>
    %1896 = arith.divf %1894, %1895 : vector<2x32xf32>
    %1897 = arith.mulf %1888, %1844 : vector<2x32xf32>
    %1898 = arith.mulf %1882, %1890 : vector<2x32xf32>
    %1899 = arith.addf %1897, %1898 : vector<2x32xf32>
    %1900 = math.tanh %1899 : vector<2x32xf32>
    %1901 = arith.mulf %1896, %1900 : vector<2x32xf32>
    %1902 = vector.extract_strided_slice %1876 {offsets = [0, 0], sizes = [2, 32], strides = [1, 1]} : vector<2x128xf32> to vector<2x32xf32>
    %1903 = arith.negf %1902 : vector<2x32xf32>
    %1904 = math.exp %1903 : vector<2x32xf32>
    %cst_230 = arith.constant 1.000000e+00 : f32
    %1905 = vector.broadcast %cst_230 : f32 to vector<2x32xf32>
    %1906 = arith.addf %1905, %1904 : vector<2x32xf32>
    %1907 = arith.divf %1905, %1906 : vector<2x32xf32>
    %1908 = vector.extract_strided_slice %1876 {offsets = [0, 32], sizes = [2, 32], strides = [1, 1]} : vector<2x128xf32> to vector<2x32xf32>
    %1909 = arith.negf %1908 : vector<2x32xf32>
    %1910 = math.exp %1909 : vector<2x32xf32>
    %cst_231 = arith.constant 1.000000e+00 : f32
    %1911 = vector.broadcast %cst_231 : f32 to vector<2x32xf32>
    %1912 = arith.addf %1911, %1910 : vector<2x32xf32>
    %1913 = arith.divf %1911, %1912 : vector<2x32xf32>
    %1914 = vector.extract_strided_slice %1876 {offsets = [0, 64], sizes = [2, 32], strides = [1, 1]} : vector<2x128xf32> to vector<2x32xf32>
    %1915 = math.tanh %1914 : vector<2x32xf32>
    %1916 = vector.extract_strided_slice %1876 {offsets = [0, 96], sizes = [2, 32], strides = [1, 1]} : vector<2x128xf32> to vector<2x32xf32>
    %1917 = arith.negf %1916 : vector<2x32xf32>
    %1918 = math.exp %1917 : vector<2x32xf32>
    %cst_232 = arith.constant 1.000000e+00 : f32
    %1919 = vector.broadcast %cst_232 : f32 to vector<2x32xf32>
    %1920 = arith.addf %1919, %1918 : vector<2x32xf32>
    %1921 = arith.divf %1919, %1920 : vector<2x32xf32>
    %1922 = arith.mulf %1913, %1858 : vector<2x32xf32>
    %1923 = arith.mulf %1907, %1915 : vector<2x32xf32>
    %1924 = arith.addf %1922, %1923 : vector<2x32xf32>
    %1925 = math.tanh %1924 : vector<2x32xf32>
    %1926 = arith.mulf %1921, %1925 : vector<2x32xf32>
    %1927 = vector.extract_strided_slice %566 {offsets = [5, 0, 0], sizes = [1, 2, 1], strides = [1, 1, 1]} : vector<8x2x1xf32> to vector<1x2x1xf32>
    %1928 = vector.shape_cast %1927 : vector<1x2x1xf32> to vector<2x1xf32>
    %1929 = vector.extract_strided_slice %566 {offsets = [2, 0, 0], sizes = [1, 2, 1], strides = [1, 1, 1]} : vector<8x2x1xf32> to vector<1x2x1xf32>
    %1930 = vector.shape_cast %1929 : vector<1x2x1xf32> to vector<2x1xf32>
    %1931 = vector.broadcast %1928 : vector<2x1xf32> to vector<2x32xf32>
    %1932 = arith.mulf %1931, %1901 : vector<2x32xf32>
    %cst_233 = arith.constant 1.000000e+00 : f32
    %1933 = vector.broadcast %cst_233 : f32 to vector<2x1xf32>
    %1934 = arith.subf %1933, %1928 : vector<2x1xf32>
    %1935 = vector.broadcast %1934 : vector<2x1xf32> to vector<2x32xf32>
    %1936 = arith.mulf %1935, %1837 : vector<2x32xf32>
    %1937 = arith.addf %1932, %1936 : vector<2x32xf32>
    %1938 = vector.broadcast %1928 : vector<2x1xf32> to vector<2x32xf32>
    %1939 = arith.mulf %1938, %1899 : vector<2x32xf32>
    %cst_234 = arith.constant 1.000000e+00 : f32
    %1940 = vector.broadcast %cst_234 : f32 to vector<2x1xf32>
    %1941 = arith.subf %1940, %1928 : vector<2x1xf32>
    %1942 = vector.broadcast %1941 : vector<2x1xf32> to vector<2x32xf32>
    %1943 = arith.mulf %1942, %1844 : vector<2x32xf32>
    %1944 = arith.addf %1939, %1943 : vector<2x32xf32>
    %1945 = vector.broadcast %1930 : vector<2x1xf32> to vector<2x32xf32>
    %1946 = arith.mulf %1945, %1926 : vector<2x32xf32>
    %cst_235 = arith.constant 1.000000e+00 : f32
    %1947 = vector.broadcast %cst_235 : f32 to vector<2x1xf32>
    %1948 = arith.subf %1947, %1930 : vector<2x1xf32>
    %1949 = vector.broadcast %1948 : vector<2x1xf32> to vector<2x32xf32>
    %1950 = arith.mulf %1949, %1851 : vector<2x32xf32>
    %1951 = arith.addf %1946, %1950 : vector<2x32xf32>
    %1952 = vector.broadcast %1930 : vector<2x1xf32> to vector<2x32xf32>
    %1953 = arith.mulf %1952, %1924 : vector<2x32xf32>
    %cst_236 = arith.constant 1.000000e+00 : f32
    %1954 = vector.broadcast %cst_236 : f32 to vector<2x1xf32>
    %1955 = arith.subf %1954, %1930 : vector<2x1xf32>
    %1956 = vector.broadcast %1955 : vector<2x1xf32> to vector<2x32xf32>
    %1957 = arith.mulf %1956, %1858 : vector<2x32xf32>
    %1958 = arith.addf %1953, %1957 : vector<2x32xf32>
    %1959 = vector.broadcast %1928 : vector<2x1xf32> to vector<2x32xf32>
    %1960 = arith.mulf %1959, %1901 : vector<2x32xf32>
    %1961 = vector.broadcast %1930 : vector<2x1xf32> to vector<2x32xf32>
    %1962 = arith.mulf %1961, %1926 : vector<2x32xf32>
    %1963 = tpu.concatenate %1937, %1951 in 1 : vector<2x32xf32>, vector<2x32xf32> -> vector<2x64xf32>
    %cst_237 = arith.constant dense<0.000000e+00> : vector<2x256xf32>
    %1964 = tpu.matmul %1963, %1358, %cst_237 {dimension_numbers = #tpu.dot_dimension_numbers<[1], [0], [0], [1], [0, 0, 1, 1], [], []>} : vector<2x64xf32>, vector<64x256xf32>, vector<2x256xf32> -> vector<2x256xf32>
    %1965 = vector.extract_strided_slice %1361 {offsets = [12, 0], sizes = [1, 256], strides = [1, 1]} : vector<16x256xf32> to vector<1x256xf32>
    %1966 = vector.extract_strided_slice %1361 {offsets = [13, 0], sizes = [1, 256], strides = [1, 1]} : vector<16x256xf32> to vector<1x256xf32>
    %1967 = tpu.concatenate %1965, %1966 in 0 : vector<1x256xf32>, vector<1x256xf32> -> vector<2x256xf32>
    %1968 = vector.extract_strided_slice %1967 {offsets = [0, 0], sizes = [2, 128], strides = [1, 1]} : vector<2x256xf32> to vector<2x128xf32>
    %1969 = vector.extract_strided_slice %1964 {offsets = [0, 0], sizes = [2, 128], strides = [1, 1]} : vector<2x256xf32> to vector<2x128xf32>
    %1970 = arith.addf %1968, %1969 : vector<2x128xf32>
    %1971 = vector.extract_strided_slice %1361 {offsets = [2, 0], sizes = [1, 256], strides = [1, 1]} : vector<16x256xf32> to vector<1x256xf32>
    %1972 = vector.extract_strided_slice %1361 {offsets = [3, 0], sizes = [1, 256], strides = [1, 1]} : vector<16x256xf32> to vector<1x256xf32>
    %1973 = tpu.concatenate %1971, %1972 in 0 : vector<1x256xf32>, vector<1x256xf32> -> vector<2x256xf32>
    %1974 = vector.extract_strided_slice %1973 {offsets = [0, 128], sizes = [2, 128], strides = [1, 1]} : vector<2x256xf32> to vector<2x128xf32>
    %1975 = vector.extract_strided_slice %1964 {offsets = [0, 128], sizes = [2, 128], strides = [1, 1]} : vector<2x256xf32> to vector<2x128xf32>
    %1976 = arith.addf %1974, %1975 : vector<2x128xf32>
    %1977 = vector.extract_strided_slice %1970 {offsets = [0, 0], sizes = [2, 32], strides = [1, 1]} : vector<2x128xf32> to vector<2x32xf32>
    %1978 = arith.negf %1977 : vector<2x32xf32>
    %1979 = math.exp %1978 : vector<2x32xf32>
    %cst_238 = arith.constant 1.000000e+00 : f32
    %1980 = vector.broadcast %cst_238 : f32 to vector<2x32xf32>
    %1981 = arith.addf %1980, %1979 : vector<2x32xf32>
    %1982 = arith.divf %1980, %1981 : vector<2x32xf32>
    %1983 = vector.extract_strided_slice %1970 {offsets = [0, 32], sizes = [2, 32], strides = [1, 1]} : vector<2x128xf32> to vector<2x32xf32>
    %1984 = arith.negf %1983 : vector<2x32xf32>
    %1985 = math.exp %1984 : vector<2x32xf32>
    %cst_239 = arith.constant 1.000000e+00 : f32
    %1986 = vector.broadcast %cst_239 : f32 to vector<2x32xf32>
    %1987 = arith.addf %1986, %1985 : vector<2x32xf32>
    %1988 = arith.divf %1986, %1987 : vector<2x32xf32>
    %1989 = vector.extract_strided_slice %1970 {offsets = [0, 64], sizes = [2, 32], strides = [1, 1]} : vector<2x128xf32> to vector<2x32xf32>
    %1990 = math.tanh %1989 : vector<2x32xf32>
    %1991 = vector.extract_strided_slice %1970 {offsets = [0, 96], sizes = [2, 32], strides = [1, 1]} : vector<2x128xf32> to vector<2x32xf32>
    %1992 = arith.negf %1991 : vector<2x32xf32>
    %1993 = math.exp %1992 : vector<2x32xf32>
    %cst_240 = arith.constant 1.000000e+00 : f32
    %1994 = vector.broadcast %cst_240 : f32 to vector<2x32xf32>
    %1995 = arith.addf %1994, %1993 : vector<2x32xf32>
    %1996 = arith.divf %1994, %1995 : vector<2x32xf32>
    %1997 = arith.mulf %1988, %1944 : vector<2x32xf32>
    %1998 = arith.mulf %1982, %1990 : vector<2x32xf32>
    %1999 = arith.addf %1997, %1998 : vector<2x32xf32>
    %2000 = math.tanh %1999 : vector<2x32xf32>
    %2001 = arith.mulf %1996, %2000 : vector<2x32xf32>
    %2002 = vector.extract_strided_slice %1976 {offsets = [0, 0], sizes = [2, 32], strides = [1, 1]} : vector<2x128xf32> to vector<2x32xf32>
    %2003 = arith.negf %2002 : vector<2x32xf32>
    %2004 = math.exp %2003 : vector<2x32xf32>
    %cst_241 = arith.constant 1.000000e+00 : f32
    %2005 = vector.broadcast %cst_241 : f32 to vector<2x32xf32>
    %2006 = arith.addf %2005, %2004 : vector<2x32xf32>
    %2007 = arith.divf %2005, %2006 : vector<2x32xf32>
    %2008 = vector.extract_strided_slice %1976 {offsets = [0, 32], sizes = [2, 32], strides = [1, 1]} : vector<2x128xf32> to vector<2x32xf32>
    %2009 = arith.negf %2008 : vector<2x32xf32>
    %2010 = math.exp %2009 : vector<2x32xf32>
    %cst_242 = arith.constant 1.000000e+00 : f32
    %2011 = vector.broadcast %cst_242 : f32 to vector<2x32xf32>
    %2012 = arith.addf %2011, %2010 : vector<2x32xf32>
    %2013 = arith.divf %2011, %2012 : vector<2x32xf32>
    %2014 = vector.extract_strided_slice %1976 {offsets = [0, 64], sizes = [2, 32], strides = [1, 1]} : vector<2x128xf32> to vector<2x32xf32>
    %2015 = math.tanh %2014 : vector<2x32xf32>
    %2016 = vector.extract_strided_slice %1976 {offsets = [0, 96], sizes = [2, 32], strides = [1, 1]} : vector<2x128xf32> to vector<2x32xf32>
    %2017 = arith.negf %2016 : vector<2x32xf32>
    %2018 = math.exp %2017 : vector<2x32xf32>
    %cst_243 = arith.constant 1.000000e+00 : f32
    %2019 = vector.broadcast %cst_243 : f32 to vector<2x32xf32>
    %2020 = arith.addf %2019, %2018 : vector<2x32xf32>
    %2021 = arith.divf %2019, %2020 : vector<2x32xf32>
    %2022 = arith.mulf %2013, %1958 : vector<2x32xf32>
    %2023 = arith.mulf %2007, %2015 : vector<2x32xf32>
    %2024 = arith.addf %2022, %2023 : vector<2x32xf32>
    %2025 = math.tanh %2024 : vector<2x32xf32>
    %2026 = arith.mulf %2021, %2025 : vector<2x32xf32>
    %2027 = vector.extract_strided_slice %566 {offsets = [6, 0, 0], sizes = [1, 2, 1], strides = [1, 1, 1]} : vector<8x2x1xf32> to vector<1x2x1xf32>
    %2028 = vector.shape_cast %2027 : vector<1x2x1xf32> to vector<2x1xf32>
    %2029 = vector.extract_strided_slice %566 {offsets = [1, 0, 0], sizes = [1, 2, 1], strides = [1, 1, 1]} : vector<8x2x1xf32> to vector<1x2x1xf32>
    %2030 = vector.shape_cast %2029 : vector<1x2x1xf32> to vector<2x1xf32>
    %2031 = vector.broadcast %2028 : vector<2x1xf32> to vector<2x32xf32>
    %2032 = arith.mulf %2031, %2001 : vector<2x32xf32>
    %cst_244 = arith.constant 1.000000e+00 : f32
    %2033 = vector.broadcast %cst_244 : f32 to vector<2x1xf32>
    %2034 = arith.subf %2033, %2028 : vector<2x1xf32>
    %2035 = vector.broadcast %2034 : vector<2x1xf32> to vector<2x32xf32>
    %2036 = arith.mulf %2035, %1937 : vector<2x32xf32>
    %2037 = arith.addf %2032, %2036 : vector<2x32xf32>
    %2038 = vector.broadcast %2028 : vector<2x1xf32> to vector<2x32xf32>
    %2039 = arith.mulf %2038, %1999 : vector<2x32xf32>
    %cst_245 = arith.constant 1.000000e+00 : f32
    %2040 = vector.broadcast %cst_245 : f32 to vector<2x1xf32>
    %2041 = arith.subf %2040, %2028 : vector<2x1xf32>
    %2042 = vector.broadcast %2041 : vector<2x1xf32> to vector<2x32xf32>
    %2043 = arith.mulf %2042, %1944 : vector<2x32xf32>
    %2044 = arith.addf %2039, %2043 : vector<2x32xf32>
    %2045 = vector.broadcast %2030 : vector<2x1xf32> to vector<2x32xf32>
    %2046 = arith.mulf %2045, %2026 : vector<2x32xf32>
    %cst_246 = arith.constant 1.000000e+00 : f32
    %2047 = vector.broadcast %cst_246 : f32 to vector<2x1xf32>
    %2048 = arith.subf %2047, %2030 : vector<2x1xf32>
    %2049 = vector.broadcast %2048 : vector<2x1xf32> to vector<2x32xf32>
    %2050 = arith.mulf %2049, %1951 : vector<2x32xf32>
    %2051 = arith.addf %2046, %2050 : vector<2x32xf32>
    %2052 = vector.broadcast %2030 : vector<2x1xf32> to vector<2x32xf32>
    %2053 = arith.mulf %2052, %2024 : vector<2x32xf32>
    %cst_247 = arith.constant 1.000000e+00 : f32
    %2054 = vector.broadcast %cst_247 : f32 to vector<2x1xf32>
    %2055 = arith.subf %2054, %2030 : vector<2x1xf32>
    %2056 = vector.broadcast %2055 : vector<2x1xf32> to vector<2x32xf32>
    %2057 = arith.mulf %2056, %1958 : vector<2x32xf32>
    %2058 = arith.addf %2053, %2057 : vector<2x32xf32>
    %2059 = vector.broadcast %2028 : vector<2x1xf32> to vector<2x32xf32>
    %2060 = arith.mulf %2059, %2001 : vector<2x32xf32>
    %2061 = vector.broadcast %2030 : vector<2x1xf32> to vector<2x32xf32>
    %2062 = arith.mulf %2061, %2026 : vector<2x32xf32>
    %2063 = tpu.concatenate %2037, %2051 in 1 : vector<2x32xf32>, vector<2x32xf32> -> vector<2x64xf32>
    %cst_248 = arith.constant dense<0.000000e+00> : vector<2x256xf32>
    %2064 = tpu.matmul %2063, %1358, %cst_248 {dimension_numbers = #tpu.dot_dimension_numbers<[1], [0], [0], [1], [0, 0, 1, 1], [], []>} : vector<2x64xf32>, vector<64x256xf32>, vector<2x256xf32> -> vector<2x256xf32>
    %2065 = vector.extract_strided_slice %1361 {offsets = [14, 0], sizes = [1, 256], strides = [1, 1]} : vector<16x256xf32> to vector<1x256xf32>
    %2066 = vector.extract_strided_slice %1361 {offsets = [15, 0], sizes = [1, 256], strides = [1, 1]} : vector<16x256xf32> to vector<1x256xf32>
    %2067 = tpu.concatenate %2065, %2066 in 0 : vector<1x256xf32>, vector<1x256xf32> -> vector<2x256xf32>
    %2068 = vector.extract_strided_slice %2067 {offsets = [0, 0], sizes = [2, 128], strides = [1, 1]} : vector<2x256xf32> to vector<2x128xf32>
    %2069 = vector.extract_strided_slice %2064 {offsets = [0, 0], sizes = [2, 128], strides = [1, 1]} : vector<2x256xf32> to vector<2x128xf32>
    %2070 = arith.addf %2068, %2069 : vector<2x128xf32>
    %2071 = vector.extract_strided_slice %1361 {offsets = [0, 0], sizes = [1, 256], strides = [1, 1]} : vector<16x256xf32> to vector<1x256xf32>
    %2072 = vector.extract_strided_slice %1361 {offsets = [1, 0], sizes = [1, 256], strides = [1, 1]} : vector<16x256xf32> to vector<1x256xf32>
    %2073 = tpu.concatenate %2071, %2072 in 0 : vector<1x256xf32>, vector<1x256xf32> -> vector<2x256xf32>
    %2074 = vector.extract_strided_slice %2073 {offsets = [0, 128], sizes = [2, 128], strides = [1, 1]} : vector<2x256xf32> to vector<2x128xf32>
    %2075 = vector.extract_strided_slice %2064 {offsets = [0, 128], sizes = [2, 128], strides = [1, 1]} : vector<2x256xf32> to vector<2x128xf32>
    %2076 = arith.addf %2074, %2075 : vector<2x128xf32>
    %2077 = vector.extract_strided_slice %2070 {offsets = [0, 0], sizes = [2, 32], strides = [1, 1]} : vector<2x128xf32> to vector<2x32xf32>
    %2078 = arith.negf %2077 : vector<2x32xf32>
    %2079 = math.exp %2078 : vector<2x32xf32>
    %cst_249 = arith.constant 1.000000e+00 : f32
    %2080 = vector.broadcast %cst_249 : f32 to vector<2x32xf32>
    %2081 = arith.addf %2080, %2079 : vector<2x32xf32>
    %2082 = arith.divf %2080, %2081 : vector<2x32xf32>
    %2083 = vector.extract_strided_slice %2070 {offsets = [0, 32], sizes = [2, 32], strides = [1, 1]} : vector<2x128xf32> to vector<2x32xf32>
    %2084 = arith.negf %2083 : vector<2x32xf32>
    %2085 = math.exp %2084 : vector<2x32xf32>
    %cst_250 = arith.constant 1.000000e+00 : f32
    %2086 = vector.broadcast %cst_250 : f32 to vector<2x32xf32>
    %2087 = arith.addf %2086, %2085 : vector<2x32xf32>
    %2088 = arith.divf %2086, %2087 : vector<2x32xf32>
    %2089 = vector.extract_strided_slice %2070 {offsets = [0, 64], sizes = [2, 32], strides = [1, 1]} : vector<2x128xf32> to vector<2x32xf32>
    %2090 = math.tanh %2089 : vector<2x32xf32>
    %2091 = vector.extract_strided_slice %2070 {offsets = [0, 96], sizes = [2, 32], strides = [1, 1]} : vector<2x128xf32> to vector<2x32xf32>
    %2092 = arith.negf %2091 : vector<2x32xf32>
    %2093 = math.exp %2092 : vector<2x32xf32>
    %cst_251 = arith.constant 1.000000e+00 : f32
    %2094 = vector.broadcast %cst_251 : f32 to vector<2x32xf32>
    %2095 = arith.addf %2094, %2093 : vector<2x32xf32>
    %2096 = arith.divf %2094, %2095 : vector<2x32xf32>
    %2097 = arith.mulf %2088, %2044 : vector<2x32xf32>
    %2098 = arith.mulf %2082, %2090 : vector<2x32xf32>
    %2099 = arith.addf %2097, %2098 : vector<2x32xf32>
    %2100 = math.tanh %2099 : vector<2x32xf32>
    %2101 = arith.mulf %2096, %2100 : vector<2x32xf32>
    %2102 = vector.extract_strided_slice %2076 {offsets = [0, 0], sizes = [2, 32], strides = [1, 1]} : vector<2x128xf32> to vector<2x32xf32>
    %2103 = arith.negf %2102 : vector<2x32xf32>
    %2104 = math.exp %2103 : vector<2x32xf32>
    %cst_252 = arith.constant 1.000000e+00 : f32
    %2105 = vector.broadcast %cst_252 : f32 to vector<2x32xf32>
    %2106 = arith.addf %2105, %2104 : vector<2x32xf32>
    %2107 = arith.divf %2105, %2106 : vector<2x32xf32>
    %2108 = vector.extract_strided_slice %2076 {offsets = [0, 32], sizes = [2, 32], strides = [1, 1]} : vector<2x128xf32> to vector<2x32xf32>
    %2109 = arith.negf %2108 : vector<2x32xf32>
    %2110 = math.exp %2109 : vector<2x32xf32>
    %cst_253 = arith.constant 1.000000e+00 : f32
    %2111 = vector.broadcast %cst_253 : f32 to vector<2x32xf32>
    %2112 = arith.addf %2111, %2110 : vector<2x32xf32>
    %2113 = arith.divf %2111, %2112 : vector<2x32xf32>
    %2114 = vector.extract_strided_slice %2076 {offsets = [0, 64], sizes = [2, 32], strides = [1, 1]} : vector<2x128xf32> to vector<2x32xf32>
    %2115 = math.tanh %2114 : vector<2x32xf32>
    %2116 = vector.extract_strided_slice %2076 {offsets = [0, 96], sizes = [2, 32], strides = [1, 1]} : vector<2x128xf32> to vector<2x32xf32>
    %2117 = arith.negf %2116 : vector<2x32xf32>
    %2118 = math.exp %2117 : vector<2x32xf32>
    %cst_254 = arith.constant 1.000000e+00 : f32
    %2119 = vector.broadcast %cst_254 : f32 to vector<2x32xf32>
    %2120 = arith.addf %2119, %2118 : vector<2x32xf32>
    %2121 = arith.divf %2119, %2120 : vector<2x32xf32>
    %2122 = arith.mulf %2113, %2058 : vector<2x32xf32>
    %2123 = arith.mulf %2107, %2115 : vector<2x32xf32>
    %2124 = arith.addf %2122, %2123 : vector<2x32xf32>
    %2125 = math.tanh %2124 : vector<2x32xf32>
    %2126 = arith.mulf %2121, %2125 : vector<2x32xf32>
    %2127 = vector.extract_strided_slice %566 {offsets = [7, 0, 0], sizes = [1, 2, 1], strides = [1, 1, 1]} : vector<8x2x1xf32> to vector<1x2x1xf32>
    %2128 = vector.shape_cast %2127 : vector<1x2x1xf32> to vector<2x1xf32>
    %2129 = vector.extract_strided_slice %566 {offsets = [0, 0, 0], sizes = [1, 2, 1], strides = [1, 1, 1]} : vector<8x2x1xf32> to vector<1x2x1xf32>
    %2130 = vector.shape_cast %2129 : vector<1x2x1xf32> to vector<2x1xf32>
    %2131 = vector.broadcast %2128 : vector<2x1xf32> to vector<2x32xf32>
    %2132 = arith.mulf %2131, %2101 : vector<2x32xf32>
    %2133 = vector.broadcast %2130 : vector<2x1xf32> to vector<2x32xf32>
    %2134 = arith.mulf %2133, %2126 : vector<2x32xf32>
    %2135 = vector.extract_strided_slice %1460 {offsets = [0, 0], sizes = [1, 32], strides = [1, 1]} : vector<2x32xf32> to vector<1x32xf32>
    %2136 = vector.extract_strided_slice %1560 {offsets = [0, 0], sizes = [1, 32], strides = [1, 1]} : vector<2x32xf32> to vector<1x32xf32>
    %2137 = vector.extract_strided_slice %1660 {offsets = [0, 0], sizes = [1, 32], strides = [1, 1]} : vector<2x32xf32> to vector<1x32xf32>
    %2138 = vector.extract_strided_slice %1760 {offsets = [0, 0], sizes = [1, 32], strides = [1, 1]} : vector<2x32xf32> to vector<1x32xf32>
    %2139 = vector.extract_strided_slice %1860 {offsets = [0, 0], sizes = [1, 32], strides = [1, 1]} : vector<2x32xf32> to vector<1x32xf32>
    %2140 = vector.extract_strided_slice %1960 {offsets = [0, 0], sizes = [1, 32], strides = [1, 1]} : vector<2x32xf32> to vector<1x32xf32>
    %2141 = vector.extract_strided_slice %2060 {offsets = [0, 0], sizes = [1, 32], strides = [1, 1]} : vector<2x32xf32> to vector<1x32xf32>
    %2142 = vector.extract_strided_slice %2132 {offsets = [0, 0], sizes = [1, 32], strides = [1, 1]} : vector<2x32xf32> to vector<1x32xf32>
    %2143 = tpu.concatenate %2135, %2136, %2137, %2138, %2139, %2140, %2141, %2142 in 0 : vector<1x32xf32>, vector<1x32xf32>, vector<1x32xf32>, vector<1x32xf32>, vector<1x32xf32>, vector<1x32xf32>, vector<1x32xf32>, vector<1x32xf32> -> vector<8x32xf32>
    %2144 = vector.extract_strided_slice %2134 {offsets = [0, 0], sizes = [1, 32], strides = [1, 1]} : vector<2x32xf32> to vector<1x32xf32>
    %2145 = vector.extract_strided_slice %2062 {offsets = [0, 0], sizes = [1, 32], strides = [1, 1]} : vector<2x32xf32> to vector<1x32xf32>
    %2146 = vector.extract_strided_slice %1962 {offsets = [0, 0], sizes = [1, 32], strides = [1, 1]} : vector<2x32xf32> to vector<1x32xf32>
    %2147 = vector.extract_strided_slice %1862 {offsets = [0, 0], sizes = [1, 32], strides = [1, 1]} : vector<2x32xf32> to vector<1x32xf32>
    %2148 = vector.extract_strided_slice %1762 {offsets = [0, 0], sizes = [1, 32], strides = [1, 1]} : vector<2x32xf32> to vector<1x32xf32>
    %2149 = vector.extract_strided_slice %1662 {offsets = [0, 0], sizes = [1, 32], strides = [1, 1]} : vector<2x32xf32> to vector<1x32xf32>
    %2150 = vector.extract_strided_slice %1562 {offsets = [0, 0], sizes = [1, 32], strides = [1, 1]} : vector<2x32xf32> to vector<1x32xf32>
    %2151 = vector.extract_strided_slice %1462 {offsets = [0, 0], sizes = [1, 32], strides = [1, 1]} : vector<2x32xf32> to vector<1x32xf32>
    %2152 = tpu.concatenate %2144, %2145, %2146, %2147, %2148, %2149, %2150, %2151 in 0 : vector<1x32xf32>, vector<1x32xf32>, vector<1x32xf32>, vector<1x32xf32>, vector<1x32xf32>, vector<1x32xf32>, vector<1x32xf32>, vector<1x32xf32> -> vector<8x32xf32>
    %2153 = tpu.concatenate %2143, %2152 in 1 : vector<8x32xf32>, vector<8x32xf32> -> vector<8x64xf32>
    %cst_255 = arith.constant 0.000000e+00 : f32
    %2154 = vector.broadcast %cst_255 : f32 to vector<2x64xf32>
    %2155 = vector.extract_strided_slice %1460 {offsets = [1, 0], sizes = [1, 32], strides = [1, 1]} : vector<2x32xf32> to vector<1x32xf32>
    %2156 = vector.extract_strided_slice %1560 {offsets = [1, 0], sizes = [1, 32], strides = [1, 1]} : vector<2x32xf32> to vector<1x32xf32>
    %2157 = vector.extract_strided_slice %1660 {offsets = [1, 0], sizes = [1, 32], strides = [1, 1]} : vector<2x32xf32> to vector<1x32xf32>
    %2158 = vector.extract_strided_slice %1760 {offsets = [1, 0], sizes = [1, 32], strides = [1, 1]} : vector<2x32xf32> to vector<1x32xf32>
    %2159 = vector.extract_strided_slice %1860 {offsets = [1, 0], sizes = [1, 32], strides = [1, 1]} : vector<2x32xf32> to vector<1x32xf32>
    %2160 = vector.extract_strided_slice %1960 {offsets = [1, 0], sizes = [1, 32], strides = [1, 1]} : vector<2x32xf32> to vector<1x32xf32>
    %2161 = vector.extract_strided_slice %2060 {offsets = [1, 0], sizes = [1, 32], strides = [1, 1]} : vector<2x32xf32> to vector<1x32xf32>
    %2162 = vector.extract_strided_slice %2132 {offsets = [1, 0], sizes = [1, 32], strides = [1, 1]} : vector<2x32xf32> to vector<1x32xf32>
    %2163 = tpu.concatenate %2155, %2156, %2157, %2158, %2159, %2160, %2161, %2162 in 0 : vector<1x32xf32>, vector<1x32xf32>, vector<1x32xf32>, vector<1x32xf32>, vector<1x32xf32>, vector<1x32xf32>, vector<1x32xf32>, vector<1x32xf32> -> vector<8x32xf32>
    %2164 = vector.extract_strided_slice %2134 {offsets = [1, 0], sizes = [1, 32], strides = [1, 1]} : vector<2x32xf32> to vector<1x32xf32>
    %2165 = vector.extract_strided_slice %2062 {offsets = [1, 0], sizes = [1, 32], strides = [1, 1]} : vector<2x32xf32> to vector<1x32xf32>
    %2166 = vector.extract_strided_slice %1962 {offsets = [1, 0], sizes = [1, 32], strides = [1, 1]} : vector<2x32xf32> to vector<1x32xf32>
    %2167 = vector.extract_strided_slice %1862 {offsets = [1, 0], sizes = [1, 32], strides = [1, 1]} : vector<2x32xf32> to vector<1x32xf32>
    %2168 = vector.extract_strided_slice %1762 {offsets = [1, 0], sizes = [1, 32], strides = [1, 1]} : vector<2x32xf32> to vector<1x32xf32>
    %2169 = vector.extract_strided_slice %1662 {offsets = [1, 0], sizes = [1, 32], strides = [1, 1]} : vector<2x32xf32> to vector<1x32xf32>
    %2170 = vector.extract_strided_slice %1562 {offsets = [1, 0], sizes = [1, 32], strides = [1, 1]} : vector<2x32xf32> to vector<1x32xf32>
    %2171 = vector.extract_strided_slice %1462 {offsets = [1, 0], sizes = [1, 32], strides = [1, 1]} : vector<2x32xf32> to vector<1x32xf32>
    %2172 = tpu.concatenate %2164, %2165, %2166, %2167, %2168, %2169, %2170, %2171 in 0 : vector<1x32xf32>, vector<1x32xf32>, vector<1x32xf32>, vector<1x32xf32>, vector<1x32xf32>, vector<1x32xf32>, vector<1x32xf32>, vector<1x32xf32> -> vector<8x32xf32>
    %2173 = tpu.concatenate %2163, %2172 in 1 : vector<8x32xf32>, vector<8x32xf32> -> vector<8x64xf32>
    %cst_256 = arith.constant 0.000000e+00 : f32
    %2174 = vector.broadcast %cst_256 : f32 to vector<2x64xf32>
    %2175 = tpu.concatenate %2153, %2154, %2173, %2174 in 0 : vector<8x64xf32>, vector<2x64xf32>, vector<8x64xf32>, vector<2x64xf32> -> vector<20x64xf32>
    %c0_257 = arith.constant 0 : index
    %c0_258 = arith.constant 0 : index
    %2176 = vector.load %arg9[%c0_257, %c0_258] : memref<64x16xf32, #tpu.memory_space<vmem>>, vector<64x16xf32>
    %cst_259 = arith.constant dense<0.000000e+00> : vector<20x16xf32>
    %2177 = tpu.matmul %2175, %2176, %cst_259 {dimension_numbers = #tpu.dot_dimension_numbers<[1], [0], [0], [1], [0, 0, 1, 1], [], []>} : vector<20x64xf32>, vector<64x16xf32>, vector<20x16xf32> -> vector<20x16xf32>
    %c0_260 = arith.constant 0 : index
    %c0_261 = arith.constant 0 : index
    %2178 = vector.load %arg10[%c0_260, %c0_261] : memref<1x16xf32, #tpu.memory_space<vmem>>, vector<1x16xf32>
    %2179 = vector.broadcast %2178 : vector<1x16xf32> to vector<20x16xf32>
    %2180 = arith.addf %2177, %2179 : vector<20x16xf32>
    %cst_262 = arith.constant dense<0xFF800000> : vector<20xf32>
    %2181 = vector.multi_reduction <maximumf>, %2180, %cst_262 [1] : vector<20x16xf32> to vector<20xf32>
    %2182 = vector.shape_cast %2181 : vector<20xf32> to vector<20x1xf32>
    %2183 = vector.broadcast %2182 : vector<20x1xf32> to vector<20x16xf32>
    %2184 = arith.subf %2180, %2183 : vector<20x16xf32>
    %2185 = math.exp %2184 : vector<20x16xf32>
    %cst_263 = arith.constant dense<0.000000e+00> : vector<20xf32>
    %2186 = vector.multi_reduction <add>, %2185, %cst_263 [1] : vector<20x16xf32> to vector<20xf32>
    %2187 = vector.shape_cast %2186 : vector<20xf32> to vector<20x1xf32>
    %2188 = math.log %2187 : vector<20x1xf32>
    %2189 = arith.addf %2188, %2182 : vector<20x1xf32>
    %2190 = vector.broadcast %2189 : vector<20x1xf32> to vector<20x16xf32>
    %2191 = arith.subf %2180, %2190 : vector<20x16xf32>
    %c0_264 = arith.constant 0 : index
    %c0_265 = arith.constant 0 : index
    %2192 = vector.load %arg11[%c0_264, %c0_265] : memref<20x16xf32, #tpu.memory_space<vmem>>, vector<20x16xf32>
    tpu.vector_store %arg11[%c0_264, %c0_265], %2191 {strides = array<i32>} : memref<20x16xf32, #tpu.memory_space<vmem>>, vector<20x16xf32>,
    return
  }
}

</mosaic_0001>

<llo_original>
// kernel: forward.1
$region0: #{forward.1}
  #allocation0 [shape = 'u32[]', space=smem, size = 0x4, offset = 0x4, fixed_abs, tag = 'smem constant byte address 0x4 - core index']
  #allocation1 [shape = 'u32[144,128]{1,0:T(1,128)}', space=vmem, size = 0x12000, scoped, tag = 'internal scratch']
  %s0 = inlined_call_operand.vmem [shape: f32[48], index: 0, kind: input, shape index: {}]
  %s1 = inlined_call_operand.vmem [shape: f32[2,5,10,42], index: 1, kind: input, shape index: {}]
  %s2 = inlined_call_operand.vmem [shape: f32[8,2,1], index: 2, kind: input, shape index: {}]
  %s3 = inlined_call_operand.vmem [shape: f32[40,256], index: 3, kind: input, shape index: {}]
  %s4 = inlined_call_operand.vmem [shape: f32[1,256], index: 4, kind: input, shape index: {}]
  %s5 = inlined_call_operand.vmem [shape: f32[64,256], index: 5, kind: input, shape index: {}]
  %s6 = inlined_call_operand.vmem [shape: f32[64,256], index: 6, kind: input, shape index: {}]
  %s7 = inlined_call_operand.vmem [shape: f32[1,256], index: 7, kind: input, shape index: {}]
  %s8 = inlined_call_operand.vmem [shape: f32[64,256], index: 8, kind: input, shape index: {}]
  %s9 = inlined_call_operand.vmem [shape: f32[64,16], index: 9, kind: input, shape index: {}]
  %s10 = inlined_call_operand.vmem [shape: f32[1,16], index: 10, kind: input, shape index: {}]
  %s11 = inlined_call_operand.vmem [shape: f32[20,16], index: 11, kind: output, shape index: {}]
  %s12 = sld [smem:[#allocation0]]
  $region58: #{forward.1} parent=0
    _
  %s14 = ssub.s32 1, %s12
  %s15 = scalar_select 0, %s14, %s12
  $region1: #{forward.1} parent=0
    #allocation2 [shape = 'u8[512]{0}', space=smem, size = 0x200, scoped, tag = 'input window, operand 0, single buffered']
    #allocation3 [shape = 's32[1]{0}', space=sflag, size = 0x4, scoped, tag = 'scoped memory for forward.1']
    %16 = vsyncpa [#allocation3], 0
    // Predicated region
    $region2: #{forward.1} parent=1 // pred_check
      _
    $region3: #{forward.1} parent=1 // pred_check_branch
      %18 = sbr.rel (0) target = $region5
    $region4: #{forward.1} parent=1 // pred_region
      %s20 = ssub.s32 16, 16
      %21 = vsyncadd [#allocation3], %s20
      %s23 = sshll.u32 %s0, 4
      %s24 = int_to_ptr.vmem [resolvable:$true] %s23
      %26 = dma.vmem_to_smem %s24, 16, [#allocation2], [#allocation3]
    $region5: #{forward.1} parent=1 // pred_fallthru
      _
    // Predicated region
    $region6: #{forward.1} parent=1 // pred_check
      _
    $region7: #{forward.1} parent=1 // pred_check_branch
      %28 = sbr.rel (0) target = $region9
    $region8: #{forward.1} parent=1 // pred_region
      _
    $region9: #{forward.1} parent=1 // pred_fallthru
      _
    // Predicated region
    $region10: #{forward.1} parent=1 // pred_check
      _
    $region11: #{forward.1} parent=1 // pred_check_branch
      %30 = sbr.rel (0) target = $region13
    $region12: #{forward.1} parent=1 // pred_region
      _
    $region13: #{forward.1} parent=1 // pred_fallthru
      _
    // Predicated region
    $region14: #{forward.1} parent=1 // pred_check
      _
    $region15: #{forward.1} parent=1 // pred_check_branch
      %32 = sbr.rel (0) target = $region17
    $region16: #{forward.1} parent=1 // pred_region
      _
    $region17: #{forward.1} parent=1 // pred_fallthru
      _
    // Predicated region
    $region18: #{forward.1} parent=1 // pred_check
      _
    $region19: #{forward.1} parent=1 // pred_check_branch
      %34 = sbr.rel (0) target = $region21
    $region20: #{forward.1} parent=1 // pred_region
      _
    $region21: #{forward.1} parent=1 // pred_fallthru
      _
    // Predicated region
    $region22: #{forward.1} parent=1 // pred_check
      _
    $region23: #{forward.1} parent=1 // pred_check_branch
      %36 = sbr.rel (0) target = $region25
    $region24: #{forward.1} parent=1 // pred_region
      _
    $region25: #{forward.1} parent=1 // pred_fallthru
      _
    // Predicated region
    $region26: #{forward.1} parent=1 // pred_check
      _
    $region27: #{forward.1} parent=1 // pred_check_branch
      %38 = sbr.rel (0) target = $region29
    $region28: #{forward.1} parent=1 // pred_region
      _
    $region29: #{forward.1} parent=1 // pred_fallthru
      _
    // Predicated region
    $region30: #{forward.1} parent=1 // pred_check
      _
    $region31: #{forward.1} parent=1 // pred_check_branch
      %40 = sbr.rel (0) target = $region33
    $region32: #{forward.1} parent=1 // pred_region
      _
    $region33: #{forward.1} parent=1 // pred_fallthru
      _
    // Predicated region
    $region34: #{forward.1} parent=1 // pred_check
      _
    $region35: #{forward.1} parent=1 // pred_check_branch
      %42 = sbr.rel (0) target = $region37
    $region36: #{forward.1} parent=1 // pred_region
      _
    $region37: #{forward.1} parent=1 // pred_fallthru
      _
    // Predicated region
    $region38: #{forward.1} parent=1 // pred_check
      _
    $region39: #{forward.1} parent=1 // pred_check_branch
      %44 = sbr.rel (0) target = $region41
    $region40: #{forward.1} parent=1 // pred_region
      _
    $region41: #{forward.1} parent=1 // pred_fallthru
      _
    // Predicated region
    $region42: #{forward.1} parent=1 // pred_check
      _
    $region43: #{forward.1} parent=1 // pred_check_branch
      %46 = sbr.rel (0) target = $region45
    $region44: #{forward.1} parent=1 // pred_region
      _
    $region45: #{forward.1} parent=1 // pred_fallthru
      _
    // Predicated region
    $region46: #{forward.1} parent=1 // pred_check
      _
    $region47: #{forward.1} parent=1 // pred_check_branch
      %48 = sbr.rel (0) target = $region49
    $region48: #{forward.1} parent=1 // pred_region
      %49 = dma.done [#allocation3], 16
    $region49: #{forward.1} parent=1 // pred_fallthru
      _
    %50 = sfence
    %v51 = vld [vmem:[%s1] sm:$0xff]
    %v52 = vld [vmem:[%s1 + $0x8] sm:$0x3]
    %v53 = vld [vmem:[%s1 + $0x10] sm:$0xff]
    %v54 = vld [vmem:[%s1 + $0x18] sm:$0x3]
    %v55 = vld [vmem:[%s1 + $0x20] sm:$0xff]
    %v56 = vld [vmem:[%s1 + $0x28] sm:$0x3]
    %v57 = vld [vmem:[%s1 + $0x30] sm:$0xff]
    %v58 = vld [vmem:[%s1 + $0x38] sm:$0x3]
    %v59 = vld [vmem:[%s1 + $0x40] sm:$0xff]
    %v60 = vld [vmem:[%s1 + $0x48] sm:$0x3]
    %s61 = sld [smem:[#allocation2]]
    %v62 = vstv %s61
    %v63 = vmul.f32 %v51, %v62
    %v64 = vadd.f32 %v63, 0.0
    %s65 = sld [smem:[#allocation2 + $0x3]]
    %v66 = vstv %s65
    %v67 = vmul.f32 %v51, %v66
    %v68 = vmul.f32 %v52, %v66
    %vm71 = vcmask 1046528
    %v72 = vrot.slane %v67, 1
    %v73 = vrot.slane %v68, 1
    %v74 = vsel %vm71, %v72, %v73
    %v76 = vadd.f32 %v64, %v74
    %s77 = sld [smem:[#allocation2 + $0x6]]
    %v78 = vstv %s77
    %v79 = vmul.f32 %v51, %v78
    %v80 = vmul.f32 %v52, %v78
    %vm83 = vcmask 1045504
    %v84 = vrot.slane %v79, 2
    %v85 = vrot.slane %v80, 2
    %v86 = vsel %vm83, %v84, %v85
    %v88 = vadd.f32 %v76, %v86
    %s89 = sld [smem:[#allocation2 + $0x1]]
    %v90 = vstv %s89
    %v91 = vmul.f32 %v51, %v90
    %93 = vrot.lane.b32.xlu0 %v91, 127
    %v94 = vpop.permute.xlu0 %93
    %v96 = vadd.f32 %v88, %v94
    %s97 = sld [smem:[#allocation2 + $0x4]]
    %v98 = vstv %s97
    %v99 = vmul.f32 %v51, %v98
    %v100 = vmul.f32 %v52, %v98
    %v103 = vrot.slane %v99, 1
    %v104 = vrot.slane %v100, 1
    %v105 = vsel %vm71, %v103, %v104
    %106 = vrot.lane.b32.xlu0 %v105, 127
    %v107 = vpop.permute.xlu0 %106
    %v109 = vadd.f32 %v96, %v107
    %s110 = sld [smem:[#allocation2 + $0x7]]
    %v111 = vstv %s110
    %v112 = vmul.f32 %v51, %v111
    %v113 = vmul.f32 %v52, %v111
    %v116 = vrot.slane %v112, 2
    %v117 = vrot.slane %v113, 2
    %v118 = vsel %vm83, %v116, %v117
    %119 = vrot.lane.b32.xlu0 %v118, 127
    %v120 = vpop.permute.xlu0 %119
    %v122 = vadd.f32 %v109, %v120
    %s123 = sld [smem:[#allocation2 + $0x2]]
    %v124 = vstv %s123
    %v125 = vmul.f32 %v51, %v124
    %127 = vrot.lane.b32.xlu0 %v125, 126
    %v128 = vpop.permute.xlu0 %127
    %v130 = vadd.f32 %v122, %v128
    %s131 = sld [smem:[#allocation2 + $0x5]]
    %v132 = vstv %s131
    %v133 = vmul.f32 %v51, %v132
    %v134 = vmul.f32 %v52, %v132
    %v137 = vrot.slane %v133, 1
    %v138 = vrot.slane %v134, 1
    %v139 = vsel %vm71, %v137, %v138
    %140 = vrot.lane.b32.xlu0 %v139, 126
    %v141 = vpop.permute.xlu0 %140
    %v143 = vadd.f32 %v130, %v141
    %s144 = sld [smem:[#allocation2 + $0x8]]
    %v145 = vstv %s144
    %v146 = vmul.f32 %v51, %v145
    %v147 = vmul.f32 %v52, %v145
    %v150 = vrot.slane %v146, 2
    %v151 = vrot.slane %v147, 2
    %v152 = vsel %vm83, %v150, %v151
    %153 = vrot.lane.b32.xlu0 %v152, 126
    %v154 = vpop.permute.xlu0 %153
    %v156 = vadd.f32 %v143, %v154
    %s157 = sld [smem:[#allocation2 + $0x9]]
    %v158 = vstv %s157
    %v159 = vmul.f32 %v53, %v158
    %v160 = vadd.f32 %v156, %v159
    %s161 = sld [smem:[#allocation2 + $0xc]]
    %v162 = vstv %s161
    %v163 = vmul.f32 %v53, %v162
    %v164 = vmul.f32 %v54, %v162
    %v167 = vrot.slane %v163, 1
    %v168 = vrot.slane %v164, 1
    %v169 = vsel %vm71, %v167, %v168
    %v171 = vadd.f32 %v160, %v169
    %s172 = sld [smem:[#allocation2 + $0xf]]
    %v173 = vstv %s172
    %v174 = vmul.f32 %v53, %v173
    %v175 = vmul.f32 %v54, %v173
    %v178 = vrot.slane %v174, 2
    %v179 = vrot.slane %v175, 2
    %v180 = vsel %vm83, %v178, %v179
    %v182 = vadd.f32 %v171, %v180
    %s183 = sld [smem:[#allocation2 + $0xa]]
    %v184 = vstv %s183
    %v185 = vmul.f32 %v53, %v184
    %187 = vrot.lane.b32.xlu0 %v185, 127
    %v188 = vpop.permute.xlu0 %187
    %v190 = vadd.f32 %v182, %v188
    %s191 = sld [smem:[#allocation2 + $0xd]]
    %v192 = vstv %s191
    %v193 = vmul.f32 %v53, %v192
    %v194 = vmul.f32 %v54, %v192
    %v197 = vrot.slane %v193, 1
    %v198 = vrot.slane %v194, 1
    %v199 = vsel %vm71, %v197, %v198
    %200 = vrot.lane.b32.xlu0 %v199, 127
    %v201 = vpop.permute.xlu0 %200
    %v203 = vadd.f32 %v190, %v201
    %s204 = sld [smem:[#allocation2 + $0x10]]
    %v205 = vstv %s204
    %v206 = vmul.f32 %v53, %v205
    %v207 = vmul.f32 %v54, %v205
    %v210 = vrot.slane %v206, 2
    %v211 = vrot.slane %v207, 2
    %v212 = vsel %vm83, %v210, %v211
    %213 = vrot.lane.b32.xlu0 %v212, 127
    %v214 = vpop.permute.xlu0 %213
    %v216 = vadd.f32 %v203, %v214
    %s217 = sld [smem:[#allocation2 + $0xb]]
    %v218 = vstv %s217
    %v219 = vmul.f32 %v53, %v218
    %221 = vrot.lane.b32.xlu0 %v219, 126
    %v222 = vpop.permute.xlu0 %221
    %v224 = vadd.f32 %v216, %v222
    %s225 = sld [smem:[#allocation2 + $0xe]]
    %v226 = vstv %s225
    %v227 = vmul.f32 %v53, %v226
    %v228 = vmul.f32 %v54, %v226
    %v231 = vrot.slane %v227, 1
    %v232 = vrot.slane %v228, 1
    %v233 = vsel %vm71, %v231, %v232
    %234 = vrot.lane.b32.xlu0 %v233, 126
    %v235 = vpop.permute.xlu0 %234
    %v237 = vadd.f32 %v224, %v235
    %s238 = sld [smem:[#allocation2 + $0x11]]
    %v239 = vstv %s238
    %v240 = vmul.f32 %v53, %v239
    %v241 = vmul.f32 %v54, %v239
    %v244 = vrot.slane %v240, 2
    %v245 = vrot.slane %v241, 2
    %v246 = vsel %vm83, %v244, %v245
    %247 = vrot.lane.b32.xlu0 %v246, 126
    %v248 = vpop.permute.xlu0 %247
    %v250 = vadd.f32 %v237, %v248
    %s251 = sld [smem:[#allocation2 + $0x12]]
    %v252 = vstv %s251
    %v253 = vmul.f32 %v55, %v252
    %v254 = vadd.f32 %v250, %v253
    %s255 = sld [smem:[#allocation2 + $0x15]]
    %v256 = vstv %s255
    %v257 = vmul.f32 %v55, %v256
    %v258 = vmul.f32 %v56, %v256
    %v261 = vrot.slane %v257, 1
    %v262 = vrot.slane %v258, 1
    %v263 = vsel %vm71, %v261, %v262
    %v265 = vadd.f32 %v254, %v263
    %s266 = sld [smem:[#allocation2 + $0x18]]
    %v267 = vstv %s266
    %v268 = vmul.f32 %v55, %v267
    %v269 = vmul.f32 %v56, %v267
    %v272 = vrot.slane %v268, 2
    %v273 = vrot.slane %v269, 2
    %v274 = vsel %vm83, %v272, %v273
    %v276 = vadd.f32 %v265, %v274
    %s277 = sld [smem:[#allocation2 + $0x13]]
    %v278 = vstv %s277
    %v279 = vmul.f32 %v55, %v278
    %281 = vrot.lane.b32.xlu0 %v279, 127
    %v282 = vpop.permute.xlu0 %281
    %v284 = vadd.f32 %v276, %v282
    %s285 = sld [smem:[#allocation2 + $0x16]]
    %v286 = vstv %s285
    %v287 = vmul.f32 %v55, %v286
    %v288 = vmul.f32 %v56, %v286
    %v291 = vrot.slane %v287, 1
    %v292 = vrot.slane %v288, 1
    %v293 = vsel %vm71, %v291, %v292
    %294 = vrot.lane.b32.xlu0 %v293, 127
    %v295 = vpop.permute.xlu0 %294
    %v297 = vadd.f32 %v284, %v295
    %s298 = sld [smem:[#allocation2 + $0x19]]
    %v299 = vstv %s298
    %v300 = vmul.f32 %v55, %v299
    %v301 = vmul.f32 %v56, %v299
    %v304 = vrot.slane %v300, 2
    %v305 = vrot.slane %v301, 2
    %v306 = vsel %vm83, %v304, %v305
    %307 = vrot.lane.b32.xlu0 %v306, 127
    %v308 = vpop.permute.xlu0 %307
    %v310 = vadd.f32 %v297, %v308
    %s311 = sld [smem:[#allocation2 + $0x14]]
    %v312 = vstv %s311
    %v313 = vmul.f32 %v55, %v312
    %315 = vrot.lane.b32.xlu0 %v313, 126
    %v316 = vpop.permute.xlu0 %315
    %v318 = vadd.f32 %v310, %v316
    %s319 = sld [smem:[#allocation2 + $0x17]]
    %v320 = vstv %s319
    %v321 = vmul.f32 %v55, %v320
    %v322 = vmul.f32 %v56, %v320
    %v325 = vrot.slane %v321, 1
    %v326 = vrot.slane %v322, 1
    %v327 = vsel %vm71, %v325, %v326
    %328 = vrot.lane.b32.xlu0 %v327, 126
    %v329 = vpop.permute.xlu0 %328
    %v331 = vadd.f32 %v318, %v329
    %s332 = sld [smem:[#allocation2 + $0x1a]]
    %v333 = vstv %s332
    %v334 = vmul.f32 %v55, %v333
    %v335 = vmul.f32 %v56, %v333
    %v338 = vrot.slane %v334, 2
    %v339 = vrot.slane %v335, 2
    %v340 = vsel %vm83, %v338, %v339
    %341 = vrot.lane.b32.xlu0 %v340, 126
    %v342 = vpop.permute.xlu0 %341
    %v344 = vadd.f32 %v331, %v342
    %s345 = sld [smem:[#allocation2 + $0x1b]]
    %v346 = vstv %s345
    %v347 = vmul.f32 %v57, %v346
    %v348 = vadd.f32 %v344, %v347
    %s349 = sld [smem:[#allocation2 + $0x1e]]
    %v350 = vstv %s349
    %v351 = vmul.f32 %v57, %v350
    %v352 = vmul.f32 %v58, %v350
    %v355 = vrot.slane %v351, 1
    %v356 = vrot.slane %v352, 1
    %v357 = vsel %vm71, %v355, %v356
    %v359 = vadd.f32 %v348, %v357
    %s360 = sld [smem:[#allocation2 + $0x21]]
    %v361 = vstv %s360
    %v362 = vmul.f32 %v57, %v361
    %v363 = vmul.f32 %v58, %v361
    %v366 = vrot.slane %v362, 2
    %v367 = vrot.slane %v363, 2
    %v368 = vsel %vm83, %v366, %v367
    %v370 = vadd.f32 %v359, %v368
    %s371 = sld [smem:[#allocation2 + $0x1c]]
    %v372 = vstv %s371
    %v373 = vmul.f32 %v57, %v372
    %375 = vrot.lane.b32.xlu0 %v373, 127
    %v376 = vpop.permute.xlu0 %375
    %v378 = vadd.f32 %v370, %v376
    %s379 = sld [smem:[#allocation2 + $0x1f]]
    %v380 = vstv %s379
    %v381 = vmul.f32 %v57, %v380
    %v382 = vmul.f32 %v58, %v380
    %v385 = vrot.slane %v381, 1
    %v386 = vrot.slane %v382, 1
    %v387 = vsel %vm71, %v385, %v386
    %388 = vrot.lane.b32.xlu0 %v387, 127
    %v389 = vpop.permute.xlu0 %388
    %v391 = vadd.f32 %v378, %v389
    %s392 = sld [smem:[#allocation2 + $0x22]]
    %v393 = vstv %s392
    %v394 = vmul.f32 %v57, %v393
    %v395 = vmul.f32 %v58, %v393
    %v398 = vrot.slane %v394, 2
    %v399 = vrot.slane %v395, 2
    %v400 = vsel %vm83, %v398, %v399
    %401 = vrot.lane.b32.xlu0 %v400, 127
    %v402 = vpop.permute.xlu0 %401
    %v404 = vadd.f32 %v391, %v402
    %s405 = sld [smem:[#allocation2 + $0x1d]]
    %v406 = vstv %s405
    %v407 = vmul.f32 %v57, %v406
    %409 = vrot.lane.b32.xlu0 %v407, 126
    %v410 = vpop.permute.xlu0 %409
    %v412 = vadd.f32 %v404, %v410
    %s413 = sld [smem:[#allocation2 + $0x20]]
    %v414 = vstv %s413
    %v415 = vmul.f32 %v57, %v414
    %v416 = vmul.f32 %v58, %v414
    %v419 = vrot.slane %v415, 1
    %v420 = vrot.slane %v416, 1
    %v421 = vsel %vm71, %v419, %v420
    %422 = vrot.lane.b32.xlu0 %v421, 126
    %v423 = vpop.permute.xlu0 %422
    %v425 = vadd.f32 %v412, %v423
    %s426 = sld [smem:[#allocation2 + $0x23]]
    %v427 = vstv %s426
    %v428 = vmul.f32 %v57, %v427
    %v429 = vmul.f32 %v58, %v427
    %v432 = vrot.slane %v428, 2
    %v433 = vrot.slane %v429, 2
    %v434 = vsel %vm83, %v432, %v433
    %435 = vrot.lane.b32.xlu0 %v434, 126
    %v436 = vpop.permute.xlu0 %435
    %v438 = vadd.f32 %v425, %v436
    %s439 = sld [smem:[#allocation2 + $0x24]]
    %v440 = vstv %s439
    %v441 = vmul.f32 %v59, %v440
    %v442 = vadd.f32 %v438, %v441
    %s443 = sld [smem:[#allocation2 + $0x27]]
    %v444 = vstv %s443
    %v445 = vmul.f32 %v59, %v444
    %v446 = vmul.f32 %v60, %v444
    %v449 = vrot.slane %v445, 1
    %v450 = vrot.slane %v446, 1
    %v451 = vsel %vm71, %v449, %v450
    %v453 = vadd.f32 %v442, %v451
    %s454 = sld [smem:[#allocation2 + $0x2a]]
    %v455 = vstv %s454
    %v456 = vmul.f32 %v59, %v455
    %v457 = vmul.f32 %v60, %v455
    %v460 = vrot.slane %v456, 2
    %v461 = vrot.slane %v457, 2
    %v462 = vsel %vm83, %v460, %v461
    %v464 = vadd.f32 %v453, %v462
    %s465 = sld [smem:[#allocation2 + $0x25]]
    %v466 = vstv %s465
    %v467 = vmul.f32 %v59, %v466
    %469 = vrot.lane.b32.xlu0 %v467, 127
    %v470 = vpop.permute.xlu0 %469
    %v472 = vadd.f32 %v464, %v470
    %s473 = sld [smem:[#allocation2 + $0x28]]
    %v474 = vstv %s473
    %v475 = vmul.f32 %v59, %v474
    %v476 = vmul.f32 %v60, %v474
    %v479 = vrot.slane %v475, 1
    %v480 = vrot.slane %v476, 1
    %v481 = vsel %vm71, %v479, %v480
    %482 = vrot.lane.b32.xlu0 %v481, 127
    %v483 = vpop.permute.xlu0 %482
    %v485 = vadd.f32 %v472, %v483
    %s486 = sld [smem:[#allocation2 + $0x2b]]
    %v487 = vstv %s486
    %v488 = vmul.f32 %v59, %v487
    %v489 = vmul.f32 %v60, %v487
    %v492 = vrot.slane %v488, 2
    %v493 = vrot.slane %v489, 2
    %v494 = vsel %vm83, %v492, %v493
    %495 = vrot.lane.b32.xlu0 %v494, 127
    %v496 = vpop.permute.xlu0 %495
    %v498 = vadd.f32 %v485, %v496
    %s499 = sld [smem:[#allocation2 + $0x26]]
    %v500 = vstv %s499
    %v501 = vmul.f32 %v59, %v500
    %503 = vrot.lane.b32.xlu0 %v501, 126
    %v504 = vpop.permute.xlu0 %503
    %v506 = vadd.f32 %v498, %v504
    %s507 = sld [smem:[#allocation2 + $0x29]]
    %v508 = vstv %s507
    %v509 = vmul.f32 %v59, %v508
    %v510 = vmul.f32 %v60, %v508
    %v513 = vrot.slane %v509, 1
    %v514 = vrot.slane %v510, 1
    %v515 = vsel %vm71, %v513, %v514
    %516 = vrot.lane.b32.xlu0 %v515, 126
    %v517 = vpop.permute.xlu0 %516
    %v519 = vadd.f32 %v506, %v517
    %s520 = sld [smem:[#allocation2 + $0x2c]]
    %v521 = vstv %s520
    %v522 = vmul.f32 %v59, %v521
    %v523 = vmul.f32 %v60, %v521
    %v526 = vrot.slane %v522, 2
    %v527 = vrot.slane %v523, 2
    %v528 = vsel %vm83, %v526, %v527
    %529 = vrot.lane.b32.xlu0 %v528, 126
    %v530 = vpop.permute.xlu0 %529
    %v532 = vadd.f32 %v519, %v530
    %s533 = sld [smem:[#allocation2 + $0x2d]]
    %v534 = vstv %s533
    %v535 = vadd.f32 %v532, %v534
    %s536 = scalar_lea.vmem %s1, 80
    %v537 = vld [vmem:[%s536] sm:$0xff]
    %v538 = vld [vmem:[%s536 + $0x8] sm:$0x3]
    %v539 = vld [vmem:[%s536 + $0x10] sm:$0xff]
    %v540 = vld [vmem:[%s536 + $0x18] sm:$0x3]
    %v541 = vld [vmem:[%s536 + $0x20] sm:$0xff]
    %v542 = vld [vmem:[%s536 + $0x28] sm:$0x3]
    %v543 = vld [vmem:[%s536 + $0x30] sm:$0xff]
    %v544 = vld [vmem:[%s536 + $0x38] sm:$0x3]
    %v545 = vld [vmem:[%s536 + $0x40] sm:$0xff]
    %v546 = vld [vmem:[%s536 + $0x48] sm:$0x3]
    %v547 = vmul.f32 %v537, %v62
    %v548 = vadd.f32 %v547, 0.0
    %v549 = vmul.f32 %v537, %v66
    %v550 = vmul.f32 %v538, %v66
    %v553 = vrot.slane %v549, 1
    %v554 = vrot.slane %v550, 1
    %v555 = vsel %vm71, %v553, %v554
    %v557 = vadd.f32 %v548, %v555
    %v558 = vmul.f32 %v537, %v78
    %v559 = vmul.f32 %v538, %v78
    %v562 = vrot.slane %v558, 2
    %v563 = vrot.slane %v559, 2
    %v564 = vsel %vm83, %v562, %v563
    %v566 = vadd.f32 %v557, %v564
    %v567 = vmul.f32 %v537, %v90
    %569 = vrot.lane.b32.xlu0 %v567, 127
    %v570 = vpop.permute.xlu0 %569
    %v572 = vadd.f32 %v566, %v570
    %v573 = vmul.f32 %v537, %v98
    %v574 = vmul.f32 %v538, %v98
    %v577 = vrot.slane %v573, 1
    %v578 = vrot.slane %v574, 1
    %v579 = vsel %vm71, %v577, %v578
    %580 = vrot.lane.b32.xlu0 %v579, 127
    %v581 = vpop.permute.xlu0 %580
    %v583 = vadd.f32 %v572, %v581
    %v584 = vmul.f32 %v537, %v111
    %v585 = vmul.f32 %v538, %v111
    %v588 = vrot.slane %v584, 2
    %v589 = vrot.slane %v585, 2
    %v590 = vsel %vm83, %v588, %v589
    %591 = vrot.lane.b32.xlu0 %v590, 127
    %v592 = vpop.permute.xlu0 %591
    %v594 = vadd.f32 %v583, %v592
    %v595 = vmul.f32 %v537, %v124
    %597 = vrot.lane.b32.xlu0 %v595, 126
    %v598 = vpop.permute.xlu0 %597
    %v600 = vadd.f32 %v594, %v598
    %v601 = vmul.f32 %v537, %v132
    %v602 = vmul.f32 %v538, %v132
    %v605 = vrot.slane %v601, 1
    %v606 = vrot.slane %v602, 1
    %v607 = vsel %vm71, %v605, %v606
    %608 = vrot.lane.b32.xlu0 %v607, 126
    %v609 = vpop.permute.xlu0 %608
    %v611 = vadd.f32 %v600, %v609
    %v612 = vmul.f32 %v537, %v145
    %v613 = vmul.f32 %v538, %v145
    %v616 = vrot.slane %v612, 2
    %v617 = vrot.slane %v613, 2
    %v618 = vsel %vm83, %v616, %v617
    %619 = vrot.lane.b32.xlu0 %v618, 126
    %v620 = vpop.permute.xlu0 %619
    %v622 = vadd.f32 %v611, %v620
    %v623 = vmul.f32 %v539, %v158
    %v624 = vadd.f32 %v622, %v623
    %v625 = vmul.f32 %v539, %v162
    %v626 = vmul.f32 %v540, %v162
    %v629 = vrot.slane %v625, 1
    %v630 = vrot.slane %v626, 1
    %v631 = vsel %vm71, %v629, %v630
    %v633 = vadd.f32 %v624, %v631
    %v634 = vmul.f32 %v539, %v173
    %v635 = vmul.f32 %v540, %v173
    %v638 = vrot.slane %v634, 2
    %v639 = vrot.slane %v635, 2
    %v640 = vsel %vm83, %v638, %v639
    %v642 = vadd.f32 %v633, %v640
    %v643 = vmul.f32 %v539, %v184
    %645 = vrot.lane.b32.xlu0 %v643, 127
    %v646 = vpop.permute.xlu0 %645
    %v648 = vadd.f32 %v642, %v646
    %v649 = vmul.f32 %v539, %v192
    %v650 = vmul.f32 %v540, %v192
    %v653 = vrot.slane %v649, 1
    %v654 = vrot.slane %v650, 1
    %v655 = vsel %vm71, %v653, %v654
    %656 = vrot.lane.b32.xlu0 %v655, 127
    %v657 = vpop.permute.xlu0 %656
    %v659 = vadd.f32 %v648, %v657
    %v660 = vmul.f32 %v539, %v205
    %v661 = vmul.f32 %v540, %v205
    %v664 = vrot.slane %v660, 2
    %v665 = vrot.slane %v661, 2
    %v666 = vsel %vm83, %v664, %v665
    %667 = vrot.lane.b32.xlu0 %v666, 127
    %v668 = vpop.permute.xlu0 %667
    %v670 = vadd.f32 %v659, %v668
    %v671 = vmul.f32 %v539, %v218
    %673 = vrot.lane.b32.xlu0 %v671, 126
    %v674 = vpop.permute.xlu0 %673
    %v676 = vadd.f32 %v670, %v674
    %v677 = vmul.f32 %v539, %v226
    %v678 = vmul.f32 %v540, %v226
    %v681 = vrot.slane %v677, 1
    %v682 = vrot.slane %v678, 1
    %v683 = vsel %vm71, %v681, %v682
    %684 = vrot.lane.b32.xlu0 %v683, 126
    %v685 = vpop.permute.xlu0 %684
    %v687 = vadd.f32 %v676, %v685
    %v688 = vmul.f32 %v539, %v239
    %v689 = vmul.f32 %v540, %v239
    %v692 = vrot.slane %v688, 2
    %v693 = vrot.slane %v689, 2
    %v694 = vsel %vm83, %v692, %v693
    %695 = vrot.lane.b32.xlu0 %v694, 126
    %v696 = vpop.permute.xlu0 %695
    %v698 = vadd.f32 %v687, %v696
    %v699 = vmul.f32 %v541, %v252
    %v700 = vadd.f32 %v698, %v699
    %v701 = vmul.f32 %v541, %v256
    %v702 = vmul.f32 %v542, %v256
    %v705 = vrot.slane %v701, 1
    %v706 = vrot.slane %v702, 1
    %v707 = vsel %vm71, %v705, %v706
    %v709 = vadd.f32 %v700, %v707
    %v710 = vmul.f32 %v541, %v267
    %v711 = vmul.f32 %v542, %v267
    %v714 = vrot.slane %v710, 2
    %v715 = vrot.slane %v711, 2
    %v716 = vsel %vm83, %v714, %v715
    %v718 = vadd.f32 %v709, %v716
    %v719 = vmul.f32 %v541, %v278
    %721 = vrot.lane.b32.xlu0 %v719, 127
    %v722 = vpop.permute.xlu0 %721
    %v724 = vadd.f32 %v718, %v722
    %v725 = vmul.f32 %v541, %v286
    %v726 = vmul.f32 %v542, %v286
    %v729 = vrot.slane %v725, 1
    %v730 = vrot.slane %v726, 1
    %v731 = vsel %vm71, %v729, %v730
    %732 = vrot.lane.b32.xlu0 %v731, 127
    %v733 = vpop.permute.xlu0 %732
    %v735 = vadd.f32 %v724, %v733
    %v736 = vmul.f32 %v541, %v299
    %v737 = vmul.f32 %v542, %v299
    %v740 = vrot.slane %v736, 2
    %v741 = vrot.slane %v737, 2
    %v742 = vsel %vm83, %v740, %v741
    %743 = vrot.lane.b32.xlu0 %v742, 127
    %v744 = vpop.permute.xlu0 %743
    %v746 = vadd.f32 %v735, %v744
    %v747 = vmul.f32 %v541, %v312
    %749 = vrot.lane.b32.xlu0 %v747, 126
    %v750 = vpop.permute.xlu0 %749
    %v752 = vadd.f32 %v746, %v750
    %v753 = vmul.f32 %v541, %v320
    %v754 = vmul.f32 %v542, %v320
    %v757 = vrot.slane %v753, 1
    %v758 = vrot.slane %v754, 1
    %v759 = vsel %vm71, %v757, %v758
    %760 = vrot.lane.b32.xlu0 %v759, 126
    %v761 = vpop.permute.xlu0 %760
    %v763 = vadd.f32 %v752, %v761
    %v764 = vmul.f32 %v541, %v333
    %v765 = vmul.f32 %v542, %v333
    %v768 = vrot.slane %v764, 2
    %v769 = vrot.slane %v765, 2
    %v770 = vsel %vm83, %v768, %v769
    %771 = vrot.lane.b32.xlu0 %v770, 126
    %v772 = vpop.permute.xlu0 %771
    %v774 = vadd.f32 %v763, %v772
    %v775 = vmul.f32 %v543, %v346
    %v776 = vadd.f32 %v774, %v775
    %v777 = vmul.f32 %v543, %v350
    %v778 = vmul.f32 %v544, %v350
    %v781 = vrot.slane %v777, 1
    %v782 = vrot.slane %v778, 1
    %v783 = vsel %vm71, %v781, %v782
    %v785 = vadd.f32 %v776, %v783
    %v786 = vmul.f32 %v543, %v361
    %v787 = vmul.f32 %v544, %v361
    %v790 = vrot.slane %v786, 2
    %v791 = vrot.slane %v787, 2
    %v792 = vsel %vm83, %v790, %v791
    %v794 = vadd.f32 %v785, %v792
    %v795 = vmul.f32 %v543, %v372
    %797 = vrot.lane.b32.xlu0 %v795, 127
    %v798 = vpop.permute.xlu0 %797
    %v800 = vadd.f32 %v794, %v798
    %v801 = vmul.f32 %v543, %v380
    %v802 = vmul.f32 %v544, %v380
    %v805 = vrot.slane %v801, 1
    %v806 = vrot.slane %v802, 1
    %v807 = vsel %vm71, %v805, %v806
    %808 = vrot.lane.b32.xlu0 %v807, 127
    %v809 = vpop.permute.xlu0 %808
    %v811 = vadd.f32 %v800, %v809
    %v812 = vmul.f32 %v543, %v393
    %v813 = vmul.f32 %v544, %v393
    %v816 = vrot.slane %v812, 2
    %v817 = vrot.slane %v813, 2
    %v818 = vsel %vm83, %v816, %v817
    %819 = vrot.lane.b32.xlu0 %v818, 127
    %v820 = vpop.permute.xlu0 %819
    %v822 = vadd.f32 %v811, %v820
    %v823 = vmul.f32 %v543, %v406
    %825 = vrot.lane.b32.xlu0 %v823, 126
    %v826 = vpop.permute.xlu0 %825
    %v828 = vadd.f32 %v822, %v826
    %v829 = vmul.f32 %v543, %v414
    %v830 = vmul.f32 %v544, %v414
    %v833 = vrot.slane %v829, 1
    %v834 = vrot.slane %v830, 1
    %v835 = vsel %vm71, %v833, %v834
    %836 = vrot.lane.b32.xlu0 %v835, 126
    %v837 = vpop.permute.xlu0 %836
    %v839 = vadd.f32 %v828, %v837
    %v840 = vmul.f32 %v543, %v427
    %v841 = vmul.f32 %v544, %v427
    %v844 = vrot.slane %v840, 2
    %v845 = vrot.slane %v841, 2
    %v846 = vsel %vm83, %v844, %v845
    %847 = vrot.lane.b32.xlu0 %v846, 126
    %v848 = vpop.permute.xlu0 %847
    %v850 = vadd.f32 %v839, %v848
    %v851 = vmul.f32 %v545, %v440
    %v852 = vadd.f32 %v850, %v851
    %v853 = vmul.f32 %v545, %v444
    %v854 = vmul.f32 %v546, %v444
    %v857 = vrot.slane %v853, 1
    %v858 = vrot.slane %v854, 1
    %v859 = vsel %vm71, %v857, %v858
    %v861 = vadd.f32 %v852, %v859
    %v862 = vmul.f32 %v545, %v455
    %v863 = vmul.f32 %v546, %v455
    %v866 = vrot.slane %v862, 2
    %v867 = vrot.slane %v863, 2
    %v868 = vsel %vm83, %v866, %v867
    %v870 = vadd.f32 %v861, %v868
    %v871 = vmul.f32 %v545, %v466
    %873 = vrot.lane.b32.xlu0 %v871, 127
    %v874 = vpop.permute.xlu0 %873
    %v876 = vadd.f32 %v870, %v874
    %v877 = vmul.f32 %v545, %v474
    %v878 = vmul.f32 %v546, %v474
    %v881 = vrot.slane %v877, 1
    %v882 = vrot.slane %v878, 1
    %v883 = vsel %vm71, %v881, %v882
    %884 = vrot.lane.b32.xlu0 %v883, 127
    %v885 = vpop.permute.xlu0 %884
    %v887 = vadd.f32 %v876, %v885
    %v888 = vmul.f32 %v545, %v487
    %v889 = vmul.f32 %v546, %v487
    %v892 = vrot.slane %v888, 2
    %v893 = vrot.slane %v889, 2
    %v894 = vsel %vm83, %v892, %v893
    %895 = vrot.lane.b32.xlu0 %v894, 127
    %v896 = vpop.permute.xlu0 %895
    %v898 = vadd.f32 %v887, %v896
    %v899 = vmul.f32 %v545, %v500
    %901 = vrot.lane.b32.xlu0 %v899, 126
    %v902 = vpop.permute.xlu0 %901
    %v904 = vadd.f32 %v898, %v902
    %v905 = vmul.f32 %v545, %v508
    %v906 = vmul.f32 %v546, %v508
    %v909 = vrot.slane %v905, 1
    %v910 = vrot.slane %v906, 1
    %v911 = vsel %vm71, %v909, %v910
    %912 = vrot.lane.b32.xlu0 %v911, 126
    %v913 = vpop.permute.xlu0 %912
    %v915 = vadd.f32 %v904, %v913
    %v916 = vmul.f32 %v545, %v521
    %v917 = vmul.f32 %v546, %v521
    %v920 = vrot.slane %v916, 2
    %v921 = vrot.slane %v917, 2
    %v922 = vsel %vm83, %v920, %v921
    %923 = vrot.lane.b32.xlu0 %v922, 126
    %v924 = vpop.permute.xlu0 %923
    %v926 = vadd.f32 %v915, %v924
    %v927 = vadd.f32 %v926, %v534
    %vm928 = vcmask 326656
    %v929 = vsel %vm928, %v535, 0.0
    %930 = vadd.xlane.f32.xlu0 %v929
    %v931 = vpop.xlane.xlu0 %930
    %v932 = vrot.slane %v931, 4
    %v933 = vadd.f32 %v931, %v932
    %v934 = vrot.slane %v933, 2
    %v935 = vadd.f32 %v933, %v934
    %v936 = vrot.slane %v935, 1
    %v937 = vadd.f32 %v935, %v936
    %s938 = vtos %v937
    %s939 = sadd.f32 %s938, 0.0
    %v940 = vsel %vm928, %v927, 0.0
    %941 = vadd.xlane.f32.xlu0 %v940
    %v942 = vpop.xlane.xlu0 %941
    %v943 = vrot.slane %v942, 4
    %v944 = vadd.f32 %v942, %v943
    %v945 = vrot.slane %v944, 2
    %v946 = vadd.f32 %v944, %v945
    %v947 = vrot.slane %v946, 1
    %v948 = vadd.f32 %v946, %v947
    %s949 = vtos %v948
    %s950 = sadd.f32 %s939, %s949
    %v951 = vrcp.pop 640.0
    %s952 = vtos %v951
    %s953 = smul.f32 %s950, %s952
    %v954 = vstv %s953
    %v955 = vsub.f32 %v535, %v954
    %v956 = vmul.f32 %v955, %v955
    %v957 = vsel %vm928, %v956, 0.0
    %958 = vadd.xlane.f32.xlu0 %v957
    %v959 = vpop.xlane.xlu0 %958
    %v960 = vrot.slane %v959, 4
    %v961 = vadd.f32 %v959, %v960
    %v962 = vrot.slane %v961, 2
    %v963 = vadd.f32 %v961, %v962
    %v964 = vrot.slane %v963, 1
    %v965 = vadd.f32 %v963, %v964
    %s966 = vtos %v965
    %s967 = sadd.f32 %s966, 0.0
    %v968 = vsub.f32 %v927, %v954
    %v969 = vmul.f32 %v968, %v968
    %v970 = vsel %vm928, %v969, 0.0
    %971 = vadd.xlane.f32.xlu0 %v970
    %v972 = vpop.xlane.xlu0 %971
    %v973 = vrot.slane %v972, 4
    %v974 = vadd.f32 %v972, %v973
    %v975 = vrot.slane %v974, 2
    %v976 = vadd.f32 %v974, %v975
    %v977 = vrot.slane %v976, 1
    %v978 = vadd.f32 %v976, %v977
    %s979 = vtos %v978
    %s980 = sadd.f32 %s967, %s979
    %v981 = vrcp.pop 640.0
    %s982 = vtos %v981
    %s983 = smul.f32 %s980, %s982
    %s984 = sadd.f32 %s983, 1e-05
    %v985 = vstv %s984
    %v986 = vrsqrt.pop %v985
    %s987 = vtos %v986
    %s988 = sld [smem:[#allocation2 + $0x2e]]
    %v989 = vstv %s987
    %v990 = vmul.f32 %v955, %v989
    %v991 = vstv %s988
    %v992 = vmul.f32 %v991, %v990
    %s993 = sld [smem:[#allocation2 + $0x2f]]
    %v994 = vstv %s993
    %v995 = vadd.f32 %v992, %v994
    %v996 = vmax.f32 %v995, 0.0
    %v997 = vmul.f32 %v968, %v989
    %v998 = vmul.f32 %v991, %v997
    %v999 = vadd.f32 %v998, %v994
    %v1000 = vmax.f32 %v999, 0.0
    %v1001 = vld [vmem:[%s2] sm:$0x3]
    %v1002 = vld [vmem:[%s2 + $0x2] sm:$0x3]
    %v1003 = vld [vmem:[%s2 + $0x4] sm:$0x3]
    %v1004 = vld [vmem:[%s2 + $0x6] sm:$0x3]
    %v1005 = vld [vmem:[%s2 + $0x8] sm:$0x3]
    %v1006 = vld [vmem:[%s2 + $0xa] sm:$0x3]
    %v1007 = vld [vmem:[%s2 + $0xc] sm:$0x3]
    %v1008 = vld [vmem:[%s2 + $0xe] sm:$0x3]
    %v1009 = vld [vmem:[%s3] sm:$0xff]
    %v1010 = vld [vmem:[%s3 + $0x8] sm:$0xff]
    %v1011 = vld [vmem:[%s3 + $0x10] sm:$0xff]
    %v1012 = vld [vmem:[%s3 + $0x18] sm:$0xff]
    %v1013 = vld [vmem:[%s3 + $0x20] sm:$0xff]
    %v1014 = vld [vmem:[%s3 + $0x28] sm:$0xff]
    %v1015 = vld [vmem:[%s3 + $0x30] sm:$0xff]
    %v1016 = vld [vmem:[%s3 + $0x38] sm:$0xff]
    %v1017 = vld [vmem:[%s3 + $0x40] sm:$0xff]
    %v1018 = vld [vmem:[%s3 + $0x48] sm:$0xff]
    %v1019 = vld [vmem:[%s4] sm:$0x3]
    %v1020 = vld [vmem:[%s5] sm:$0xff]
    %v1021 = vld [vmem:[%s5 + $0x8] sm:$0xff]
    %v1022 = vld [vmem:[%s5 + $0x10] sm:$0xff]
    %v1023 = vld [vmem:[%s5 + $0x18] sm:$0xff]
    %v1024 = vld [vmem:[%s5 + $0x20] sm:$0xff]
    %v1025 = vld [vmem:[%s5 + $0x28] sm:$0xff]
    %v1026 = vld [vmem:[%s5 + $0x30] sm:$0xff]
    %v1027 = vld [vmem:[%s5 + $0x38] sm:$0xff]
    %v1028 = vld [vmem:[%s5 + $0x40] sm:$0xff]
    %v1029 = vld [vmem:[%s5 + $0x48] sm:$0xff]
    %v1030 = vld [vmem:[%s5 + $0x50] sm:$0xff]
    %v1031 = vld [vmem:[%s5 + $0x58] sm:$0xff]
    %v1032 = vld [vmem:[%s5 + $0x60] sm:$0xff]
    %v1033 = vld [vmem:[%s5 + $0x68] sm:$0xff]
    %v1034 = vld [vmem:[%s5 + $0x70] sm:$0xff]
    %v1035 = vld [vmem:[%s5 + $0x78] sm:$0xff]
    %v1037 = vlaneseq
    %v1038 = vshrl.u32 %v1037, 7
    %v1039 = vsub.s32 0, %v1038
    %v1040 = vrot.slane %v1019, %v1039
    %v1041 = vlaneseq
    %v1042 = vshrl.u32 %v1041, 7
    %v1043 = vsub.s32 1, %v1042
    %v1044 = vrot.slane %v1019, %v1043
    %v1048 = vsel %vm928, %v996, 0
    %v1051 = vsel %vm928, %v1000, 0
    %1053 = vmatprep.subr.mxu0 0.0
    %1054 = vmatpush1.msra.mxu0 0.0
    %1055 = vmatprep.subr.mxu0 0.0
    %1056 = vmatpush1.msra.mxu0 0.0
    %1057 = vmatprep.subr.mxu0 0.0
    %1058 = vmatpush1.msra.mxu0 0.0
    %1059 = vmatprep.subr.mxu0 0.0
    %1060 = vmatpush1.msra.mxu0 0.0
    %1061 = vmatprep.subr.mxu0 0.0
    %1062 = vmatpush1.msra.mxu0 0.0
    %1063 = vmatprep.subr.mxu0 0.0
    %1064 = vmatpush1.msra.mxu0 0.0
    %1065 = vmatprep.subr.mxu0 0.0
    %1066 = vmatpush1.msra.mxu0 0.0
    %1067 = vmatprep.subr.mxu0 0.0
    %1068 = vmatpush1.msra.mxu0 0.0
    %1069 = vmatprep.subr.mxu0 0.0
    %1070 = vmatpush1.msra.mxu0 0.0
    %1071 = vmatprep.subr.mxu0 0.0
    %1072 = vmatpush1.msra.mxu0 0.0
    %1073 = vmatprep.subr.mxu0 0.0
    %1074 = vmatpush1.msra.mxu0 0.0
    %1075 = vmatprep.subr.mxu0 %v1018
    %1076 = vmatpush1.msra.mxu0 %v1017
    %1077 = vmatprep.subr.mxu0 %v1016
    %1078 = vmatpush1.msra.mxu0 %v1015
    %1079 = vmatprep.subr.mxu0 %v1014
    %1080 = vmatpush1.msra.mxu0 %v1013
    %1081 = vmatprep.subr.mxu0 %v1012
    %1082 = vmatpush1.msra.mxu0 %v1011
    %1083 = vmatprep.subr.mxu0 %v1010
    %1084 = vmatpush1.msra.mxu0 %v1009
    %1085 = vmatprep.subr.mxu0 0.0
    %1086 = vmatpush2.msra.mxu0 0.0
    %1087 = vmatprep.subr.mxu0 0.0
    %1088 = vmatpush2.msra.mxu0 0.0
    %1089 = vmatprep.subr.mxu0 0.0
    %1090 = vmatpush2.msra.mxu0 0.0
    %1091 = vmatprep.subr.mxu0 0.0
    %1092 = vmatpush2.msra.mxu0 0.0
    %1093 = vmatprep.subr.mxu0 0.0
    %1094 = vmatpush2.msra.mxu0 0.0
    %1095 = vmatprep.subr.mxu0 0.0
    %1096 = vmatpush2.msra.mxu0 0.0
    %1097 = vmatprep.subr.mxu0 0.0
    %1098 = vmatpush2.msra.mxu0 0.0
    %1099 = vmatprep.subr.mxu0 0.0
    %1100 = vmatpush2.msra.mxu0 0.0
    %1101 = vmatprep.subr.mxu0 0.0
    %1102 = vmatpush2.msra.mxu0 0.0
    %1103 = vmatprep.subr.mxu0 0.0
    %1104 = vmatpush2.msra.mxu0 0.0
    %1105 = vmatprep.subr.mxu0 0.0
    %1106 = vmatpush2.msra.mxu0 0.0
    %1107 = vmatprep.subr.mxu0 0.0
    %1108 = vmatpush2.msra.mxu0 0.0
    %1109 = vmatprep.subr.mxu0 0.0
    %1110 = vmatpush2.msra.mxu0 0.0
    %1111 = vmatprep.subr.mxu0 0.0
    %1112 = vmatpush2.msra.mxu0 0.0
    %1113 = vmatprep.subr.mxu0 0.0
    %1114 = vmatpush2.msra.mxu0 0.0
    %1115 = vmatprep.subr.mxu0 0.0
    %1116 = vmatpush2.msra.mxu0 0.0
    %1117 = vmatprep.mubr.f32.mxu0 0.0
    %1118 = vmatmul.mubr.f32.gmra.mxu0 %v1048
    %v1119 = vpop.f32.mrf.mxu0
    %v1120 = vadd.f32 %v1040, %v1119
    %v1121 = vpop.f32.mrf.mxu0
    %v1122 = vadd.f32 %v1044, %v1121
    %1123 = vmatprep.mubr.f32.mxu0 0.0
    %1124 = vmatmul.mubr.f32.gmra.mxu0 %v1051
    %v1125 = vpop.f32.mrf.mxu0
    %v1126 = vadd.f32 %v1040, %v1125
    %v1127 = vpop.f32.mrf.mxu0
    %v1128 = vadd.f32 %v1044, %v1127
    %1129 = vdwg.mxu0
    %vm1130 = vcmask 523264
    %v1132 = vsel %vm1130, 0.0, 0
    %1134 = vmatprep.subr.mxu0 0.0
    %1135 = vmatpush1.msra.mxu0 0.0
    %1136 = vmatprep.subr.mxu0 0.0
    %1137 = vmatpush1.msra.mxu0 0.0
    %1138 = vmatprep.subr.mxu0 0.0
    %1139 = vmatpush1.msra.mxu0 0.0
    %1140 = vmatprep.subr.mxu0 0.0
    %1141 = vmatpush1.msra.mxu0 0.0
    %1142 = vmatprep.subr.mxu0 0.0
    %1143 = vmatpush1.msra.mxu0 0.0
    %1144 = vmatprep.subr.mxu0 0.0
    %1145 = vmatpush1.msra.mxu0 0.0
    %1146 = vmatprep.subr.mxu0 0.0
    %1147 = vmatpush1.msra.mxu0 0.0
    %1148 = vmatprep.subr.mxu0 0.0
    %1149 = vmatpush1.msra.mxu0 0.0
    %1150 = vmatprep.subr.mxu0 %v1035
    %1151 = vmatpush1.msra.mxu0 %v1034
    %1152 = vmatprep.subr.mxu0 %v1033
    %1153 = vmatpush1.msra.mxu0 %v1032
    %1154 = vmatprep.subr.mxu0 %v1031
    %1155 = vmatpush1.msra.mxu0 %v1030
    %1156 = vmatprep.subr.mxu0 %v1029
    %1157 = vmatpush1.msra.mxu0 %v1028
    %1158 = vmatprep.subr.mxu0 %v1027
    %1159 = vmatpush1.msra.mxu0 %v1026
    %1160 = vmatprep.subr.mxu0 %v1025
    %1161 = vmatpush1.msra.mxu0 %v1024
    %1162 = vmatprep.subr.mxu0 %v1023
    %1163 = vmatpush1.msra.mxu0 %v1022
    %1164 = vmatprep.subr.mxu0 %v1021
    %1165 = vmatpush1.msra.mxu0 %v1020
    %1166 = vmatprep.subr.mxu0 0.0
    %1167 = vmatpush2.msra.mxu0 0.0
    %1168 = vmatprep.subr.mxu0 0.0
    %1169 = vmatpush2.msra.mxu0 0.0
    %1170 = vmatprep.subr.mxu0 0.0
    %1171 = vmatpush2.msra.mxu0 0.0
    %1172 = vmatprep.subr.mxu0 0.0
    %1173 = vmatpush2.msra.mxu0 0.0
    %1174 = vmatprep.subr.mxu0 0.0
    %1175 = vmatpush2.msra.mxu0 0.0
    %1176 = vmatprep.subr.mxu0 0.0
    %1177 = vmatpush2.msra.mxu0 0.0
    %1178 = vmatprep.subr.mxu0 0.0
    %1179 = vmatpush2.msra.mxu0 0.0
    %1180 = vmatprep.subr.mxu0 0.0
    %1181 = vmatpush2.msra.mxu0 0.0
    %1182 = vmatprep.subr.mxu0 0.0
    %1183 = vmatpush2.msra.mxu0 0.0
    %1184 = vmatprep.subr.mxu0 0.0
    %1185 = vmatpush2.msra.mxu0 0.0
    %1186 = vmatprep.subr.mxu0 0.0
    %1187 = vmatpush2.msra.mxu0 0.0
    %1188 = vmatprep.subr.mxu0 0.0
    %1189 = vmatpush2.msra.mxu0 0.0
    %1190 = vmatprep.subr.mxu0 0.0
    %1191 = vmatpush2.msra.mxu0 0.0
    %1192 = vmatprep.subr.mxu0 0.0
    %1193 = vmatpush2.msra.mxu0 0.0
    %1194 = vmatprep.subr.mxu0 0.0
    %1195 = vmatpush2.msra.mxu0 0.0
    %1196 = vmatprep.subr.mxu0 0.0
    %1197 = vmatpush2.msra.mxu0 0.0
    %1198 = vmatprep.mubr.f32.mxu0 0.0
    %1199 = vmatmul.mubr.f32.gmra.mxu0 %v1132
    %v1200 = vpop.f32.mrf.mxu0
    %v1201 = vadd.f32 0.0, %v1200
    %v1202 = vpop.f32.mrf.mxu0
    %v1203 = vadd.f32 0.0, %v1202
    %1204 = vdwg.mxu0
    %v1207 = vrot.slane %v1126, 7
    %v1208 = vrot.slane %v1128, 7
    %vm1211 = vcmask 1040384
    %v1212 = vsel %vm1211, %v1120, %v1207
    %v1213 = vsel %vm1211, %v1122, %v1208
    %v1214 = vadd.f32 %v1212, %v1201
    %v1217 = vrot.slane %v1120, 7
    %v1218 = vrot.slane %v1122, 7
    %v1221 = vrot.slane %v1126, 6
    %v1222 = vrot.slane %v1128, 6
    %v1225 = vsel %vm1211, %v1217, %v1221
    %v1226 = vsel %vm1211, %v1218, %v1222
    %v1227 = vadd.f32 %v1226, %v1203
    %v1228 = vxor.u32 %v1214, 2147483648
    %v1229 = vmul.f32 %v1228, 1.442695
    %v1230 = vpow.pop %v1229
    %v1231 = vadd.f32 %v1230, 1.0
    %v1232 = vrcp.pop %v1231
    %v1233 = vmul.f32 1.0, %v1232
    %v1234 = vtanh.pop %v1214
    %v1235 = vmul.f32 %v1233, 0.0
    %1237 = vrot.lane.b32.xlu0 %v1234, 64
    %v1238 = vpop.permute.xlu0 %1237
    %v1240 = vmul.f32 %v1233, %v1238
    %1242 = vrot.lane.b32.xlu0 %v1240, 32
    %v1243 = vpop.permute.xlu0 %1242
    %v1245 = vadd.f32 %v1235, %v1243
    %v1246 = vtanh.pop %v1245
    %1248 = vrot.lane.b32.xlu0 %v1246, 64
    %v1249 = vpop.permute.xlu0 %1248
    %v1251 = vmul.f32 %v1233, %v1249
    %v1252 = vxor.u32 %v1227, 2147483648
    %v1253 = vmul.f32 %v1252, 1.442695
    %v1254 = vpow.pop %v1253
    %v1255 = vadd.f32 %v1254, 1.0
    %v1256 = vrcp.pop %v1255
    %v1257 = vmul.f32 1.0, %v1256
    %v1258 = vtanh.pop %v1227
    %v1259 = vmul.f32 %v1257, 0.0
    %1261 = vrot.lane.b32.xlu0 %v1258, 64
    %v1262 = vpop.permute.xlu0 %1261
    %v1264 = vmul.f32 %v1257, %v1262
    %1266 = vrot.lane.b32.xlu0 %v1264, 32
    %v1267 = vpop.permute.xlu0 %1266
    %v1269 = vadd.f32 %v1259, %v1267
    %v1270 = vtanh.pop %v1269
    %1272 = vrot.lane.b32.xlu0 %v1270, 64
    %v1273 = vpop.permute.xlu0 %1272
    %v1275 = vmul.f32 %v1257, %v1273
    %1277 = vset.pattern.permute.xlu0 0
    %1278 = vperm.xlu0 %1277, %v1001
    %v1279 = vpop.permute.xlu0 %1278
    %v1281 = vmul.f32 %v1279, %v1251
    %v1282 = vsub.f32 1.0, %v1001
    %1284 = vset.pattern.permute.xlu0 0
    %1285 = vperm.xlu0 %1284, %v1282
    %v1286 = vpop.permute.xlu0 %1285
    %v1288 = vmul.f32 %v1286, 0.0
    %v1289 = vadd.f32 %v1281, %v1288
    %v1290 = vmul.f32 %v1279, %v1245
    %v1291 = vadd.f32 %v1290, %v1288
    %1293 = vset.pattern.permute.xlu0 0
    %1294 = vperm.xlu0 %1293, %v1008
    %v1295 = vpop.permute.xlu0 %1294
    %v1297 = vmul.f32 %v1295, %v1275
    %v1298 = vsub.f32 1.0, %v1008
    %1300 = vset.pattern.permute.xlu0 0
    %1301 = vperm.xlu0 %1300, %v1298
    %v1302 = vpop.permute.xlu0 %1301
    %v1304 = vmul.f32 %v1302, 0.0
    %v1305 = vadd.f32 %v1297, %v1304
    %v1306 = vmul.f32 %v1295, %v1269
    %v1307 = vadd.f32 %v1306, %v1304
    %1309 = vrot.lane.b32.xlu0 %v1289, 32
    %v1310 = vpop.permute.xlu0 %1309
    %1313 = vrot.lane.b32.xlu0 %v1305, 64
    %v1314 = vpop.permute.xlu0 %1313
    %vm1316 = vcmask 261120
    %v1317 = vsel %vm1316, %v1310, %v1314
    %v1319 = vsel %vm1130, %v1317, 0
    %1321 = vmatprep.subr.mxu0 0.0
    %1322 = vmatpush1.msra.mxu0 0.0
    %1323 = vmatprep.subr.mxu0 0.0
    %1324 = vmatpush1.msra.mxu0 0.0
    %1325 = vmatprep.subr.mxu0 0.0
    %1326 = vmatpush1.msra.mxu0 0.0
    %1327 = vmatprep.subr.mxu0 0.0
    %1328 = vmatpush1.msra.mxu0 0.0
    %1329 = vmatprep.subr.mxu0 0.0
    %1330 = vmatpush1.msra.mxu0 0.0
    %1331 = vmatprep.subr.mxu0 0.0
    %1332 = vmatpush1.msra.mxu0 0.0
    %1333 = vmatprep.subr.mxu0 0.0
    %1334 = vmatpush1.msra.mxu0 0.0
    %1335 = vmatprep.subr.mxu0 0.0
    %1336 = vmatpush1.msra.mxu0 0.0
    %1337 = vmatprep.subr.mxu0 %v1035
    %1338 = vmatpush1.msra.mxu0 %v1034
    %1339 = vmatprep.subr.mxu0 %v1033
    %1340 = vmatpush1.msra.mxu0 %v1032
    %1341 = vmatprep.subr.mxu0 %v1031
    %1342 = vmatpush1.msra.mxu0 %v1030
    %1343 = vmatprep.subr.mxu0 %v1029
    %1344 = vmatpush1.msra.mxu0 %v1028
    %1345 = vmatprep.subr.mxu0 %v1027
    %1346 = vmatpush1.msra.mxu0 %v1026
    %1347 = vmatprep.subr.mxu0 %v1025
    %1348 = vmatpush1.msra.mxu0 %v1024
    %1349 = vmatprep.subr.mxu0 %v1023
    %1350 = vmatpush1.msra.mxu0 %v1022
    %1351 = vmatprep.subr.mxu0 %v1021
    %1352 = vmatpush1.msra.mxu0 %v1020
    %1353 = vmatprep.subr.mxu0 0.0
    %1354 = vmatpush2.msra.mxu0 0.0
    %1355 = vmatprep.subr.mxu0 0.0
    %1356 = vmatpush2.msra.mxu0 0.0
    %1357 = vmatprep.subr.mxu0 0.0
    %1358 = vmatpush2.msra.mxu0 0.0
    %1359 = vmatprep.subr.mxu0 0.0
    %1360 = vmatpush2.msra.mxu0 0.0
    %1361 = vmatprep.subr.mxu0 0.0
    %1362 = vmatpush2.msra.mxu0 0.0
    %1363 = vmatprep.subr.mxu0 0.0
    %1364 = vmatpush2.msra.mxu0 0.0
    %1365 = vmatprep.subr.mxu0 0.0
    %1366 = vmatpush2.msra.mxu0 0.0
    %1367 = vmatprep.subr.mxu0 0.0
    %1368 = vmatpush2.msra.mxu0 0.0
    %1369 = vmatprep.subr.mxu0 0.0
    %1370 = vmatpush2.msra.mxu0 0.0
    %1371 = vmatprep.subr.mxu0 0.0
    %1372 = vmatpush2.msra.mxu0 0.0
    %1373 = vmatprep.subr.mxu0 0.0
    %1374 = vmatpush2.msra.mxu0 0.0
    %1375 = vmatprep.subr.mxu0 0.0
    %1376 = vmatpush2.msra.mxu0 0.0
    %1377 = vmatprep.subr.mxu0 0.0
    %1378 = vmatpush2.msra.mxu0 0.0
    %1379 = vmatprep.subr.mxu0 0.0
    %1380 = vmatpush2.msra.mxu0 0.0
    %1381 = vmatprep.subr.mxu0 0.0
    %1382 = vmatpush2.msra.mxu0 0.0
    %1383 = vmatprep.subr.mxu0 0.0
    %1384 = vmatpush2.msra.mxu0 0.0
    %1385 = vmatprep.mubr.f32.mxu0 0.0
    %1386 = vmatmul.mubr.f32.gmra.mxu0 %v1319
    %v1387 = vpop.f32.mrf.mxu0
    %v1388 = vadd.f32 0.0, %v1387
    %v1389 = vpop.f32.mrf.mxu0
    %v1390 = vadd.f32 0.0, %v1389
    %1391 = vdwg.mxu0
    %v1392 = vrot.slane %v1120, 1
    %v1393 = vrot.slane %v1122, 1
    %v1396 = vsel %vm1211, %v1392, %v1126
    %v1397 = vsel %vm1211, %v1393, %v1128
    %v1398 = vadd.f32 %v1396, %v1388
    %v1399 = vrot.slane %v1120, 6
    %v1400 = vrot.slane %v1122, 6
    %v1403 = vrot.slane %v1126, 5
    %v1404 = vrot.slane %v1128, 5
    %v1407 = vsel %vm1211, %v1399, %v1403
    %v1408 = vsel %vm1211, %v1400, %v1404
    %v1409 = vadd.f32 %v1408, %v1390
    %v1410 = vxor.u32 %v1398, 2147483648
    %v1411 = vmul.f32 %v1410, 1.442695
    %v1412 = vpow.pop %v1411
    %v1413 = vadd.f32 %v1412, 1.0
    %v1414 = vrcp.pop %v1413
    %v1415 = vmul.f32 1.0, %v1414
    %v1416 = vtanh.pop %v1398
    %v1417 = vmul.f32 %v1415, %v1291
    %1419 = vrot.lane.b32.xlu0 %v1416, 64
    %v1420 = vpop.permute.xlu0 %1419
    %v1422 = vmul.f32 %v1415, %v1420
    %1424 = vrot.lane.b32.xlu0 %v1422, 32
    %v1425 = vpop.permute.xlu0 %1424
    %v1427 = vadd.f32 %v1417, %v1425
    %v1428 = vtanh.pop %v1427
    %1430 = vrot.lane.b32.xlu0 %v1428, 64
    %v1431 = vpop.permute.xlu0 %1430
    %v1433 = vmul.f32 %v1415, %v1431
    %v1434 = vxor.u32 %v1409, 2147483648
    %v1435 = vmul.f32 %v1434, 1.442695
    %v1436 = vpow.pop %v1435
    %v1437 = vadd.f32 %v1436, 1.0
    %v1438 = vrcp.pop %v1437
    %v1439 = vmul.f32 1.0, %v1438
    %v1440 = vtanh.pop %v1409
    %v1441 = vmul.f32 %v1439, %v1307
    %1443 = vrot.lane.b32.xlu0 %v1440, 64
    %v1444 = vpop.permute.xlu0 %1443
    %v1446 = vmul.f32 %v1439, %v1444
    %1448 = vrot.lane.b32.xlu0 %v1446, 32
    %v1449 = vpop.permute.xlu0 %1448
    %v1451 = vadd.f32 %v1441, %v1449
    %v1452 = vtanh.pop %v1451
    %1454 = vrot.lane.b32.xlu0 %v1452, 64
    %v1455 = vpop.permute.xlu0 %1454
    %v1457 = vmul.f32 %v1439, %v1455
    %1459 = vset.pattern.permute.xlu0 0
    %1460 = vperm.xlu0 %1459, %v1002
    %v1461 = vpop.permute.xlu0 %1460
    %v1463 = vmul.f32 %v1461, %v1433
    %v1464 = vsub.f32 1.0, %v1002
    %1466 = vset.pattern.permute.xlu0 0
    %1467 = vperm.xlu0 %1466, %v1464
    %v1468 = vpop.permute.xlu0 %1467
    %v1470 = vmul.f32 %v1468, %v1289
    %v1471 = vadd.f32 %v1463, %v1470
    %v1472 = vmul.f32 %v1461, %v1427
    %v1473 = vmul.f32 %v1468, %v1291
    %v1474 = vadd.f32 %v1472, %v1473
    %1476 = vset.pattern.permute.xlu0 0
    %1477 = vperm.xlu0 %1476, %v1007
    %v1478 = vpop.permute.xlu0 %1477
    %v1480 = vmul.f32 %v1478, %v1457
    %v1481 = vsub.f32 1.0, %v1007
    %1483 = vset.pattern.permute.xlu0 0
    %1484 = vperm.xlu0 %1483, %v1481
    %v1485 = vpop.permute.xlu0 %1484
    %v1487 = vmul.f32 %v1485, %v1305
    %v1488 = vadd.f32 %v1480, %v1487
    %v1489 = vmul.f32 %v1478, %v1451
    %v1490 = vmul.f32 %v1485, %v1307
    %v1491 = vadd.f32 %v1489, %v1490
    %1493 = vrot.lane.b32.xlu0 %v1471, 32
    %v1494 = vpop.permute.xlu0 %1493
    %1497 = vrot.lane.b32.xlu0 %v1488, 64
    %v1498 = vpop.permute.xlu0 %1497
    %v1500 = vsel %vm1316, %v1494, %v1498
    %v1502 = vsel %vm1130, %v1500, 0
    %1504 = vmatprep.subr.mxu0 0.0
    %1505 = vmatpush1.msra.mxu0 0.0
    %1506 = vmatprep.subr.mxu0 0.0
    %1507 = vmatpush1.msra.mxu0 0.0
    %1508 = vmatprep.subr.mxu0 0.0
    %1509 = vmatpush1.msra.mxu0 0.0
    %1510 = vmatprep.subr.mxu0 0.0
    %1511 = vmatpush1.msra.mxu0 0.0
    %1512 = vmatprep.subr.mxu0 0.0
    %1513 = vmatpush1.msra.mxu0 0.0
    %1514 = vmatprep.subr.mxu0 0.0
    %1515 = vmatpush1.msra.mxu0 0.0
    %1516 = vmatprep.subr.mxu0 0.0
    %1517 = vmatpush1.msra.mxu0 0.0
    %1518 = vmatprep.subr.mxu0 0.0
    %1519 = vmatpush1.msra.mxu0 0.0
    %1520 = vmatprep.subr.mxu0 %v1035
    %1521 = vmatpush1.msra.mxu0 %v1034
    %1522 = vmatprep.subr.mxu0 %v1033
    %1523 = vmatpush1.msra.mxu0 %v1032
    %1524 = vmatprep.subr.mxu0 %v1031
    %1525 = vmatpush1.msra.mxu0 %v1030
    %1526 = vmatprep.subr.mxu0 %v1029
    %1527 = vmatpush1.msra.mxu0 %v1028
    %1528 = vmatprep.subr.mxu0 %v1027
    %1529 = vmatpush1.msra.mxu0 %v1026
    %1530 = vmatprep.subr.mxu0 %v1025
    %1531 = vmatpush1.msra.mxu0 %v1024
    %1532 = vmatprep.subr.mxu0 %v1023
    %1533 = vmatpush1.msra.mxu0 %v1022
    %1534 = vmatprep.subr.mxu0 %v1021
    %1535 = vmatpush1.msra.mxu0 %v1020
    %1536 = vmatprep.subr.mxu0 0.0
    %1537 = vmatpush2.msra.mxu0 0.0
    %1538 = vmatprep.subr.mxu0 0.0
    %1539 = vmatpush2.msra.mxu0 0.0
    %1540 = vmatprep.subr.mxu0 0.0
    %1541 = vmatpush2.msra.mxu0 0.0
    %1542 = vmatprep.subr.mxu0 0.0
    %1543 = vmatpush2.msra.mxu0 0.0
    %1544 = vmatprep.subr.mxu0 0.0
    %1545 = vmatpush2.msra.mxu0 0.0
    %1546 = vmatprep.subr.mxu0 0.0
    %1547 = vmatpush2.msra.mxu0 0.0
    %1548 = vmatprep.subr.mxu0 0.0
    %1549 = vmatpush2.msra.mxu0 0.0
    %1550 = vmatprep.subr.mxu0 0.0
    %1551 = vmatpush2.msra.mxu0 0.0
    %1552 = vmatprep.subr.mxu0 0.0
    %1553 = vmatpush2.msra.mxu0 0.0
    %1554 = vmatprep.subr.mxu0 0.0
    %1555 = vmatpush2.msra.mxu0 0.0
    %1556 = vmatprep.subr.mxu0 0.0
    %1557 = vmatpush2.msra.mxu0 0.0
    %1558 = vmatprep.subr.mxu0 0.0
    %1559 = vmatpush2.msra.mxu0 0.0
    %1560 = vmatprep.subr.mxu0 0.0
    %1561 = vmatpush2.msra.mxu0 0.0
    %1562 = vmatprep.subr.mxu0 0.0
    %1563 = vmatpush2.msra.mxu0 0.0
    %1564 = vmatprep.subr.mxu0 0.0
    %1565 = vmatpush2.msra.mxu0 0.0
    %1566 = vmatprep.subr.mxu0 0.0
    %1567 = vmatpush2.msra.mxu0 0.0
    %1568 = vmatprep.mubr.f32.mxu0 0.0
    %1569 = vmatmul.mubr.f32.gmra.mxu0 %v1502
    %v1570 = vpop.f32.mrf.mxu0
    %v1571 = vadd.f32 0.0, %v1570
    %v1572 = vpop.f32.mrf.mxu0
    %v1573 = vadd.f32 0.0, %v1572
    %1574 = vdwg.mxu0
    %v1575 = vrot.slane %v1120, 2
    %v1576 = vrot.slane %v1122, 2
    %v1579 = vrot.slane %v1126, 1
    %v1580 = vrot.slane %v1128, 1
    %v1583 = vsel %vm1211, %v1575, %v1579
    %v1584 = vsel %vm1211, %v1576, %v1580
    %v1585 = vadd.f32 %v1583, %v1571
    %v1586 = vrot.slane %v1120, 5
    %v1587 = vrot.slane %v1122, 5
    %v1590 = vrot.slane %v1126, 4
    %v1591 = vrot.slane %v1128, 4
    %v1594 = vsel %vm1211, %v1586, %v1590
    %v1595 = vsel %vm1211, %v1587, %v1591
    %v1596 = vadd.f32 %v1595, %v1573
    %v1597 = vxor.u32 %v1585, 2147483648
    %v1598 = vmul.f32 %v1597, 1.442695
    %v1599 = vpow.pop %v1598
    %v1600 = vadd.f32 %v1599, 1.0
    %v1601 = vrcp.pop %v1600
    %v1602 = vmul.f32 1.0, %v1601
    %v1603 = vtanh.pop %v1585
    %v1604 = vmul.f32 %v1602, %v1474
    %1606 = vrot.lane.b32.xlu0 %v1603, 64
    %v1607 = vpop.permute.xlu0 %1606
    %v1609 = vmul.f32 %v1602, %v1607
    %1611 = vrot.lane.b32.xlu0 %v1609, 32
    %v1612 = vpop.permute.xlu0 %1611
    %v1614 = vadd.f32 %v1604, %v1612
    %v1615 = vtanh.pop %v1614
    %1617 = vrot.lane.b32.xlu0 %v1615, 64
    %v1618 = vpop.permute.xlu0 %1617
    %v1620 = vmul.f32 %v1602, %v1618
    %v1621 = vxor.u32 %v1596, 2147483648
    %v1622 = vmul.f32 %v1621, 1.442695
    %v1623 = vpow.pop %v1622
    %v1624 = vadd.f32 %v1623, 1.0
    %v1625 = vrcp.pop %v1624
    %v1626 = vmul.f32 1.0, %v1625
    %v1627 = vtanh.pop %v1596
    %v1628 = vmul.f32 %v1626, %v1491
    %1630 = vrot.lane.b32.xlu0 %v1627, 64
    %v1631 = vpop.permute.xlu0 %1630
    %v1633 = vmul.f32 %v1626, %v1631
    %1635 = vrot.lane.b32.xlu0 %v1633, 32
    %v1636 = vpop.permute.xlu0 %1635
    %v1638 = vadd.f32 %v1628, %v1636
    %v1639 = vtanh.pop %v1638
    %1641 = vrot.lane.b32.xlu0 %v1639, 64
    %v1642 = vpop.permute.xlu0 %1641
    %v1644 = vmul.f32 %v1626, %v1642
    %1646 = vset.pattern.permute.xlu0 0
    %1647 = vperm.xlu0 %1646, %v1003
    %v1648 = vpop.permute.xlu0 %1647
    %v1650 = vmul.f32 %v1648, %v1620
    %v1651 = vsub.f32 1.0, %v1003
    %1653 = vset.pattern.permute.xlu0 0
    %1654 = vperm.xlu0 %1653, %v1651
    %v1655 = vpop.permute.xlu0 %1654
    %v1657 = vmul.f32 %v1655, %v1471
    %v1658 = vadd.f32 %v1650, %v1657
    %v1659 = vmul.f32 %v1648, %v1614
    %v1660 = vmul.f32 %v1655, %v1474
    %v1661 = vadd.f32 %v1659, %v1660
    %1663 = vset.pattern.permute.xlu0 0
    %1664 = vperm.xlu0 %1663, %v1006
    %v1665 = vpop.permute.xlu0 %1664
    %v1667 = vmul.f32 %v1665, %v1644
    %v1668 = vsub.f32 1.0, %v1006
    %1670 = vset.pattern.permute.xlu0 0
    %1671 = vperm.xlu0 %1670, %v1668
    %v1672 = vpop.permute.xlu0 %1671
    %v1674 = vmul.f32 %v1672, %v1488
    %v1675 = vadd.f32 %v1667, %v1674
    %v1676 = vmul.f32 %v1665, %v1638
    %v1677 = vmul.f32 %v1672, %v1491
    %v1678 = vadd.f32 %v1676, %v1677
    %1680 = vrot.lane.b32.xlu0 %v1658, 32
    %v1681 = vpop.permute.xlu0 %1680
    %1684 = vrot.lane.b32.xlu0 %v1675, 64
    %v1685 = vpop.permute.xlu0 %1684
    %v1687 = vsel %vm1316, %v1681, %v1685
    %v1689 = vsel %vm1130, %v1687, 0
    %1691 = vmatprep.subr.mxu0 0.0
    %1692 = vmatpush1.msra.mxu0 0.0
    %1693 = vmatprep.subr.mxu0 0.0
    %1694 = vmatpush1.msra.mxu0 0.0
    %1695 = vmatprep.subr.mxu0 0.0
    %1696 = vmatpush1.msra.mxu0 0.0
    %1697 = vmatprep.subr.mxu0 0.0
    %1698 = vmatpush1.msra.mxu0 0.0
    %1699 = vmatprep.subr.mxu0 0.0
    %1700 = vmatpush1.msra.mxu0 0.0
    %1701 = vmatprep.subr.mxu0 0.0
    %1702 = vmatpush1.msra.mxu0 0.0
    %1703 = vmatprep.subr.mxu0 0.0
    %1704 = vmatpush1.msra.mxu0 0.0
    %1705 = vmatprep.subr.mxu0 0.0
    %1706 = vmatpush1.msra.mxu0 0.0
    %1707 = vmatprep.subr.mxu0 %v1035
    %1708 = vmatpush1.msra.mxu0 %v1034
    %1709 = vmatprep.subr.mxu0 %v1033
    %1710 = vmatpush1.msra.mxu0 %v1032
    %1711 = vmatprep.subr.mxu0 %v1031
    %1712 = vmatpush1.msra.mxu0 %v1030
    %1713 = vmatprep.subr.mxu0 %v1029
    %1714 = vmatpush1.msra.mxu0 %v1028
    %1715 = vmatprep.subr.mxu0 %v1027
    %1716 = vmatpush1.msra.mxu0 %v1026
    %1717 = vmatprep.subr.mxu0 %v1025
    %1718 = vmatpush1.msra.mxu0 %v1024
    %1719 = vmatprep.subr.mxu0 %v1023
    %1720 = vmatpush1.msra.mxu0 %v1022
    %1721 = vmatprep.subr.mxu0 %v1021
    %1722 = vmatpush1.msra.mxu0 %v1020
    %1723 = vmatprep.subr.mxu0 0.0
    %1724 = vmatpush2.msra.mxu0 0.0
    %1725 = vmatprep.subr.mxu0 0.0
    %1726 = vmatpush2.msra.mxu0 0.0
    %1727 = vmatprep.subr.mxu0 0.0
    %1728 = vmatpush2.msra.mxu0 0.0
    %1729 = vmatprep.subr.mxu0 0.0
    %1730 = vmatpush2.msra.mxu0 0.0
    %1731 = vmatprep.subr.mxu0 0.0
    %1732 = vmatpush2.msra.mxu0 0.0
    %1733 = vmatprep.subr.mxu0 0.0
    %1734 = vmatpush2.msra.mxu0 0.0
    %1735 = vmatprep.subr.mxu0 0.0
    %1736 = vmatpush2.msra.mxu0 0.0
    %1737 = vmatprep.subr.mxu0 0.0
    %1738 = vmatpush2.msra.mxu0 0.0
    %1739 = vmatprep.subr.mxu0 0.0
    %1740 = vmatpush2.msra.mxu0 0.0
    %1741 = vmatprep.subr.mxu0 0.0
    %1742 = vmatpush2.msra.mxu0 0.0
    %1743 = vmatprep.subr.mxu0 0.0
    %1744 = vmatpush2.msra.mxu0 0.0
    %1745 = vmatprep.subr.mxu0 0.0
    %1746 = vmatpush2.msra.mxu0 0.0
    %1747 = vmatprep.subr.mxu0 0.0
    %1748 = vmatpush2.msra.mxu0 0.0
    %1749 = vmatprep.subr.mxu0 0.0
    %1750 = vmatpush2.msra.mxu0 0.0
    %1751 = vmatprep.subr.mxu0 0.0
    %1752 = vmatpush2.msra.mxu0 0.0
    %1753 = vmatprep.subr.mxu0 0.0
    %1754 = vmatpush2.msra.mxu0 0.0
    %1755 = vmatprep.mubr.f32.mxu0 0.0
    %1756 = vmatmul.mubr.f32.gmra.mxu0 %v1689
    %v1757 = vpop.f32.mrf.mxu0
    %v1758 = vadd.f32 0.0, %v1757
    %v1759 = vpop.f32.mrf.mxu0
    %v1760 = vadd.f32 0.0, %v1759
    %1761 = vdwg.mxu0
    %v1762 = vrot.slane %v1120, 3
    %v1763 = vrot.slane %v1122, 3
    %v1766 = vrot.slane %v1126, 2
    %v1767 = vrot.slane %v1128, 2
    %v1770 = vsel %vm1211, %v1762, %v1766
    %v1771 = vsel %vm1211, %v1763, %v1767
    %v1772 = vadd.f32 %v1770, %v1758
    %v1773 = vrot.slane %v1120, 4
    %v1774 = vrot.slane %v1122, 4
    %v1777 = vrot.slane %v1126, 3
    %v1778 = vrot.slane %v1128, 3
    %v1781 = vsel %vm1211, %v1773, %v1777
    %v1782 = vsel %vm1211, %v1774, %v1778
    %v1783 = vadd.f32 %v1782, %v1760
    %v1784 = vxor.u32 %v1772, 2147483648
    %v1785 = vmul.f32 %v1784, 1.442695
    %v1786 = vpow.pop %v1785
    %v1787 = vadd.f32 %v1786, 1.0
    %v1788 = vrcp.pop %v1787
    %v1789 = vmul.f32 1.0, %v1788
    %v1790 = vtanh.pop %v1772
    %v1791 = vmul.f32 %v1789, %v1661
    %1793 = vrot.lane.b32.xlu0 %v1790, 64
    %v1794 = vpop.permute.xlu0 %1793
    %v1796 = vmul.f32 %v1789, %v1794
    %1798 = vrot.lane.b32.xlu0 %v1796, 32
    %v1799 = vpop.permute.xlu0 %1798
    %v1801 = vadd.f32 %v1791, %v1799
    %v1802 = vtanh.pop %v1801
    %1804 = vrot.lane.b32.xlu0 %v1802, 64
    %v1805 = vpop.permute.xlu0 %1804
    %v1807 = vmul.f32 %v1789, %v1805
    %v1808 = vxor.u32 %v1783, 2147483648
    %v1809 = vmul.f32 %v1808, 1.442695
    %v1810 = vpow.pop %v1809
    %v1811 = vadd.f32 %v1810, 1.0
    %v1812 = vrcp.pop %v1811
    %v1813 = vmul.f32 1.0, %v1812
    %v1814 = vtanh.pop %v1783
    %v1815 = vmul.f32 %v1813, %v1678
    %1817 = vrot.lane.b32.xlu0 %v1814, 64
    %v1818 = vpop.permute.xlu0 %1817
    %v1820 = vmul.f32 %v1813, %v1818
    %1822 = vrot.lane.b32.xlu0 %v1820, 32
    %v1823 = vpop.permute.xlu0 %1822
    %v1825 = vadd.f32 %v1815, %v1823
    %v1826 = vtanh.pop %v1825
    %1828 = vrot.lane.b32.xlu0 %v1826, 64
    %v1829 = vpop.permute.xlu0 %1828
    %v1831 = vmul.f32 %v1813, %v1829
    %1833 = vset.pattern.permute.xlu0 0
    %1834 = vperm.xlu0 %1833, %v1004
    %v1835 = vpop.permute.xlu0 %1834
    %v1837 = vmul.f32 %v1835, %v1807
    %v1838 = vsub.f32 1.0, %v1004
    %1840 = vset.pattern.permute.xlu0 0
    %1841 = vperm.xlu0 %1840, %v1838
    %v1842 = vpop.permute.xlu0 %1841
    %v1844 = vmul.f32 %v1842, %v1658
    %v1845 = vadd.f32 %v1837, %v1844
    %v1846 = vmul.f32 %v1835, %v1801
    %v1847 = vmul.f32 %v1842, %v1661
    %v1848 = vadd.f32 %v1846, %v1847
    %1850 = vset.pattern.permute.xlu0 0
    %1851 = vperm.xlu0 %1850, %v1005
    %v1852 = vpop.permute.xlu0 %1851
    %v1854 = vmul.f32 %v1852, %v1831
    %v1855 = vsub.f32 1.0, %v1005
    %1857 = vset.pattern.permute.xlu0 0
    %1858 = vperm.xlu0 %1857, %v1855
    %v1859 = vpop.permute.xlu0 %1858
    %v1861 = vmul.f32 %v1859, %v1675
    %v1862 = vadd.f32 %v1854, %v1861
    %v1863 = vmul.f32 %v1852, %v1825
    %v1864 = vmul.f32 %v1859, %v1678
    %v1865 = vadd.f32 %v1863, %v1864
    %1867 = vrot.lane.b32.xlu0 %v1845, 32
    %v1868 = vpop.permute.xlu0 %1867
    %1871 = vrot.lane.b32.xlu0 %v1862, 64
    %v1872 = vpop.permute.xlu0 %1871
    %v1874 = vsel %vm1316, %v1868, %v1872
    %v1876 = vsel %vm1130, %v1874, 0
    %1878 = vmatprep.subr.mxu0 0.0
    %1879 = vmatpush1.msra.mxu0 0.0
    %1880 = vmatprep.subr.mxu0 0.0
    %1881 = vmatpush1.msra.mxu0 0.0
    %1882 = vmatprep.subr.mxu0 0.0
    %1883 = vmatpush1.msra.mxu0 0.0
    %1884 = vmatprep.subr.mxu0 0.0
    %1885 = vmatpush1.msra.mxu0 0.0
    %1886 = vmatprep.subr.mxu0 0.0
    %1887 = vmatpush1.msra.mxu0 0.0
    %1888 = vmatprep.subr.mxu0 0.0
    %1889 = vmatpush1.msra.mxu0 0.0
    %1890 = vmatprep.subr.mxu0 0.0
    %1891 = vmatpush1.msra.mxu0 0.0
    %1892 = vmatprep.subr.mxu0 0.0
    %1893 = vmatpush1.msra.mxu0 0.0
    %1894 = vmatprep.subr.mxu0 %v1035
    %1895 = vmatpush1.msra.mxu0 %v1034
    %1896 = vmatprep.subr.mxu0 %v1033
    %1897 = vmatpush1.msra.mxu0 %v1032
    %1898 = vmatprep.subr.mxu0 %v1031
    %1899 = vmatpush1.msra.mxu0 %v1030
    %1900 = vmatprep.subr.mxu0 %v1029
    %1901 = vmatpush1.msra.mxu0 %v1028
    %1902 = vmatprep.subr.mxu0 %v1027
    %1903 = vmatpush1.msra.mxu0 %v1026
    %1904 = vmatprep.subr.mxu0 %v1025
    %1905 = vmatpush1.msra.mxu0 %v1024
    %1906 = vmatprep.subr.mxu0 %v1023
    %1907 = vmatpush1.msra.mxu0 %v1022
    %1908 = vmatprep.subr.mxu0 %v1021
    %1909 = vmatpush1.msra.mxu0 %v1020
    %1910 = vmatprep.subr.mxu0 0.0
    %1911 = vmatpush2.msra.mxu0 0.0
    %1912 = vmatprep.subr.mxu0 0.0
    %1913 = vmatpush2.msra.mxu0 0.0
    %1914 = vmatprep.subr.mxu0 0.0
    %1915 = vmatpush2.msra.mxu0 0.0
    %1916 = vmatprep.subr.mxu0 0.0
    %1917 = vmatpush2.msra.mxu0 0.0
    %1918 = vmatprep.subr.mxu0 0.0
    %1919 = vmatpush2.msra.mxu0 0.0
    %1920 = vmatprep.subr.mxu0 0.0
    %1921 = vmatpush2.msra.mxu0 0.0
    %1922 = vmatprep.subr.mxu0 0.0
    %1923 = vmatpush2.msra.mxu0 0.0
    %1924 = vmatprep.subr.mxu0 0.0
    %1925 = vmatpush2.msra.mxu0 0.0
    %1926 = vmatprep.subr.mxu0 0.0
    %1927 = vmatpush2.msra.mxu0 0.0
    %1928 = vmatprep.subr.mxu0 0.0
    %1929 = vmatpush2.msra.mxu0 0.0
    %1930 = vmatprep.subr.mxu0 0.0
    %1931 = vmatpush2.msra.mxu0 0.0
    %1932 = vmatprep.subr.mxu0 0.0
    %1933 = vmatpush2.msra.mxu0 0.0
    %1934 = vmatprep.subr.mxu0 0.0
    %1935 = vmatpush2.msra.mxu0 0.0
    %1936 = vmatprep.subr.mxu0 0.0
    %1937 = vmatpush2.msra.mxu0 0.0
    %1938 = vmatprep.subr.mxu0 0.0
    %1939 = vmatpush2.msra.mxu0 0.0
    %1940 = vmatprep.subr.mxu0 0.0
    %1941 = vmatpush2.msra.mxu0 0.0
    %1942 = vmatprep.mubr.f32.mxu0 0.0
    %1943 = vmatmul.mubr.f32.gmra.mxu0 %v1876
    %v1944 = vpop.f32.mrf.mxu0
    %v1945 = vadd.f32 0.0, %v1944
    %v1946 = vpop.f32.mrf.mxu0
    %v1947 = vadd.f32 0.0, %v1946
    %1948 = vdwg.mxu0
    %v1949 = vadd.f32 %v1781, %v1945
    %v1950 = vadd.f32 %v1771, %v1947
    %v1951 = vxor.u32 %v1949, 2147483648
    %v1952 = vmul.f32 %v1951, 1.442695
    %v1953 = vpow.pop %v1952
    %v1954 = vadd.f32 %v1953, 1.0
    %v1955 = vrcp.pop %v1954
    %v1956 = vmul.f32 1.0, %v1955
    %v1957 = vtanh.pop %v1949
    %v1958 = vmul.f32 %v1956, %v1848
    %1960 = vrot.lane.b32.xlu0 %v1957, 64
    %v1961 = vpop.permute.xlu0 %1960
    %v1963 = vmul.f32 %v1956, %v1961
    %1965 = vrot.lane.b32.xlu0 %v1963, 32
    %v1966 = vpop.permute.xlu0 %1965
    %v1968 = vadd.f32 %v1958, %v1966
    %v1969 = vtanh.pop %v1968
    %1971 = vrot.lane.b32.xlu0 %v1969, 64
    %v1972 = vpop.permute.xlu0 %1971
    %v1974 = vmul.f32 %v1956, %v1972
    %v1975 = vxor.u32 %v1950, 2147483648
    %v1976 = vmul.f32 %v1975, 1.442695
    %v1977 = vpow.pop %v1976
    %v1978 = vadd.f32 %v1977, 1.0
    %v1979 = vrcp.pop %v1978
    %v1980 = vmul.f32 1.0, %v1979
    %v1981 = vtanh.pop %v1950
    %v1982 = vmul.f32 %v1980, %v1865
    %1984 = vrot.lane.b32.xlu0 %v1981, 64
    %v1985 = vpop.permute.xlu0 %1984
    %v1987 = vmul.f32 %v1980, %v1985
    %1989 = vrot.lane.b32.xlu0 %v1987, 32
    %v1990 = vpop.permute.xlu0 %1989
    %v1992 = vadd.f32 %v1982, %v1990
    %v1993 = vtanh.pop %v1992
    %1995 = vrot.lane.b32.xlu0 %v1993, 64
    %v1996 = vpop.permute.xlu0 %1995
    %v1998 = vmul.f32 %v1980, %v1996
    %v1999 = vmul.f32 %v1852, %v1974
    %v2000 = vmul.f32 %v1859, %v1845
    %v2001 = vadd.f32 %v1999, %v2000
    %v2002 = vmul.f32 %v1852, %v1968
    %v2003 = vmul.f32 %v1859, %v1848
    %v2004 = vadd.f32 %v2002, %v2003
    %v2005 = vmul.f32 %v1835, %v1998
    %v2006 = vmul.f32 %v1842, %v1862
    %v2007 = vadd.f32 %v2005, %v2006
    %v2008 = vmul.f32 %v1835, %v1992
    %v2009 = vmul.f32 %v1842, %v1865
    %v2010 = vadd.f32 %v2008, %v2009
    %2012 = vrot.lane.b32.xlu0 %v2001, 32
    %v2013 = vpop.permute.xlu0 %2012
    %2016 = vrot.lane.b32.xlu0 %v2007, 64
    %v2017 = vpop.permute.xlu0 %2016
    %v2019 = vsel %vm1316, %v2013, %v2017
    %v2021 = vsel %vm1130, %v2019, 0
    %2023 = vmatprep.subr.mxu0 0.0
    %2024 = vmatpush1.msra.mxu0 0.0
    %2025 = vmatprep.subr.mxu0 0.0
    %2026 = vmatpush1.msra.mxu0 0.0
    %2027 = vmatprep.subr.mxu0 0.0
    %2028 = vmatpush1.msra.mxu0 0.0
    %2029 = vmatprep.subr.mxu0 0.0
    %2030 = vmatpush1.msra.mxu0 0.0
    %2031 = vmatprep.subr.mxu0 0.0
    %2032 = vmatpush1.msra.mxu0 0.0
    %2033 = vmatprep.subr.mxu0 0.0
    %2034 = vmatpush1.msra.mxu0 0.0
    %2035 = vmatprep.subr.mxu0 0.0
    %2036 = vmatpush1.msra.mxu0 0.0
    %2037 = vmatprep.subr.mxu0 0.0
    %2038 = vmatpush1.msra.mxu0 0.0
    %2039 = vmatprep.subr.mxu0 %v1035
    %2040 = vmatpush1.msra.mxu0 %v1034
    %2041 = vmatprep.subr.mxu0 %v1033
    %2042 = vmatpush1.msra.mxu0 %v1032
    %2043 = vmatprep.subr.mxu0 %v1031
    %2044 = vmatpush1.msra.mxu0 %v1030
    %2045 = vmatprep.subr.mxu0 %v1029
    %2046 = vmatpush1.msra.mxu0 %v1028
    %2047 = vmatprep.subr.mxu0 %v1027
    %2048 = vmatpush1.msra.mxu0 %v1026
    %2049 = vmatprep.subr.mxu0 %v1025
    %2050 = vmatpush1.msra.mxu0 %v1024
    %2051 = vmatprep.subr.mxu0 %v1023
    %2052 = vmatpush1.msra.mxu0 %v1022
    %2053 = vmatprep.subr.mxu0 %v1021
    %2054 = vmatpush1.msra.mxu0 %v1020
    %2055 = vmatprep.subr.mxu0 0.0
    %2056 = vmatpush2.msra.mxu0 0.0
    %2057 = vmatprep.subr.mxu0 0.0
    %2058 = vmatpush2.msra.mxu0 0.0
    %2059 = vmatprep.subr.mxu0 0.0
    %2060 = vmatpush2.msra.mxu0 0.0
    %2061 = vmatprep.subr.mxu0 0.0
    %2062 = vmatpush2.msra.mxu0 0.0
    %2063 = vmatprep.subr.mxu0 0.0
    %2064 = vmatpush2.msra.mxu0 0.0
    %2065 = vmatprep.subr.mxu0 0.0
    %2066 = vmatpush2.msra.mxu0 0.0
    %2067 = vmatprep.subr.mxu0 0.0
    %2068 = vmatpush2.msra.mxu0 0.0
    %2069 = vmatprep.subr.mxu0 0.0
    %2070 = vmatpush2.msra.mxu0 0.0
    %2071 = vmatprep.subr.mxu0 0.0
    %2072 = vmatpush2.msra.mxu0 0.0
    %2073 = vmatprep.subr.mxu0 0.0
    %2074 = vmatpush2.msra.mxu0 0.0
    %2075 = vmatprep.subr.mxu0 0.0
    %2076 = vmatpush2.msra.mxu0 0.0
    %2077 = vmatprep.subr.mxu0 0.0
    %2078 = vmatpush2.msra.mxu0 0.0
    %2079 = vmatprep.subr.mxu0 0.0
    %2080 = vmatpush2.msra.mxu0 0.0
    %2081 = vmatprep.subr.mxu0 0.0
    %2082 = vmatpush2.msra.mxu0 0.0
    %2083 = vmatprep.subr.mxu0 0.0
    %2084 = vmatpush2.msra.mxu0 0.0
    %2085 = vmatprep.subr.mxu0 0.0
    %2086 = vmatpush2.msra.mxu0 0.0
    %2087 = vmatprep.mubr.f32.mxu0 0.0
    %2088 = vmatmul.mubr.f32.gmra.mxu0 %v2021
    %v2089 = vpop.f32.mrf.mxu0
    %v2090 = vadd.f32 0.0, %v2089
    %v2091 = vpop.f32.mrf.mxu0
    %v2092 = vadd.f32 0.0, %v2091
    %2093 = vdwg.mxu0
    %v2094 = vadd.f32 %v1594, %v2090
    %v2095 = vadd.f32 %v1584, %v2092
    %v2096 = vxor.u32 %v2094, 2147483648
    %v2097 = vmul.f32 %v2096, 1.442695
    %v2098 = vpow.pop %v2097
    %v2099 = vadd.f32 %v2098, 1.0
    %v2100 = vrcp.pop %v2099
    %v2101 = vmul.f32 1.0, %v2100
    %v2102 = vtanh.pop %v2094
    %v2103 = vmul.f32 %v2101, %v2004
    %2105 = vrot.lane.b32.xlu0 %v2102, 64
    %v2106 = vpop.permute.xlu0 %2105
    %v2108 = vmul.f32 %v2101, %v2106
    %2110 = vrot.lane.b32.xlu0 %v2108, 32
    %v2111 = vpop.permute.xlu0 %2110
    %v2113 = vadd.f32 %v2103, %v2111
    %v2114 = vtanh.pop %v2113
    %2116 = vrot.lane.b32.xlu0 %v2114, 64
    %v2117 = vpop.permute.xlu0 %2116
    %v2119 = vmul.f32 %v2101, %v2117
    %v2120 = vxor.u32 %v2095, 2147483648
    %v2121 = vmul.f32 %v2120, 1.442695
    %v2122 = vpow.pop %v2121
    %v2123 = vadd.f32 %v2122, 1.0
    %v2124 = vrcp.pop %v2123
    %v2125 = vmul.f32 1.0, %v2124
    %v2126 = vtanh.pop %v2095
    %v2127 = vmul.f32 %v2125, %v2010
    %2129 = vrot.lane.b32.xlu0 %v2126, 64
    %v2130 = vpop.permute.xlu0 %2129
    %v2132 = vmul.f32 %v2125, %v2130
    %2134 = vrot.lane.b32.xlu0 %v2132, 32
    %v2135 = vpop.permute.xlu0 %2134
    %v2137 = vadd.f32 %v2127, %v2135
    %v2138 = vtanh.pop %v2137
    %2140 = vrot.lane.b32.xlu0 %v2138, 64
    %v2141 = vpop.permute.xlu0 %2140
    %v2143 = vmul.f32 %v2125, %v2141
    %v2144 = vmul.f32 %v1665, %v2119
    %v2145 = vmul.f32 %v1672, %v2001
    %v2146 = vadd.f32 %v2144, %v2145
    %v2147 = vmul.f32 %v1665, %v2113
    %v2148 = vmul.f32 %v1672, %v2004
    %v2149 = vadd.f32 %v2147, %v2148
    %v2150 = vmul.f32 %v1648, %v2143
    %v2151 = vmul.f32 %v1655, %v2007
    %v2152 = vadd.f32 %v2150, %v2151
    %v2153 = vmul.f32 %v1648, %v2137
    %v2154 = vmul.f32 %v1655, %v2010
    %v2155 = vadd.f32 %v2153, %v2154
    %2157 = vrot.lane.b32.xlu0 %v2146, 32
    %v2158 = vpop.permute.xlu0 %2157
    %2161 = vrot.lane.b32.xlu0 %v2152, 64
    %v2162 = vpop.permute.xlu0 %2161
    %v2164 = vsel %vm1316, %v2158, %v2162
    %v2166 = vsel %vm1130, %v2164, 0
    %2168 = vmatprep.subr.mxu0 0.0
    %2169 = vmatpush1.msra.mxu0 0.0
    %2170 = vmatprep.subr.mxu0 0.0
    %2171 = vmatpush1.msra.mxu0 0.0
    %2172 = vmatprep.subr.mxu0 0.0
    %2173 = vmatpush1.msra.mxu0 0.0
    %2174 = vmatprep.subr.mxu0 0.0
    %2175 = vmatpush1.msra.mxu0 0.0
    %2176 = vmatprep.subr.mxu0 0.0
    %2177 = vmatpush1.msra.mxu0 0.0
    %2178 = vmatprep.subr.mxu0 0.0
    %2179 = vmatpush1.msra.mxu0 0.0
    %2180 = vmatprep.subr.mxu0 0.0
    %2181 = vmatpush1.msra.mxu0 0.0
    %2182 = vmatprep.subr.mxu0 0.0
    %2183 = vmatpush1.msra.mxu0 0.0
    %2184 = vmatprep.subr.mxu0 %v1035
    %2185 = vmatpush1.msra.mxu0 %v1034
    %2186 = vmatprep.subr.mxu0 %v1033
    %2187 = vmatpush1.msra.mxu0 %v1032
    %2188 = vmatprep.subr.mxu0 %v1031
    %2189 = vmatpush1.msra.mxu0 %v1030
    %2190 = vmatprep.subr.mxu0 %v1029
    %2191 = vmatpush1.msra.mxu0 %v1028
    %2192 = vmatprep.subr.mxu0 %v1027
    %2193 = vmatpush1.msra.mxu0 %v1026
    %2194 = vmatprep.subr.mxu0 %v1025
    %2195 = vmatpush1.msra.mxu0 %v1024
    %2196 = vmatprep.subr.mxu0 %v1023
    %2197 = vmatpush1.msra.mxu0 %v1022
    %2198 = vmatprep.subr.mxu0 %v1021
    %2199 = vmatpush1.msra.mxu0 %v1020
    %2200 = vmatprep.subr.mxu0 0.0
    %2201 = vmatpush2.msra.mxu0 0.0
    %2202 = vmatprep.subr.mxu0 0.0
    %2203 = vmatpush2.msra.mxu0 0.0
    %2204 = vmatprep.subr.mxu0 0.0
    %2205 = vmatpush2.msra.mxu0 0.0
    %2206 = vmatprep.subr.mxu0 0.0
    %2207 = vmatpush2.msra.mxu0 0.0
    %2208 = vmatprep.subr.mxu0 0.0
    %2209 = vmatpush2.msra.mxu0 0.0
    %2210 = vmatprep.subr.mxu0 0.0
    %2211 = vmatpush2.msra.mxu0 0.0
    %2212 = vmatprep.subr.mxu0 0.0
    %2213 = vmatpush2.msra.mxu0 0.0
    %2214 = vmatprep.subr.mxu0 0.0
    %2215 = vmatpush2.msra.mxu0 0.0
    %2216 = vmatprep.subr.mxu0 0.0
    %2217 = vmatpush2.msra.mxu0 0.0
    %2218 = vmatprep.subr.mxu0 0.0
    %2219 = vmatpush2.msra.mxu0 0.0
    %2220 = vmatprep.subr.mxu0 0.0
    %2221 = vmatpush2.msra.mxu0 0.0
    %2222 = vmatprep.subr.mxu0 0.0
    %2223 = vmatpush2.msra.mxu0 0.0
    %2224 = vmatprep.subr.mxu0 0.0
    %2225 = vmatpush2.msra.mxu0 0.0
    %2226 = vmatprep.subr.mxu0 0.0
    %2227 = vmatpush2.msra.mxu0 0.0
    %2228 = vmatprep.subr.mxu0 0.0
    %2229 = vmatpush2.msra.mxu0 0.0
    %2230 = vmatprep.subr.mxu0 0.0
    %2231 = vmatpush2.msra.mxu0 0.0
    %2232 = vmatprep.mubr.f32.mxu0 0.0
    %2233 = vmatmul.mubr.f32.gmra.mxu0 %v2166
    %v2234 = vpop.f32.mrf.mxu0
    %v2235 = vadd.f32 0.0, %v2234
    %v2236 = vpop.f32.mrf.mxu0
    %v2237 = vadd.f32 0.0, %v2236
    %2238 = vdwg.mxu0
    %v2239 = vadd.f32 %v1407, %v2235
    %v2240 = vadd.f32 %v1397, %v2237
    %v2241 = vxor.u32 %v2239, 2147483648
    %v2242 = vmul.f32 %v2241, 1.442695
    %v2243 = vpow.pop %v2242
    %v2244 = vadd.f32 %v2243, 1.0
    %v2245 = vrcp.pop %v2244
    %v2246 = vmul.f32 1.0, %v2245
    %v2247 = vtanh.pop %v2239
    %v2248 = vmul.f32 %v2246, %v2149
    %2250 = vrot.lane.b32.xlu0 %v2247, 64
    %v2251 = vpop.permute.xlu0 %2250
    %v2253 = vmul.f32 %v2246, %v2251
    %2255 = vrot.lane.b32.xlu0 %v2253, 32
    %v2256 = vpop.permute.xlu0 %2255
    %v2258 = vadd.f32 %v2248, %v2256
    %v2259 = vtanh.pop %v2258
    %2261 = vrot.lane.b32.xlu0 %v2259, 64
    %v2262 = vpop.permute.xlu0 %2261
    %v2264 = vmul.f32 %v2246, %v2262
    %v2265 = vxor.u32 %v2240, 2147483648
    %v2266 = vmul.f32 %v2265, 1.442695
    %v2267 = vpow.pop %v2266
    %v2268 = vadd.f32 %v2267, 1.0
    %v2269 = vrcp.pop %v2268
    %v2270 = vmul.f32 1.0, %v2269
    %v2271 = vtanh.pop %v2240
    %v2272 = vmul.f32 %v2270, %v2155
    %2274 = vrot.lane.b32.xlu0 %v2271, 64
    %v2275 = vpop.permute.xlu0 %2274
    %v2277 = vmul.f32 %v2270, %v2275
    %2279 = vrot.lane.b32.xlu0 %v2277, 32
    %v2280 = vpop.permute.xlu0 %2279
    %v2282 = vadd.f32 %v2272, %v2280
    %v2283 = vtanh.pop %v2282
    %2285 = vrot.lane.b32.xlu0 %v2283, 64
    %v2286 = vpop.permute.xlu0 %2285
    %v2288 = vmul.f32 %v2270, %v2286
    %v2289 = vmul.f32 %v1478, %v2264
    %v2290 = vmul.f32 %v1485, %v2146
    %v2291 = vadd.f32 %v2289, %v2290
    %v2292 = vmul.f32 %v1478, %v2258
    %v2293 = vmul.f32 %v1485, %v2149
    %v2294 = vadd.f32 %v2292, %v2293
    %v2295 = vmul.f32 %v1461, %v2288
    %v2296 = vmul.f32 %v1468, %v2152
    %v2297 = vadd.f32 %v2295, %v2296
    %v2298 = vmul.f32 %v1461, %v2282
    %v2299 = vmul.f32 %v1468, %v2155
    %v2300 = vadd.f32 %v2298, %v2299
    %2302 = vrot.lane.b32.xlu0 %v2291, 32
    %v2303 = vpop.permute.xlu0 %2302
    %2306 = vrot.lane.b32.xlu0 %v2297, 64
    %v2307 = vpop.permute.xlu0 %2306
    %v2309 = vsel %vm1316, %v2303, %v2307
    %v2311 = vsel %vm1130, %v2309, 0
    %2313 = vmatprep.subr.mxu0 0.0
    %2314 = vmatpush1.msra.mxu0 0.0
    %2315 = vmatprep.subr.mxu0 0.0
    %2316 = vmatpush1.msra.mxu0 0.0
    %2317 = vmatprep.subr.mxu0 0.0
    %2318 = vmatpush1.msra.mxu0 0.0
    %2319 = vmatprep.subr.mxu0 0.0
    %2320 = vmatpush1.msra.mxu0 0.0
    %2321 = vmatprep.subr.mxu0 0.0
    %2322 = vmatpush1.msra.mxu0 0.0
    %2323 = vmatprep.subr.mxu0 0.0
    %2324 = vmatpush1.msra.mxu0 0.0
    %2325 = vmatprep.subr.mxu0 0.0
    %2326 = vmatpush1.msra.mxu0 0.0
    %2327 = vmatprep.subr.mxu0 0.0
    %2328 = vmatpush1.msra.mxu0 0.0
    %2329 = vmatprep.subr.mxu0 %v1035
    %2330 = vmatpush1.msra.mxu0 %v1034
    %2331 = vmatprep.subr.mxu0 %v1033
    %2332 = vmatpush1.msra.mxu0 %v1032
    %2333 = vmatprep.subr.mxu0 %v1031
    %2334 = vmatpush1.msra.mxu0 %v1030
    %2335 = vmatprep.subr.mxu0 %v1029
    %2336 = vmatpush1.msra.mxu0 %v1028
    %2337 = vmatprep.subr.mxu0 %v1027
    %2338 = vmatpush1.msra.mxu0 %v1026
    %2339 = vmatprep.subr.mxu0 %v1025
    %2340 = vmatpush1.msra.mxu0 %v1024
    %2341 = vmatprep.subr.mxu0 %v1023
    %2342 = vmatpush1.msra.mxu0 %v1022
    %2343 = vmatprep.subr.mxu0 %v1021
    %2344 = vmatpush1.msra.mxu0 %v1020
    %2345 = vmatprep.subr.mxu0 0.0
    %2346 = vmatpush2.msra.mxu0 0.0
    %2347 = vmatprep.subr.mxu0 0.0
    %2348 = vmatpush2.msra.mxu0 0.0
    %2349 = vmatprep.subr.mxu0 0.0
    %2350 = vmatpush2.msra.mxu0 0.0
    %2351 = vmatprep.subr.mxu0 0.0
    %2352 = vmatpush2.msra.mxu0 0.0
    %2353 = vmatprep.subr.mxu0 0.0
    %2354 = vmatpush2.msra.mxu0 0.0
    %2355 = vmatprep.subr.mxu0 0.0
    %2356 = vmatpush2.msra.mxu0 0.0
    %2357 = vmatprep.subr.mxu0 0.0
    %2358 = vmatpush2.msra.mxu0 0.0
    %2359 = vmatprep.subr.mxu0 0.0
    %2360 = vmatpush2.msra.mxu0 0.0
    %2361 = vmatprep.subr.mxu0 0.0
    %2362 = vmatpush2.msra.mxu0 0.0
    %2363 = vmatprep.subr.mxu0 0.0
    %2364 = vmatpush2.msra.mxu0 0.0
    %2365 = vmatprep.subr.mxu0 0.0
    %2366 = vmatpush2.msra.mxu0 0.0
    %2367 = vmatprep.subr.mxu0 0.0
    %2368 = vmatpush2.msra.mxu0 0.0
    %2369 = vmatprep.subr.mxu0 0.0
    %2370 = vmatpush2.msra.mxu0 0.0
    %2371 = vmatprep.subr.mxu0 0.0
    %2372 = vmatpush2.msra.mxu0 0.0
    %2373 = vmatprep.subr.mxu0 0.0
    %2374 = vmatpush2.msra.mxu0 0.0
    %2375 = vmatprep.subr.mxu0 0.0
    %2376 = vmatpush2.msra.mxu0 0.0
    %2377 = vmatprep.mubr.f32.mxu0 0.0
    %2378 = vmatmul.mubr.f32.gmra.mxu0 %v2311
    %v2379 = vpop.f32.mrf.mxu0
    %v2380 = vadd.f32 0.0, %v2379
    %v2381 = vpop.f32.mrf.mxu0
    %v2382 = vadd.f32 0.0, %v2381
    %2383 = vdwg.mxu0
    %v2384 = vadd.f32 %v1225, %v2380
    %v2385 = vadd.f32 %v1213, %v2382
    %v2386 = vxor.u32 %v2384, 2147483648
    %v2387 = vmul.f32 %v2386, 1.442695
    %v2388 = vpow.pop %v2387
    %v2389 = vadd.f32 %v2388, 1.0
    %v2390 = vrcp.pop %v2389
    %v2391 = vmul.f32 1.0, %v2390
    %v2392 = vtanh.pop %v2384
    %v2393 = vmul.f32 %v2391, %v2294
    %2395 = vrot.lane.b32.xlu0 %v2392, 64
    %v2396 = vpop.permute.xlu0 %2395
    %v2398 = vmul.f32 %v2391, %v2396
    %2400 = vrot.lane.b32.xlu0 %v2398, 32
    %v2401 = vpop.permute.xlu0 %2400
    %v2403 = vadd.f32 %v2393, %v2401
    %v2404 = vtanh.pop %v2403
    %2406 = vrot.lane.b32.xlu0 %v2404, 64
    %v2407 = vpop.permute.xlu0 %2406
    %v2409 = vmul.f32 %v2391, %v2407
    %v2410 = vxor.u32 %v2385, 2147483648
    %v2411 = vmul.f32 %v2410, 1.442695
    %v2412 = vpow.pop %v2411
    %v2413 = vadd.f32 %v2412, 1.0
    %v2414 = vrcp.pop %v2413
    %v2415 = vmul.f32 1.0, %v2414
    %v2416 = vtanh.pop %v2385
    %v2417 = vmul.f32 %v2415, %v2300
    %2419 = vrot.lane.b32.xlu0 %v2416, 64
    %v2420 = vpop.permute.xlu0 %2419
    %v2422 = vmul.f32 %v2415, %v2420
    %2424 = vrot.lane.b32.xlu0 %v2422, 32
    %v2425 = vpop.permute.xlu0 %2424
    %v2427 = vadd.f32 %v2417, %v2425
    %v2428 = vtanh.pop %v2427
    %2430 = vrot.lane.b32.xlu0 %v2428, 64
    %v2431 = vpop.permute.xlu0 %2430
    %v2433 = vmul.f32 %v2415, %v2431
    %v2434 = vmul.f32 %v1295, %v2409
    %v2435 = vmul.f32 %v1279, %v2433
    %2437 = vrot.lane.b32.xlu0 %v1281, 32
    %v2438 = vpop.permute.xlu0 %2437
    %2441 = vrot.lane.b32.xlu0 %v2435, 64
    %v2442 = vpop.permute.xlu0 %2441
    %v2444 = vsel %vm1316, %v2438, %v2442
    %2446 = vrot.lane.b32.xlu0 %v1463, 32
    %v2447 = vpop.permute.xlu0 %2446
    %2450 = vrot.lane.b32.xlu0 %v2295, 64
    %v2451 = vpop.permute.xlu0 %2450
    %v2453 = vsel %vm1316, %v2447, %v2451
    %2455 = vrot.lane.b32.xlu0 %v1650, 32
    %v2456 = vpop.permute.xlu0 %2455
    %2459 = vrot.lane.b32.xlu0 %v2150, 64
    %v2460 = vpop.permute.xlu0 %2459
    %v2462 = vsel %vm1316, %v2456, %v2460
    %2464 = vrot.lane.b32.xlu0 %v1837, 32
    %v2465 = vpop.permute.xlu0 %2464
    %2468 = vrot.lane.b32.xlu0 %v2005, 64
    %v2469 = vpop.permute.xlu0 %2468
    %v2471 = vsel %vm1316, %v2465, %v2469
    %2473 = vrot.lane.b32.xlu0 %v1999, 32
    %v2474 = vpop.permute.xlu0 %2473
    %2477 = vrot.lane.b32.xlu0 %v1854, 64
    %v2478 = vpop.permute.xlu0 %2477
    %v2480 = vsel %vm1316, %v2474, %v2478
    %2482 = vrot.lane.b32.xlu0 %v2144, 32
    %v2483 = vpop.permute.xlu0 %2482
    %2486 = vrot.lane.b32.xlu0 %v1667, 64
    %v2487 = vpop.permute.xlu0 %2486
    %v2489 = vsel %vm1316, %v2483, %v2487
    %2491 = vrot.lane.b32.xlu0 %v2289, 32
    %v2492 = vpop.permute.xlu0 %2491
    %2495 = vrot.lane.b32.xlu0 %v1480, 64
    %v2496 = vpop.permute.xlu0 %2495
    %v2498 = vsel %vm1316, %v2492, %v2496
    %2500 = vrot.lane.b32.xlu0 %v2434, 32
    %v2501 = vpop.permute.xlu0 %2500
    %2504 = vrot.lane.b32.xlu0 %v1297, 64
    %v2505 = vpop.permute.xlu0 %2504
    %v2507 = vsel %vm1316, %v2501, %v2505
    %v2509 = vrot.slane %v2453, 6
    %v2512 = vrot.slane %v2462, 4
    %v2515 = vrot.slane %v2471, 2
    %v2518 = vrot.slane %v2489, 6
    %v2521 = vrot.slane %v2498, 4
    %v2524 = vrot.slane %v2507, 2
    %vm2526 = vcmask 1041408
    %v2527 = vsel %vm2526, %v2444, %v2509
    %vm2528 = vcmask 1043456
    %v2529 = vsel %vm2528, %v2527, %v2512
    %v2530 = vsel %vm83, %v2529, %v2515
    %v2531 = vsel %vm2526, %v2480, %v2518
    %v2532 = vsel %vm2528, %v2531, %v2521
    %v2533 = vsel %vm83, %v2532, %v2524
    %v2534 = vld [vmem:[%s6] sm:$0xff]
    %v2535 = vld [vmem:[%s6 + $0x8] sm:$0xff]
    %v2536 = vld [vmem:[%s6 + $0x10] sm:$0xff]
    %v2537 = vld [vmem:[%s6 + $0x18] sm:$0xff]
    %v2538 = vld [vmem:[%s6 + $0x20] sm:$0xff]
    %v2539 = vld [vmem:[%s6 + $0x28] sm:$0xff]
    %v2540 = vld [vmem:[%s6 + $0x30] sm:$0xff]
    %v2541 = vld [vmem:[%s6 + $0x38] sm:$0xff]
    %v2542 = vld [vmem:[%s6 + $0x40] sm:$0xff]
    %v2543 = vld [vmem:[%s6 + $0x48] sm:$0xff]
    %v2544 = vld [vmem:[%s6 + $0x50] sm:$0xff]
    %v2545 = vld [vmem:[%s6 + $0x58] sm:$0xff]
    %v2546 = vld [vmem:[%s6 + $0x60] sm:$0xff]
    %v2547 = vld [vmem:[%s6 + $0x68] sm:$0xff]
    %v2548 = vld [vmem:[%s6 + $0x70] sm:$0xff]
    %v2549 = vld [vmem:[%s6 + $0x78] sm:$0xff]
    %v2550 = vld [vmem:[%s7] sm:$0x3]
    %v2551 = vld [vmem:[%s8] sm:$0xff]
    %v2552 = vld [vmem:[%s8 + $0x8] sm:$0xff]
    %v2553 = vld [vmem:[%s8 + $0x10] sm:$0xff]
    %v2554 = vld [vmem:[%s8 + $0x18] sm:$0xff]
    %v2555 = vld [vmem:[%s8 + $0x20] sm:$0xff]
    %v2556 = vld [vmem:[%s8 + $0x28] sm:$0xff]
    %v2557 = vld [vmem:[%s8 + $0x30] sm:$0xff]
    %v2558 = vld [vmem:[%s8 + $0x38] sm:$0xff]
    %v2559 = vld [vmem:[%s8 + $0x40] sm:$0xff]
    %v2560 = vld [vmem:[%s8 + $0x48] sm:$0xff]
    %v2561 = vld [vmem:[%s8 + $0x50] sm:$0xff]
    %v2562 = vld [vmem:[%s8 + $0x58] sm:$0xff]
    %v2563 = vld [vmem:[%s8 + $0x60] sm:$0xff]
    %v2564 = vld [vmem:[%s8 + $0x68] sm:$0xff]
    %v2565 = vld [vmem:[%s8 + $0x70] sm:$0xff]
    %v2566 = vld [vmem:[%s8 + $0x78] sm:$0xff]
    %v2568 = vlaneseq
    %v2569 = vshrl.u32 %v2568, 7
    %v2570 = vsub.s32 0, %v2569
    %v2571 = vrot.slane %v2550, %v2570
    %v2572 = vlaneseq
    %v2573 = vshrl.u32 %v2572, 7
    %v2574 = vsub.s32 1, %v2573
    %v2575 = vrot.slane %v2550, %v2574
    %v2579 = vsel %vm1130, %v2530, 0
    %v2582 = vsel %vm1130, %v2533, 0
    %2584 = vmatprep.subr.mxu0 0.0
    %2585 = vmatpush1.msra.mxu0 0.0
    %2586 = vmatprep.subr.mxu0 0.0
    %2587 = vmatpush1.msra.mxu0 0.0
    %2588 = vmatprep.subr.mxu0 0.0
    %2589 = vmatpush1.msra.mxu0 0.0
    %2590 = vmatprep.subr.mxu0 0.0
    %2591 = vmatpush1.msra.mxu0 0.0
    %2592 = vmatprep.subr.mxu0 0.0
    %2593 = vmatpush1.msra.mxu0 0.0
    %2594 = vmatprep.subr.mxu0 0.0
    %2595 = vmatpush1.msra.mxu0 0.0
    %2596 = vmatprep.subr.mxu0 0.0
    %2597 = vmatpush1.msra.mxu0 0.0
    %2598 = vmatprep.subr.mxu0 0.0
    %2599 = vmatpush1.msra.mxu0 0.0
    %2600 = vmatprep.subr.mxu0 %v2549
    %2601 = vmatpush1.msra.mxu0 %v2548
    %2602 = vmatprep.subr.mxu0 %v2547
    %2603 = vmatpush1.msra.mxu0 %v2546
    %2604 = vmatprep.subr.mxu0 %v2545
    %2605 = vmatpush1.msra.mxu0 %v2544
    %2606 = vmatprep.subr.mxu0 %v2543
    %2607 = vmatpush1.msra.mxu0 %v2542
    %2608 = vmatprep.subr.mxu0 %v2541
    %2609 = vmatpush1.msra.mxu0 %v2540
    %2610 = vmatprep.subr.mxu0 %v2539
    %2611 = vmatpush1.msra.mxu0 %v2538
    %2612 = vmatprep.subr.mxu0 %v2537
    %2613 = vmatpush1.msra.mxu0 %v2536
    %2614 = vmatprep.subr.mxu0 %v2535
    %2615 = vmatpush1.msra.mxu0 %v2534
    %2616 = vmatprep.subr.mxu0 0.0
    %2617 = vmatpush2.msra.mxu0 0.0
    %2618 = vmatprep.subr.mxu0 0.0
    %2619 = vmatpush2.msra.mxu0 0.0
    %2620 = vmatprep.subr.mxu0 0.0
    %2621 = vmatpush2.msra.mxu0 0.0
    %2622 = vmatprep.subr.mxu0 0.0
    %2623 = vmatpush2.msra.mxu0 0.0
    %2624 = vmatprep.subr.mxu0 0.0
    %2625 = vmatpush2.msra.mxu0 0.0
    %2626 = vmatprep.subr.mxu0 0.0
    %2627 = vmatpush2.msra.mxu0 0.0
    %2628 = vmatprep.subr.mxu0 0.0
    %2629 = vmatpush2.msra.mxu0 0.0
    %2630 = vmatprep.subr.mxu0 0.0
    %2631 = vmatpush2.msra.mxu0 0.0
    %2632 = vmatprep.subr.mxu0 0.0
    %2633 = vmatpush2.msra.mxu0 0.0
    %2634 = vmatprep.subr.mxu0 0.0
    %2635 = vmatpush2.msra.mxu0 0.0
    %2636 = vmatprep.subr.mxu0 0.0
    %2637 = vmatpush2.msra.mxu0 0.0
    %2638 = vmatprep.subr.mxu0 0.0
    %2639 = vmatpush2.msra.mxu0 0.0
    %2640 = vmatprep.subr.mxu0 0.0
    %2641 = vmatpush2.msra.mxu0 0.0
    %2642 = vmatprep.subr.mxu0 0.0
    %2643 = vmatpush2.msra.mxu0 0.0
    %2644 = vmatprep.subr.mxu0 0.0
    %2645 = vmatpush2.msra.mxu0 0.0
    %2646 = vmatprep.subr.mxu0 0.0
    %2647 = vmatpush2.msra.mxu0 0.0
    %2648 = vmatprep.mubr.f32.mxu0 0.0
    %2649 = vmatmul.mubr.f32.gmra.mxu0 %v2579
    %v2650 = vpop.f32.mrf.mxu0
    %v2651 = vadd.f32 %v2571, %v2650
    %v2652 = vpop.f32.mrf.mxu0
    %v2653 = vadd.f32 %v2575, %v2652
    %2654 = vmatprep.mubr.f32.mxu0 0.0
    %2655 = vmatmul.mubr.f32.gmra.mxu0 %v2582
    %v2656 = vpop.f32.mrf.mxu0
    %v2657 = vadd.f32 %v2571, %v2656
    %v2658 = vpop.f32.mrf.mxu0
    %v2659 = vadd.f32 %v2575, %v2658
    %2660 = vdwg.mxu0
    %2661 = vmatprep.subr.mxu0 0.0
    %2662 = vmatpush1.msra.mxu0 0.0
    %2663 = vmatprep.subr.mxu0 0.0
    %2664 = vmatpush1.msra.mxu0 0.0
    %2665 = vmatprep.subr.mxu0 0.0
    %2666 = vmatpush1.msra.mxu0 0.0
    %2667 = vmatprep.subr.mxu0 0.0
    %2668 = vmatpush1.msra.mxu0 0.0
    %2669 = vmatprep.subr.mxu0 0.0
    %2670 = vmatpush1.msra.mxu0 0.0
    %2671 = vmatprep.subr.mxu0 0.0
    %2672 = vmatpush1.msra.mxu0 0.0
    %2673 = vmatprep.subr.mxu0 0.0
    %2674 = vmatpush1.msra.mxu0 0.0
    %2675 = vmatprep.subr.mxu0 0.0
    %2676 = vmatpush1.msra.mxu0 0.0
    %2677 = vmatprep.subr.mxu0 %v2566
    %2678 = vmatpush1.msra.mxu0 %v2565
    %2679 = vmatprep.subr.mxu0 %v2564
    %2680 = vmatpush1.msra.mxu0 %v2563
    %2681 = vmatprep.subr.mxu0 %v2562
    %2682 = vmatpush1.msra.mxu0 %v2561
    %2683 = vmatprep.subr.mxu0 %v2560
    %2684 = vmatpush1.msra.mxu0 %v2559
    %2685 = vmatprep.subr.mxu0 %v2558
    %2686 = vmatpush1.msra.mxu0 %v2557
    %2687 = vmatprep.subr.mxu0 %v2556
    %2688 = vmatpush1.msra.mxu0 %v2555
    %2689 = vmatprep.subr.mxu0 %v2554
    %2690 = vmatpush1.msra.mxu0 %v2553
    %2691 = vmatprep.subr.mxu0 %v2552
    %2692 = vmatpush1.msra.mxu0 %v2551
    %2693 = vmatprep.subr.mxu0 0.0
    %2694 = vmatpush2.msra.mxu0 0.0
    %2695 = vmatprep.subr.mxu0 0.0
    %2696 = vmatpush2.msra.mxu0 0.0
    %2697 = vmatprep.subr.mxu0 0.0
    %2698 = vmatpush2.msra.mxu0 0.0
    %2699 = vmatprep.subr.mxu0 0.0
    %2700 = vmatpush2.msra.mxu0 0.0
    %2701 = vmatprep.subr.mxu0 0.0
    %2702 = vmatpush2.msra.mxu0 0.0
    %2703 = vmatprep.subr.mxu0 0.0
    %2704 = vmatpush2.msra.mxu0 0.0
    %2705 = vmatprep.subr.mxu0 0.0
    %2706 = vmatpush2.msra.mxu0 0.0
    %2707 = vmatprep.subr.mxu0 0.0
    %2708 = vmatpush2.msra.mxu0 0.0
    %2709 = vmatprep.subr.mxu0 0.0
    %2710 = vmatpush2.msra.mxu0 0.0
    %2711 = vmatprep.subr.mxu0 0.0
    %2712 = vmatpush2.msra.mxu0 0.0
    %2713 = vmatprep.subr.mxu0 0.0
    %2714 = vmatpush2.msra.mxu0 0.0
    %2715 = vmatprep.subr.mxu0 0.0
    %2716 = vmatpush2.msra.mxu0 0.0
    %2717 = vmatprep.subr.mxu0 0.0
    %2718 = vmatpush2.msra.mxu0 0.0
    %2719 = vmatprep.subr.mxu0 0.0
    %2720 = vmatpush2.msra.mxu0 0.0
    %2721 = vmatprep.subr.mxu0 0.0
    %2722 = vmatpush2.msra.mxu0 0.0
    %2723 = vmatprep.subr.mxu0 0.0
    %2724 = vmatpush2.msra.mxu0 0.0
    %2725 = vmatprep.mubr.f32.mxu0 0.0
    %2726 = vmatmul.mubr.f32.gmra.mxu0 %v1132
    %v2727 = vpop.f32.mrf.mxu0
    %v2728 = vadd.f32 0.0, %v2727
    %v2729 = vpop.f32.mrf.mxu0
    %v2730 = vadd.f32 0.0, %v2729
    %2731 = vdwg.mxu0
    %v2732 = vadd.f32 %v2651, %v2728
    %v2735 = vrot.slane %v2657, 6
    %v2736 = vrot.slane %v2659, 6
    %v2739 = vadd.f32 %v2736, %v2730
    %v2740 = vxor.u32 %v2732, 2147483648
    %v2741 = vmul.f32 %v2740, 1.442695
    %v2742 = vpow.pop %v2741
    %v2743 = vadd.f32 %v2742, 1.0
    %v2744 = vrcp.pop %v2743
    %v2745 = vmul.f32 1.0, %v2744
    %v2746 = vtanh.pop %v2732
    %v2747 = vmul.f32 %v2745, 0.0
    %2749 = vrot.lane.b32.xlu0 %v2746, 64
    %v2750 = vpop.permute.xlu0 %2749
    %v2752 = vmul.f32 %v2745, %v2750
    %2754 = vrot.lane.b32.xlu0 %v2752, 32
    %v2755 = vpop.permute.xlu0 %2754
    %v2757 = vadd.f32 %v2747, %v2755
    %v2758 = vtanh.pop %v2757
    %2760 = vrot.lane.b32.xlu0 %v2758, 64
    %v2761 = vpop.permute.xlu0 %2760
    %v2763 = vmul.f32 %v2745, %v2761
    %v2764 = vxor.u32 %v2739, 2147483648
    %v2765 = vmul.f32 %v2764, 1.442695
    %v2766 = vpow.pop %v2765
    %v2767 = vadd.f32 %v2766, 1.0
    %v2768 = vrcp.pop %v2767
    %v2769 = vmul.f32 1.0, %v2768
    %v2770 = vtanh.pop %v2739
    %v2771 = vmul.f32 %v2769, 0.0
    %2773 = vrot.lane.b32.xlu0 %v2770, 64
    %v2774 = vpop.permute.xlu0 %2773
    %v2776 = vmul.f32 %v2769, %v2774
    %2778 = vrot.lane.b32.xlu0 %v2776, 32
    %v2779 = vpop.permute.xlu0 %2778
    %v2781 = vadd.f32 %v2771, %v2779
    %v2782 = vtanh.pop %v2781
    %2784 = vrot.lane.b32.xlu0 %v2782, 64
    %v2785 = vpop.permute.xlu0 %2784
    %v2787 = vmul.f32 %v2769, %v2785
    %v2788 = vmul.f32 %v1279, %v2763
    %v2789 = vadd.f32 %v2788, %v1288
    %v2790 = vmul.f32 %v1279, %v2757
    %v2791 = vadd.f32 %v2790, %v1288
    %v2792 = vmul.f32 %v1295, %v2787
    %v2793 = vadd.f32 %v2792, %v1304
    %v2794 = vmul.f32 %v1295, %v2781
    %v2795 = vadd.f32 %v2794, %v1304
    %2797 = vrot.lane.b32.xlu0 %v2789, 32
    %v2798 = vpop.permute.xlu0 %2797
    %2801 = vrot.lane.b32.xlu0 %v2793, 64
    %v2802 = vpop.permute.xlu0 %2801
    %v2804 = vsel %vm1316, %v2798, %v2802
    %v2806 = vsel %vm1130, %v2804, 0
    %2808 = vmatprep.subr.mxu0 0.0
    %2809 = vmatpush1.msra.mxu0 0.0
    %2810 = vmatprep.subr.mxu0 0.0
    %2811 = vmatpush1.msra.mxu0 0.0
    %2812 = vmatprep.subr.mxu0 0.0
    %2813 = vmatpush1.msra.mxu0 0.0
    %2814 = vmatprep.subr.mxu0 0.0
    %2815 = vmatpush1.msra.mxu0 0.0
    %2816 = vmatprep.subr.mxu0 0.0
    %2817 = vmatpush1.msra.mxu0 0.0
    %2818 = vmatprep.subr.mxu0 0.0
    %2819 = vmatpush1.msra.mxu0 0.0
    %2820 = vmatprep.subr.mxu0 0.0
    %2821 = vmatpush1.msra.mxu0 0.0
    %2822 = vmatprep.subr.mxu0 0.0
    %2823 = vmatpush1.msra.mxu0 0.0
    %2824 = vmatprep.subr.mxu0 %v2566
    %2825 = vmatpush1.msra.mxu0 %v2565
    %2826 = vmatprep.subr.mxu0 %v2564
    %2827 = vmatpush1.msra.mxu0 %v2563
    %2828 = vmatprep.subr.mxu0 %v2562
    %2829 = vmatpush1.msra.mxu0 %v2561
    %2830 = vmatprep.subr.mxu0 %v2560
    %2831 = vmatpush1.msra.mxu0 %v2559
    %2832 = vmatprep.subr.mxu0 %v2558
    %2833 = vmatpush1.msra.mxu0 %v2557
    %2834 = vmatprep.subr.mxu0 %v2556
    %2835 = vmatpush1.msra.mxu0 %v2555
    %2836 = vmatprep.subr.mxu0 %v2554
    %2837 = vmatpush1.msra.mxu0 %v2553
    %2838 = vmatprep.subr.mxu0 %v2552
    %2839 = vmatpush1.msra.mxu0 %v2551
    %2840 = vmatprep.subr.mxu0 0.0
    %2841 = vmatpush2.msra.mxu0 0.0
    %2842 = vmatprep.subr.mxu0 0.0
    %2843 = vmatpush2.msra.mxu0 0.0
    %2844 = vmatprep.subr.mxu0 0.0
    %2845 = vmatpush2.msra.mxu0 0.0
    %2846 = vmatprep.subr.mxu0 0.0
    %2847 = vmatpush2.msra.mxu0 0.0
    %2848 = vmatprep.subr.mxu0 0.0
    %2849 = vmatpush2.msra.mxu0 0.0
    %2850 = vmatprep.subr.mxu0 0.0
    %2851 = vmatpush2.msra.mxu0 0.0
    %2852 = vmatprep.subr.mxu0 0.0
    %2853 = vmatpush2.msra.mxu0 0.0
    %2854 = vmatprep.subr.mxu0 0.0
    %2855 = vmatpush2.msra.mxu0 0.0
    %2856 = vmatprep.subr.mxu0 0.0
    %2857 = vmatpush2.msra.mxu0 0.0
    %2858 = vmatprep.subr.mxu0 0.0
    %2859 = vmatpush2.msra.mxu0 0.0
    %2860 = vmatprep.subr.mxu0 0.0
    %2861 = vmatpush2.msra.mxu0 0.0
    %2862 = vmatprep.subr.mxu0 0.0
    %2863 = vmatpush2.msra.mxu0 0.0
    %2864 = vmatprep.subr.mxu0 0.0
    %2865 = vmatpush2.msra.mxu0 0.0
    %2866 = vmatprep.subr.mxu0 0.0
    %2867 = vmatpush2.msra.mxu0 0.0
    %2868 = vmatprep.subr.mxu0 0.0
    %2869 = vmatpush2.msra.mxu0 0.0
    %2870 = vmatprep.subr.mxu0 0.0
    %2871 = vmatpush2.msra.mxu0 0.0
    %2872 = vmatprep.mubr.f32.mxu0 0.0
    %2873 = vmatmul.mubr.f32.gmra.mxu0 %v2806
    %v2874 = vpop.f32.mrf.mxu0
    %v2875 = vadd.f32 0.0, %v2874
    %v2876 = vpop.f32.mrf.mxu0
    %v2877 = vadd.f32 0.0, %v2876
    %2878 = vdwg.mxu0
    %v2881 = vrot.slane %v2651, 2
    %v2882 = vrot.slane %v2653, 2
    %v2885 = vadd.f32 %v2881, %v2875
    %v2886 = vrot.slane %v2657, 4
    %v2887 = vrot.slane %v2659, 4
    %v2890 = vadd.f32 %v2887, %v2877
    %v2891 = vxor.u32 %v2885, 2147483648
    %v2892 = vmul.f32 %v2891, 1.442695
    %v2893 = vpow.pop %v2892
    %v2894 = vadd.f32 %v2893, 1.0
    %v2895 = vrcp.pop %v2894
    %v2896 = vmul.f32 1.0, %v2895
    %v2897 = vtanh.pop %v2885
    %v2898 = vmul.f32 %v2896, %v2791
    %2900 = vrot.lane.b32.xlu0 %v2897, 64
    %v2901 = vpop.permute.xlu0 %2900
    %v2903 = vmul.f32 %v2896, %v2901
    %2905 = vrot.lane.b32.xlu0 %v2903, 32
    %v2906 = vpop.permute.xlu0 %2905
    %v2908 = vadd.f32 %v2898, %v2906
    %v2909 = vtanh.pop %v2908
    %2911 = vrot.lane.b32.xlu0 %v2909, 64
    %v2912 = vpop.permute.xlu0 %2911
    %v2914 = vmul.f32 %v2896, %v2912
    %v2915 = vxor.u32 %v2890, 2147483648
    %v2916 = vmul.f32 %v2915, 1.442695
    %v2917 = vpow.pop %v2916
    %v2918 = vadd.f32 %v2917, 1.0
    %v2919 = vrcp.pop %v2918
    %v2920 = vmul.f32 1.0, %v2919
    %v2921 = vtanh.pop %v2890
    %v2922 = vmul.f32 %v2920, %v2795
    %2924 = vrot.lane.b32.xlu0 %v2921, 64
    %v2925 = vpop.permute.xlu0 %2924
    %v2927 = vmul.f32 %v2920, %v2925
    %2929 = vrot.lane.b32.xlu0 %v2927, 32
    %v2930 = vpop.permute.xlu0 %2929
    %v2932 = vadd.f32 %v2922, %v2930
    %v2933 = vtanh.pop %v2932
    %2935 = vrot.lane.b32.xlu0 %v2933, 64
    %v2936 = vpop.permute.xlu0 %2935
    %v2938 = vmul.f32 %v2920, %v2936
    %v2939 = vmul.f32 %v1461, %v2914
    %v2940 = vmul.f32 %v1468, %v2789
    %v2941 = vadd.f32 %v2939, %v2940
    %v2942 = vmul.f32 %v1461, %v2908
    %v2943 = vmul.f32 %v1468, %v2791
    %v2944 = vadd.f32 %v2942, %v2943
    %v2945 = vmul.f32 %v1478, %v2938
    %v2946 = vmul.f32 %v1485, %v2793
    %v2947 = vadd.f32 %v2945, %v2946
    %v2948 = vmul.f32 %v1478, %v2932
    %v2949 = vmul.f32 %v1485, %v2795
    %v2950 = vadd.f32 %v2948, %v2949
    %2952 = vrot.lane.b32.xlu0 %v2941, 32
    %v2953 = vpop.permute.xlu0 %2952
    %2956 = vrot.lane.b32.xlu0 %v2947, 64
    %v2957 = vpop.permute.xlu0 %2956
    %v2959 = vsel %vm1316, %v2953, %v2957
    %v2961 = vsel %vm1130, %v2959, 0
    %2963 = vmatprep.subr.mxu0 0.0
    %2964 = vmatpush1.msra.mxu0 0.0
    %2965 = vmatprep.subr.mxu0 0.0
    %2966 = vmatpush1.msra.mxu0 0.0
    %2967 = vmatprep.subr.mxu0 0.0
    %2968 = vmatpush1.msra.mxu0 0.0
    %2969 = vmatprep.subr.mxu0 0.0
    %2970 = vmatpush1.msra.mxu0 0.0
    %2971 = vmatprep.subr.mxu0 0.0
    %2972 = vmatpush1.msra.mxu0 0.0
    %2973 = vmatprep.subr.mxu0 0.0
    %2974 = vmatpush1.msra.mxu0 0.0
    %2975 = vmatprep.subr.mxu0 0.0
    %2976 = vmatpush1.msra.mxu0 0.0
    %2977 = vmatprep.subr.mxu0 0.0
    %2978 = vmatpush1.msra.mxu0 0.0
    %2979 = vmatprep.subr.mxu0 %v2566
    %2980 = vmatpush1.msra.mxu0 %v2565
    %2981 = vmatprep.subr.mxu0 %v2564
    %2982 = vmatpush1.msra.mxu0 %v2563
    %2983 = vmatprep.subr.mxu0 %v2562
    %2984 = vmatpush1.msra.mxu0 %v2561
    %2985 = vmatprep.subr.mxu0 %v2560
    %2986 = vmatpush1.msra.mxu0 %v2559
    %2987 = vmatprep.subr.mxu0 %v2558
    %2988 = vmatpush1.msra.mxu0 %v2557
    %2989 = vmatprep.subr.mxu0 %v2556
    %2990 = vmatpush1.msra.mxu0 %v2555
    %2991 = vmatprep.subr.mxu0 %v2554
    %2992 = vmatpush1.msra.mxu0 %v2553
    %2993 = vmatprep.subr.mxu0 %v2552
    %2994 = vmatpush1.msra.mxu0 %v2551
    %2995 = vmatprep.subr.mxu0 0.0
    %2996 = vmatpush2.msra.mxu0 0.0
    %2997 = vmatprep.subr.mxu0 0.0
    %2998 = vmatpush2.msra.mxu0 0.0
    %2999 = vmatprep.subr.mxu0 0.0
    %3000 = vmatpush2.msra.mxu0 0.0
    %3001 = vmatprep.subr.mxu0 0.0
    %3002 = vmatpush2.msra.mxu0 0.0
    %3003 = vmatprep.subr.mxu0 0.0
    %3004 = vmatpush2.msra.mxu0 0.0
    %3005 = vmatprep.subr.mxu0 0.0
    %3006 = vmatpush2.msra.mxu0 0.0
    %3007 = vmatprep.subr.mxu0 0.0
    %3008 = vmatpush2.msra.mxu0 0.0
    %3009 = vmatprep.subr.mxu0 0.0
    %3010 = vmatpush2.msra.mxu0 0.0
    %3011 = vmatprep.subr.mxu0 0.0
    %3012 = vmatpush2.msra.mxu0 0.0
    %3013 = vmatprep.subr.mxu0 0.0
    %3014 = vmatpush2.msra.mxu0 0.0
    %3015 = vmatprep.subr.mxu0 0.0
    %3016 = vmatpush2.msra.mxu0 0.0
    %3017 = vmatprep.subr.mxu0 0.0
    %3018 = vmatpush2.msra.mxu0 0.0
    %3019 = vmatprep.subr.mxu0 0.0
    %3020 = vmatpush2.msra.mxu0 0.0
    %3021 = vmatprep.subr.mxu0 0.0
    %3022 = vmatpush2.msra.mxu0 0.0
    %3023 = vmatprep.subr.mxu0 0.0
    %3024 = vmatpush2.msra.mxu0 0.0
    %3025 = vmatprep.subr.mxu0 0.0
    %3026 = vmatpush2.msra.mxu0 0.0
    %3027 = vmatprep.mubr.f32.mxu0 0.0
    %3028 = vmatmul.mubr.f32.gmra.mxu0 %v2961
    %v3029 = vpop.f32.mrf.mxu0
    %v3030 = vadd.f32 0.0, %v3029
    %v3031 = vpop.f32.mrf.mxu0
    %v3032 = vadd.f32 0.0, %v3031
    %3033 = vdwg.mxu0
    %v3034 = vrot.slane %v2651, 4
    %v3035 = vrot.slane %v2653, 4
    %v3038 = vadd.f32 %v3034, %v3030
    %v3039 = vrot.slane %v2657, 2
    %v3040 = vrot.slane %v2659, 2
    %v3043 = vadd.f32 %v3040, %v3032
    %v3044 = vxor.u32 %v3038, 2147483648
    %v3045 = vmul.f32 %v3044, 1.442695
    %v3046 = vpow.pop %v3045
    %v3047 = vadd.f32 %v3046, 1.0
    %v3048 = vrcp.pop %v3047
    %v3049 = vmul.f32 1.0, %v3048
    %v3050 = vtanh.pop %v3038
    %v3051 = vmul.f32 %v3049, %v2944
    %3053 = vrot.lane.b32.xlu0 %v3050, 64
    %v3054 = vpop.permute.xlu0 %3053
    %v3056 = vmul.f32 %v3049, %v3054
    %3058 = vrot.lane.b32.xlu0 %v3056, 32
    %v3059 = vpop.permute.xlu0 %3058
    %v3061 = vadd.f32 %v3051, %v3059
    %v3062 = vtanh.pop %v3061
    %3064 = vrot.lane.b32.xlu0 %v3062, 64
    %v3065 = vpop.permute.xlu0 %3064
    %v3067 = vmul.f32 %v3049, %v3065
    %v3068 = vxor.u32 %v3043, 2147483648
    %v3069 = vmul.f32 %v3068, 1.442695
    %v3070 = vpow.pop %v3069
    %v3071 = vadd.f32 %v3070, 1.0
    %v3072 = vrcp.pop %v3071
    %v3073 = vmul.f32 1.0, %v3072
    %v3074 = vtanh.pop %v3043
    %v3075 = vmul.f32 %v3073, %v2950
    %3077 = vrot.lane.b32.xlu0 %v3074, 64
    %v3078 = vpop.permute.xlu0 %3077
    %v3080 = vmul.f32 %v3073, %v3078
    %3082 = vrot.lane.b32.xlu0 %v3080, 32
    %v3083 = vpop.permute.xlu0 %3082
    %v3085 = vadd.f32 %v3075, %v3083
    %v3086 = vtanh.pop %v3085
    %3088 = vrot.lane.b32.xlu0 %v3086, 64
    %v3089 = vpop.permute.xlu0 %3088
    %v3091 = vmul.f32 %v3073, %v3089
    %v3092 = vmul.f32 %v1648, %v3067
    %v3093 = vmul.f32 %v1655, %v2941
    %v3094 = vadd.f32 %v3092, %v3093
    %v3095 = vmul.f32 %v1648, %v3061
    %v3096 = vmul.f32 %v1655, %v2944
    %v3097 = vadd.f32 %v3095, %v3096
    %v3098 = vmul.f32 %v1665, %v3091
    %v3099 = vmul.f32 %v1672, %v2947
    %v3100 = vadd.f32 %v3098, %v3099
    %v3101 = vmul.f32 %v1665, %v3085
    %v3102 = vmul.f32 %v1672, %v2950
    %v3103 = vadd.f32 %v3101, %v3102
    %3105 = vrot.lane.b32.xlu0 %v3094, 32
    %v3106 = vpop.permute.xlu0 %3105
    %3109 = vrot.lane.b32.xlu0 %v3100, 64
    %v3110 = vpop.permute.xlu0 %3109
    %v3112 = vsel %vm1316, %v3106, %v3110
    %v3114 = vsel %vm1130, %v3112, 0
    %3116 = vmatprep.subr.mxu0 0.0
    %3117 = vmatpush1.msra.mxu0 0.0
    %3118 = vmatprep.subr.mxu0 0.0
    %3119 = vmatpush1.msra.mxu0 0.0
    %3120 = vmatprep.subr.mxu0 0.0
    %3121 = vmatpush1.msra.mxu0 0.0
    %3122 = vmatprep.subr.mxu0 0.0
    %3123 = vmatpush1.msra.mxu0 0.0
    %3124 = vmatprep.subr.mxu0 0.0
    %3125 = vmatpush1.msra.mxu0 0.0
    %3126 = vmatprep.subr.mxu0 0.0
    %3127 = vmatpush1.msra.mxu0 0.0
    %3128 = vmatprep.subr.mxu0 0.0
    %3129 = vmatpush1.msra.mxu0 0.0
    %3130 = vmatprep.subr.mxu0 0.0
    %3131 = vmatpush1.msra.mxu0 0.0
    %3132 = vmatprep.subr.mxu0 %v2566
    %3133 = vmatpush1.msra.mxu0 %v2565
    %3134 = vmatprep.subr.mxu0 %v2564
    %3135 = vmatpush1.msra.mxu0 %v2563
    %3136 = vmatprep.subr.mxu0 %v2562
    %3137 = vmatpush1.msra.mxu0 %v2561
    %3138 = vmatprep.subr.mxu0 %v2560
    %3139 = vmatpush1.msra.mxu0 %v2559
    %3140 = vmatprep.subr.mxu0 %v2558
    %3141 = vmatpush1.msra.mxu0 %v2557
    %3142 = vmatprep.subr.mxu0 %v2556
    %3143 = vmatpush1.msra.mxu0 %v2555
    %3144 = vmatprep.subr.mxu0 %v2554
    %3145 = vmatpush1.msra.mxu0 %v2553
    %3146 = vmatprep.subr.mxu0 %v2552
    %3147 = vmatpush1.msra.mxu0 %v2551
    %3148 = vmatprep.subr.mxu0 0.0
    %3149 = vmatpush2.msra.mxu0 0.0
    %3150 = vmatprep.subr.mxu0 0.0
    %3151 = vmatpush2.msra.mxu0 0.0
    %3152 = vmatprep.subr.mxu0 0.0
    %3153 = vmatpush2.msra.mxu0 0.0
    %3154 = vmatprep.subr.mxu0 0.0
    %3155 = vmatpush2.msra.mxu0 0.0
    %3156 = vmatprep.subr.mxu0 0.0
    %3157 = vmatpush2.msra.mxu0 0.0
    %3158 = vmatprep.subr.mxu0 0.0
    %3159 = vmatpush2.msra.mxu0 0.0
    %3160 = vmatprep.subr.mxu0 0.0
    %3161 = vmatpush2.msra.mxu0 0.0
    %3162 = vmatprep.subr.mxu0 0.0
    %3163 = vmatpush2.msra.mxu0 0.0
    %3164 = vmatprep.subr.mxu0 0.0
    %3165 = vmatpush2.msra.mxu0 0.0
    %3166 = vmatprep.subr.mxu0 0.0
    %3167 = vmatpush2.msra.mxu0 0.0
    %3168 = vmatprep.subr.mxu0 0.0
    %3169 = vmatpush2.msra.mxu0 0.0
    %3170 = vmatprep.subr.mxu0 0.0
    %3171 = vmatpush2.msra.mxu0 0.0
    %3172 = vmatprep.subr.mxu0 0.0
    %3173 = vmatpush2.msra.mxu0 0.0
    %3174 = vmatprep.subr.mxu0 0.0
    %3175 = vmatpush2.msra.mxu0 0.0
    %3176 = vmatprep.subr.mxu0 0.0
    %3177 = vmatpush2.msra.mxu0 0.0
    %3178 = vmatprep.subr.mxu0 0.0
    %3179 = vmatpush2.msra.mxu0 0.0
    %3180 = vmatprep.mubr.f32.mxu0 0.0
    %3181 = vmatmul.mubr.f32.gmra.mxu0 %v3114
    %v3182 = vpop.f32.mrf.mxu0
    %v3183 = vadd.f32 0.0, %v3182
    %v3184 = vpop.f32.mrf.mxu0
    %v3185 = vadd.f32 0.0, %v3184
    %3186 = vdwg.mxu0
    %v3187 = vrot.slane %v2651, 6
    %v3188 = vrot.slane %v2653, 6
    %v3191 = vadd.f32 %v3187, %v3183
    %v3192 = vadd.f32 %v2659, %v3185
    %v3193 = vxor.u32 %v3191, 2147483648
    %v3194 = vmul.f32 %v3193, 1.442695
    %v3195 = vpow.pop %v3194
    %v3196 = vadd.f32 %v3195, 1.0
    %v3197 = vrcp.pop %v3196
    %v3198 = vmul.f32 1.0, %v3197
    %v3199 = vtanh.pop %v3191
    %v3200 = vmul.f32 %v3198, %v3097
    %3202 = vrot.lane.b32.xlu0 %v3199, 64
    %v3203 = vpop.permute.xlu0 %3202
    %v3205 = vmul.f32 %v3198, %v3203
    %3207 = vrot.lane.b32.xlu0 %v3205, 32
    %v3208 = vpop.permute.xlu0 %3207
    %v3210 = vadd.f32 %v3200, %v3208
    %v3211 = vtanh.pop %v3210
    %3213 = vrot.lane.b32.xlu0 %v3211, 64
    %v3214 = vpop.permute.xlu0 %3213
    %v3216 = vmul.f32 %v3198, %v3214
    %v3217 = vxor.u32 %v3192, 2147483648
    %v3218 = vmul.f32 %v3217, 1.442695
    %v3219 = vpow.pop %v3218
    %v3220 = vadd.f32 %v3219, 1.0
    %v3221 = vrcp.pop %v3220
    %v3222 = vmul.f32 1.0, %v3221
    %v3223 = vtanh.pop %v3192
    %v3224 = vmul.f32 %v3222, %v3103
    %3226 = vrot.lane.b32.xlu0 %v3223, 64
    %v3227 = vpop.permute.xlu0 %3226
    %v3229 = vmul.f32 %v3222, %v3227
    %3231 = vrot.lane.b32.xlu0 %v3229, 32
    %v3232 = vpop.permute.xlu0 %3231
    %v3234 = vadd.f32 %v3224, %v3232
    %v3235 = vtanh.pop %v3234
    %3237 = vrot.lane.b32.xlu0 %v3235, 64
    %v3238 = vpop.permute.xlu0 %3237
    %v3240 = vmul.f32 %v3222, %v3238
    %v3241 = vmul.f32 %v1835, %v3216
    %v3242 = vmul.f32 %v1842, %v3094
    %v3243 = vadd.f32 %v3241, %v3242
    %v3244 = vmul.f32 %v1835, %v3210
    %v3245 = vmul.f32 %v1842, %v3097
    %v3246 = vadd.f32 %v3244, %v3245
    %v3247 = vmul.f32 %v1852, %v3240
    %v3248 = vmul.f32 %v1859, %v3100
    %v3249 = vadd.f32 %v3247, %v3248
    %v3250 = vmul.f32 %v1852, %v3234
    %v3251 = vmul.f32 %v1859, %v3103
    %v3252 = vadd.f32 %v3250, %v3251
    %3254 = vrot.lane.b32.xlu0 %v3243, 32
    %v3255 = vpop.permute.xlu0 %3254
    %3258 = vrot.lane.b32.xlu0 %v3249, 64
    %v3259 = vpop.permute.xlu0 %3258
    %v3261 = vsel %vm1316, %v3255, %v3259
    %v3263 = vsel %vm1130, %v3261, 0
    %3265 = vmatprep.subr.mxu0 0.0
    %3266 = vmatpush1.msra.mxu0 0.0
    %3267 = vmatprep.subr.mxu0 0.0
    %3268 = vmatpush1.msra.mxu0 0.0
    %3269 = vmatprep.subr.mxu0 0.0
    %3270 = vmatpush1.msra.mxu0 0.0
    %3271 = vmatprep.subr.mxu0 0.0
    %3272 = vmatpush1.msra.mxu0 0.0
    %3273 = vmatprep.subr.mxu0 0.0
    %3274 = vmatpush1.msra.mxu0 0.0
    %3275 = vmatprep.subr.mxu0 0.0
    %3276 = vmatpush1.msra.mxu0 0.0
    %3277 = vmatprep.subr.mxu0 0.0
    %3278 = vmatpush1.msra.mxu0 0.0
    %3279 = vmatprep.subr.mxu0 0.0
    %3280 = vmatpush1.msra.mxu0 0.0
    %3281 = vmatprep.subr.mxu0 %v2566
    %3282 = vmatpush1.msra.mxu0 %v2565
    %3283 = vmatprep.subr.mxu0 %v2564
    %3284 = vmatpush1.msra.mxu0 %v2563
    %3285 = vmatprep.subr.mxu0 %v2562
    %3286 = vmatpush1.msra.mxu0 %v2561
    %3287 = vmatprep.subr.mxu0 %v2560
    %3288 = vmatpush1.msra.mxu0 %v2559
    %3289 = vmatprep.subr.mxu0 %v2558
    %3290 = vmatpush1.msra.mxu0 %v2557
    %3291 = vmatprep.subr.mxu0 %v2556
    %3292 = vmatpush1.msra.mxu0 %v2555
    %3293 = vmatprep.subr.mxu0 %v2554
    %3294 = vmatpush1.msra.mxu0 %v2553
    %3295 = vmatprep.subr.mxu0 %v2552
    %3296 = vmatpush1.msra.mxu0 %v2551
    %3297 = vmatprep.subr.mxu0 0.0
    %3298 = vmatpush2.msra.mxu0 0.0
    %3299 = vmatprep.subr.mxu0 0.0
    %3300 = vmatpush2.msra.mxu0 0.0
    %3301 = vmatprep.subr.mxu0 0.0
    %3302 = vmatpush2.msra.mxu0 0.0
    %3303 = vmatprep.subr.mxu0 0.0
    %3304 = vmatpush2.msra.mxu0 0.0
    %3305 = vmatprep.subr.mxu0 0.0
    %3306 = vmatpush2.msra.mxu0 0.0
    %3307 = vmatprep.subr.mxu0 0.0
    %3308 = vmatpush2.msra.mxu0 0.0
    %3309 = vmatprep.subr.mxu0 0.0
    %3310 = vmatpush2.msra.mxu0 0.0
    %3311 = vmatprep.subr.mxu0 0.0
    %3312 = vmatpush2.msra.mxu0 0.0
    %3313 = vmatprep.subr.mxu0 0.0
    %3314 = vmatpush2.msra.mxu0 0.0
    %3315 = vmatprep.subr.mxu0 0.0
    %3316 = vmatpush2.msra.mxu0 0.0
    %3317 = vmatprep.subr.mxu0 0.0
    %3318 = vmatpush2.msra.mxu0 0.0
    %3319 = vmatprep.subr.mxu0 0.0
    %3320 = vmatpush2.msra.mxu0 0.0
    %3321 = vmatprep.subr.mxu0 0.0
    %3322 = vmatpush2.msra.mxu0 0.0
    %3323 = vmatprep.subr.mxu0 0.0
    %3324 = vmatpush2.msra.mxu0 0.0
    %3325 = vmatprep.subr.mxu0 0.0
    %3326 = vmatpush2.msra.mxu0 0.0
    %3327 = vmatprep.subr.mxu0 0.0
    %3328 = vmatpush2.msra.mxu0 0.0
    %3329 = vmatprep.mubr.f32.mxu0 0.0
    %3330 = vmatmul.mubr.f32.gmra.mxu0 %v3263
    %v3331 = vpop.f32.mrf.mxu0
    %v3332 = vadd.f32 0.0, %v3331
    %v3333 = vpop.f32.mrf.mxu0
    %v3334 = vadd.f32 0.0, %v3333
    %3335 = vdwg.mxu0
    %v3336 = vadd.f32 %v2657, %v3332
    %v3337 = vadd.f32 %v3188, %v3334
    %v3338 = vxor.u32 %v3336, 2147483648
    %v3339 = vmul.f32 %v3338, 1.442695
    %v3340 = vpow.pop %v3339
    %v3341 = vadd.f32 %v3340, 1.0
    %v3342 = vrcp.pop %v3341
    %v3343 = vmul.f32 1.0, %v3342
    %v3344 = vtanh.pop %v3336
    %v3345 = vmul.f32 %v3343, %v3246
    %3347 = vrot.lane.b32.xlu0 %v3344, 64
    %v3348 = vpop.permute.xlu0 %3347
    %v3350 = vmul.f32 %v3343, %v3348
    %3352 = vrot.lane.b32.xlu0 %v3350, 32
    %v3353 = vpop.permute.xlu0 %3352
    %v3355 = vadd.f32 %v3345, %v3353
    %v3356 = vtanh.pop %v3355
    %3358 = vrot.lane.b32.xlu0 %v3356, 64
    %v3359 = vpop.permute.xlu0 %3358
    %v3361 = vmul.f32 %v3343, %v3359
    %v3362 = vxor.u32 %v3337, 2147483648
    %v3363 = vmul.f32 %v3362, 1.442695
    %v3364 = vpow.pop %v3363
    %v3365 = vadd.f32 %v3364, 1.0
    %v3366 = vrcp.pop %v3365
    %v3367 = vmul.f32 1.0, %v3366
    %v3368 = vtanh.pop %v3337
    %v3369 = vmul.f32 %v3367, %v3252
    %3371 = vrot.lane.b32.xlu0 %v3368, 64
    %v3372 = vpop.permute.xlu0 %3371
    %v3374 = vmul.f32 %v3367, %v3372
    %3376 = vrot.lane.b32.xlu0 %v3374, 32
    %v3377 = vpop.permute.xlu0 %3376
    %v3379 = vadd.f32 %v3369, %v3377
    %v3380 = vtanh.pop %v3379
    %3382 = vrot.lane.b32.xlu0 %v3380, 64
    %v3383 = vpop.permute.xlu0 %3382
    %v3385 = vmul.f32 %v3367, %v3383
    %v3386 = vmul.f32 %v1852, %v3361
    %v3387 = vmul.f32 %v1859, %v3243
    %v3388 = vadd.f32 %v3386, %v3387
    %v3389 = vmul.f32 %v1852, %v3355
    %v3390 = vmul.f32 %v1859, %v3246
    %v3391 = vadd.f32 %v3389, %v3390
    %v3392 = vmul.f32 %v1835, %v3385
    %v3393 = vmul.f32 %v1842, %v3249
    %v3394 = vadd.f32 %v3392, %v3393
    %v3395 = vmul.f32 %v1835, %v3379
    %v3396 = vmul.f32 %v1842, %v3252
    %v3397 = vadd.f32 %v3395, %v3396
    %3399 = vrot.lane.b32.xlu0 %v3388, 32
    %v3400 = vpop.permute.xlu0 %3399
    %3403 = vrot.lane.b32.xlu0 %v3394, 64
    %v3404 = vpop.permute.xlu0 %3403
    %v3406 = vsel %vm1316, %v3400, %v3404
    %v3408 = vsel %vm1130, %v3406, 0
    %3410 = vmatprep.subr.mxu0 0.0
    %3411 = vmatpush1.msra.mxu0 0.0
    %3412 = vmatprep.subr.mxu0 0.0
    %3413 = vmatpush1.msra.mxu0 0.0
    %3414 = vmatprep.subr.mxu0 0.0
    %3415 = vmatpush1.msra.mxu0 0.0
    %3416 = vmatprep.subr.mxu0 0.0
    %3417 = vmatpush1.msra.mxu0 0.0
    %3418 = vmatprep.subr.mxu0 0.0
    %3419 = vmatpush1.msra.mxu0 0.0
    %3420 = vmatprep.subr.mxu0 0.0
    %3421 = vmatpush1.msra.mxu0 0.0
    %3422 = vmatprep.subr.mxu0 0.0
    %3423 = vmatpush1.msra.mxu0 0.0
    %3424 = vmatprep.subr.mxu0 0.0
    %3425 = vmatpush1.msra.mxu0 0.0
    %3426 = vmatprep.subr.mxu0 %v2566
    %3427 = vmatpush1.msra.mxu0 %v2565
    %3428 = vmatprep.subr.mxu0 %v2564
    %3429 = vmatpush1.msra.mxu0 %v2563
    %3430 = vmatprep.subr.mxu0 %v2562
    %3431 = vmatpush1.msra.mxu0 %v2561
    %3432 = vmatprep.subr.mxu0 %v2560
    %3433 = vmatpush1.msra.mxu0 %v2559
    %3434 = vmatprep.subr.mxu0 %v2558
    %3435 = vmatpush1.msra.mxu0 %v2557
    %3436 = vmatprep.subr.mxu0 %v2556
    %3437 = vmatpush1.msra.mxu0 %v2555
    %3438 = vmatprep.subr.mxu0 %v2554
    %3439 = vmatpush1.msra.mxu0 %v2553
    %3440 = vmatprep.subr.mxu0 %v2552
    %3441 = vmatpush1.msra.mxu0 %v2551
    %3442 = vmatprep.subr.mxu0 0.0
    %3443 = vmatpush2.msra.mxu0 0.0
    %3444 = vmatprep.subr.mxu0 0.0
    %3445 = vmatpush2.msra.mxu0 0.0
    %3446 = vmatprep.subr.mxu0 0.0
    %3447 = vmatpush2.msra.mxu0 0.0
    %3448 = vmatprep.subr.mxu0 0.0
    %3449 = vmatpush2.msra.mxu0 0.0
    %3450 = vmatprep.subr.mxu0 0.0
    %3451 = vmatpush2.msra.mxu0 0.0
    %3452 = vmatprep.subr.mxu0 0.0
    %3453 = vmatpush2.msra.mxu0 0.0
    %3454 = vmatprep.subr.mxu0 0.0
    %3455 = vmatpush2.msra.mxu0 0.0
    %3456 = vmatprep.subr.mxu0 0.0
    %3457 = vmatpush2.msra.mxu0 0.0
    %3458 = vmatprep.subr.mxu0 0.0
    %3459 = vmatpush2.msra.mxu0 0.0
    %3460 = vmatprep.subr.mxu0 0.0
    %3461 = vmatpush2.msra.mxu0 0.0
    %3462 = vmatprep.subr.mxu0 0.0
    %3463 = vmatpush2.msra.mxu0 0.0
    %3464 = vmatprep.subr.mxu0 0.0
    %3465 = vmatpush2.msra.mxu0 0.0
    %3466 = vmatprep.subr.mxu0 0.0
    %3467 = vmatpush2.msra.mxu0 0.0
    %3468 = vmatprep.subr.mxu0 0.0
    %3469 = vmatpush2.msra.mxu0 0.0
    %3470 = vmatprep.subr.mxu0 0.0
    %3471 = vmatpush2.msra.mxu0 0.0
    %3472 = vmatprep.subr.mxu0 0.0
    %3473 = vmatpush2.msra.mxu0 0.0
    %3474 = vmatprep.mubr.f32.mxu0 0.0
    %3475 = vmatmul.mubr.f32.gmra.mxu0 %v3408
    %v3476 = vpop.f32.mrf.mxu0
    %v3477 = vadd.f32 0.0, %v3476
    %v3478 = vpop.f32.mrf.mxu0
    %v3479 = vadd.f32 0.0, %v3478
    %3480 = vdwg.mxu0
    %v3481 = vadd.f32 %v3039, %v3477
    %v3482 = vadd.f32 %v3035, %v3479
    %v3483 = vxor.u32 %v3481, 2147483648
    %v3484 = vmul.f32 %v3483, 1.442695
    %v3485 = vpow.pop %v3484
    %v3486 = vadd.f32 %v3485, 1.0
    %v3487 = vrcp.pop %v3486
    %v3488 = vmul.f32 1.0, %v3487
    %v3489 = vtanh.pop %v3481
    %v3490 = vmul.f32 %v3488, %v3391
    %3492 = vrot.lane.b32.xlu0 %v3489, 64
    %v3493 = vpop.permute.xlu0 %3492
    %v3495 = vmul.f32 %v3488, %v3493
    %3497 = vrot.lane.b32.xlu0 %v3495, 32
    %v3498 = vpop.permute.xlu0 %3497
    %v3500 = vadd.f32 %v3490, %v3498
    %v3501 = vtanh.pop %v3500
    %3503 = vrot.lane.b32.xlu0 %v3501, 64
    %v3504 = vpop.permute.xlu0 %3503
    %v3506 = vmul.f32 %v3488, %v3504
    %v3507 = vxor.u32 %v3482, 2147483648
    %v3508 = vmul.f32 %v3507, 1.442695
    %v3509 = vpow.pop %v3508
    %v3510 = vadd.f32 %v3509, 1.0
    %v3511 = vrcp.pop %v3510
    %v3512 = vmul.f32 1.0, %v3511
    %v3513 = vtanh.pop %v3482
    %v3514 = vmul.f32 %v3512, %v3397
    %3516 = vrot.lane.b32.xlu0 %v3513, 64
    %v3517 = vpop.permute.xlu0 %3516
    %v3519 = vmul.f32 %v3512, %v3517
    %3521 = vrot.lane.b32.xlu0 %v3519, 32
    %v3522 = vpop.permute.xlu0 %3521
    %v3524 = vadd.f32 %v3514, %v3522
    %v3525 = vtanh.pop %v3524
    %3527 = vrot.lane.b32.xlu0 %v3525, 64
    %v3528 = vpop.permute.xlu0 %3527
    %v3530 = vmul.f32 %v3512, %v3528
    %v3531 = vmul.f32 %v1665, %v3506
    %v3532 = vmul.f32 %v1672, %v3388
    %v3533 = vadd.f32 %v3531, %v3532
    %v3534 = vmul.f32 %v1665, %v3500
    %v3535 = vmul.f32 %v1672, %v3391
    %v3536 = vadd.f32 %v3534, %v3535
    %v3537 = vmul.f32 %v1648, %v3530
    %v3538 = vmul.f32 %v1655, %v3394
    %v3539 = vadd.f32 %v3537, %v3538
    %v3540 = vmul.f32 %v1648, %v3524
    %v3541 = vmul.f32 %v1655, %v3397
    %v3542 = vadd.f32 %v3540, %v3541
    %3544 = vrot.lane.b32.xlu0 %v3533, 32
    %v3545 = vpop.permute.xlu0 %3544
    %3548 = vrot.lane.b32.xlu0 %v3539, 64
    %v3549 = vpop.permute.xlu0 %3548
    %v3551 = vsel %vm1316, %v3545, %v3549
    %v3553 = vsel %vm1130, %v3551, 0
    %3555 = vmatprep.subr.mxu0 0.0
    %3556 = vmatpush1.msra.mxu0 0.0
    %3557 = vmatprep.subr.mxu0 0.0
    %3558 = vmatpush1.msra.mxu0 0.0
    %3559 = vmatprep.subr.mxu0 0.0
    %3560 = vmatpush1.msra.mxu0 0.0
    %3561 = vmatprep.subr.mxu0 0.0
    %3562 = vmatpush1.msra.mxu0 0.0
    %3563 = vmatprep.subr.mxu0 0.0
    %3564 = vmatpush1.msra.mxu0 0.0
    %3565 = vmatprep.subr.mxu0 0.0
    %3566 = vmatpush1.msra.mxu0 0.0
    %3567 = vmatprep.subr.mxu0 0.0
    %3568 = vmatpush1.msra.mxu0 0.0
    %3569 = vmatprep.subr.mxu0 0.0
    %3570 = vmatpush1.msra.mxu0 0.0
    %3571 = vmatprep.subr.mxu0 %v2566
    %3572 = vmatpush1.msra.mxu0 %v2565
    %3573 = vmatprep.subr.mxu0 %v2564
    %3574 = vmatpush1.msra.mxu0 %v2563
    %3575 = vmatprep.subr.mxu0 %v2562
    %3576 = vmatpush1.msra.mxu0 %v2561
    %3577 = vmatprep.subr.mxu0 %v2560
    %3578 = vmatpush1.msra.mxu0 %v2559
    %3579 = vmatprep.subr.mxu0 %v2558
    %3580 = vmatpush1.msra.mxu0 %v2557
    %3581 = vmatprep.subr.mxu0 %v2556
    %3582 = vmatpush1.msra.mxu0 %v2555
    %3583 = vmatprep.subr.mxu0 %v2554
    %3584 = vmatpush1.msra.mxu0 %v2553
    %3585 = vmatprep.subr.mxu0 %v2552
    %3586 = vmatpush1.msra.mxu0 %v2551
    %3587 = vmatprep.subr.mxu0 0.0
    %3588 = vmatpush2.msra.mxu0 0.0
    %3589 = vmatprep.subr.mxu0 0.0
    %3590 = vmatpush2.msra.mxu0 0.0
    %3591 = vmatprep.subr.mxu0 0.0
    %3592 = vmatpush2.msra.mxu0 0.0
    %3593 = vmatprep.subr.mxu0 0.0
    %3594 = vmatpush2.msra.mxu0 0.0
    %3595 = vmatprep.subr.mxu0 0.0
    %3596 = vmatpush2.msra.mxu0 0.0
    %3597 = vmatprep.subr.mxu0 0.0
    %3598 = vmatpush2.msra.mxu0 0.0
    %3599 = vmatprep.subr.mxu0 0.0
    %3600 = vmatpush2.msra.mxu0 0.0
    %3601 = vmatprep.subr.mxu0 0.0
    %3602 = vmatpush2.msra.mxu0 0.0
    %3603 = vmatprep.subr.mxu0 0.0
    %3604 = vmatpush2.msra.mxu0 0.0
    %3605 = vmatprep.subr.mxu0 0.0
    %3606 = vmatpush2.msra.mxu0 0.0
    %3607 = vmatprep.subr.mxu0 0.0
    %3608 = vmatpush2.msra.mxu0 0.0
    %3609 = vmatprep.subr.mxu0 0.0
    %3610 = vmatpush2.msra.mxu0 0.0
    %3611 = vmatprep.subr.mxu0 0.0
    %3612 = vmatpush2.msra.mxu0 0.0
    %3613 = vmatprep.subr.mxu0 0.0
    %3614 = vmatpush2.msra.mxu0 0.0
    %3615 = vmatprep.subr.mxu0 0.0
    %3616 = vmatpush2.msra.mxu0 0.0
    %3617 = vmatprep.subr.mxu0 0.0
    %3618 = vmatpush2.msra.mxu0 0.0
    %3619 = vmatprep.mubr.f32.mxu0 0.0
    %3620 = vmatmul.mubr.f32.gmra.mxu0 %v3553
    %v3621 = vpop.f32.mrf.mxu0
    %v3622 = vadd.f32 0.0, %v3621
    %v3623 = vpop.f32.mrf.mxu0
    %v3624 = vadd.f32 0.0, %v3623
    %3625 = vdwg.mxu0
    %v3626 = vadd.f32 %v2886, %v3622
    %v3627 = vadd.f32 %v2882, %v3624
    %v3628 = vxor.u32 %v3626, 2147483648
    %v3629 = vmul.f32 %v3628, 1.442695
    %v3630 = vpow.pop %v3629
    %v3631 = vadd.f32 %v3630, 1.0
    %v3632 = vrcp.pop %v3631
    %v3633 = vmul.f32 1.0, %v3632
    %v3634 = vtanh.pop %v3626
    %v3635 = vmul.f32 %v3633, %v3536
    %3637 = vrot.lane.b32.xlu0 %v3634, 64
    %v3638 = vpop.permute.xlu0 %3637
    %v3640 = vmul.f32 %v3633, %v3638
    %3642 = vrot.lane.b32.xlu0 %v3640, 32
    %v3643 = vpop.permute.xlu0 %3642
    %v3645 = vadd.f32 %v3635, %v3643
    %v3646 = vtanh.pop %v3645
    %3648 = vrot.lane.b32.xlu0 %v3646, 64
    %v3649 = vpop.permute.xlu0 %3648
    %v3651 = vmul.f32 %v3633, %v3649
    %v3652 = vxor.u32 %v3627, 2147483648
    %v3653 = vmul.f32 %v3652, 1.442695
    %v3654 = vpow.pop %v3653
    %v3655 = vadd.f32 %v3654, 1.0
    %v3656 = vrcp.pop %v3655
    %v3657 = vmul.f32 1.0, %v3656
    %v3658 = vtanh.pop %v3627
    %v3659 = vmul.f32 %v3657, %v3542
    %3661 = vrot.lane.b32.xlu0 %v3658, 64
    %v3662 = vpop.permute.xlu0 %3661
    %v3664 = vmul.f32 %v3657, %v3662
    %3666 = vrot.lane.b32.xlu0 %v3664, 32
    %v3667 = vpop.permute.xlu0 %3666
    %v3669 = vadd.f32 %v3659, %v3667
    %v3670 = vtanh.pop %v3669
    %3672 = vrot.lane.b32.xlu0 %v3670, 64
    %v3673 = vpop.permute.xlu0 %3672
    %v3675 = vmul.f32 %v3657, %v3673
    %v3676 = vmul.f32 %v1478, %v3651
    %v3677 = vmul.f32 %v1485, %v3533
    %v3678 = vadd.f32 %v3676, %v3677
    %v3679 = vmul.f32 %v1478, %v3645
    %v3680 = vmul.f32 %v1485, %v3536
    %v3681 = vadd.f32 %v3679, %v3680
    %v3682 = vmul.f32 %v1461, %v3675
    %v3683 = vmul.f32 %v1468, %v3539
    %v3684 = vadd.f32 %v3682, %v3683
    %v3685 = vmul.f32 %v1461, %v3669
    %v3686 = vmul.f32 %v1468, %v3542
    %v3687 = vadd.f32 %v3685, %v3686
    %3689 = vrot.lane.b32.xlu0 %v3678, 32
    %v3690 = vpop.permute.xlu0 %3689
    %3693 = vrot.lane.b32.xlu0 %v3684, 64
    %v3694 = vpop.permute.xlu0 %3693
    %v3696 = vsel %vm1316, %v3690, %v3694
    %v3698 = vsel %vm1130, %v3696, 0
    %3700 = vmatprep.subr.mxu0 0.0
    %3701 = vmatpush1.msra.mxu0 0.0
    %3702 = vmatprep.subr.mxu0 0.0
    %3703 = vmatpush1.msra.mxu0 0.0
    %3704 = vmatprep.subr.mxu0 0.0
    %3705 = vmatpush1.msra.mxu0 0.0
    %3706 = vmatprep.subr.mxu0 0.0
    %3707 = vmatpush1.msra.mxu0 0.0
    %3708 = vmatprep.subr.mxu0 0.0
    %3709 = vmatpush1.msra.mxu0 0.0
    %3710 = vmatprep.subr.mxu0 0.0
    %3711 = vmatpush1.msra.mxu0 0.0
    %3712 = vmatprep.subr.mxu0 0.0
    %3713 = vmatpush1.msra.mxu0 0.0
    %3714 = vmatprep.subr.mxu0 0.0
    %3715 = vmatpush1.msra.mxu0 0.0
    %3716 = vmatprep.subr.mxu0 %v2566
    %3717 = vmatpush1.msra.mxu0 %v2565
    %3718 = vmatprep.subr.mxu0 %v2564
    %3719 = vmatpush1.msra.mxu0 %v2563
    %3720 = vmatprep.subr.mxu0 %v2562
    %3721 = vmatpush1.msra.mxu0 %v2561
    %3722 = vmatprep.subr.mxu0 %v2560
    %3723 = vmatpush1.msra.mxu0 %v2559
    %3724 = vmatprep.subr.mxu0 %v2558
    %3725 = vmatpush1.msra.mxu0 %v2557
    %3726 = vmatprep.subr.mxu0 %v2556
    %3727 = vmatpush1.msra.mxu0 %v2555
    %3728 = vmatprep.subr.mxu0 %v2554
    %3729 = vmatpush1.msra.mxu0 %v2553
    %3730 = vmatprep.subr.mxu0 %v2552
    %3731 = vmatpush1.msra.mxu0 %v2551
    %3732 = vmatprep.subr.mxu0 0.0
    %3733 = vmatpush2.msra.mxu0 0.0
    %3734 = vmatprep.subr.mxu0 0.0
    %3735 = vmatpush2.msra.mxu0 0.0
    %3736 = vmatprep.subr.mxu0 0.0
    %3737 = vmatpush2.msra.mxu0 0.0
    %3738 = vmatprep.subr.mxu0 0.0
    %3739 = vmatpush2.msra.mxu0 0.0
    %3740 = vmatprep.subr.mxu0 0.0
    %3741 = vmatpush2.msra.mxu0 0.0
    %3742 = vmatprep.subr.mxu0 0.0
    %3743 = vmatpush2.msra.mxu0 0.0
    %3744 = vmatprep.subr.mxu0 0.0
    %3745 = vmatpush2.msra.mxu0 0.0
    %3746 = vmatprep.subr.mxu0 0.0
    %3747 = vmatpush2.msra.mxu0 0.0
    %3748 = vmatprep.subr.mxu0 0.0
    %3749 = vmatpush2.msra.mxu0 0.0
    %3750 = vmatprep.subr.mxu0 0.0
    %3751 = vmatpush2.msra.mxu0 0.0
    %3752 = vmatprep.subr.mxu0 0.0
    %3753 = vmatpush2.msra.mxu0 0.0
    %3754 = vmatprep.subr.mxu0 0.0
    %3755 = vmatpush2.msra.mxu0 0.0
    %3756 = vmatprep.subr.mxu0 0.0
    %3757 = vmatpush2.msra.mxu0 0.0
    %3758 = vmatprep.subr.mxu0 0.0
    %3759 = vmatpush2.msra.mxu0 0.0
    %3760 = vmatprep.subr.mxu0 0.0
    %3761 = vmatpush2.msra.mxu0 0.0
    %3762 = vmatprep.subr.mxu0 0.0
    %3763 = vmatpush2.msra.mxu0 0.0
    %3764 = vmatprep.mubr.f32.mxu0 0.0
    %3765 = vmatmul.mubr.f32.gmra.mxu0 %v3698
    %v3766 = vpop.f32.mrf.mxu0
    %v3767 = vadd.f32 0.0, %v3766
    %v3768 = vpop.f32.mrf.mxu0
    %v3769 = vadd.f32 0.0, %v3768
    %3770 = vdwg.mxu0
    %v3771 = vadd.f32 %v2735, %v3767
    %v3772 = vadd.f32 %v2653, %v3769
    %v3773 = vxor.u32 %v3771, 2147483648
    %v3774 = vmul.f32 %v3773, 1.442695
    %v3775 = vpow.pop %v3774
    %v3776 = vadd.f32 %v3775, 1.0
    %v3777 = vrcp.pop %v3776
    %v3778 = vmul.f32 1.0, %v3777
    %v3779 = vtanh.pop %v3771
    %v3780 = vmul.f32 %v3778, %v3681
    %3782 = vrot.lane.b32.xlu0 %v3779, 64
    %v3783 = vpop.permute.xlu0 %3782
    %v3785 = vmul.f32 %v3778, %v3783
    %3787 = vrot.lane.b32.xlu0 %v3785, 32
    %v3788 = vpop.permute.xlu0 %3787
    %v3790 = vadd.f32 %v3780, %v3788
    %v3791 = vtanh.pop %v3790
    %3793 = vrot.lane.b32.xlu0 %v3791, 64
    %v3794 = vpop.permute.xlu0 %3793
    %v3796 = vmul.f32 %v3778, %v3794
    %v3797 = vxor.u32 %v3772, 2147483648
    %v3798 = vmul.f32 %v3797, 1.442695
    %v3799 = vpow.pop %v3798
    %v3800 = vadd.f32 %v3799, 1.0
    %v3801 = vrcp.pop %v3800
    %v3802 = vmul.f32 1.0, %v3801
    %v3803 = vtanh.pop %v3772
    %v3804 = vmul.f32 %v3802, %v3687
    %3806 = vrot.lane.b32.xlu0 %v3803, 64
    %v3807 = vpop.permute.xlu0 %3806
    %v3809 = vmul.f32 %v3802, %v3807
    %3811 = vrot.lane.b32.xlu0 %v3809, 32
    %v3812 = vpop.permute.xlu0 %3811
    %v3814 = vadd.f32 %v3804, %v3812
    %v3815 = vtanh.pop %v3814
    %3817 = vrot.lane.b32.xlu0 %v3815, 64
    %v3818 = vpop.permute.xlu0 %3817
    %v3820 = vmul.f32 %v3802, %v3818
    %v3821 = vmul.f32 %v1295, %v3796
    %v3822 = vmul.f32 %v1279, %v3820
    %v3824 = vrot.slane %v2939, 7
    %v3827 = vrot.slane %v3092, 6
    %v3830 = vrot.slane %v3241, 5
    %v3833 = vrot.slane %v3386, 4
    %v3836 = vrot.slane %v3531, 3
    %v3839 = vrot.slane %v3676, 2
    %v3842 = vrot.slane %v3821, 1
    %v3844 = vsel %vm1211, %v2788, %v3824
    %v3845 = vsel %vm2526, %v3844, %v3827
    %vm3846 = vcmask 1042432
    %v3847 = vsel %vm3846, %v3845, %v3830
    %v3848 = vsel %vm2528, %v3847, %v3833
    %vm3849 = vcmask 1044480
    %v3850 = vsel %vm3849, %v3848, %v3836
    %v3851 = vsel %vm83, %v3850, %v3839
    %v3852 = vsel %vm71, %v3851, %v3842
    %v3854 = vrot.slane %v3682, 7
    %v3857 = vrot.slane %v3537, 6
    %v3860 = vrot.slane %v3392, 5
    %v3863 = vrot.slane %v3247, 4
    %v3866 = vrot.slane %v3098, 3
    %v3869 = vrot.slane %v2945, 2
    %v3872 = vrot.slane %v2792, 1
    %v3874 = vsel %vm1211, %v3822, %v3854
    %v3875 = vsel %vm2526, %v3874, %v3857
    %v3876 = vsel %vm3846, %v3875, %v3860
    %v3877 = vsel %vm2528, %v3876, %v3863
    %v3878 = vsel %vm3849, %v3877, %v3866
    %v3879 = vsel %vm83, %v3878, %v3869
    %v3880 = vsel %vm71, %v3879, %v3872
    %3882 = vrot.lane.b32.xlu0 %v3852, 32
    %v3883 = vpop.permute.xlu0 %3882
    %3886 = vrot.lane.b32.xlu0 %v3880, 64
    %v3887 = vpop.permute.xlu0 %3886
    %v3889 = vsel %vm1316, %v3883, %v3887
    %v3891 = vrot.slane %v2788, 1
    %v3893 = vrot.slane %v3092, 7
    %v3895 = vrot.slane %v3241, 6
    %v3897 = vrot.slane %v3386, 5
    %v3899 = vrot.slane %v3531, 4
    %v3901 = vrot.slane %v3676, 3
    %v3903 = vrot.slane %v3821, 2
    %v3905 = vsel %vm1211, %v3891, %v2939
    %v3906 = vsel %vm2526, %v3905, %v3893
    %v3907 = vsel %vm3846, %v3906, %v3895
    %v3908 = vsel %vm2528, %v3907, %v3897
    %v3909 = vsel %vm3849, %v3908, %v3899
    %v3910 = vsel %vm83, %v3909, %v3901
    %v3911 = vsel %vm71, %v3910, %v3903
    %v3913 = vrot.slane %v3822, 1
    %v3915 = vrot.slane %v3537, 7
    %v3917 = vrot.slane %v3392, 6
    %v3919 = vrot.slane %v3247, 5
    %v3921 = vrot.slane %v3098, 4
    %v3923 = vrot.slane %v2945, 3
    %v3925 = vrot.slane %v2792, 2
    %v3927 = vsel %vm1211, %v3913, %v3682
    %v3928 = vsel %vm2526, %v3927, %v3915
    %v3929 = vsel %vm3846, %v3928, %v3917
    %v3930 = vsel %vm2528, %v3929, %v3919
    %v3931 = vsel %vm3849, %v3930, %v3921
    %v3932 = vsel %vm83, %v3931, %v3923
    %v3933 = vsel %vm71, %v3932, %v3925
    %3935 = vrot.lane.b32.xlu0 %v3911, 32
    %v3936 = vpop.permute.xlu0 %3935
    %3939 = vrot.lane.b32.xlu0 %v3933, 64
    %v3940 = vpop.permute.xlu0 %3939
    %v3942 = vsel %vm1316, %v3936, %v3940
    %v3944 = vrot.slane %v3942, 6
    %v3946 = vsel %vm2526, 0.0, %v3944
    %v3947 = vsel %vm2526, %v3944, 0.0
    %v3948 = vld [vmem:[%s9] sm:$0xff]
    %v3949 = vld [vmem:[%s9 + $0x8] sm:$0xff]
    %v3950 = vld [vmem:[%s9 + $0x10] sm:$0xff]
    %v3951 = vld [vmem:[%s9 + $0x18] sm:$0xff]
    %v3952 = vld [vmem:[%s9 + $0x20] sm:$0xff]
    %v3953 = vld [vmem:[%s9 + $0x28] sm:$0xff]
    %v3954 = vld [vmem:[%s9 + $0x30] sm:$0xff]
    %v3955 = vld [vmem:[%s9 + $0x38] sm:$0xff]
    %v3956 = vld [vmem:[%s10] sm:$0x1]
    %v3958 = vlaneseq
    %v3959 = vshrl.u32 %v3958, 7
    %v3960 = vsub.s32 0, %v3959
    %v3961 = vrot.slane %v3956, %v3960
    %v3964 = vsel %vm1130, %v3889, 0
    %v3967 = vsel %vm1130, %v3946, 0
    %v3970 = vsel %vm1130, %v3947, 0
    %3972 = vmatprep.subr.mxu0 0.0
    %3973 = vmatpush1.msra.mxu0 0.0
    %3974 = vmatprep.subr.mxu0 0.0
    %3975 = vmatpush1.msra.mxu0 0.0
    %3976 = vmatprep.subr.mxu0 0.0
    %3977 = vmatpush1.msra.mxu0 0.0
    %3978 = vmatprep.subr.mxu0 0.0
    %3979 = vmatpush1.msra.mxu0 0.0
    %3980 = vmatprep.subr.mxu0 0.0
    %3981 = vmatpush1.msra.mxu0 0.0
    %3982 = vmatprep.subr.mxu0 0.0
    %3983 = vmatpush1.msra.mxu0 0.0
    %3984 = vmatprep.subr.mxu0 0.0
    %3985 = vmatpush1.msra.mxu0 0.0
    %3986 = vmatprep.subr.mxu0 0.0
    %3987 = vmatpush1.msra.mxu0 0.0
    %3988 = vmatprep.subr.mxu0 0.0
    %3989 = vmatpush1.msra.mxu0 %v3955
    %3990 = vmatprep.subr.mxu0 0.0
    %3991 = vmatpush1.msra.mxu0 %v3954
    %3992 = vmatprep.subr.mxu0 0.0
    %3993 = vmatpush1.msra.mxu0 %v3953
    %3994 = vmatprep.subr.mxu0 0.0
    %3995 = vmatpush1.msra.mxu0 %v3952
    %3996 = vmatprep.subr.mxu0 0.0
    %3997 = vmatpush1.msra.mxu0 %v3951
    %3998 = vmatprep.subr.mxu0 0.0
    %3999 = vmatpush1.msra.mxu0 %v3950
    %4000 = vmatprep.subr.mxu0 0.0
    %4001 = vmatpush1.msra.mxu0 %v3949
    %4002 = vmatprep.subr.mxu0 0.0
    %4003 = vmatpush1.msra.mxu0 %v3948
    %4004 = vmatprep.subr.mxu0 0.0
    %4005 = vmatpush2.msra.mxu0 0.0
    %4006 = vmatprep.subr.mxu0 0.0
    %4007 = vmatpush2.msra.mxu0 0.0
    %4008 = vmatprep.subr.mxu0 0.0
    %4009 = vmatpush2.msra.mxu0 0.0
    %4010 = vmatprep.subr.mxu0 0.0
    %4011 = vmatpush2.msra.mxu0 0.0
    %4012 = vmatprep.subr.mxu0 0.0
    %4013 = vmatpush2.msra.mxu0 0.0
    %4014 = vmatprep.subr.mxu0 0.0
    %4015 = vmatpush2.msra.mxu0 0.0
    %4016 = vmatprep.subr.mxu0 0.0
    %4017 = vmatpush2.msra.mxu0 0.0
    %4018 = vmatprep.subr.mxu0 0.0
    %4019 = vmatpush2.msra.mxu0 0.0
    %4020 = vmatprep.subr.mxu0 0.0
    %4021 = vmatpush2.msra.mxu0 0.0
    %4022 = vmatprep.subr.mxu0 0.0
    %4023 = vmatpush2.msra.mxu0 0.0
    %4024 = vmatprep.subr.mxu0 0.0
    %4025 = vmatpush2.msra.mxu0 0.0
    %4026 = vmatprep.subr.mxu0 0.0
    %4027 = vmatpush2.msra.mxu0 0.0
    %4028 = vmatprep.subr.mxu0 0.0
    %4029 = vmatpush2.msra.mxu0 0.0
    %4030 = vmatprep.subr.mxu0 0.0
    %4031 = vmatpush2.msra.mxu0 0.0
    %4032 = vmatprep.subr.mxu0 0.0
    %4033 = vmatpush2.msra.mxu0 0.0
    %4034 = vmatprep.subr.mxu0 0.0
    %4035 = vmatpush2.msra.mxu0 0.0
    %4036 = vmatprep.mubr.f32.mxu0 0.0
    %4037 = vmatmul.mubr.f32.gmra.mxu0 %v3964
    %v4038 = vpop.f32.mrf.mxu0
    %v4039 = vadd.f32 %v3961, %v4038
    %v4040 = vpop.f32.mrf.mxu0
    %4041 = vmatprep.mubr.f32.mxu0 0.0
    %4042 = vmatmul.mubr.f32.gmra.mxu0 %v3967
    %v4043 = vpop.f32.mrf.mxu0
    %v4044 = vadd.f32 %v3961, %v4043
    %v4045 = vpop.f32.mrf.mxu0
    %4046 = vmatprep.mubr.f32.mxu0 0.0
    %4047 = vmatmul.mubr.f32.gmra.mxu0 %v3970
    %v4048 = vpop.f32.mrf.mxu0
    %v4049 = vadd.f32 %v3961, %v4048
    %v4050 = vpop.f32.mrf.mxu0
    %4051 = vdwg.mxu0
    %vm4052 = vcmask 130048
    %v4053 = vsel %vm4052, %v4039, -inf
    %4054 = vmax.xlane.f32.xlu0 %v4053
    %v4055 = vpop.xlane.xlu0 %4054
    %v4056 = vsel %vm4052, %v4044, -inf
    %4057 = vmax.xlane.f32.xlu0 %v4056
    %v4058 = vpop.xlane.xlu0 %4057
    %vm4059 = vcmask 125952
    %v4060 = vsel %vm4059, %v4049, -inf
    %4061 = vmax.xlane.f32.xlu0 %v4060
    %v4062 = vpop.xlane.xlu0 %4061
    %v4063 = vsub.f32 %v4039, %v4055
    %v4064 = vsub.f32 %v4044, %v4058
    %v4065 = vsub.f32 %v4049, %v4062
    %v4066 = vmul.f32 %v4063, 1.442695
    %v4067 = vpow.pop %v4066
    %v4068 = vmul.f32 %v4064, 1.442695
    %v4069 = vpow.pop %v4068
    %v4070 = vmul.f32 %v4065, 1.442695
    %v4071 = vpow.pop %v4070
    %v4072 = vsel %vm4052, %v4067, 0.0
    %4073 = vadd.xlane.f32.xlu0 %v4072
    %v4074 = vpop.xlane.xlu0 %4073
    %v4075 = vsel %vm4052, %v4069, 0.0
    %4076 = vadd.xlane.f32.xlu0 %v4075
    %v4077 = vpop.xlane.xlu0 %4076
    %v4078 = vsel %vm4059, %v4071, 0.0
    %4079 = vadd.xlane.f32.xlu0 %v4078
    %v4080 = vpop.xlane.xlu0 %4079
    %v4081 = vlog2.pop %v4074
    %v4082 = vmul.f32 %v4081, 0.6931472
    %v4083 = vlog2.pop %v4077
    %v4084 = vmul.f32 %v4083, 0.6931472
    %v4085 = vlog2.pop %v4080
    %v4086 = vmul.f32 %v4085, 0.6931472
    %v4087 = vadd.f32 %v4082, %v4055
    %v4088 = vadd.f32 %v4084, %v4058
    %v4089 = vadd.f32 %v4086, %v4062
    %v4090 = vsub.f32 %v4039, %v4087
    %v4091 = vsub.f32 %v4044, %v4088
    %v4092 = vsub.f32 %v4049, %v4089
    %4093 = vst.msk [vmem:[%s11] sm:$0xff] %vm4052, %v4090
    %4094 = vst.msk [vmem:[%s11 + $0x8] sm:$0xff] %vm4052, %v4091
    %4095 = vst.msk [vmem:[%s11 + $0x10] sm:$0xf] %vm4059, %v4092
    // Predicated region
    $region50: #{forward.1} parent=1 // pred_check
      _
    $region51: #{forward.1} parent=1 // pred_check_branch
      %4097 = sbr.rel (0) target = $region53
    $region52: #{forward.1} parent=1 // pred_region
      _
    $region53: #{forward.1} parent=1 // pred_fallthru
      _
    // Predicated region
    $region54: #{forward.1} parent=1 // pred_check
      _
    $region55: #{forward.1} parent=1 // pred_check_branch
      %4099 = sbr.rel (0) target = $region57
    $region56: #{forward.1} parent=1 // pred_region
      _
    $region57: #{forward.1} parent=1 // pred_fallthru
      _
    %4100 = vsyncpa [#allocation3], 1

</llo_original>
